<compile_context>
chip_gen: v7x
topology: tpu7x:2x2x1
jax: 0.10.0
libtpu: 0.0.40
codegen_flags: <defaults>
</compile_context>

<pallas_src>
import math

import jax
import jax.numpy as jnp
from jax.experimental import pallas as pl
from jax.experimental.pallas import tpu as pltpu

# ---------------- config (small, consistent with the module) ----------------
D_MODEL = 32
N_HEADS = 4
D_FF = 64
N_LAYERS = 2
VOCAB_SRC = 41
VOCAB_TGT = 37

V_SRC_PAD = ((VOCAB_SRC + 7) // 8) * 8   # 48
V_TGT_PAD = ((VOCAB_TGT + 7) // 8) * 8   # 40

PACK_W = 128                              # lane-dense slab width (multiple of 128)


# ---------------- parameter slab layout (static Python, shared by host + kernel) ----------------

def _build_layout():
    """Row layout of the single packed parameter slab.  Every param starts on an
    8-row (sublane) boundary so in-kernel static slices are tile-aligned."""
    layout = {}
    row = 0

    def add(name, r, c):
        nonlocal row
        layout[name] = (row, r, c)
        row += ((r + 7) // 8) * 8

    add("src_emb", V_SRC_PAD, D_MODEL)
    add("tgt_emb", V_TGT_PAD, D_MODEL)

    for l in range(N_LAYERS):                       # encoder layers
        add(f"e{l}_qkv_w", D_MODEL, 3 * D_MODEL)
        add(f"e{l}_qkv_b", 1, 3 * D_MODEL)
        add(f"e{l}_wo", D_MODEL, D_MODEL)
        add(f"e{l}_bo", 1, D_MODEL)
        add(f"e{l}_ff_w1", D_MODEL, D_FF)
        add(f"e{l}_ff_b1", 1, D_FF)
        add(f"e{l}_ff_w2", D_FF, D_MODEL)
        add(f"e{l}_ff_b2", 1, D_MODEL)
        add(f"e{l}_ln_g", 2, D_MODEL)
        add(f"e{l}_ln_b", 2, D_MODEL)
    add("e_fln_g", 1, D_MODEL)
    add("e_fln_b", 1, D_MODEL)

    # cross-attention K/V weights of ALL decoder layers fused: [D, L*2D] = [32, 128]
    add("d_cross_kv_w", D_MODEL, N_LAYERS * 2 * D_MODEL)
    add("d_cross_kv_b", 1, N_LAYERS * 2 * D_MODEL)

    for l in range(N_LAYERS):                       # decoder layers
        add(f"d{l}_self_qkv_w", D_MODEL, 3 * D_MODEL)
        add(f"d{l}_self_qkv_b", 1, 3 * D_MODEL)
        add(f"d{l}_self_wo", D_MODEL, D_MODEL)
        add(f"d{l}_self_bo", 1, D_MODEL)
        add(f"d{l}_cross_q_w", D_MODEL, D_MODEL)
        add(f"d{l}_cross_q_b", 1, D_MODEL)
        add(f"d{l}_cross_wo", D_MODEL, D_MODEL)
        add(f"d{l}_cross_bo", 1, D_MODEL)
        add(f"d{l}_ff_w1", D_MODEL, D_FF)
        add(f"d{l}_ff_b1", 1, D_FF)
        add(f"d{l}_ff_w2", D_FF, D_MODEL)
        add(f"d{l}_ff_b2", 1, D_MODEL)
        add(f"d{l}_ln_g", 3, D_MODEL)
        add(f"d{l}_ln_b", 3, D_MODEL)
    add("d_fln_g", 1, D_MODEL)
    add("d_fln_b", 1, D_MODEL)

    return layout, ((row + 7) // 8) * 8


LAYOUT, SLAB_ROWS = _build_layout()   # SLAB_ROWS = 1152  (~576 KB f32, VMEM-resident)


# ---------------- the single fused kernel (one batch element per grid step) ----------------

def _encoder_decoder_kernel(src_ids_ref, tgt_ids_ref, src_bias_ref, tgt_bias_ref,
                            w_ref, out_ref):
    f32 = jnp.float32
    dk = D_MODEL // N_HEADS
    inv_sqrt_dk = 1.0 / math.sqrt(dk)
    emb_scale = math.sqrt(D_MODEL)

    def get(name):
        off, r, c = LAYOUT[name]
        return w_ref[off:off + r, :c]          # static slice of the VMEM slab — free

    src_bias = src_bias_ref[0]                 # [1, Ss]  additive bias (0 / -1e9)
    tgt_bias = tgt_bias_ref[0]                 # [St, St] additive causal bias

    def layer_norm(x, g, b):
        # Annotated-Transformer LayerNorm: g * (x - mean) / (std + eps) + b, unbiased std.
        mean = jnp.mean(x, axis=-1, keepdims=True)
        diff = x - mean
        var = jnp.sum(diff * diff, axis=-1, keepdims=True) * (1.0 / (x.shape[-1] - 1))
        std = jnp.sqrt(var)
        return g * diff / (std + 1e-6) + b

    def attention(q, k, v, wo, bo, bias):
        # q already scaled by 1/sqrt(dk).  Per-head: score -> softmax -> ctx, then
        # accumulate directly into W_o via sublane-aligned row slices (no lane concat).
        out = None
        for h in range(N_HEADS):
            qh = q[:, h * dk:(h + 1) * dk]
            kh = k[:, h * dk:(h + 1) * dk]
            vh = v[:, h * dk:(h + 1) * dk]
            s = jax.lax.dot_general(qh, kh, (((1,), (1,)), ((), ())),
                                    preferred_element_type=f32)
            s = s + bias
            s = s - jnp.max(s, axis=-1, keepdims=True)
            p = jnp.exp(s)
            p = p * pl.reciprocal(jnp.sum(p, axis=-1, keepdims=True), approx=True)
            ctx = jnp.dot(p, vh, preferred_element_type=f32)                 # [s_q, dk]
            part = jnp.dot(ctx, wo[h * dk:(h + 1) * dk, :],
                           preferred_element_type=f32)                       # [s_q, D]
            out = part if out is None else out + part
        return out + bo

    def self_attention(x, w_qkv, b_qkv, wo, bo, bias):
        # fused [M, 3D] projection (lane width 96 instead of 3x32)
        qkv = jnp.dot(x, w_qkv, preferred_element_type=f32) + b_qkv
        q = qkv[:, :D_MODEL] * inv_sqrt_dk
        k = qkv[:, D_MODEL:2 * D_MODEL]
        v = qkv[:, 2 * D_MODEL:]
        return attention(q, k, v, wo, bo, bias)

    def ffn(x, w1, b1, w2, b2):
        h = jnp.maximum(jnp.dot(x, w1, preferred_element_type=f32) + b1, 0.0)
        return jnp.dot(h, w2, preferred_element_type=f32) + b2

    def embed(ids, table):
        # token gather as a one-hot matmul, everything stays in VMEM
        m = ids.shape[0]
        vpad = table.shape[0]
        iota = jax.lax.broadcasted_iota(jnp.int32, (m, vpad), 1)
        onehot = (iota == ids).astype(f32)
        return jnp.dot(onehot, table, preferred_element_type=f32) * emb_scale

    # ---------------- encoder ----------------
    x = embed(src_ids_ref[...], get("src_emb"))                  # [Ss, D]
    for l in range(N_LAYERS):
        g = get(f"e{l}_ln_g")
        b = get(f"e{l}_ln_b")
        y = layer_norm(x, g[0:1, :], b[0:1, :])
        x = x + self_attention(y, get(f"e{l}_qkv_w"), get(f"e{l}_qkv_b"),
                               get(f"e{l}_wo"), get(f"e{l}_bo"), src_bias)
        y = layer_norm(x, g[1:2, :], b[1:2, :])
        x = x + ffn(y, get(f"e{l}_ff_w1"), get(f"e{l}_ff_b1"),
                    get(f"e{l}_ff_w2"), get(f"e{l}_ff_b2"))
    memory = layer_norm(x, get("e_fln_g"), get("e_fln_b"))       # [Ss, D]

    # hoisted cross-attention K/V projection of memory for ALL decoder layers:
    # one lane-dense [Ss, 32] x [32, L*2D=128] matmul, sliced per layer below.
    kv_all = (jnp.dot(memory, get("d_cross_kv_w"), preferred_element_type=f32)
              + get("d_cross_kv_b"))

    # ---------------- decoder ----------------
    x = embed(tgt_ids_ref[...], get("tgt_emb"))                  # [St, D]
    for l in range(N_LAYERS):
        g = get(f"d{l}_ln_g")
        b = get(f"d{l}_ln_b")
        # masked self-attention
        y = layer_norm(x, g[0:1, :], b[0:1, :])
        x = x + self_attention(y, get(f"d{l}_self_qkv_w"), get(f"d{l}_self_qkv_b"),
                               get(f"d{l}_self_wo"), get(f"d{l}_self_bo"), tgt_bias)
        # cross-attention (K/V already projected from memory above)
        y = layer_norm(x, g[1:2, :], b[1:2, :])
        q = (jnp.dot(y, get(f"d{l}_cross_q_w"), preferred_element_type=f32)
             + get(f"d{l}_cross_q_b")) * inv_sqrt_dk
        k = kv_all[:, l * 2 * D_MODEL: l * 2 * D_MODEL + D_MODEL]
        v = kv_all[:, l * 2 * D_MODEL + D_MODEL: (l + 1) * 2 * D_MODEL]
        x = x + attention(q, k, v, get(f"d{l}_cross_wo"), get(f"d{l}_cross_bo"), src_bias)
        # feed-forward
        y = layer_norm(x, g[2:3, :], b[2:3, :])
        x = x + ffn(y, get(f"d{l}_ff_w1"), get(f"d{l}_ff_b1"),
                    get(f"d{l}_ff_w2"), get(f"d{l}_ff_b2"))

    out_ref[...] = layer_norm(x, get("d_fln_g"), get("d_fln_b")).astype(out_ref.dtype)


# ---------------- wrapper ----------------

def encoder_decoder_forward(slab, src, tgt, src_mask, tgt_mask):
    """EncoderDecoder.forward: decode(encode(src, src_mask), src_mask, tgt, tgt_mask)."""
    B, Ss = src.shape
    St = tgt.shape[1]

    src_ids = src.reshape(B * Ss, 1).astype(jnp.int32)
    tgt_ids = tgt.reshape(B * St, 1).astype(jnp.int32)
    # additive attention biases: 0 where visible, -1e9 where masked (computed once here)
    src_bias = ((src_mask.astype(jnp.float32) - 1.0) * 1e9).reshape(B, 1, Ss)
    tgt_bias = ((tgt_mask.astype(jnp.float32) - 1.0) * 1e9).reshape(B, St, St)

    out2d = pl.pallas_call(
        _encoder_decoder_kernel,
        out_shape=jax.ShapeDtypeStruct((B * St, D_MODEL), jnp.float32),
        grid_spec=pltpu.PrefetchScalarGridSpec(
            num_scalar_prefetch=0,
            grid=(B,),                                           # one batch element / step
            in_specs=[
                pl.BlockSpec((Ss, 1), lambda b: (b, 0)),         # src ids for batch b
                pl.BlockSpec((St, 1), lambda b: (b, 0)),         # tgt ids for batch b
                pl.BlockSpec((1, 1, Ss), lambda b: (b, 0, 0)),   # src additive bias
                pl.BlockSpec((1, St, St), lambda b: (b, 0, 0)),  # tgt additive bias
                pl.BlockSpec((SLAB_ROWS, PACK_W), lambda b: (0, 0)),  # weight slab (DMA'd once)
            ],
            out_specs=pl.BlockSpec((St, D_MODEL), lambda b: (b, 0)),
        ),
        compiler_params=pltpu.CompilerParams(
            dimension_semantics=("parallel",),                   # v7x: one batch per core
            vmem_limit_bytes=32 * 1024 * 1024,
        ),
    )(src_ids, tgt_ids, src_bias, tgt_bias, slab)
    return out2d.reshape(B, St, D_MODEL)


# ---------------- deterministic parameter init + packing ----------------

def init_params(key):
    names = list(LAYOUT.keys())
    keys = jax.random.split(key, len(names))
    params = {}
    for k, name in zip(keys, names):
        _, r, c = LAYOUT[name]
        if name.endswith("ln_g"):
            params[name] = jnp.ones((r, c), jnp.float32)
        elif (name.endswith("ln_b") or name.endswith("_b") or name.endswith("_bo")
              or name.endswith("_b1") or name.endswith("_b2")):
            params[name] = jnp.zeros((r, c), jnp.float32)
        else:
            params[name] = jax.random.normal(k, (r, c), jnp.float32) * 0.02
    return params


def pack_params(params):
    """Pack all parameters into one lane-dense [SLAB_ROWS, 128] f32 slab (single DMA)."""
    slab = jnp.zeros((SLAB_ROWS, PACK_W), jnp.float32)
    for name, (off, r, c) in LAYOUT.items():
        slab = slab.at[off:off + r, :c].set(params[name])
    return slab


# ---------------- main ----------------

if __name__ == "__main__":
    B, S_SRC, S_TGT = 2, 8, 8

    root = jax.random.PRNGKey(0)
    kp, ks, kt = jax.random.split(root, 3)

    params = init_params(kp)
    slab = pack_params(params)

    src = jax.random.randint(ks, (B, S_SRC), 0, VOCAB_SRC, dtype=jnp.int32)
    tgt = jax.random.randint(kt, (B, S_TGT), 0, VOCAB_TGT, dtype=jnp.int32)

    # src_mask: [B, 1, S_src] (all visible); tgt_mask: [B, S_tgt, S_tgt] causal
    src_mask = jnp.ones((B, 1, S_SRC), jnp.float32)
    tgt_mask = jnp.broadcast_to(
        jnp.tril(jnp.ones((S_TGT, S_TGT), jnp.float32))[None], (B, S_TGT, S_TGT)
    )

    fwd = jax.jit(encoder_decoder_forward)
    out = fwd(slab, src, tgt, src_mask, tgt_mask)
    out = jax.block_until_ready(out)

    assert out.shape == (B, S_TGT, D_MODEL), out.shape
    assert bool(jnp.all(jnp.isfinite(out)))
    print("KERNEL_OK")
</pallas_src>

<mosaic_0001>
module attributes {stable_mosaic.version = 11 : i64} {
  func.func @_encoder_decoder_kernel(%arg0: i32, %arg1: memref<8x1xi32, #tpu.memory_space<vmem>>, %arg2: memref<8x1xi32, #tpu.memory_space<vmem>>, %arg3: memref<1x1x8xf32, #tpu.memory_space<vmem>>, %arg4: memref<1x8x8xf32, #tpu.memory_space<vmem>>, %arg5: memref<1152x128xf32, #tpu.memory_space<vmem>>, %arg6: memref<8x32xf32, #tpu.memory_space<vmem>>) attributes {dimension_semantics = [#tpu.dimension_semantics<parallel>], iteration_bounds = array<i64: 2>, scalar_prefetch = 0 : i64, scratch_operands = 0 : i64, tpu.core_type = #tpu.core_type<tc>, window_params = [{transform_indices = @transform_0, window_bounds = array<i64: 8, 1>}, {transform_indices = @transform_1, window_bounds = array<i64: 8, 1>}, {transform_indices = @transform_2, window_bounds = array<i64: 1, 1, 8>}, {transform_indices = @transform_3, window_bounds = array<i64: 1, 8, 8>}, {pipeline_mode = #tpu.pipeline_mode<synchronous>, transform_indices = @transform_4, window_bounds = array<i64: 1152, 128>}, {transform_indices = @transform_5, window_bounds = array<i64: 8, 32>}]} {
    %c0 = arith.constant 0 : index
    %c0_0 = arith.constant 0 : index
    %c0_1 = arith.constant 0 : index
    %0 = vector.load %arg3[%c0, %c0_0, %c0_1] : memref<1x1x8xf32, #tpu.memory_space<vmem>>, vector<1x1x8xf32>
    %1 = vector.shape_cast %0 : vector<1x1x8xf32> to vector<1x8xf32>
    %c0_2 = arith.constant 0 : index
    %c0_3 = arith.constant 0 : index
    %c0_4 = arith.constant 0 : index
    %2 = vector.load %arg4[%c0_2, %c0_3, %c0_4] : memref<1x8x8xf32, #tpu.memory_space<vmem>>, vector<1x8x8xf32>
    %3 = vector.shape_cast %2 : vector<1x8x8xf32> to vector<8x8xf32>
    %c0_5 = arith.constant 0 : index
    %c0_6 = arith.constant 0 : index
    %4 = vector.load %arg1[%c0_5, %c0_6] : memref<8x1xi32, #tpu.memory_space<vmem>>, vector<8x1xi32>
    %c0_7 = arith.constant 0 : index
    %c0_8 = arith.constant 0 : index
    %5 = vector.load %arg5[%c0_7, %c0_8] : memref<1152x128xf32, #tpu.memory_space<vmem>>, vector<48x32xf32>
    %6 = tpu.iota {dimensions = array<i32: 1>} : vector<8x48xi32>
    %7 = vector.broadcast %4 : vector<8x1xi32> to vector<8x48xi32>
    %8 = arith.cmpi eq, %6, %7 : vector<8x48xi32>
    %9 = arith.extui %8 : vector<8x48xi1> to vector<8x48xi32>
    %10 = arith.sitofp %9 : vector<8x48xi32> to vector<8x48xf32>
    %cst = arith.constant dense<0.000000e+00> : vector<8x32xf32>
    %11 = tpu.matmul %10, %5, %cst {dimension_numbers = #tpu.dot_dimension_numbers<[1], [0], [0], [1], [0, 0, 1, 1], [], []>} : vector<8x48xf32>, vector<48x32xf32>, vector<8x32xf32> -> vector<8x32xf32>
    %cst_9 = arith.constant 5.65685415 : f32
    %12 = vector.broadcast %cst_9 : f32 to vector<8x32xf32>
    %13 = arith.mulf %11, %12 : vector<8x32xf32>
    %c280 = arith.constant 280 : index
    %c0_10 = arith.constant 0 : index
    %14 = vector.load %arg5[%c280, %c0_10] : memref<1152x128xf32, #tpu.memory_space<vmem>>, vector<2x32xf32>
    %c288 = arith.constant 288 : index
    %c0_11 = arith.constant 0 : index
    %15 = vector.load %arg5[%c288, %c0_11] : memref<1152x128xf32, #tpu.memory_space<vmem>>, vector<2x32xf32>
    %16 = vector.extract_strided_slice %14 {offsets = [0, 0], sizes = [1, 32], strides = [1, 1]} : vector<2x32xf32> to vector<1x32xf32>
    %17 = vector.extract_strided_slice %15 {offsets = [0, 0], sizes = [1, 32], strides = [1, 1]} : vector<2x32xf32> to vector<1x32xf32>
    %cst_12 = arith.constant dense<0.000000e+00> : vector<8xf32>
    %18 = vector.multi_reduction <add>, %13, %cst_12 [1] : vector<8x32xf32> to vector<8xf32>
    %19 = vector.shape_cast %18 : vector<8xf32> to vector<8x1xf32>
    %cst_13 = arith.constant 3.200000e+01 : f32
    %20 = vector.broadcast %cst_13 : f32 to vector<8x1xf32>
    %21 = arith.divf %19, %20 : vector<8x1xf32>
    %22 = vector.broadcast %21 : vector<8x1xf32> to vector<8x32xf32>
    %23 = arith.subf %13, %22 : vector<8x32xf32>
    %24 = arith.mulf %23, %23 : vector<8x32xf32>
    %cst_14 = arith.constant dense<0.000000e+00> : vector<8xf32>
    %25 = vector.multi_reduction <add>, %24, %cst_14 [1] : vector<8x32xf32> to vector<8xf32>
    %26 = vector.shape_cast %25 : vector<8xf32> to vector<8x1xf32>
    %cst_15 = arith.constant 0.0322580636 : f32
    %27 = vector.broadcast %cst_15 : f32 to vector<8x1xf32>
    %28 = arith.mulf %26, %27 : vector<8x1xf32>
    %29 = math.sqrt %28 : vector<8x1xf32>
    %30 = vector.broadcast %16 : vector<1x32xf32> to vector<8x32xf32>
    %31 = arith.mulf %30, %23 : vector<8x32xf32>
    %cst_16 = arith.constant 9.99999997E-7 : f32
    %32 = vector.broadcast %cst_16 : f32 to vector<8x1xf32>
    %33 = arith.addf %29, %32 : vector<8x1xf32>
    %34 = vector.broadcast %33 : vector<8x1xf32> to vector<8x32xf32>
    %35 = arith.divf %31, %34 : vector<8x32xf32>
    %36 = vector.broadcast %17 : vector<1x32xf32> to vector<8x32xf32>
    %37 = arith.addf %35, %36 : vector<8x32xf32>
    %c88 = arith.constant 88 : index
    %c0_17 = arith.constant 0 : index
    %38 = vector.load %arg5[%c88, %c0_17] : memref<1152x128xf32, #tpu.memory_space<vmem>>, vector<32x96xf32>
    %c120 = arith.constant 120 : index
    %c0_18 = arith.constant 0 : index
    %39 = vector.load %arg5[%c120, %c0_18] : memref<1152x128xf32, #tpu.memory_space<vmem>>, vector<1x96xf32>
    %c128 = arith.constant 128 : index
    %c0_19 = arith.constant 0 : index
    %40 = vector.load %arg5[%c128, %c0_19] : memref<1152x128xf32, #tpu.memory_space<vmem>>, vector<32x32xf32>
    %c160 = arith.constant 160 : index
    %c0_20 = arith.constant 0 : index
    %41 = vector.load %arg5[%c160, %c0_20] : memref<1152x128xf32, #tpu.memory_space<vmem>>, vector<1x32xf32>
    %cst_21 = arith.constant dense<0.000000e+00> : vector<8x96xf32>
    %42 = tpu.matmul %37, %38, %cst_21 {dimension_numbers = #tpu.dot_dimension_numbers<[1], [0], [0], [1], [0, 0, 1, 1], [], []>} : vector<8x32xf32>, vector<32x96xf32>, vector<8x96xf32> -> vector<8x96xf32>
    %43 = vector.broadcast %39 : vector<1x96xf32> to vector<8x96xf32>
    %44 = arith.addf %42, %43 : vector<8x96xf32>
    %45 = vector.extract_strided_slice %44 {offsets = [0, 0], sizes = [8, 32], strides = [1, 1]} : vector<8x96xf32> to vector<8x32xf32>
    %cst_22 = arith.constant 0.353553385 : f32
    %46 = vector.broadcast %cst_22 : f32 to vector<8x32xf32>
    %47 = arith.mulf %45, %46 : vector<8x32xf32>
    %48 = vector.extract_strided_slice %44 {offsets = [0, 32], sizes = [8, 32], strides = [1, 1]} : vector<8x96xf32> to vector<8x32xf32>
    %49 = vector.extract_strided_slice %44 {offsets = [0, 64], sizes = [8, 32], strides = [1, 1]} : vector<8x96xf32> to vector<8x32xf32>
    %50 = vector.extract_strided_slice %47 {offsets = [0, 0], sizes = [8, 8], strides = [1, 1]} : vector<8x32xf32> to vector<8x8xf32>
    %51 = vector.extract_strided_slice %48 {offsets = [0, 0], sizes = [8, 8], strides = [1, 1]} : vector<8x32xf32> to vector<8x8xf32>
    %52 = vector.extract_strided_slice %49 {offsets = [0, 0], sizes = [8, 8], strides = [1, 1]} : vector<8x32xf32> to vector<8x8xf32>
    %cst_23 = arith.constant dense<0.000000e+00> : vector<8x8xf32>
    %53 = tpu.matmul %50, %51, %cst_23 {dimension_numbers = #tpu.dot_dimension_numbers<[1], [1], [0], [0], [0, 0, 1, 0], [], []>} : vector<8x8xf32>, vector<8x8xf32>, vector<8x8xf32> -> vector<8x8xf32>
    %54 = vector.broadcast %1 : vector<1x8xf32> to vector<8x8xf32>
    %55 = arith.addf %53, %54 : vector<8x8xf32>
    %cst_24 = arith.constant dense<0xFF800000> : vector<8xf32>
    %56 = vector.multi_reduction <maximumf>, %55, %cst_24 [1] : vector<8x8xf32> to vector<8xf32>
    %57 = vector.shape_cast %56 : vector<8xf32> to vector<8x1xf32>
    %58 = vector.broadcast %57 : vector<8x1xf32> to vector<8x8xf32>
    %59 = arith.subf %55, %58 : vector<8x8xf32>
    %60 = math.exp %59 : vector<8x8xf32>
    %cst_25 = arith.constant dense<0.000000e+00> : vector<8xf32>
    %61 = vector.multi_reduction <add>, %60, %cst_25 [1] : vector<8x8xf32> to vector<8xf32>
    %62 = vector.shape_cast %61 : vector<8xf32> to vector<8x1xf32>
    %63 = tpu.reciprocal %62 {approx = true} : vector<8x1xf32> -> vector<8x1xf32>
    %64 = vector.broadcast %63 : vector<8x1xf32> to vector<8x8xf32>
    %65 = arith.mulf %60, %64 : vector<8x8xf32>
    %cst_26 = arith.constant dense<0.000000e+00> : vector<8x8xf32>
    %66 = tpu.matmul %65, %52, %cst_26 {dimension_numbers = #tpu.dot_dimension_numbers<[1], [0], [0], [1], [0, 0, 1, 1], [], []>} : vector<8x8xf32>, vector<8x8xf32>, vector<8x8xf32> -> vector<8x8xf32>
    %67 = vector.extract_strided_slice %40 {offsets = [0, 0], sizes = [8, 32], strides = [1, 1]} : vector<32x32xf32> to vector<8x32xf32>
    %cst_27 = arith.constant dense<0.000000e+00> : vector<8x32xf32>
    %68 = tpu.matmul %66, %67, %cst_27 {dimension_numbers = #tpu.dot_dimension_numbers<[1], [0], [0], [1], [0, 0, 1, 1], [], []>} : vector<8x8xf32>, vector<8x32xf32>, vector<8x32xf32> -> vector<8x32xf32>
    %69 = vector.extract_strided_slice %47 {offsets = [0, 8], sizes = [8, 8], strides = [1, 1]} : vector<8x32xf32> to vector<8x8xf32>
    %70 = vector.extract_strided_slice %48 {offsets = [0, 8], sizes = [8, 8], strides = [1, 1]} : vector<8x32xf32> to vector<8x8xf32>
    %71 = vector.extract_strided_slice %49 {offsets = [0, 8], sizes = [8, 8], strides = [1, 1]} : vector<8x32xf32> to vector<8x8xf32>
    %cst_28 = arith.constant dense<0.000000e+00> : vector<8x8xf32>
    %72 = tpu.matmul %69, %70, %cst_28 {dimension_numbers = #tpu.dot_dimension_numbers<[1], [1], [0], [0], [0, 0, 1, 0], [], []>} : vector<8x8xf32>, vector<8x8xf32>, vector<8x8xf32> -> vector<8x8xf32>
    %73 = vector.broadcast %1 : vector<1x8xf32> to vector<8x8xf32>
    %74 = arith.addf %72, %73 : vector<8x8xf32>
    %cst_29 = arith.constant dense<0xFF800000> : vector<8xf32>
    %75 = vector.multi_reduction <maximumf>, %74, %cst_29 [1] : vector<8x8xf32> to vector<8xf32>
    %76 = vector.shape_cast %75 : vector<8xf32> to vector<8x1xf32>
    %77 = vector.broadcast %76 : vector<8x1xf32> to vector<8x8xf32>
    %78 = arith.subf %74, %77 : vector<8x8xf32>
    %79 = math.exp %78 : vector<8x8xf32>
    %cst_30 = arith.constant dense<0.000000e+00> : vector<8xf32>
    %80 = vector.multi_reduction <add>, %79, %cst_30 [1] : vector<8x8xf32> to vector<8xf32>
    %81 = vector.shape_cast %80 : vector<8xf32> to vector<8x1xf32>
    %82 = tpu.reciprocal %81 {approx = true} : vector<8x1xf32> -> vector<8x1xf32>
    %83 = vector.broadcast %82 : vector<8x1xf32> to vector<8x8xf32>
    %84 = arith.mulf %79, %83 : vector<8x8xf32>
    %cst_31 = arith.constant dense<0.000000e+00> : vector<8x8xf32>
    %85 = tpu.matmul %84, %71, %cst_31 {dimension_numbers = #tpu.dot_dimension_numbers<[1], [0], [0], [1], [0, 0, 1, 1], [], []>} : vector<8x8xf32>, vector<8x8xf32>, vector<8x8xf32> -> vector<8x8xf32>
    %86 = vector.extract_strided_slice %40 {offsets = [8, 0], sizes = [8, 32], strides = [1, 1]} : vector<32x32xf32> to vector<8x32xf32>
    %cst_32 = arith.constant dense<0.000000e+00> : vector<8x32xf32>
    %87 = tpu.matmul %85, %86, %cst_32 {dimension_numbers = #tpu.dot_dimension_numbers<[1], [0], [0], [1], [0, 0, 1, 1], [], []>} : vector<8x8xf32>, vector<8x32xf32>, vector<8x32xf32> -> vector<8x32xf32>
    %88 = arith.addf %68, %87 : vector<8x32xf32>
    %89 = vector.extract_strided_slice %47 {offsets = [0, 16], sizes = [8, 8], strides = [1, 1]} : vector<8x32xf32> to vector<8x8xf32>
    %90 = vector.extract_strided_slice %48 {offsets = [0, 16], sizes = [8, 8], strides = [1, 1]} : vector<8x32xf32> to vector<8x8xf32>
    %91 = vector.extract_strided_slice %49 {offsets = [0, 16], sizes = [8, 8], strides = [1, 1]} : vector<8x32xf32> to vector<8x8xf32>
    %cst_33 = arith.constant dense<0.000000e+00> : vector<8x8xf32>
    %92 = tpu.matmul %89, %90, %cst_33 {dimension_numbers = #tpu.dot_dimension_numbers<[1], [1], [0], [0], [0, 0, 1, 0], [], []>} : vector<8x8xf32>, vector<8x8xf32>, vector<8x8xf32> -> vector<8x8xf32>
    %93 = vector.broadcast %1 : vector<1x8xf32> to vector<8x8xf32>
    %94 = arith.addf %92, %93 : vector<8x8xf32>
    %cst_34 = arith.constant dense<0xFF800000> : vector<8xf32>
    %95 = vector.multi_reduction <maximumf>, %94, %cst_34 [1] : vector<8x8xf32> to vector<8xf32>
    %96 = vector.shape_cast %95 : vector<8xf32> to vector<8x1xf32>
    %97 = vector.broadcast %96 : vector<8x1xf32> to vector<8x8xf32>
    %98 = arith.subf %94, %97 : vector<8x8xf32>
    %99 = math.exp %98 : vector<8x8xf32>
    %cst_35 = arith.constant dense<0.000000e+00> : vector<8xf32>
    %100 = vector.multi_reduction <add>, %99, %cst_35 [1] : vector<8x8xf32> to vector<8xf32>
    %101 = vector.shape_cast %100 : vector<8xf32> to vector<8x1xf32>
    %102 = tpu.reciprocal %101 {approx = true} : vector<8x1xf32> -> vector<8x1xf32>
    %103 = vector.broadcast %102 : vector<8x1xf32> to vector<8x8xf32>
    %104 = arith.mulf %99, %103 : vector<8x8xf32>
    %cst_36 = arith.constant dense<0.000000e+00> : vector<8x8xf32>
    %105 = tpu.matmul %104, %91, %cst_36 {dimension_numbers = #tpu.dot_dimension_numbers<[1], [0], [0], [1], [0, 0, 1, 1], [], []>} : vector<8x8xf32>, vector<8x8xf32>, vector<8x8xf32> -> vector<8x8xf32>
    %106 = vector.extract_strided_slice %40 {offsets = [16, 0], sizes = [8, 32], strides = [1, 1]} : vector<32x32xf32> to vector<8x32xf32>
    %cst_37 = arith.constant dense<0.000000e+00> : vector<8x32xf32>
    %107 = tpu.matmul %105, %106, %cst_37 {dimension_numbers = #tpu.dot_dimension_numbers<[1], [0], [0], [1], [0, 0, 1, 1], [], []>} : vector<8x8xf32>, vector<8x32xf32>, vector<8x32xf32> -> vector<8x32xf32>
    %108 = arith.addf %88, %107 : vector<8x32xf32>
    %109 = vector.extract_strided_slice %47 {offsets = [0, 24], sizes = [8, 8], strides = [1, 1]} : vector<8x32xf32> to vector<8x8xf32>
    %110 = vector.extract_strided_slice %48 {offsets = [0, 24], sizes = [8, 8], strides = [1, 1]} : vector<8x32xf32> to vector<8x8xf32>
    %111 = vector.extract_strided_slice %49 {offsets = [0, 24], sizes = [8, 8], strides = [1, 1]} : vector<8x32xf32> to vector<8x8xf32>
    %cst_38 = arith.constant dense<0.000000e+00> : vector<8x8xf32>
    %112 = tpu.matmul %109, %110, %cst_38 {dimension_numbers = #tpu.dot_dimension_numbers<[1], [1], [0], [0], [0, 0, 1, 0], [], []>} : vector<8x8xf32>, vector<8x8xf32>, vector<8x8xf32> -> vector<8x8xf32>
    %113 = vector.broadcast %1 : vector<1x8xf32> to vector<8x8xf32>
    %114 = arith.addf %112, %113 : vector<8x8xf32>
    %cst_39 = arith.constant dense<0xFF800000> : vector<8xf32>
    %115 = vector.multi_reduction <maximumf>, %114, %cst_39 [1] : vector<8x8xf32> to vector<8xf32>
    %116 = vector.shape_cast %115 : vector<8xf32> to vector<8x1xf32>
    %117 = vector.broadcast %116 : vector<8x1xf32> to vector<8x8xf32>
    %118 = arith.subf %114, %117 : vector<8x8xf32>
    %119 = math.exp %118 : vector<8x8xf32>
    %cst_40 = arith.constant dense<0.000000e+00> : vector<8xf32>
    %120 = vector.multi_reduction <add>, %119, %cst_40 [1] : vector<8x8xf32> to vector<8xf32>
    %121 = vector.shape_cast %120 : vector<8xf32> to vector<8x1xf32>
    %122 = tpu.reciprocal %121 {approx = true} : vector<8x1xf32> -> vector<8x1xf32>
    %123 = vector.broadcast %122 : vector<8x1xf32> to vector<8x8xf32>
    %124 = arith.mulf %119, %123 : vector<8x8xf32>
    %cst_41 = arith.constant dense<0.000000e+00> : vector<8x8xf32>
    %125 = tpu.matmul %124, %111, %cst_41 {dimension_numbers = #tpu.dot_dimension_numbers<[1], [0], [0], [1], [0, 0, 1, 1], [], []>} : vector<8x8xf32>, vector<8x8xf32>, vector<8x8xf32> -> vector<8x8xf32>
    %126 = vector.extract_strided_slice %40 {offsets = [24, 0], sizes = [8, 32], strides = [1, 1]} : vector<32x32xf32> to vector<8x32xf32>
    %cst_42 = arith.constant dense<0.000000e+00> : vector<8x32xf32>
    %127 = tpu.matmul %125, %126, %cst_42 {dimension_numbers = #tpu.dot_dimension_numbers<[1], [0], [0], [1], [0, 0, 1, 1], [], []>} : vector<8x8xf32>, vector<8x32xf32>, vector<8x32xf32> -> vector<8x32xf32>
    %128 = arith.addf %108, %127 : vector<8x32xf32>
    %129 = vector.broadcast %41 : vector<1x32xf32> to vector<8x32xf32>
    %130 = arith.addf %128, %129 : vector<8x32xf32>
    %131 = arith.addf %13, %130 : vector<8x32xf32>
    %132 = vector.extract_strided_slice %14 {offsets = [1, 0], sizes = [1, 32], strides = [1, 1]} : vector<2x32xf32> to vector<1x32xf32>
    %133 = vector.extract_strided_slice %15 {offsets = [1, 0], sizes = [1, 32], strides = [1, 1]} : vector<2x32xf32> to vector<1x32xf32>
    %cst_43 = arith.constant dense<0.000000e+00> : vector<8xf32>
    %134 = vector.multi_reduction <add>, %131, %cst_43 [1] : vector<8x32xf32> to vector<8xf32>
    %135 = vector.shape_cast %134 : vector<8xf32> to vector<8x1xf32>
    %cst_44 = arith.constant 3.200000e+01 : f32
    %136 = vector.broadcast %cst_44 : f32 to vector<8x1xf32>
    %137 = arith.divf %135, %136 : vector<8x1xf32>
    %138 = vector.broadcast %137 : vector<8x1xf32> to vector<8x32xf32>
    %139 = arith.subf %131, %138 : vector<8x32xf32>
    %140 = arith.mulf %139, %139 : vector<8x32xf32>
    %cst_45 = arith.constant dense<0.000000e+00> : vector<8xf32>
    %141 = vector.multi_reduction <add>, %140, %cst_45 [1] : vector<8x32xf32> to vector<8xf32>
    %142 = vector.shape_cast %141 : vector<8xf32> to vector<8x1xf32>
    %cst_46 = arith.constant 0.0322580636 : f32
    %143 = vector.broadcast %cst_46 : f32 to vector<8x1xf32>
    %144 = arith.mulf %142, %143 : vector<8x1xf32>
    %145 = math.sqrt %144 : vector<8x1xf32>
    %146 = vector.broadcast %132 : vector<1x32xf32> to vector<8x32xf32>
    %147 = arith.mulf %146, %139 : vector<8x32xf32>
    %cst_47 = arith.constant 9.99999997E-7 : f32
    %148 = vector.broadcast %cst_47 : f32 to vector<8x1xf32>
    %149 = arith.addf %145, %148 : vector<8x1xf32>
    %150 = vector.broadcast %149 : vector<8x1xf32> to vector<8x32xf32>
    %151 = arith.divf %147, %150 : vector<8x32xf32>
    %152 = vector.broadcast %133 : vector<1x32xf32> to vector<8x32xf32>
    %153 = arith.addf %151, %152 : vector<8x32xf32>
    %c168 = arith.constant 168 : index
    %c0_48 = arith.constant 0 : index
    %154 = vector.load %arg5[%c168, %c0_48] : memref<1152x128xf32, #tpu.memory_space<vmem>>, vector<32x64xf32>
    %c200 = arith.constant 200 : index
    %c0_49 = arith.constant 0 : index
    %155 = vector.load %arg5[%c200, %c0_49] : memref<1152x128xf32, #tpu.memory_space<vmem>>, vector<1x64xf32>
    %c208 = arith.constant 208 : index
    %c0_50 = arith.constant 0 : index
    %156 = vector.load %arg5[%c208, %c0_50] : memref<1152x128xf32, #tpu.memory_space<vmem>>, vector<64x32xf32>
    %c272 = arith.constant 272 : index
    %c0_51 = arith.constant 0 : index
    %157 = vector.load %arg5[%c272, %c0_51] : memref<1152x128xf32, #tpu.memory_space<vmem>>, vector<1x32xf32>
    %cst_52 = arith.constant dense<0.000000e+00> : vector<8x64xf32>
    %158 = tpu.matmul %153, %154, %cst_52 {dimension_numbers = #tpu.dot_dimension_numbers<[1], [0], [0], [1], [0, 0, 1, 1], [], []>} : vector<8x32xf32>, vector<32x64xf32>, vector<8x64xf32> -> vector<8x64xf32>
    %159 = vector.broadcast %155 : vector<1x64xf32> to vector<8x64xf32>
    %160 = arith.addf %158, %159 : vector<8x64xf32>
    %cst_53 = arith.constant 0.000000e+00 : f32
    %161 = vector.broadcast %cst_53 : f32 to vector<8x64xf32>
    %162 = arith.maximumf %160, %161 : vector<8x64xf32>
    %cst_54 = arith.constant dense<0.000000e+00> : vector<8x32xf32>
    %163 = tpu.matmul %162, %156, %cst_54 {dimension_numbers = #tpu.dot_dimension_numbers<[1], [0], [0], [1], [0, 0, 1, 1], [], []>} : vector<8x64xf32>, vector<64x32xf32>, vector<8x32xf32> -> vector<8x32xf32>
    %164 = vector.broadcast %157 : vector<1x32xf32> to vector<8x32xf32>
    %165 = arith.addf %163, %164 : vector<8x32xf32>
    %166 = arith.addf %131, %165 : vector<8x32xf32>
    %c488 = arith.constant 488 : index
    %c0_55 = arith.constant 0 : index
    %167 = vector.load %arg5[%c488, %c0_55] : memref<1152x128xf32, #tpu.memory_space<vmem>>, vector<2x32xf32>
    %c496 = arith.constant 496 : index
    %c0_56 = arith.constant 0 : index
    %168 = vector.load %arg5[%c496, %c0_56] : memref<1152x128xf32, #tpu.memory_space<vmem>>, vector<2x32xf32>
    %169 = vector.extract_strided_slice %167 {offsets = [0, 0], sizes = [1, 32], strides = [1, 1]} : vector<2x32xf32> to vector<1x32xf32>
    %170 = vector.extract_strided_slice %168 {offsets = [0, 0], sizes = [1, 32], strides = [1, 1]} : vector<2x32xf32> to vector<1x32xf32>
    %cst_57 = arith.constant dense<0.000000e+00> : vector<8xf32>
    %171 = vector.multi_reduction <add>, %166, %cst_57 [1] : vector<8x32xf32> to vector<8xf32>
    %172 = vector.shape_cast %171 : vector<8xf32> to vector<8x1xf32>
    %cst_58 = arith.constant 3.200000e+01 : f32
    %173 = vector.broadcast %cst_58 : f32 to vector<8x1xf32>
    %174 = arith.divf %172, %173 : vector<8x1xf32>
    %175 = vector.broadcast %174 : vector<8x1xf32> to vector<8x32xf32>
    %176 = arith.subf %166, %175 : vector<8x32xf32>
    %177 = arith.mulf %176, %176 : vector<8x32xf32>
    %cst_59 = arith.constant dense<0.000000e+00> : vector<8xf32>
    %178 = vector.multi_reduction <add>, %177, %cst_59 [1] : vector<8x32xf32> to vector<8xf32>
    %179 = vector.shape_cast %178 : vector<8xf32> to vector<8x1xf32>
    %cst_60 = arith.constant 0.0322580636 : f32
    %180 = vector.broadcast %cst_60 : f32 to vector<8x1xf32>
    %181 = arith.mulf %179, %180 : vector<8x1xf32>
    %182 = math.sqrt %181 : vector<8x1xf32>
    %183 = vector.broadcast %169 : vector<1x32xf32> to vector<8x32xf32>
    %184 = arith.mulf %183, %176 : vector<8x32xf32>
    %cst_61 = arith.constant 9.99999997E-7 : f32
    %185 = vector.broadcast %cst_61 : f32 to vector<8x1xf32>
    %186 = arith.addf %182, %185 : vector<8x1xf32>
    %187 = vector.broadcast %186 : vector<8x1xf32> to vector<8x32xf32>
    %188 = arith.divf %184, %187 : vector<8x32xf32>
    %189 = vector.broadcast %170 : vector<1x32xf32> to vector<8x32xf32>
    %190 = arith.addf %188, %189 : vector<8x32xf32>
    %c296 = arith.constant 296 : index
    %c0_62 = arith.constant 0 : index
    %191 = vector.load %arg5[%c296, %c0_62] : memref<1152x128xf32, #tpu.memory_space<vmem>>, vector<32x96xf32>
    %c328 = arith.constant 328 : index
    %c0_63 = arith.constant 0 : index
    %192 = vector.load %arg5[%c328, %c0_63] : memref<1152x128xf32, #tpu.memory_space<vmem>>, vector<1x96xf32>
    %c336 = arith.constant 336 : index
    %c0_64 = arith.constant 0 : index
    %193 = vector.load %arg5[%c336, %c0_64] : memref<1152x128xf32, #tpu.memory_space<vmem>>, vector<32x32xf32>
    %c368 = arith.constant 368 : index
    %c0_65 = arith.constant 0 : index
    %194 = vector.load %arg5[%c368, %c0_65] : memref<1152x128xf32, #tpu.memory_space<vmem>>, vector<1x32xf32>
    %cst_66 = arith.constant dense<0.000000e+00> : vector<8x96xf32>
    %195 = tpu.matmul %190, %191, %cst_66 {dimension_numbers = #tpu.dot_dimension_numbers<[1], [0], [0], [1], [0, 0, 1, 1], [], []>} : vector<8x32xf32>, vector<32x96xf32>, vector<8x96xf32> -> vector<8x96xf32>
    %196 = vector.broadcast %192 : vector<1x96xf32> to vector<8x96xf32>
    %197 = arith.addf %195, %196 : vector<8x96xf32>
    %198 = vector.extract_strided_slice %197 {offsets = [0, 0], sizes = [8, 32], strides = [1, 1]} : vector<8x96xf32> to vector<8x32xf32>
    %cst_67 = arith.constant 0.353553385 : f32
    %199 = vector.broadcast %cst_67 : f32 to vector<8x32xf32>
    %200 = arith.mulf %198, %199 : vector<8x32xf32>
    %201 = vector.extract_strided_slice %197 {offsets = [0, 32], sizes = [8, 32], strides = [1, 1]} : vector<8x96xf32> to vector<8x32xf32>
    %202 = vector.extract_strided_slice %197 {offsets = [0, 64], sizes = [8, 32], strides = [1, 1]} : vector<8x96xf32> to vector<8x32xf32>
    %203 = vector.extract_strided_slice %200 {offsets = [0, 0], sizes = [8, 8], strides = [1, 1]} : vector<8x32xf32> to vector<8x8xf32>
    %204 = vector.extract_strided_slice %201 {offsets = [0, 0], sizes = [8, 8], strides = [1, 1]} : vector<8x32xf32> to vector<8x8xf32>
    %205 = vector.extract_strided_slice %202 {offsets = [0, 0], sizes = [8, 8], strides = [1, 1]} : vector<8x32xf32> to vector<8x8xf32>
    %cst_68 = arith.constant dense<0.000000e+00> : vector<8x8xf32>
    %206 = tpu.matmul %203, %204, %cst_68 {dimension_numbers = #tpu.dot_dimension_numbers<[1], [1], [0], [0], [0, 0, 1, 0], [], []>} : vector<8x8xf32>, vector<8x8xf32>, vector<8x8xf32> -> vector<8x8xf32>
    %207 = vector.broadcast %1 : vector<1x8xf32> to vector<8x8xf32>
    %208 = arith.addf %206, %207 : vector<8x8xf32>
    %cst_69 = arith.constant dense<0xFF800000> : vector<8xf32>
    %209 = vector.multi_reduction <maximumf>, %208, %cst_69 [1] : vector<8x8xf32> to vector<8xf32>
    %210 = vector.shape_cast %209 : vector<8xf32> to vector<8x1xf32>
    %211 = vector.broadcast %210 : vector<8x1xf32> to vector<8x8xf32>
    %212 = arith.subf %208, %211 : vector<8x8xf32>
    %213 = math.exp %212 : vector<8x8xf32>
    %cst_70 = arith.constant dense<0.000000e+00> : vector<8xf32>
    %214 = vector.multi_reduction <add>, %213, %cst_70 [1] : vector<8x8xf32> to vector<8xf32>
    %215 = vector.shape_cast %214 : vector<8xf32> to vector<8x1xf32>
    %216 = tpu.reciprocal %215 {approx = true} : vector<8x1xf32> -> vector<8x1xf32>
    %217 = vector.broadcast %216 : vector<8x1xf32> to vector<8x8xf32>
    %218 = arith.mulf %213, %217 : vector<8x8xf32>
    %cst_71 = arith.constant dense<0.000000e+00> : vector<8x8xf32>
    %219 = tpu.matmul %218, %205, %cst_71 {dimension_numbers = #tpu.dot_dimension_numbers<[1], [0], [0], [1], [0, 0, 1, 1], [], []>} : vector<8x8xf32>, vector<8x8xf32>, vector<8x8xf32> -> vector<8x8xf32>
    %220 = vector.extract_strided_slice %193 {offsets = [0, 0], sizes = [8, 32], strides = [1, 1]} : vector<32x32xf32> to vector<8x32xf32>
    %cst_72 = arith.constant dense<0.000000e+00> : vector<8x32xf32>
    %221 = tpu.matmul %219, %220, %cst_72 {dimension_numbers = #tpu.dot_dimension_numbers<[1], [0], [0], [1], [0, 0, 1, 1], [], []>} : vector<8x8xf32>, vector<8x32xf32>, vector<8x32xf32> -> vector<8x32xf32>
    %222 = vector.extract_strided_slice %200 {offsets = [0, 8], sizes = [8, 8], strides = [1, 1]} : vector<8x32xf32> to vector<8x8xf32>
    %223 = vector.extract_strided_slice %201 {offsets = [0, 8], sizes = [8, 8], strides = [1, 1]} : vector<8x32xf32> to vector<8x8xf32>
    %224 = vector.extract_strided_slice %202 {offsets = [0, 8], sizes = [8, 8], strides = [1, 1]} : vector<8x32xf32> to vector<8x8xf32>
    %cst_73 = arith.constant dense<0.000000e+00> : vector<8x8xf32>
    %225 = tpu.matmul %222, %223, %cst_73 {dimension_numbers = #tpu.dot_dimension_numbers<[1], [1], [0], [0], [0, 0, 1, 0], [], []>} : vector<8x8xf32>, vector<8x8xf32>, vector<8x8xf32> -> vector<8x8xf32>
    %226 = vector.broadcast %1 : vector<1x8xf32> to vector<8x8xf32>
    %227 = arith.addf %225, %226 : vector<8x8xf32>
    %cst_74 = arith.constant dense<0xFF800000> : vector<8xf32>
    %228 = vector.multi_reduction <maximumf>, %227, %cst_74 [1] : vector<8x8xf32> to vector<8xf32>
    %229 = vector.shape_cast %228 : vector<8xf32> to vector<8x1xf32>
    %230 = vector.broadcast %229 : vector<8x1xf32> to vector<8x8xf32>
    %231 = arith.subf %227, %230 : vector<8x8xf32>
    %232 = math.exp %231 : vector<8x8xf32>
    %cst_75 = arith.constant dense<0.000000e+00> : vector<8xf32>
    %233 = vector.multi_reduction <add>, %232, %cst_75 [1] : vector<8x8xf32> to vector<8xf32>
    %234 = vector.shape_cast %233 : vector<8xf32> to vector<8x1xf32>
    %235 = tpu.reciprocal %234 {approx = true} : vector<8x1xf32> -> vector<8x1xf32>
    %236 = vector.broadcast %235 : vector<8x1xf32> to vector<8x8xf32>
    %237 = arith.mulf %232, %236 : vector<8x8xf32>
    %cst_76 = arith.constant dense<0.000000e+00> : vector<8x8xf32>
    %238 = tpu.matmul %237, %224, %cst_76 {dimension_numbers = #tpu.dot_dimension_numbers<[1], [0], [0], [1], [0, 0, 1, 1], [], []>} : vector<8x8xf32>, vector<8x8xf32>, vector<8x8xf32> -> vector<8x8xf32>
    %239 = vector.extract_strided_slice %193 {offsets = [8, 0], sizes = [8, 32], strides = [1, 1]} : vector<32x32xf32> to vector<8x32xf32>
    %cst_77 = arith.constant dense<0.000000e+00> : vector<8x32xf32>
    %240 = tpu.matmul %238, %239, %cst_77 {dimension_numbers = #tpu.dot_dimension_numbers<[1], [0], [0], [1], [0, 0, 1, 1], [], []>} : vector<8x8xf32>, vector<8x32xf32>, vector<8x32xf32> -> vector<8x32xf32>
    %241 = arith.addf %221, %240 : vector<8x32xf32>
    %242 = vector.extract_strided_slice %200 {offsets = [0, 16], sizes = [8, 8], strides = [1, 1]} : vector<8x32xf32> to vector<8x8xf32>
    %243 = vector.extract_strided_slice %201 {offsets = [0, 16], sizes = [8, 8], strides = [1, 1]} : vector<8x32xf32> to vector<8x8xf32>
    %244 = vector.extract_strided_slice %202 {offsets = [0, 16], sizes = [8, 8], strides = [1, 1]} : vector<8x32xf32> to vector<8x8xf32>
    %cst_78 = arith.constant dense<0.000000e+00> : vector<8x8xf32>
    %245 = tpu.matmul %242, %243, %cst_78 {dimension_numbers = #tpu.dot_dimension_numbers<[1], [1], [0], [0], [0, 0, 1, 0], [], []>} : vector<8x8xf32>, vector<8x8xf32>, vector<8x8xf32> -> vector<8x8xf32>
    %246 = vector.broadcast %1 : vector<1x8xf32> to vector<8x8xf32>
    %247 = arith.addf %245, %246 : vector<8x8xf32>
    %cst_79 = arith.constant dense<0xFF800000> : vector<8xf32>
    %248 = vector.multi_reduction <maximumf>, %247, %cst_79 [1] : vector<8x8xf32> to vector<8xf32>
    %249 = vector.shape_cast %248 : vector<8xf32> to vector<8x1xf32>
    %250 = vector.broadcast %249 : vector<8x1xf32> to vector<8x8xf32>
    %251 = arith.subf %247, %250 : vector<8x8xf32>
    %252 = math.exp %251 : vector<8x8xf32>
    %cst_80 = arith.constant dense<0.000000e+00> : vector<8xf32>
    %253 = vector.multi_reduction <add>, %252, %cst_80 [1] : vector<8x8xf32> to vector<8xf32>
    %254 = vector.shape_cast %253 : vector<8xf32> to vector<8x1xf32>
    %255 = tpu.reciprocal %254 {approx = true} : vector<8x1xf32> -> vector<8x1xf32>
    %256 = vector.broadcast %255 : vector<8x1xf32> to vector<8x8xf32>
    %257 = arith.mulf %252, %256 : vector<8x8xf32>
    %cst_81 = arith.constant dense<0.000000e+00> : vector<8x8xf32>
    %258 = tpu.matmul %257, %244, %cst_81 {dimension_numbers = #tpu.dot_dimension_numbers<[1], [0], [0], [1], [0, 0, 1, 1], [], []>} : vector<8x8xf32>, vector<8x8xf32>, vector<8x8xf32> -> vector<8x8xf32>
    %259 = vector.extract_strided_slice %193 {offsets = [16, 0], sizes = [8, 32], strides = [1, 1]} : vector<32x32xf32> to vector<8x32xf32>
    %cst_82 = arith.constant dense<0.000000e+00> : vector<8x32xf32>
    %260 = tpu.matmul %258, %259, %cst_82 {dimension_numbers = #tpu.dot_dimension_numbers<[1], [0], [0], [1], [0, 0, 1, 1], [], []>} : vector<8x8xf32>, vector<8x32xf32>, vector<8x32xf32> -> vector<8x32xf32>
    %261 = arith.addf %241, %260 : vector<8x32xf32>
    %262 = vector.extract_strided_slice %200 {offsets = [0, 24], sizes = [8, 8], strides = [1, 1]} : vector<8x32xf32> to vector<8x8xf32>
    %263 = vector.extract_strided_slice %201 {offsets = [0, 24], sizes = [8, 8], strides = [1, 1]} : vector<8x32xf32> to vector<8x8xf32>
    %264 = vector.extract_strided_slice %202 {offsets = [0, 24], sizes = [8, 8], strides = [1, 1]} : vector<8x32xf32> to vector<8x8xf32>
    %cst_83 = arith.constant dense<0.000000e+00> : vector<8x8xf32>
    %265 = tpu.matmul %262, %263, %cst_83 {dimension_numbers = #tpu.dot_dimension_numbers<[1], [1], [0], [0], [0, 0, 1, 0], [], []>} : vector<8x8xf32>, vector<8x8xf32>, vector<8x8xf32> -> vector<8x8xf32>
    %266 = vector.broadcast %1 : vector<1x8xf32> to vector<8x8xf32>
    %267 = arith.addf %265, %266 : vector<8x8xf32>
    %cst_84 = arith.constant dense<0xFF800000> : vector<8xf32>
    %268 = vector.multi_reduction <maximumf>, %267, %cst_84 [1] : vector<8x8xf32> to vector<8xf32>
    %269 = vector.shape_cast %268 : vector<8xf32> to vector<8x1xf32>
    %270 = vector.broadcast %269 : vector<8x1xf32> to vector<8x8xf32>
    %271 = arith.subf %267, %270 : vector<8x8xf32>
    %272 = math.exp %271 : vector<8x8xf32>
    %cst_85 = arith.constant dense<0.000000e+00> : vector<8xf32>
    %273 = vector.multi_reduction <add>, %272, %cst_85 [1] : vector<8x8xf32> to vector<8xf32>
    %274 = vector.shape_cast %273 : vector<8xf32> to vector<8x1xf32>
    %275 = tpu.reciprocal %274 {approx = true} : vector<8x1xf32> -> vector<8x1xf32>
    %276 = vector.broadcast %275 : vector<8x1xf32> to vector<8x8xf32>
    %277 = arith.mulf %272, %276 : vector<8x8xf32>
    %cst_86 = arith.constant dense<0.000000e+00> : vector<8x8xf32>
    %278 = tpu.matmul %277, %264, %cst_86 {dimension_numbers = #tpu.dot_dimension_numbers<[1], [0], [0], [1], [0, 0, 1, 1], [], []>} : vector<8x8xf32>, vector<8x8xf32>, vector<8x8xf32> -> vector<8x8xf32>
    %279 = vector.extract_strided_slice %193 {offsets = [24, 0], sizes = [8, 32], strides = [1, 1]} : vector<32x32xf32> to vector<8x32xf32>
    %cst_87 = arith.constant dense<0.000000e+00> : vector<8x32xf32>
    %280 = tpu.matmul %278, %279, %cst_87 {dimension_numbers = #tpu.dot_dimension_numbers<[1], [0], [0], [1], [0, 0, 1, 1], [], []>} : vector<8x8xf32>, vector<8x32xf32>, vector<8x32xf32> -> vector<8x32xf32>
    %281 = arith.addf %261, %280 : vector<8x32xf32>
    %282 = vector.broadcast %194 : vector<1x32xf32> to vector<8x32xf32>
    %283 = arith.addf %281, %282 : vector<8x32xf32>
    %284 = arith.addf %166, %283 : vector<8x32xf32>
    %285 = vector.extract_strided_slice %167 {offsets = [1, 0], sizes = [1, 32], strides = [1, 1]} : vector<2x32xf32> to vector<1x32xf32>
    %286 = vector.extract_strided_slice %168 {offsets = [1, 0], sizes = [1, 32], strides = [1, 1]} : vector<2x32xf32> to vector<1x32xf32>
    %cst_88 = arith.constant dense<0.000000e+00> : vector<8xf32>
    %287 = vector.multi_reduction <add>, %284, %cst_88 [1] : vector<8x32xf32> to vector<8xf32>
    %288 = vector.shape_cast %287 : vector<8xf32> to vector<8x1xf32>
    %cst_89 = arith.constant 3.200000e+01 : f32
    %289 = vector.broadcast %cst_89 : f32 to vector<8x1xf32>
    %290 = arith.divf %288, %289 : vector<8x1xf32>
    %291 = vector.broadcast %290 : vector<8x1xf32> to vector<8x32xf32>
    %292 = arith.subf %284, %291 : vector<8x32xf32>
    %293 = arith.mulf %292, %292 : vector<8x32xf32>
    %cst_90 = arith.constant dense<0.000000e+00> : vector<8xf32>
    %294 = vector.multi_reduction <add>, %293, %cst_90 [1] : vector<8x32xf32> to vector<8xf32>
    %295 = vector.shape_cast %294 : vector<8xf32> to vector<8x1xf32>
    %cst_91 = arith.constant 0.0322580636 : f32
    %296 = vector.broadcast %cst_91 : f32 to vector<8x1xf32>
    %297 = arith.mulf %295, %296 : vector<8x1xf32>
    %298 = math.sqrt %297 : vector<8x1xf32>
    %299 = vector.broadcast %285 : vector<1x32xf32> to vector<8x32xf32>
    %300 = arith.mulf %299, %292 : vector<8x32xf32>
    %cst_92 = arith.constant 9.99999997E-7 : f32
    %301 = vector.broadcast %cst_92 : f32 to vector<8x1xf32>
    %302 = arith.addf %298, %301 : vector<8x1xf32>
    %303 = vector.broadcast %302 : vector<8x1xf32> to vector<8x32xf32>
    %304 = arith.divf %300, %303 : vector<8x32xf32>
    %305 = vector.broadcast %286 : vector<1x32xf32> to vector<8x32xf32>
    %306 = arith.addf %304, %305 : vector<8x32xf32>
    %c376 = arith.constant 376 : index
    %c0_93 = arith.constant 0 : index
    %307 = vector.load %arg5[%c376, %c0_93] : memref<1152x128xf32, #tpu.memory_space<vmem>>, vector<32x64xf32>
    %c408 = arith.constant 408 : index
    %c0_94 = arith.constant 0 : index
    %308 = vector.load %arg5[%c408, %c0_94] : memref<1152x128xf32, #tpu.memory_space<vmem>>, vector<1x64xf32>
    %c416 = arith.constant 416 : index
    %c0_95 = arith.constant 0 : index
    %309 = vector.load %arg5[%c416, %c0_95] : memref<1152x128xf32, #tpu.memory_space<vmem>>, vector<64x32xf32>
    %c480 = arith.constant 480 : index
    %c0_96 = arith.constant 0 : index
    %310 = vector.load %arg5[%c480, %c0_96] : memref<1152x128xf32, #tpu.memory_space<vmem>>, vector<1x32xf32>
    %cst_97 = arith.constant dense<0.000000e+00> : vector<8x64xf32>
    %311 = tpu.matmul %306, %307, %cst_97 {dimension_numbers = #tpu.dot_dimension_numbers<[1], [0], [0], [1], [0, 0, 1, 1], [], []>} : vector<8x32xf32>, vector<32x64xf32>, vector<8x64xf32> -> vector<8x64xf32>
    %312 = vector.broadcast %308 : vector<1x64xf32> to vector<8x64xf32>
    %313 = arith.addf %311, %312 : vector<8x64xf32>
    %cst_98 = arith.constant 0.000000e+00 : f32
    %314 = vector.broadcast %cst_98 : f32 to vector<8x64xf32>
    %315 = arith.maximumf %313, %314 : vector<8x64xf32>
    %cst_99 = arith.constant dense<0.000000e+00> : vector<8x32xf32>
    %316 = tpu.matmul %315, %309, %cst_99 {dimension_numbers = #tpu.dot_dimension_numbers<[1], [0], [0], [1], [0, 0, 1, 1], [], []>} : vector<8x64xf32>, vector<64x32xf32>, vector<8x32xf32> -> vector<8x32xf32>
    %317 = vector.broadcast %310 : vector<1x32xf32> to vector<8x32xf32>
    %318 = arith.addf %316, %317 : vector<8x32xf32>
    %319 = arith.addf %284, %318 : vector<8x32xf32>
    %c504 = arith.constant 504 : index
    %c0_100 = arith.constant 0 : index
    %320 = vector.load %arg5[%c504, %c0_100] : memref<1152x128xf32, #tpu.memory_space<vmem>>, vector<1x32xf32>
    %c512 = arith.constant 512 : index
    %c0_101 = arith.constant 0 : index
    %321 = vector.load %arg5[%c512, %c0_101] : memref<1152x128xf32, #tpu.memory_space<vmem>>, vector<1x32xf32>
    %cst_102 = arith.constant dense<0.000000e+00> : vector<8xf32>
    %322 = vector.multi_reduction <add>, %319, %cst_102 [1] : vector<8x32xf32> to vector<8xf32>
    %323 = vector.shape_cast %322 : vector<8xf32> to vector<8x1xf32>
    %cst_103 = arith.constant 3.200000e+01 : f32
    %324 = vector.broadcast %cst_103 : f32 to vector<8x1xf32>
    %325 = arith.divf %323, %324 : vector<8x1xf32>
    %326 = vector.broadcast %325 : vector<8x1xf32> to vector<8x32xf32>
    %327 = arith.subf %319, %326 : vector<8x32xf32>
    %328 = arith.mulf %327, %327 : vector<8x32xf32>
    %cst_104 = arith.constant dense<0.000000e+00> : vector<8xf32>
    %329 = vector.multi_reduction <add>, %328, %cst_104 [1] : vector<8x32xf32> to vector<8xf32>
    %330 = vector.shape_cast %329 : vector<8xf32> to vector<8x1xf32>
    %cst_105 = arith.constant 0.0322580636 : f32
    %331 = vector.broadcast %cst_105 : f32 to vector<8x1xf32>
    %332 = arith.mulf %330, %331 : vector<8x1xf32>
    %333 = math.sqrt %332 : vector<8x1xf32>
    %334 = vector.broadcast %320 : vector<1x32xf32> to vector<8x32xf32>
    %335 = arith.mulf %334, %327 : vector<8x32xf32>
    %cst_106 = arith.constant 9.99999997E-7 : f32
    %336 = vector.broadcast %cst_106 : f32 to vector<8x1xf32>
    %337 = arith.addf %333, %336 : vector<8x1xf32>
    %338 = vector.broadcast %337 : vector<8x1xf32> to vector<8x32xf32>
    %339 = arith.divf %335, %338 : vector<8x32xf32>
    %340 = vector.broadcast %321 : vector<1x32xf32> to vector<8x32xf32>
    %341 = arith.addf %339, %340 : vector<8x32xf32>
    %c520 = arith.constant 520 : index
    %c0_107 = arith.constant 0 : index
    %342 = vector.load %arg5[%c520, %c0_107] : memref<1152x128xf32, #tpu.memory_space<vmem>>, vector<32x128xf32>
    %cst_108 = arith.constant dense<0.000000e+00> : vector<8x128xf32>
    %343 = tpu.matmul %341, %342, %cst_108 {dimension_numbers = #tpu.dot_dimension_numbers<[1], [0], [0], [1], [0, 0, 1, 1], [], []>} : vector<8x32xf32>, vector<32x128xf32>, vector<8x128xf32> -> vector<8x128xf32>
    %c552 = arith.constant 552 : index
    %c0_109 = arith.constant 0 : index
    %344 = vector.load %arg5[%c552, %c0_109] : memref<1152x128xf32, #tpu.memory_space<vmem>>, vector<1x128xf32>
    %345 = vector.broadcast %344 : vector<1x128xf32> to vector<8x128xf32>
    %346 = arith.addf %343, %345 : vector<8x128xf32>
    %c0_110 = arith.constant 0 : index
    %c0_111 = arith.constant 0 : index
    %347 = vector.load %arg2[%c0_110, %c0_111] : memref<8x1xi32, #tpu.memory_space<vmem>>, vector<8x1xi32>
    %c48 = arith.constant 48 : index
    %c0_112 = arith.constant 0 : index
    %348 = vector.load %arg5[%c48, %c0_112] : memref<1152x128xf32, #tpu.memory_space<vmem>>, vector<40x32xf32>
    %349 = tpu.iota {dimensions = array<i32: 1>} : vector<8x40xi32>
    %350 = vector.broadcast %347 : vector<8x1xi32> to vector<8x40xi32>
    %351 = arith.cmpi eq, %349, %350 : vector<8x40xi32>
    %352 = arith.extui %351 : vector<8x40xi1> to vector<8x40xi32>
    %353 = arith.sitofp %352 : vector<8x40xi32> to vector<8x40xf32>
    %cst_113 = arith.constant dense<0.000000e+00> : vector<8x32xf32>
    %354 = tpu.matmul %353, %348, %cst_113 {dimension_numbers = #tpu.dot_dimension_numbers<[1], [0], [0], [1], [0, 0, 1, 1], [], []>} : vector<8x40xf32>, vector<40x32xf32>, vector<8x32xf32> -> vector<8x32xf32>
    %cst_114 = arith.constant 5.65685415 : f32
    %355 = vector.broadcast %cst_114 : f32 to vector<8x32xf32>
    %356 = arith.mulf %354, %355 : vector<8x32xf32>
    %c832 = arith.constant 832 : index
    %c0_115 = arith.constant 0 : index
    %357 = vector.load %arg5[%c832, %c0_115] : memref<1152x128xf32, #tpu.memory_space<vmem>>, vector<3x32xf32>
    %c840 = arith.constant 840 : index
    %c0_116 = arith.constant 0 : index
    %358 = vector.load %arg5[%c840, %c0_116] : memref<1152x128xf32, #tpu.memory_space<vmem>>, vector<3x32xf32>
    %359 = vector.extract_strided_slice %357 {offsets = [0, 0], sizes = [1, 32], strides = [1, 1]} : vector<3x32xf32> to vector<1x32xf32>
    %360 = vector.extract_strided_slice %358 {offsets = [0, 0], sizes = [1, 32], strides = [1, 1]} : vector<3x32xf32> to vector<1x32xf32>
    %cst_117 = arith.constant dense<0.000000e+00> : vector<8xf32>
    %361 = vector.multi_reduction <add>, %356, %cst_117 [1] : vector<8x32xf32> to vector<8xf32>
    %362 = vector.shape_cast %361 : vector<8xf32> to vector<8x1xf32>
    %cst_118 = arith.constant 3.200000e+01 : f32
    %363 = vector.broadcast %cst_118 : f32 to vector<8x1xf32>
    %364 = arith.divf %362, %363 : vector<8x1xf32>
    %365 = vector.broadcast %364 : vector<8x1xf32> to vector<8x32xf32>
    %366 = arith.subf %356, %365 : vector<8x32xf32>
    %367 = arith.mulf %366, %366 : vector<8x32xf32>
    %cst_119 = arith.constant dense<0.000000e+00> : vector<8xf32>
    %368 = vector.multi_reduction <add>, %367, %cst_119 [1] : vector<8x32xf32> to vector<8xf32>
    %369 = vector.shape_cast %368 : vector<8xf32> to vector<8x1xf32>
    %cst_120 = arith.constant 0.0322580636 : f32
    %370 = vector.broadcast %cst_120 : f32 to vector<8x1xf32>
    %371 = arith.mulf %369, %370 : vector<8x1xf32>
    %372 = math.sqrt %371 : vector<8x1xf32>
    %373 = vector.broadcast %359 : vector<1x32xf32> to vector<8x32xf32>
    %374 = arith.mulf %373, %366 : vector<8x32xf32>
    %cst_121 = arith.constant 9.99999997E-7 : f32
    %375 = vector.broadcast %cst_121 : f32 to vector<8x1xf32>
    %376 = arith.addf %372, %375 : vector<8x1xf32>
    %377 = vector.broadcast %376 : vector<8x1xf32> to vector<8x32xf32>
    %378 = arith.divf %374, %377 : vector<8x32xf32>
    %379 = vector.broadcast %360 : vector<1x32xf32> to vector<8x32xf32>
    %380 = arith.addf %378, %379 : vector<8x32xf32>
    %c560 = arith.constant 560 : index
    %c0_122 = arith.constant 0 : index
    %381 = vector.load %arg5[%c560, %c0_122] : memref<1152x128xf32, #tpu.memory_space<vmem>>, vector<32x96xf32>
    %c592 = arith.constant 592 : index
    %c0_123 = arith.constant 0 : index
    %382 = vector.load %arg5[%c592, %c0_123] : memref<1152x128xf32, #tpu.memory_space<vmem>>, vector<1x96xf32>
    %c600 = arith.constant 600 : index
    %c0_124 = arith.constant 0 : index
    %383 = vector.load %arg5[%c600, %c0_124] : memref<1152x128xf32, #tpu.memory_space<vmem>>, vector<32x32xf32>
    %c632 = arith.constant 632 : index
    %c0_125 = arith.constant 0 : index
    %384 = vector.load %arg5[%c632, %c0_125] : memref<1152x128xf32, #tpu.memory_space<vmem>>, vector<1x32xf32>
    %cst_126 = arith.constant dense<0.000000e+00> : vector<8x96xf32>
    %385 = tpu.matmul %380, %381, %cst_126 {dimension_numbers = #tpu.dot_dimension_numbers<[1], [0], [0], [1], [0, 0, 1, 1], [], []>} : vector<8x32xf32>, vector<32x96xf32>, vector<8x96xf32> -> vector<8x96xf32>
    %386 = vector.broadcast %382 : vector<1x96xf32> to vector<8x96xf32>
    %387 = arith.addf %385, %386 : vector<8x96xf32>
    %388 = vector.extract_strided_slice %387 {offsets = [0, 0], sizes = [8, 32], strides = [1, 1]} : vector<8x96xf32> to vector<8x32xf32>
    %cst_127 = arith.constant 0.353553385 : f32
    %389 = vector.broadcast %cst_127 : f32 to vector<8x32xf32>
    %390 = arith.mulf %388, %389 : vector<8x32xf32>
    %391 = vector.extract_strided_slice %387 {offsets = [0, 32], sizes = [8, 32], strides = [1, 1]} : vector<8x96xf32> to vector<8x32xf32>
    %392 = vector.extract_strided_slice %387 {offsets = [0, 64], sizes = [8, 32], strides = [1, 1]} : vector<8x96xf32> to vector<8x32xf32>
    %393 = vector.extract_strided_slice %390 {offsets = [0, 0], sizes = [8, 8], strides = [1, 1]} : vector<8x32xf32> to vector<8x8xf32>
    %394 = vector.extract_strided_slice %391 {offsets = [0, 0], sizes = [8, 8], strides = [1, 1]} : vector<8x32xf32> to vector<8x8xf32>
    %395 = vector.extract_strided_slice %392 {offsets = [0, 0], sizes = [8, 8], strides = [1, 1]} : vector<8x32xf32> to vector<8x8xf32>
    %cst_128 = arith.constant dense<0.000000e+00> : vector<8x8xf32>
    %396 = tpu.matmul %393, %394, %cst_128 {dimension_numbers = #tpu.dot_dimension_numbers<[1], [1], [0], [0], [0, 0, 1, 0], [], []>} : vector<8x8xf32>, vector<8x8xf32>, vector<8x8xf32> -> vector<8x8xf32>
    %397 = arith.addf %396, %3 : vector<8x8xf32>
    %cst_129 = arith.constant dense<0xFF800000> : vector<8xf32>
    %398 = vector.multi_reduction <maximumf>, %397, %cst_129 [1] : vector<8x8xf32> to vector<8xf32>
    %399 = vector.shape_cast %398 : vector<8xf32> to vector<8x1xf32>
    %400 = vector.broadcast %399 : vector<8x1xf32> to vector<8x8xf32>
    %401 = arith.subf %397, %400 : vector<8x8xf32>
    %402 = math.exp %401 : vector<8x8xf32>
    %cst_130 = arith.constant dense<0.000000e+00> : vector<8xf32>
    %403 = vector.multi_reduction <add>, %402, %cst_130 [1] : vector<8x8xf32> to vector<8xf32>
    %404 = vector.shape_cast %403 : vector<8xf32> to vector<8x1xf32>
    %405 = tpu.reciprocal %404 {approx = true} : vector<8x1xf32> -> vector<8x1xf32>
    %406 = vector.broadcast %405 : vector<8x1xf32> to vector<8x8xf32>
    %407 = arith.mulf %402, %406 : vector<8x8xf32>
    %cst_131 = arith.constant dense<0.000000e+00> : vector<8x8xf32>
    %408 = tpu.matmul %407, %395, %cst_131 {dimension_numbers = #tpu.dot_dimension_numbers<[1], [0], [0], [1], [0, 0, 1, 1], [], []>} : vector<8x8xf32>, vector<8x8xf32>, vector<8x8xf32> -> vector<8x8xf32>
    %409 = vector.extract_strided_slice %383 {offsets = [0, 0], sizes = [8, 32], strides = [1, 1]} : vector<32x32xf32> to vector<8x32xf32>
    %cst_132 = arith.constant dense<0.000000e+00> : vector<8x32xf32>
    %410 = tpu.matmul %408, %409, %cst_132 {dimension_numbers = #tpu.dot_dimension_numbers<[1], [0], [0], [1], [0, 0, 1, 1], [], []>} : vector<8x8xf32>, vector<8x32xf32>, vector<8x32xf32> -> vector<8x32xf32>
    %411 = vector.extract_strided_slice %390 {offsets = [0, 8], sizes = [8, 8], strides = [1, 1]} : vector<8x32xf32> to vector<8x8xf32>
    %412 = vector.extract_strided_slice %391 {offsets = [0, 8], sizes = [8, 8], strides = [1, 1]} : vector<8x32xf32> to vector<8x8xf32>
    %413 = vector.extract_strided_slice %392 {offsets = [0, 8], sizes = [8, 8], strides = [1, 1]} : vector<8x32xf32> to vector<8x8xf32>
    %cst_133 = arith.constant dense<0.000000e+00> : vector<8x8xf32>
    %414 = tpu.matmul %411, %412, %cst_133 {dimension_numbers = #tpu.dot_dimension_numbers<[1], [1], [0], [0], [0, 0, 1, 0], [], []>} : vector<8x8xf32>, vector<8x8xf32>, vector<8x8xf32> -> vector<8x8xf32>
    %415 = arith.addf %414, %3 : vector<8x8xf32>
    %cst_134 = arith.constant dense<0xFF800000> : vector<8xf32>
    %416 = vector.multi_reduction <maximumf>, %415, %cst_134 [1] : vector<8x8xf32> to vector<8xf32>
    %417 = vector.shape_cast %416 : vector<8xf32> to vector<8x1xf32>
    %418 = vector.broadcast %417 : vector<8x1xf32> to vector<8x8xf32>
    %419 = arith.subf %415, %418 : vector<8x8xf32>
    %420 = math.exp %419 : vector<8x8xf32>
    %cst_135 = arith.constant dense<0.000000e+00> : vector<8xf32>
    %421 = vector.multi_reduction <add>, %420, %cst_135 [1] : vector<8x8xf32> to vector<8xf32>
    %422 = vector.shape_cast %421 : vector<8xf32> to vector<8x1xf32>
    %423 = tpu.reciprocal %422 {approx = true} : vector<8x1xf32> -> vector<8x1xf32>
    %424 = vector.broadcast %423 : vector<8x1xf32> to vector<8x8xf32>
    %425 = arith.mulf %420, %424 : vector<8x8xf32>
    %cst_136 = arith.constant dense<0.000000e+00> : vector<8x8xf32>
    %426 = tpu.matmul %425, %413, %cst_136 {dimension_numbers = #tpu.dot_dimension_numbers<[1], [0], [0], [1], [0, 0, 1, 1], [], []>} : vector<8x8xf32>, vector<8x8xf32>, vector<8x8xf32> -> vector<8x8xf32>
    %427 = vector.extract_strided_slice %383 {offsets = [8, 0], sizes = [8, 32], strides = [1, 1]} : vector<32x32xf32> to vector<8x32xf32>
    %cst_137 = arith.constant dense<0.000000e+00> : vector<8x32xf32>
    %428 = tpu.matmul %426, %427, %cst_137 {dimension_numbers = #tpu.dot_dimension_numbers<[1], [0], [0], [1], [0, 0, 1, 1], [], []>} : vector<8x8xf32>, vector<8x32xf32>, vector<8x32xf32> -> vector<8x32xf32>
    %429 = arith.addf %410, %428 : vector<8x32xf32>
    %430 = vector.extract_strided_slice %390 {offsets = [0, 16], sizes = [8, 8], strides = [1, 1]} : vector<8x32xf32> to vector<8x8xf32>
    %431 = vector.extract_strided_slice %391 {offsets = [0, 16], sizes = [8, 8], strides = [1, 1]} : vector<8x32xf32> to vector<8x8xf32>
    %432 = vector.extract_strided_slice %392 {offsets = [0, 16], sizes = [8, 8], strides = [1, 1]} : vector<8x32xf32> to vector<8x8xf32>
    %cst_138 = arith.constant dense<0.000000e+00> : vector<8x8xf32>
    %433 = tpu.matmul %430, %431, %cst_138 {dimension_numbers = #tpu.dot_dimension_numbers<[1], [1], [0], [0], [0, 0, 1, 0], [], []>} : vector<8x8xf32>, vector<8x8xf32>, vector<8x8xf32> -> vector<8x8xf32>
    %434 = arith.addf %433, %3 : vector<8x8xf32>
    %cst_139 = arith.constant dense<0xFF800000> : vector<8xf32>
    %435 = vector.multi_reduction <maximumf>, %434, %cst_139 [1] : vector<8x8xf32> to vector<8xf32>
    %436 = vector.shape_cast %435 : vector<8xf32> to vector<8x1xf32>
    %437 = vector.broadcast %436 : vector<8x1xf32> to vector<8x8xf32>
    %438 = arith.subf %434, %437 : vector<8x8xf32>
    %439 = math.exp %438 : vector<8x8xf32>
    %cst_140 = arith.constant dense<0.000000e+00> : vector<8xf32>
    %440 = vector.multi_reduction <add>, %439, %cst_140 [1] : vector<8x8xf32> to vector<8xf32>
    %441 = vector.shape_cast %440 : vector<8xf32> to vector<8x1xf32>
    %442 = tpu.reciprocal %441 {approx = true} : vector<8x1xf32> -> vector<8x1xf32>
    %443 = vector.broadcast %442 : vector<8x1xf32> to vector<8x8xf32>
    %444 = arith.mulf %439, %443 : vector<8x8xf32>
    %cst_141 = arith.constant dense<0.000000e+00> : vector<8x8xf32>
    %445 = tpu.matmul %444, %432, %cst_141 {dimension_numbers = #tpu.dot_dimension_numbers<[1], [0], [0], [1], [0, 0, 1, 1], [], []>} : vector<8x8xf32>, vector<8x8xf32>, vector<8x8xf32> -> vector<8x8xf32>
    %446 = vector.extract_strided_slice %383 {offsets = [16, 0], sizes = [8, 32], strides = [1, 1]} : vector<32x32xf32> to vector<8x32xf32>
    %cst_142 = arith.constant dense<0.000000e+00> : vector<8x32xf32>
    %447 = tpu.matmul %445, %446, %cst_142 {dimension_numbers = #tpu.dot_dimension_numbers<[1], [0], [0], [1], [0, 0, 1, 1], [], []>} : vector<8x8xf32>, vector<8x32xf32>, vector<8x32xf32> -> vector<8x32xf32>
    %448 = arith.addf %429, %447 : vector<8x32xf32>
    %449 = vector.extract_strided_slice %390 {offsets = [0, 24], sizes = [8, 8], strides = [1, 1]} : vector<8x32xf32> to vector<8x8xf32>
    %450 = vector.extract_strided_slice %391 {offsets = [0, 24], sizes = [8, 8], strides = [1, 1]} : vector<8x32xf32> to vector<8x8xf32>
    %451 = vector.extract_strided_slice %392 {offsets = [0, 24], sizes = [8, 8], strides = [1, 1]} : vector<8x32xf32> to vector<8x8xf32>
    %cst_143 = arith.constant dense<0.000000e+00> : vector<8x8xf32>
    %452 = tpu.matmul %449, %450, %cst_143 {dimension_numbers = #tpu.dot_dimension_numbers<[1], [1], [0], [0], [0, 0, 1, 0], [], []>} : vector<8x8xf32>, vector<8x8xf32>, vector<8x8xf32> -> vector<8x8xf32>
    %453 = arith.addf %452, %3 : vector<8x8xf32>
    %cst_144 = arith.constant dense<0xFF800000> : vector<8xf32>
    %454 = vector.multi_reduction <maximumf>, %453, %cst_144 [1] : vector<8x8xf32> to vector<8xf32>
    %455 = vector.shape_cast %454 : vector<8xf32> to vector<8x1xf32>
    %456 = vector.broadcast %455 : vector<8x1xf32> to vector<8x8xf32>
    %457 = arith.subf %453, %456 : vector<8x8xf32>
    %458 = math.exp %457 : vector<8x8xf32>
    %cst_145 = arith.constant dense<0.000000e+00> : vector<8xf32>
    %459 = vector.multi_reduction <add>, %458, %cst_145 [1] : vector<8x8xf32> to vector<8xf32>
    %460 = vector.shape_cast %459 : vector<8xf32> to vector<8x1xf32>
    %461 = tpu.reciprocal %460 {approx = true} : vector<8x1xf32> -> vector<8x1xf32>
    %462 = vector.broadcast %461 : vector<8x1xf32> to vector<8x8xf32>
    %463 = arith.mulf %458, %462 : vector<8x8xf32>
    %cst_146 = arith.constant dense<0.000000e+00> : vector<8x8xf32>
    %464 = tpu.matmul %463, %451, %cst_146 {dimension_numbers = #tpu.dot_dimension_numbers<[1], [0], [0], [1], [0, 0, 1, 1], [], []>} : vector<8x8xf32>, vector<8x8xf32>, vector<8x8xf32> -> vector<8x8xf32>
    %465 = vector.extract_strided_slice %383 {offsets = [24, 0], sizes = [8, 32], strides = [1, 1]} : vector<32x32xf32> to vector<8x32xf32>
    %cst_147 = arith.constant dense<0.000000e+00> : vector<8x32xf32>
    %466 = tpu.matmul %464, %465, %cst_147 {dimension_numbers = #tpu.dot_dimension_numbers<[1], [0], [0], [1], [0, 0, 1, 1], [], []>} : vector<8x8xf32>, vector<8x32xf32>, vector<8x32xf32> -> vector<8x32xf32>
    %467 = arith.addf %448, %466 : vector<8x32xf32>
    %468 = vector.broadcast %384 : vector<1x32xf32> to vector<8x32xf32>
    %469 = arith.addf %467, %468 : vector<8x32xf32>
    %470 = arith.addf %356, %469 : vector<8x32xf32>
    %471 = vector.extract_strided_slice %357 {offsets = [1, 0], sizes = [1, 32], strides = [1, 1]} : vector<3x32xf32> to vector<1x32xf32>
    %472 = vector.extract_strided_slice %358 {offsets = [1, 0], sizes = [1, 32], strides = [1, 1]} : vector<3x32xf32> to vector<1x32xf32>
    %cst_148 = arith.constant dense<0.000000e+00> : vector<8xf32>
    %473 = vector.multi_reduction <add>, %470, %cst_148 [1] : vector<8x32xf32> to vector<8xf32>
    %474 = vector.shape_cast %473 : vector<8xf32> to vector<8x1xf32>
    %cst_149 = arith.constant 3.200000e+01 : f32
    %475 = vector.broadcast %cst_149 : f32 to vector<8x1xf32>
    %476 = arith.divf %474, %475 : vector<8x1xf32>
    %477 = vector.broadcast %476 : vector<8x1xf32> to vector<8x32xf32>
    %478 = arith.subf %470, %477 : vector<8x32xf32>
    %479 = arith.mulf %478, %478 : vector<8x32xf32>
    %cst_150 = arith.constant dense<0.000000e+00> : vector<8xf32>
    %480 = vector.multi_reduction <add>, %479, %cst_150 [1] : vector<8x32xf32> to vector<8xf32>
    %481 = vector.shape_cast %480 : vector<8xf32> to vector<8x1xf32>
    %cst_151 = arith.constant 0.0322580636 : f32
    %482 = vector.broadcast %cst_151 : f32 to vector<8x1xf32>
    %483 = arith.mulf %481, %482 : vector<8x1xf32>
    %484 = math.sqrt %483 : vector<8x1xf32>
    %485 = vector.broadcast %471 : vector<1x32xf32> to vector<8x32xf32>
    %486 = arith.mulf %485, %478 : vector<8x32xf32>
    %cst_152 = arith.constant 9.99999997E-7 : f32
    %487 = vector.broadcast %cst_152 : f32 to vector<8x1xf32>
    %488 = arith.addf %484, %487 : vector<8x1xf32>
    %489 = vector.broadcast %488 : vector<8x1xf32> to vector<8x32xf32>
    %490 = arith.divf %486, %489 : vector<8x32xf32>
    %491 = vector.broadcast %472 : vector<1x32xf32> to vector<8x32xf32>
    %492 = arith.addf %490, %491 : vector<8x32xf32>
    %c640 = arith.constant 640 : index
    %c0_153 = arith.constant 0 : index
    %493 = vector.load %arg5[%c640, %c0_153] : memref<1152x128xf32, #tpu.memory_space<vmem>>, vector<32x32xf32>
    %cst_154 = arith.constant dense<0.000000e+00> : vector<8x32xf32>
    %494 = tpu.matmul %492, %493, %cst_154 {dimension_numbers = #tpu.dot_dimension_numbers<[1], [0], [0], [1], [0, 0, 1, 1], [], []>} : vector<8x32xf32>, vector<32x32xf32>, vector<8x32xf32> -> vector<8x32xf32>
    %c672 = arith.constant 672 : index
    %c0_155 = arith.constant 0 : index
    %495 = vector.load %arg5[%c672, %c0_155] : memref<1152x128xf32, #tpu.memory_space<vmem>>, vector<1x32xf32>
    %496 = vector.broadcast %495 : vector<1x32xf32> to vector<8x32xf32>
    %497 = arith.addf %494, %496 : vector<8x32xf32>
    %cst_156 = arith.constant 0.353553385 : f32
    %498 = vector.broadcast %cst_156 : f32 to vector<8x32xf32>
    %499 = arith.mulf %497, %498 : vector<8x32xf32>
    %500 = vector.extract_strided_slice %346 {offsets = [0, 0], sizes = [8, 32], strides = [1, 1]} : vector<8x128xf32> to vector<8x32xf32>
    %501 = vector.extract_strided_slice %346 {offsets = [0, 32], sizes = [8, 32], strides = [1, 1]} : vector<8x128xf32> to vector<8x32xf32>
    %c680 = arith.constant 680 : index
    %c0_157 = arith.constant 0 : index
    %502 = vector.load %arg5[%c680, %c0_157] : memref<1152x128xf32, #tpu.memory_space<vmem>>, vector<32x32xf32>
    %c712 = arith.constant 712 : index
    %c0_158 = arith.constant 0 : index
    %503 = vector.load %arg5[%c712, %c0_158] : memref<1152x128xf32, #tpu.memory_space<vmem>>, vector<1x32xf32>
    %504 = vector.extract_strided_slice %499 {offsets = [0, 0], sizes = [8, 8], strides = [1, 1]} : vector<8x32xf32> to vector<8x8xf32>
    %505 = vector.extract_strided_slice %500 {offsets = [0, 0], sizes = [8, 8], strides = [1, 1]} : vector<8x32xf32> to vector<8x8xf32>
    %506 = vector.extract_strided_slice %501 {offsets = [0, 0], sizes = [8, 8], strides = [1, 1]} : vector<8x32xf32> to vector<8x8xf32>
    %cst_159 = arith.constant dense<0.000000e+00> : vector<8x8xf32>
    %507 = tpu.matmul %504, %505, %cst_159 {dimension_numbers = #tpu.dot_dimension_numbers<[1], [1], [0], [0], [0, 0, 1, 0], [], []>} : vector<8x8xf32>, vector<8x8xf32>, vector<8x8xf32> -> vector<8x8xf32>
    %508 = vector.broadcast %1 : vector<1x8xf32> to vector<8x8xf32>
    %509 = arith.addf %507, %508 : vector<8x8xf32>
    %cst_160 = arith.constant dense<0xFF800000> : vector<8xf32>
    %510 = vector.multi_reduction <maximumf>, %509, %cst_160 [1] : vector<8x8xf32> to vector<8xf32>
    %511 = vector.shape_cast %510 : vector<8xf32> to vector<8x1xf32>
    %512 = vector.broadcast %511 : vector<8x1xf32> to vector<8x8xf32>
    %513 = arith.subf %509, %512 : vector<8x8xf32>
    %514 = math.exp %513 : vector<8x8xf32>
    %cst_161 = arith.constant dense<0.000000e+00> : vector<8xf32>
    %515 = vector.multi_reduction <add>, %514, %cst_161 [1] : vector<8x8xf32> to vector<8xf32>
    %516 = vector.shape_cast %515 : vector<8xf32> to vector<8x1xf32>
    %517 = tpu.reciprocal %516 {approx = true} : vector<8x1xf32> -> vector<8x1xf32>
    %518 = vector.broadcast %517 : vector<8x1xf32> to vector<8x8xf32>
    %519 = arith.mulf %514, %518 : vector<8x8xf32>
    %cst_162 = arith.constant dense<0.000000e+00> : vector<8x8xf32>
    %520 = tpu.matmul %519, %506, %cst_162 {dimension_numbers = #tpu.dot_dimension_numbers<[1], [0], [0], [1], [0, 0, 1, 1], [], []>} : vector<8x8xf32>, vector<8x8xf32>, vector<8x8xf32> -> vector<8x8xf32>
    %521 = vector.extract_strided_slice %502 {offsets = [0, 0], sizes = [8, 32], strides = [1, 1]} : vector<32x32xf32> to vector<8x32xf32>
    %cst_163 = arith.constant dense<0.000000e+00> : vector<8x32xf32>
    %522 = tpu.matmul %520, %521, %cst_163 {dimension_numbers = #tpu.dot_dimension_numbers<[1], [0], [0], [1], [0, 0, 1, 1], [], []>} : vector<8x8xf32>, vector<8x32xf32>, vector<8x32xf32> -> vector<8x32xf32>
    %523 = vector.extract_strided_slice %499 {offsets = [0, 8], sizes = [8, 8], strides = [1, 1]} : vector<8x32xf32> to vector<8x8xf32>
    %524 = vector.extract_strided_slice %500 {offsets = [0, 8], sizes = [8, 8], strides = [1, 1]} : vector<8x32xf32> to vector<8x8xf32>
    %525 = vector.extract_strided_slice %501 {offsets = [0, 8], sizes = [8, 8], strides = [1, 1]} : vector<8x32xf32> to vector<8x8xf32>
    %cst_164 = arith.constant dense<0.000000e+00> : vector<8x8xf32>
    %526 = tpu.matmul %523, %524, %cst_164 {dimension_numbers = #tpu.dot_dimension_numbers<[1], [1], [0], [0], [0, 0, 1, 0], [], []>} : vector<8x8xf32>, vector<8x8xf32>, vector<8x8xf32> -> vector<8x8xf32>
    %527 = vector.broadcast %1 : vector<1x8xf32> to vector<8x8xf32>
    %528 = arith.addf %526, %527 : vector<8x8xf32>
    %cst_165 = arith.constant dense<0xFF800000> : vector<8xf32>
    %529 = vector.multi_reduction <maximumf>, %528, %cst_165 [1] : vector<8x8xf32> to vector<8xf32>
    %530 = vector.shape_cast %529 : vector<8xf32> to vector<8x1xf32>
    %531 = vector.broadcast %530 : vector<8x1xf32> to vector<8x8xf32>
    %532 = arith.subf %528, %531 : vector<8x8xf32>
    %533 = math.exp %532 : vector<8x8xf32>
    %cst_166 = arith.constant dense<0.000000e+00> : vector<8xf32>
    %534 = vector.multi_reduction <add>, %533, %cst_166 [1] : vector<8x8xf32> to vector<8xf32>
    %535 = vector.shape_cast %534 : vector<8xf32> to vector<8x1xf32>
    %536 = tpu.reciprocal %535 {approx = true} : vector<8x1xf32> -> vector<8x1xf32>
    %537 = vector.broadcast %536 : vector<8x1xf32> to vector<8x8xf32>
    %538 = arith.mulf %533, %537 : vector<8x8xf32>
    %cst_167 = arith.constant dense<0.000000e+00> : vector<8x8xf32>
    %539 = tpu.matmul %538, %525, %cst_167 {dimension_numbers = #tpu.dot_dimension_numbers<[1], [0], [0], [1], [0, 0, 1, 1], [], []>} : vector<8x8xf32>, vector<8x8xf32>, vector<8x8xf32> -> vector<8x8xf32>
    %540 = vector.extract_strided_slice %502 {offsets = [8, 0], sizes = [8, 32], strides = [1, 1]} : vector<32x32xf32> to vector<8x32xf32>
    %cst_168 = arith.constant dense<0.000000e+00> : vector<8x32xf32>
    %541 = tpu.matmul %539, %540, %cst_168 {dimension_numbers = #tpu.dot_dimension_numbers<[1], [0], [0], [1], [0, 0, 1, 1], [], []>} : vector<8x8xf32>, vector<8x32xf32>, vector<8x32xf32> -> vector<8x32xf32>
    %542 = arith.addf %522, %541 : vector<8x32xf32>
    %543 = vector.extract_strided_slice %499 {offsets = [0, 16], sizes = [8, 8], strides = [1, 1]} : vector<8x32xf32> to vector<8x8xf32>
    %544 = vector.extract_strided_slice %500 {offsets = [0, 16], sizes = [8, 8], strides = [1, 1]} : vector<8x32xf32> to vector<8x8xf32>
    %545 = vector.extract_strided_slice %501 {offsets = [0, 16], sizes = [8, 8], strides = [1, 1]} : vector<8x32xf32> to vector<8x8xf32>
    %cst_169 = arith.constant dense<0.000000e+00> : vector<8x8xf32>
    %546 = tpu.matmul %543, %544, %cst_169 {dimension_numbers = #tpu.dot_dimension_numbers<[1], [1], [0], [0], [0, 0, 1, 0], [], []>} : vector<8x8xf32>, vector<8x8xf32>, vector<8x8xf32> -> vector<8x8xf32>
    %547 = vector.broadcast %1 : vector<1x8xf32> to vector<8x8xf32>
    %548 = arith.addf %546, %547 : vector<8x8xf32>
    %cst_170 = arith.constant dense<0xFF800000> : vector<8xf32>
    %549 = vector.multi_reduction <maximumf>, %548, %cst_170 [1] : vector<8x8xf32> to vector<8xf32>
    %550 = vector.shape_cast %549 : vector<8xf32> to vector<8x1xf32>
    %551 = vector.broadcast %550 : vector<8x1xf32> to vector<8x8xf32>
    %552 = arith.subf %548, %551 : vector<8x8xf32>
    %553 = math.exp %552 : vector<8x8xf32>
    %cst_171 = arith.constant dense<0.000000e+00> : vector<8xf32>
    %554 = vector.multi_reduction <add>, %553, %cst_171 [1] : vector<8x8xf32> to vector<8xf32>
    %555 = vector.shape_cast %554 : vector<8xf32> to vector<8x1xf32>
    %556 = tpu.reciprocal %555 {approx = true} : vector<8x1xf32> -> vector<8x1xf32>
    %557 = vector.broadcast %556 : vector<8x1xf32> to vector<8x8xf32>
    %558 = arith.mulf %553, %557 : vector<8x8xf32>
    %cst_172 = arith.constant dense<0.000000e+00> : vector<8x8xf32>
    %559 = tpu.matmul %558, %545, %cst_172 {dimension_numbers = #tpu.dot_dimension_numbers<[1], [0], [0], [1], [0, 0, 1, 1], [], []>} : vector<8x8xf32>, vector<8x8xf32>, vector<8x8xf32> -> vector<8x8xf32>
    %560 = vector.extract_strided_slice %502 {offsets = [16, 0], sizes = [8, 32], strides = [1, 1]} : vector<32x32xf32> to vector<8x32xf32>
    %cst_173 = arith.constant dense<0.000000e+00> : vector<8x32xf32>
    %561 = tpu.matmul %559, %560, %cst_173 {dimension_numbers = #tpu.dot_dimension_numbers<[1], [0], [0], [1], [0, 0, 1, 1], [], []>} : vector<8x8xf32>, vector<8x32xf32>, vector<8x32xf32> -> vector<8x32xf32>
    %562 = arith.addf %542, %561 : vector<8x32xf32>
    %563 = vector.extract_strided_slice %499 {offsets = [0, 24], sizes = [8, 8], strides = [1, 1]} : vector<8x32xf32> to vector<8x8xf32>
    %564 = vector.extract_strided_slice %500 {offsets = [0, 24], sizes = [8, 8], strides = [1, 1]} : vector<8x32xf32> to vector<8x8xf32>
    %565 = vector.extract_strided_slice %501 {offsets = [0, 24], sizes = [8, 8], strides = [1, 1]} : vector<8x32xf32> to vector<8x8xf32>
    %cst_174 = arith.constant dense<0.000000e+00> : vector<8x8xf32>
    %566 = tpu.matmul %563, %564, %cst_174 {dimension_numbers = #tpu.dot_dimension_numbers<[1], [1], [0], [0], [0, 0, 1, 0], [], []>} : vector<8x8xf32>, vector<8x8xf32>, vector<8x8xf32> -> vector<8x8xf32>
    %567 = vector.broadcast %1 : vector<1x8xf32> to vector<8x8xf32>
    %568 = arith.addf %566, %567 : vector<8x8xf32>
    %cst_175 = arith.constant dense<0xFF800000> : vector<8xf32>
    %569 = vector.multi_reduction <maximumf>, %568, %cst_175 [1] : vector<8x8xf32> to vector<8xf32>
    %570 = vector.shape_cast %569 : vector<8xf32> to vector<8x1xf32>
    %571 = vector.broadcast %570 : vector<8x1xf32> to vector<8x8xf32>
    %572 = arith.subf %568, %571 : vector<8x8xf32>
    %573 = math.exp %572 : vector<8x8xf32>
    %cst_176 = arith.constant dense<0.000000e+00> : vector<8xf32>
    %574 = vector.multi_reduction <add>, %573, %cst_176 [1] : vector<8x8xf32> to vector<8xf32>
    %575 = vector.shape_cast %574 : vector<8xf32> to vector<8x1xf32>
    %576 = tpu.reciprocal %575 {approx = true} : vector<8x1xf32> -> vector<8x1xf32>
    %577 = vector.broadcast %576 : vector<8x1xf32> to vector<8x8xf32>
    %578 = arith.mulf %573, %577 : vector<8x8xf32>
    %cst_177 = arith.constant dense<0.000000e+00> : vector<8x8xf32>
    %579 = tpu.matmul %578, %565, %cst_177 {dimension_numbers = #tpu.dot_dimension_numbers<[1], [0], [0], [1], [0, 0, 1, 1], [], []>} : vector<8x8xf32>, vector<8x8xf32>, vector<8x8xf32> -> vector<8x8xf32>
    %580 = vector.extract_strided_slice %502 {offsets = [24, 0], sizes = [8, 32], strides = [1, 1]} : vector<32x32xf32> to vector<8x32xf32>
    %cst_178 = arith.constant dense<0.000000e+00> : vector<8x32xf32>
    %581 = tpu.matmul %579, %580, %cst_178 {dimension_numbers = #tpu.dot_dimension_numbers<[1], [0], [0], [1], [0, 0, 1, 1], [], []>} : vector<8x8xf32>, vector<8x32xf32>, vector<8x32xf32> -> vector<8x32xf32>
    %582 = arith.addf %562, %581 : vector<8x32xf32>
    %583 = vector.broadcast %503 : vector<1x32xf32> to vector<8x32xf32>
    %584 = arith.addf %582, %583 : vector<8x32xf32>
    %585 = arith.addf %470, %584 : vector<8x32xf32>
    %586 = vector.extract_strided_slice %357 {offsets = [2, 0], sizes = [1, 32], strides = [1, 1]} : vector<3x32xf32> to vector<1x32xf32>
    %587 = vector.extract_strided_slice %358 {offsets = [2, 0], sizes = [1, 32], strides = [1, 1]} : vector<3x32xf32> to vector<1x32xf32>
    %cst_179 = arith.constant dense<0.000000e+00> : vector<8xf32>
    %588 = vector.multi_reduction <add>, %585, %cst_179 [1] : vector<8x32xf32> to vector<8xf32>
    %589 = vector.shape_cast %588 : vector<8xf32> to vector<8x1xf32>
    %cst_180 = arith.constant 3.200000e+01 : f32
    %590 = vector.broadcast %cst_180 : f32 to vector<8x1xf32>
    %591 = arith.divf %589, %590 : vector<8x1xf32>
    %592 = vector.broadcast %591 : vector<8x1xf32> to vector<8x32xf32>
    %593 = arith.subf %585, %592 : vector<8x32xf32>
    %594 = arith.mulf %593, %593 : vector<8x32xf32>
    %cst_181 = arith.constant dense<0.000000e+00> : vector<8xf32>
    %595 = vector.multi_reduction <add>, %594, %cst_181 [1] : vector<8x32xf32> to vector<8xf32>
    %596 = vector.shape_cast %595 : vector<8xf32> to vector<8x1xf32>
    %cst_182 = arith.constant 0.0322580636 : f32
    %597 = vector.broadcast %cst_182 : f32 to vector<8x1xf32>
    %598 = arith.mulf %596, %597 : vector<8x1xf32>
    %599 = math.sqrt %598 : vector<8x1xf32>
    %600 = vector.broadcast %586 : vector<1x32xf32> to vector<8x32xf32>
    %601 = arith.mulf %600, %593 : vector<8x32xf32>
    %cst_183 = arith.constant 9.99999997E-7 : f32
    %602 = vector.broadcast %cst_183 : f32 to vector<8x1xf32>
    %603 = arith.addf %599, %602 : vector<8x1xf32>
    %604 = vector.broadcast %603 : vector<8x1xf32> to vector<8x32xf32>
    %605 = arith.divf %601, %604 : vector<8x32xf32>
    %606 = vector.broadcast %587 : vector<1x32xf32> to vector<8x32xf32>
    %607 = arith.addf %605, %606 : vector<8x32xf32>
    %c720 = arith.constant 720 : index
    %c0_184 = arith.constant 0 : index
    %608 = vector.load %arg5[%c720, %c0_184] : memref<1152x128xf32, #tpu.memory_space<vmem>>, vector<32x64xf32>
    %c752 = arith.constant 752 : index
    %c0_185 = arith.constant 0 : index
    %609 = vector.load %arg5[%c752, %c0_185] : memref<1152x128xf32, #tpu.memory_space<vmem>>, vector<1x64xf32>
    %c760 = arith.constant 760 : index
    %c0_186 = arith.constant 0 : index
    %610 = vector.load %arg5[%c760, %c0_186] : memref<1152x128xf32, #tpu.memory_space<vmem>>, vector<64x32xf32>
    %c824 = arith.constant 824 : index
    %c0_187 = arith.constant 0 : index
    %611 = vector.load %arg5[%c824, %c0_187] : memref<1152x128xf32, #tpu.memory_space<vmem>>, vector<1x32xf32>
    %cst_188 = arith.constant dense<0.000000e+00> : vector<8x64xf32>
    %612 = tpu.matmul %607, %608, %cst_188 {dimension_numbers = #tpu.dot_dimension_numbers<[1], [0], [0], [1], [0, 0, 1, 1], [], []>} : vector<8x32xf32>, vector<32x64xf32>, vector<8x64xf32> -> vector<8x64xf32>
    %613 = vector.broadcast %609 : vector<1x64xf32> to vector<8x64xf32>
    %614 = arith.addf %612, %613 : vector<8x64xf32>
    %cst_189 = arith.constant 0.000000e+00 : f32
    %615 = vector.broadcast %cst_189 : f32 to vector<8x64xf32>
    %616 = arith.maximumf %614, %615 : vector<8x64xf32>
    %cst_190 = arith.constant dense<0.000000e+00> : vector<8x32xf32>
    %617 = tpu.matmul %616, %610, %cst_190 {dimension_numbers = #tpu.dot_dimension_numbers<[1], [0], [0], [1], [0, 0, 1, 1], [], []>} : vector<8x64xf32>, vector<64x32xf32>, vector<8x32xf32> -> vector<8x32xf32>
    %618 = vector.broadcast %611 : vector<1x32xf32> to vector<8x32xf32>
    %619 = arith.addf %617, %618 : vector<8x32xf32>
    %620 = arith.addf %585, %619 : vector<8x32xf32>
    %c1120 = arith.constant 1120 : index
    %c0_191 = arith.constant 0 : index
    %621 = vector.load %arg5[%c1120, %c0_191] : memref<1152x128xf32, #tpu.memory_space<vmem>>, vector<3x32xf32>
    %c1128 = arith.constant 1128 : index
    %c0_192 = arith.constant 0 : index
    %622 = vector.load %arg5[%c1128, %c0_192] : memref<1152x128xf32, #tpu.memory_space<vmem>>, vector<3x32xf32>
    %623 = vector.extract_strided_slice %621 {offsets = [0, 0], sizes = [1, 32], strides = [1, 1]} : vector<3x32xf32> to vector<1x32xf32>
    %624 = vector.extract_strided_slice %622 {offsets = [0, 0], sizes = [1, 32], strides = [1, 1]} : vector<3x32xf32> to vector<1x32xf32>
    %cst_193 = arith.constant dense<0.000000e+00> : vector<8xf32>
    %625 = vector.multi_reduction <add>, %620, %cst_193 [1] : vector<8x32xf32> to vector<8xf32>
    %626 = vector.shape_cast %625 : vector<8xf32> to vector<8x1xf32>
    %cst_194 = arith.constant 3.200000e+01 : f32
    %627 = vector.broadcast %cst_194 : f32 to vector<8x1xf32>
    %628 = arith.divf %626, %627 : vector<8x1xf32>
    %629 = vector.broadcast %628 : vector<8x1xf32> to vector<8x32xf32>
    %630 = arith.subf %620, %629 : vector<8x32xf32>
    %631 = arith.mulf %630, %630 : vector<8x32xf32>
    %cst_195 = arith.constant dense<0.000000e+00> : vector<8xf32>
    %632 = vector.multi_reduction <add>, %631, %cst_195 [1] : vector<8x32xf32> to vector<8xf32>
    %633 = vector.shape_cast %632 : vector<8xf32> to vector<8x1xf32>
    %cst_196 = arith.constant 0.0322580636 : f32
    %634 = vector.broadcast %cst_196 : f32 to vector<8x1xf32>
    %635 = arith.mulf %633, %634 : vector<8x1xf32>
    %636 = math.sqrt %635 : vector<8x1xf32>
    %637 = vector.broadcast %623 : vector<1x32xf32> to vector<8x32xf32>
    %638 = arith.mulf %637, %630 : vector<8x32xf32>
    %cst_197 = arith.constant 9.99999997E-7 : f32
    %639 = vector.broadcast %cst_197 : f32 to vector<8x1xf32>
    %640 = arith.addf %636, %639 : vector<8x1xf32>
    %641 = vector.broadcast %640 : vector<8x1xf32> to vector<8x32xf32>
    %642 = arith.divf %638, %641 : vector<8x32xf32>
    %643 = vector.broadcast %624 : vector<1x32xf32> to vector<8x32xf32>
    %644 = arith.addf %642, %643 : vector<8x32xf32>
    %c848 = arith.constant 848 : index
    %c0_198 = arith.constant 0 : index
    %645 = vector.load %arg5[%c848, %c0_198] : memref<1152x128xf32, #tpu.memory_space<vmem>>, vector<32x96xf32>
    %c880 = arith.constant 880 : index
    %c0_199 = arith.constant 0 : index
    %646 = vector.load %arg5[%c880, %c0_199] : memref<1152x128xf32, #tpu.memory_space<vmem>>, vector<1x96xf32>
    %c888 = arith.constant 888 : index
    %c0_200 = arith.constant 0 : index
    %647 = vector.load %arg5[%c888, %c0_200] : memref<1152x128xf32, #tpu.memory_space<vmem>>, vector<32x32xf32>
    %c920 = arith.constant 920 : index
    %c0_201 = arith.constant 0 : index
    %648 = vector.load %arg5[%c920, %c0_201] : memref<1152x128xf32, #tpu.memory_space<vmem>>, vector<1x32xf32>
    %cst_202 = arith.constant dense<0.000000e+00> : vector<8x96xf32>
    %649 = tpu.matmul %644, %645, %cst_202 {dimension_numbers = #tpu.dot_dimension_numbers<[1], [0], [0], [1], [0, 0, 1, 1], [], []>} : vector<8x32xf32>, vector<32x96xf32>, vector<8x96xf32> -> vector<8x96xf32>
    %650 = vector.broadcast %646 : vector<1x96xf32> to vector<8x96xf32>
    %651 = arith.addf %649, %650 : vector<8x96xf32>
    %652 = vector.extract_strided_slice %651 {offsets = [0, 0], sizes = [8, 32], strides = [1, 1]} : vector<8x96xf32> to vector<8x32xf32>
    %cst_203 = arith.constant 0.353553385 : f32
    %653 = vector.broadcast %cst_203 : f32 to vector<8x32xf32>
    %654 = arith.mulf %652, %653 : vector<8x32xf32>
    %655 = vector.extract_strided_slice %651 {offsets = [0, 32], sizes = [8, 32], strides = [1, 1]} : vector<8x96xf32> to vector<8x32xf32>
    %656 = vector.extract_strided_slice %651 {offsets = [0, 64], sizes = [8, 32], strides = [1, 1]} : vector<8x96xf32> to vector<8x32xf32>
    %657 = vector.extract_strided_slice %654 {offsets = [0, 0], sizes = [8, 8], strides = [1, 1]} : vector<8x32xf32> to vector<8x8xf32>
    %658 = vector.extract_strided_slice %655 {offsets = [0, 0], sizes = [8, 8], strides = [1, 1]} : vector<8x32xf32> to vector<8x8xf32>
    %659 = vector.extract_strided_slice %656 {offsets = [0, 0], sizes = [8, 8], strides = [1, 1]} : vector<8x32xf32> to vector<8x8xf32>
    %cst_204 = arith.constant dense<0.000000e+00> : vector<8x8xf32>
    %660 = tpu.matmul %657, %658, %cst_204 {dimension_numbers = #tpu.dot_dimension_numbers<[1], [1], [0], [0], [0, 0, 1, 0], [], []>} : vector<8x8xf32>, vector<8x8xf32>, vector<8x8xf32> -> vector<8x8xf32>
    %661 = arith.addf %660, %3 : vector<8x8xf32>
    %cst_205 = arith.constant dense<0xFF800000> : vector<8xf32>
    %662 = vector.multi_reduction <maximumf>, %661, %cst_205 [1] : vector<8x8xf32> to vector<8xf32>
    %663 = vector.shape_cast %662 : vector<8xf32> to vector<8x1xf32>
    %664 = vector.broadcast %663 : vector<8x1xf32> to vector<8x8xf32>
    %665 = arith.subf %661, %664 : vector<8x8xf32>
    %666 = math.exp %665 : vector<8x8xf32>
    %cst_206 = arith.constant dense<0.000000e+00> : vector<8xf32>
    %667 = vector.multi_reduction <add>, %666, %cst_206 [1] : vector<8x8xf32> to vector<8xf32>
    %668 = vector.shape_cast %667 : vector<8xf32> to vector<8x1xf32>
    %669 = tpu.reciprocal %668 {approx = true} : vector<8x1xf32> -> vector<8x1xf32>
    %670 = vector.broadcast %669 : vector<8x1xf32> to vector<8x8xf32>
    %671 = arith.mulf %666, %670 : vector<8x8xf32>
    %cst_207 = arith.constant dense<0.000000e+00> : vector<8x8xf32>
    %672 = tpu.matmul %671, %659, %cst_207 {dimension_numbers = #tpu.dot_dimension_numbers<[1], [0], [0], [1], [0, 0, 1, 1], [], []>} : vector<8x8xf32>, vector<8x8xf32>, vector<8x8xf32> -> vector<8x8xf32>
    %673 = vector.extract_strided_slice %647 {offsets = [0, 0], sizes = [8, 32], strides = [1, 1]} : vector<32x32xf32> to vector<8x32xf32>
    %cst_208 = arith.constant dense<0.000000e+00> : vector<8x32xf32>
    %674 = tpu.matmul %672, %673, %cst_208 {dimension_numbers = #tpu.dot_dimension_numbers<[1], [0], [0], [1], [0, 0, 1, 1], [], []>} : vector<8x8xf32>, vector<8x32xf32>, vector<8x32xf32> -> vector<8x32xf32>
    %675 = vector.extract_strided_slice %654 {offsets = [0, 8], sizes = [8, 8], strides = [1, 1]} : vector<8x32xf32> to vector<8x8xf32>
    %676 = vector.extract_strided_slice %655 {offsets = [0, 8], sizes = [8, 8], strides = [1, 1]} : vector<8x32xf32> to vector<8x8xf32>
    %677 = vector.extract_strided_slice %656 {offsets = [0, 8], sizes = [8, 8], strides = [1, 1]} : vector<8x32xf32> to vector<8x8xf32>
    %cst_209 = arith.constant dense<0.000000e+00> : vector<8x8xf32>
    %678 = tpu.matmul %675, %676, %cst_209 {dimension_numbers = #tpu.dot_dimension_numbers<[1], [1], [0], [0], [0, 0, 1, 0], [], []>} : vector<8x8xf32>, vector<8x8xf32>, vector<8x8xf32> -> vector<8x8xf32>
    %679 = arith.addf %678, %3 : vector<8x8xf32>
    %cst_210 = arith.constant dense<0xFF800000> : vector<8xf32>
    %680 = vector.multi_reduction <maximumf>, %679, %cst_210 [1] : vector<8x8xf32> to vector<8xf32>
    %681 = vector.shape_cast %680 : vector<8xf32> to vector<8x1xf32>
    %682 = vector.broadcast %681 : vector<8x1xf32> to vector<8x8xf32>
    %683 = arith.subf %679, %682 : vector<8x8xf32>
    %684 = math.exp %683 : vector<8x8xf32>
    %cst_211 = arith.constant dense<0.000000e+00> : vector<8xf32>
    %685 = vector.multi_reduction <add>, %684, %cst_211 [1] : vector<8x8xf32> to vector<8xf32>
    %686 = vector.shape_cast %685 : vector<8xf32> to vector<8x1xf32>
    %687 = tpu.reciprocal %686 {approx = true} : vector<8x1xf32> -> vector<8x1xf32>
    %688 = vector.broadcast %687 : vector<8x1xf32> to vector<8x8xf32>
    %689 = arith.mulf %684, %688 : vector<8x8xf32>
    %cst_212 = arith.constant dense<0.000000e+00> : vector<8x8xf32>
    %690 = tpu.matmul %689, %677, %cst_212 {dimension_numbers = #tpu.dot_dimension_numbers<[1], [0], [0], [1], [0, 0, 1, 1], [], []>} : vector<8x8xf32>, vector<8x8xf32>, vector<8x8xf32> -> vector<8x8xf32>
    %691 = vector.extract_strided_slice %647 {offsets = [8, 0], sizes = [8, 32], strides = [1, 1]} : vector<32x32xf32> to vector<8x32xf32>
    %cst_213 = arith.constant dense<0.000000e+00> : vector<8x32xf32>
    %692 = tpu.matmul %690, %691, %cst_213 {dimension_numbers = #tpu.dot_dimension_numbers<[1], [0], [0], [1], [0, 0, 1, 1], [], []>} : vector<8x8xf32>, vector<8x32xf32>, vector<8x32xf32> -> vector<8x32xf32>
    %693 = arith.addf %674, %692 : vector<8x32xf32>
    %694 = vector.extract_strided_slice %654 {offsets = [0, 16], sizes = [8, 8], strides = [1, 1]} : vector<8x32xf32> to vector<8x8xf32>
    %695 = vector.extract_strided_slice %655 {offsets = [0, 16], sizes = [8, 8], strides = [1, 1]} : vector<8x32xf32> to vector<8x8xf32>
    %696 = vector.extract_strided_slice %656 {offsets = [0, 16], sizes = [8, 8], strides = [1, 1]} : vector<8x32xf32> to vector<8x8xf32>
    %cst_214 = arith.constant dense<0.000000e+00> : vector<8x8xf32>
    %697 = tpu.matmul %694, %695, %cst_214 {dimension_numbers = #tpu.dot_dimension_numbers<[1], [1], [0], [0], [0, 0, 1, 0], [], []>} : vector<8x8xf32>, vector<8x8xf32>, vector<8x8xf32> -> vector<8x8xf32>
    %698 = arith.addf %697, %3 : vector<8x8xf32>
    %cst_215 = arith.constant dense<0xFF800000> : vector<8xf32>
    %699 = vector.multi_reduction <maximumf>, %698, %cst_215 [1] : vector<8x8xf32> to vector<8xf32>
    %700 = vector.shape_cast %699 : vector<8xf32> to vector<8x1xf32>
    %701 = vector.broadcast %700 : vector<8x1xf32> to vector<8x8xf32>
    %702 = arith.subf %698, %701 : vector<8x8xf32>
    %703 = math.exp %702 : vector<8x8xf32>
    %cst_216 = arith.constant dense<0.000000e+00> : vector<8xf32>
    %704 = vector.multi_reduction <add>, %703, %cst_216 [1] : vector<8x8xf32> to vector<8xf32>
    %705 = vector.shape_cast %704 : vector<8xf32> to vector<8x1xf32>
    %706 = tpu.reciprocal %705 {approx = true} : vector<8x1xf32> -> vector<8x1xf32>
    %707 = vector.broadcast %706 : vector<8x1xf32> to vector<8x8xf32>
    %708 = arith.mulf %703, %707 : vector<8x8xf32>
    %cst_217 = arith.constant dense<0.000000e+00> : vector<8x8xf32>
    %709 = tpu.matmul %708, %696, %cst_217 {dimension_numbers = #tpu.dot_dimension_numbers<[1], [0], [0], [1], [0, 0, 1, 1], [], []>} : vector<8x8xf32>, vector<8x8xf32>, vector<8x8xf32> -> vector<8x8xf32>
    %710 = vector.extract_strided_slice %647 {offsets = [16, 0], sizes = [8, 32], strides = [1, 1]} : vector<32x32xf32> to vector<8x32xf32>
    %cst_218 = arith.constant dense<0.000000e+00> : vector<8x32xf32>
    %711 = tpu.matmul %709, %710, %cst_218 {dimension_numbers = #tpu.dot_dimension_numbers<[1], [0], [0], [1], [0, 0, 1, 1], [], []>} : vector<8x8xf32>, vector<8x32xf32>, vector<8x32xf32> -> vector<8x32xf32>
    %712 = arith.addf %693, %711 : vector<8x32xf32>
    %713 = vector.extract_strided_slice %654 {offsets = [0, 24], sizes = [8, 8], strides = [1, 1]} : vector<8x32xf32> to vector<8x8xf32>
    %714 = vector.extract_strided_slice %655 {offsets = [0, 24], sizes = [8, 8], strides = [1, 1]} : vector<8x32xf32> to vector<8x8xf32>
    %715 = vector.extract_strided_slice %656 {offsets = [0, 24], sizes = [8, 8], strides = [1, 1]} : vector<8x32xf32> to vector<8x8xf32>
    %cst_219 = arith.constant dense<0.000000e+00> : vector<8x8xf32>
    %716 = tpu.matmul %713, %714, %cst_219 {dimension_numbers = #tpu.dot_dimension_numbers<[1], [1], [0], [0], [0, 0, 1, 0], [], []>} : vector<8x8xf32>, vector<8x8xf32>, vector<8x8xf32> -> vector<8x8xf32>
    %717 = arith.addf %716, %3 : vector<8x8xf32>
    %cst_220 = arith.constant dense<0xFF800000> : vector<8xf32>
    %718 = vector.multi_reduction <maximumf>, %717, %cst_220 [1] : vector<8x8xf32> to vector<8xf32>
    %719 = vector.shape_cast %718 : vector<8xf32> to vector<8x1xf32>
    %720 = vector.broadcast %719 : vector<8x1xf32> to vector<8x8xf32>
    %721 = arith.subf %717, %720 : vector<8x8xf32>
    %722 = math.exp %721 : vector<8x8xf32>
    %cst_221 = arith.constant dense<0.000000e+00> : vector<8xf32>
    %723 = vector.multi_reduction <add>, %722, %cst_221 [1] : vector<8x8xf32> to vector<8xf32>
    %724 = vector.shape_cast %723 : vector<8xf32> to vector<8x1xf32>
    %725 = tpu.reciprocal %724 {approx = true} : vector<8x1xf32> -> vector<8x1xf32>
    %726 = vector.broadcast %725 : vector<8x1xf32> to vector<8x8xf32>
    %727 = arith.mulf %722, %726 : vector<8x8xf32>
    %cst_222 = arith.constant dense<0.000000e+00> : vector<8x8xf32>
    %728 = tpu.matmul %727, %715, %cst_222 {dimension_numbers = #tpu.dot_dimension_numbers<[1], [0], [0], [1], [0, 0, 1, 1], [], []>} : vector<8x8xf32>, vector<8x8xf32>, vector<8x8xf32> -> vector<8x8xf32>
    %729 = vector.extract_strided_slice %647 {offsets = [24, 0], sizes = [8, 32], strides = [1, 1]} : vector<32x32xf32> to vector<8x32xf32>
    %cst_223 = arith.constant dense<0.000000e+00> : vector<8x32xf32>
    %730 = tpu.matmul %728, %729, %cst_223 {dimension_numbers = #tpu.dot_dimension_numbers<[1], [0], [0], [1], [0, 0, 1, 1], [], []>} : vector<8x8xf32>, vector<8x32xf32>, vector<8x32xf32> -> vector<8x32xf32>
    %731 = arith.addf %712, %730 : vector<8x32xf32>
    %732 = vector.broadcast %648 : vector<1x32xf32> to vector<8x32xf32>
    %733 = arith.addf %731, %732 : vector<8x32xf32>
    %734 = arith.addf %620, %733 : vector<8x32xf32>
    %735 = vector.extract_strided_slice %621 {offsets = [1, 0], sizes = [1, 32], strides = [1, 1]} : vector<3x32xf32> to vector<1x32xf32>
    %736 = vector.extract_strided_slice %622 {offsets = [1, 0], sizes = [1, 32], strides = [1, 1]} : vector<3x32xf32> to vector<1x32xf32>
    %cst_224 = arith.constant dense<0.000000e+00> : vector<8xf32>
    %737 = vector.multi_reduction <add>, %734, %cst_224 [1] : vector<8x32xf32> to vector<8xf32>
    %738 = vector.shape_cast %737 : vector<8xf32> to vector<8x1xf32>
    %cst_225 = arith.constant 3.200000e+01 : f32
    %739 = vector.broadcast %cst_225 : f32 to vector<8x1xf32>
    %740 = arith.divf %738, %739 : vector<8x1xf32>
    %741 = vector.broadcast %740 : vector<8x1xf32> to vector<8x32xf32>
    %742 = arith.subf %734, %741 : vector<8x32xf32>
    %743 = arith.mulf %742, %742 : vector<8x32xf32>
    %cst_226 = arith.constant dense<0.000000e+00> : vector<8xf32>
    %744 = vector.multi_reduction <add>, %743, %cst_226 [1] : vector<8x32xf32> to vector<8xf32>
    %745 = vector.shape_cast %744 : vector<8xf32> to vector<8x1xf32>
    %cst_227 = arith.constant 0.0322580636 : f32
    %746 = vector.broadcast %cst_227 : f32 to vector<8x1xf32>
    %747 = arith.mulf %745, %746 : vector<8x1xf32>
    %748 = math.sqrt %747 : vector<8x1xf32>
    %749 = vector.broadcast %735 : vector<1x32xf32> to vector<8x32xf32>
    %750 = arith.mulf %749, %742 : vector<8x32xf32>
    %cst_228 = arith.constant 9.99999997E-7 : f32
    %751 = vector.broadcast %cst_228 : f32 to vector<8x1xf32>
    %752 = arith.addf %748, %751 : vector<8x1xf32>
    %753 = vector.broadcast %752 : vector<8x1xf32> to vector<8x32xf32>
    %754 = arith.divf %750, %753 : vector<8x32xf32>
    %755 = vector.broadcast %736 : vector<1x32xf32> to vector<8x32xf32>
    %756 = arith.addf %754, %755 : vector<8x32xf32>
    %c928 = arith.constant 928 : index
    %c0_229 = arith.constant 0 : index
    %757 = vector.load %arg5[%c928, %c0_229] : memref<1152x128xf32, #tpu.memory_space<vmem>>, vector<32x32xf32>
    %cst_230 = arith.constant dense<0.000000e+00> : vector<8x32xf32>
    %758 = tpu.matmul %756, %757, %cst_230 {dimension_numbers = #tpu.dot_dimension_numbers<[1], [0], [0], [1], [0, 0, 1, 1], [], []>} : vector<8x32xf32>, vector<32x32xf32>, vector<8x32xf32> -> vector<8x32xf32>
    %c960 = arith.constant 960 : index
    %c0_231 = arith.constant 0 : index
    %759 = vector.load %arg5[%c960, %c0_231] : memref<1152x128xf32, #tpu.memory_space<vmem>>, vector<1x32xf32>
    %760 = vector.broadcast %759 : vector<1x32xf32> to vector<8x32xf32>
    %761 = arith.addf %758, %760 : vector<8x32xf32>
    %cst_232 = arith.constant 0.353553385 : f32
    %762 = vector.broadcast %cst_232 : f32 to vector<8x32xf32>
    %763 = arith.mulf %761, %762 : vector<8x32xf32>
    %764 = vector.extract_strided_slice %346 {offsets = [0, 64], sizes = [8, 32], strides = [1, 1]} : vector<8x128xf32> to vector<8x32xf32>
    %765 = vector.extract_strided_slice %346 {offsets = [0, 96], sizes = [8, 32], strides = [1, 1]} : vector<8x128xf32> to vector<8x32xf32>
    %c968 = arith.constant 968 : index
    %c0_233 = arith.constant 0 : index
    %766 = vector.load %arg5[%c968, %c0_233] : memref<1152x128xf32, #tpu.memory_space<vmem>>, vector<32x32xf32>
    %c1000 = arith.constant 1000 : index
    %c0_234 = arith.constant 0 : index
    %767 = vector.load %arg5[%c1000, %c0_234] : memref<1152x128xf32, #tpu.memory_space<vmem>>, vector<1x32xf32>
    %768 = vector.extract_strided_slice %763 {offsets = [0, 0], sizes = [8, 8], strides = [1, 1]} : vector<8x32xf32> to vector<8x8xf32>
    %769 = vector.extract_strided_slice %764 {offsets = [0, 0], sizes = [8, 8], strides = [1, 1]} : vector<8x32xf32> to vector<8x8xf32>
    %770 = vector.extract_strided_slice %765 {offsets = [0, 0], sizes = [8, 8], strides = [1, 1]} : vector<8x32xf32> to vector<8x8xf32>
    %cst_235 = arith.constant dense<0.000000e+00> : vector<8x8xf32>
    %771 = tpu.matmul %768, %769, %cst_235 {dimension_numbers = #tpu.dot_dimension_numbers<[1], [1], [0], [0], [0, 0, 1, 0], [], []>} : vector<8x8xf32>, vector<8x8xf32>, vector<8x8xf32> -> vector<8x8xf32>
    %772 = vector.broadcast %1 : vector<1x8xf32> to vector<8x8xf32>
    %773 = arith.addf %771, %772 : vector<8x8xf32>
    %cst_236 = arith.constant dense<0xFF800000> : vector<8xf32>
    %774 = vector.multi_reduction <maximumf>, %773, %cst_236 [1] : vector<8x8xf32> to vector<8xf32>
    %775 = vector.shape_cast %774 : vector<8xf32> to vector<8x1xf32>
    %776 = vector.broadcast %775 : vector<8x1xf32> to vector<8x8xf32>
    %777 = arith.subf %773, %776 : vector<8x8xf32>
    %778 = math.exp %777 : vector<8x8xf32>
    %cst_237 = arith.constant dense<0.000000e+00> : vector<8xf32>
    %779 = vector.multi_reduction <add>, %778, %cst_237 [1] : vector<8x8xf32> to vector<8xf32>
    %780 = vector.shape_cast %779 : vector<8xf32> to vector<8x1xf32>
    %781 = tpu.reciprocal %780 {approx = true} : vector<8x1xf32> -> vector<8x1xf32>
    %782 = vector.broadcast %781 : vector<8x1xf32> to vector<8x8xf32>
    %783 = arith.mulf %778, %782 : vector<8x8xf32>
    %cst_238 = arith.constant dense<0.000000e+00> : vector<8x8xf32>
    %784 = tpu.matmul %783, %770, %cst_238 {dimension_numbers = #tpu.dot_dimension_numbers<[1], [0], [0], [1], [0, 0, 1, 1], [], []>} : vector<8x8xf32>, vector<8x8xf32>, vector<8x8xf32> -> vector<8x8xf32>
    %785 = vector.extract_strided_slice %766 {offsets = [0, 0], sizes = [8, 32], strides = [1, 1]} : vector<32x32xf32> to vector<8x32xf32>
    %cst_239 = arith.constant dense<0.000000e+00> : vector<8x32xf32>
    %786 = tpu.matmul %784, %785, %cst_239 {dimension_numbers = #tpu.dot_dimension_numbers<[1], [0], [0], [1], [0, 0, 1, 1], [], []>} : vector<8x8xf32>, vector<8x32xf32>, vector<8x32xf32> -> vector<8x32xf32>
    %787 = vector.extract_strided_slice %763 {offsets = [0, 8], sizes = [8, 8], strides = [1, 1]} : vector<8x32xf32> to vector<8x8xf32>
    %788 = vector.extract_strided_slice %764 {offsets = [0, 8], sizes = [8, 8], strides = [1, 1]} : vector<8x32xf32> to vector<8x8xf32>
    %789 = vector.extract_strided_slice %765 {offsets = [0, 8], sizes = [8, 8], strides = [1, 1]} : vector<8x32xf32> to vector<8x8xf32>
    %cst_240 = arith.constant dense<0.000000e+00> : vector<8x8xf32>
    %790 = tpu.matmul %787, %788, %cst_240 {dimension_numbers = #tpu.dot_dimension_numbers<[1], [1], [0], [0], [0, 0, 1, 0], [], []>} : vector<8x8xf32>, vector<8x8xf32>, vector<8x8xf32> -> vector<8x8xf32>
    %791 = vector.broadcast %1 : vector<1x8xf32> to vector<8x8xf32>
    %792 = arith.addf %790, %791 : vector<8x8xf32>
    %cst_241 = arith.constant dense<0xFF800000> : vector<8xf32>
    %793 = vector.multi_reduction <maximumf>, %792, %cst_241 [1] : vector<8x8xf32> to vector<8xf32>
    %794 = vector.shape_cast %793 : vector<8xf32> to vector<8x1xf32>
    %795 = vector.broadcast %794 : vector<8x1xf32> to vector<8x8xf32>
    %796 = arith.subf %792, %795 : vector<8x8xf32>
    %797 = math.exp %796 : vector<8x8xf32>
    %cst_242 = arith.constant dense<0.000000e+00> : vector<8xf32>
    %798 = vector.multi_reduction <add>, %797, %cst_242 [1] : vector<8x8xf32> to vector<8xf32>
    %799 = vector.shape_cast %798 : vector<8xf32> to vector<8x1xf32>
    %800 = tpu.reciprocal %799 {approx = true} : vector<8x1xf32> -> vector<8x1xf32>
    %801 = vector.broadcast %800 : vector<8x1xf32> to vector<8x8xf32>
    %802 = arith.mulf %797, %801 : vector<8x8xf32>
    %cst_243 = arith.constant dense<0.000000e+00> : vector<8x8xf32>
    %803 = tpu.matmul %802, %789, %cst_243 {dimension_numbers = #tpu.dot_dimension_numbers<[1], [0], [0], [1], [0, 0, 1, 1], [], []>} : vector<8x8xf32>, vector<8x8xf32>, vector<8x8xf32> -> vector<8x8xf32>
    %804 = vector.extract_strided_slice %766 {offsets = [8, 0], sizes = [8, 32], strides = [1, 1]} : vector<32x32xf32> to vector<8x32xf32>
    %cst_244 = arith.constant dense<0.000000e+00> : vector<8x32xf32>
    %805 = tpu.matmul %803, %804, %cst_244 {dimension_numbers = #tpu.dot_dimension_numbers<[1], [0], [0], [1], [0, 0, 1, 1], [], []>} : vector<8x8xf32>, vector<8x32xf32>, vector<8x32xf32> -> vector<8x32xf32>
    %806 = arith.addf %786, %805 : vector<8x32xf32>
    %807 = vector.extract_strided_slice %763 {offsets = [0, 16], sizes = [8, 8], strides = [1, 1]} : vector<8x32xf32> to vector<8x8xf32>
    %808 = vector.extract_strided_slice %764 {offsets = [0, 16], sizes = [8, 8], strides = [1, 1]} : vector<8x32xf32> to vector<8x8xf32>
    %809 = vector.extract_strided_slice %765 {offsets = [0, 16], sizes = [8, 8], strides = [1, 1]} : vector<8x32xf32> to vector<8x8xf32>
    %cst_245 = arith.constant dense<0.000000e+00> : vector<8x8xf32>
    %810 = tpu.matmul %807, %808, %cst_245 {dimension_numbers = #tpu.dot_dimension_numbers<[1], [1], [0], [0], [0, 0, 1, 0], [], []>} : vector<8x8xf32>, vector<8x8xf32>, vector<8x8xf32> -> vector<8x8xf32>
    %811 = vector.broadcast %1 : vector<1x8xf32> to vector<8x8xf32>
    %812 = arith.addf %810, %811 : vector<8x8xf32>
    %cst_246 = arith.constant dense<0xFF800000> : vector<8xf32>
    %813 = vector.multi_reduction <maximumf>, %812, %cst_246 [1] : vector<8x8xf32> to vector<8xf32>
    %814 = vector.shape_cast %813 : vector<8xf32> to vector<8x1xf32>
    %815 = vector.broadcast %814 : vector<8x1xf32> to vector<8x8xf32>
    %816 = arith.subf %812, %815 : vector<8x8xf32>
    %817 = math.exp %816 : vector<8x8xf32>
    %cst_247 = arith.constant dense<0.000000e+00> : vector<8xf32>
    %818 = vector.multi_reduction <add>, %817, %cst_247 [1] : vector<8x8xf32> to vector<8xf32>
    %819 = vector.shape_cast %818 : vector<8xf32> to vector<8x1xf32>
    %820 = tpu.reciprocal %819 {approx = true} : vector<8x1xf32> -> vector<8x1xf32>
    %821 = vector.broadcast %820 : vector<8x1xf32> to vector<8x8xf32>
    %822 = arith.mulf %817, %821 : vector<8x8xf32>
    %cst_248 = arith.constant dense<0.000000e+00> : vector<8x8xf32>
    %823 = tpu.matmul %822, %809, %cst_248 {dimension_numbers = #tpu.dot_dimension_numbers<[1], [0], [0], [1], [0, 0, 1, 1], [], []>} : vector<8x8xf32>, vector<8x8xf32>, vector<8x8xf32> -> vector<8x8xf32>
    %824 = vector.extract_strided_slice %766 {offsets = [16, 0], sizes = [8, 32], strides = [1, 1]} : vector<32x32xf32> to vector<8x32xf32>
    %cst_249 = arith.constant dense<0.000000e+00> : vector<8x32xf32>
    %825 = tpu.matmul %823, %824, %cst_249 {dimension_numbers = #tpu.dot_dimension_numbers<[1], [0], [0], [1], [0, 0, 1, 1], [], []>} : vector<8x8xf32>, vector<8x32xf32>, vector<8x32xf32> -> vector<8x32xf32>
    %826 = arith.addf %806, %825 : vector<8x32xf32>
    %827 = vector.extract_strided_slice %763 {offsets = [0, 24], sizes = [8, 8], strides = [1, 1]} : vector<8x32xf32> to vector<8x8xf32>
    %828 = vector.extract_strided_slice %764 {offsets = [0, 24], sizes = [8, 8], strides = [1, 1]} : vector<8x32xf32> to vector<8x8xf32>
    %829 = vector.extract_strided_slice %765 {offsets = [0, 24], sizes = [8, 8], strides = [1, 1]} : vector<8x32xf32> to vector<8x8xf32>
    %cst_250 = arith.constant dense<0.000000e+00> : vector<8x8xf32>
    %830 = tpu.matmul %827, %828, %cst_250 {dimension_numbers = #tpu.dot_dimension_numbers<[1], [1], [0], [0], [0, 0, 1, 0], [], []>} : vector<8x8xf32>, vector<8x8xf32>, vector<8x8xf32> -> vector<8x8xf32>
    %831 = vector.broadcast %1 : vector<1x8xf32> to vector<8x8xf32>
    %832 = arith.addf %830, %831 : vector<8x8xf32>
    %cst_251 = arith.constant dense<0xFF800000> : vector<8xf32>
    %833 = vector.multi_reduction <maximumf>, %832, %cst_251 [1] : vector<8x8xf32> to vector<8xf32>
    %834 = vector.shape_cast %833 : vector<8xf32> to vector<8x1xf32>
    %835 = vector.broadcast %834 : vector<8x1xf32> to vector<8x8xf32>
    %836 = arith.subf %832, %835 : vector<8x8xf32>
    %837 = math.exp %836 : vector<8x8xf32>
    %cst_252 = arith.constant dense<0.000000e+00> : vector<8xf32>
    %838 = vector.multi_reduction <add>, %837, %cst_252 [1] : vector<8x8xf32> to vector<8xf32>
    %839 = vector.shape_cast %838 : vector<8xf32> to vector<8x1xf32>
    %840 = tpu.reciprocal %839 {approx = true} : vector<8x1xf32> -> vector<8x1xf32>
    %841 = vector.broadcast %840 : vector<8x1xf32> to vector<8x8xf32>
    %842 = arith.mulf %837, %841 : vector<8x8xf32>
    %cst_253 = arith.constant dense<0.000000e+00> : vector<8x8xf32>
    %843 = tpu.matmul %842, %829, %cst_253 {dimension_numbers = #tpu.dot_dimension_numbers<[1], [0], [0], [1], [0, 0, 1, 1], [], []>} : vector<8x8xf32>, vector<8x8xf32>, vector<8x8xf32> -> vector<8x8xf32>
    %844 = vector.extract_strided_slice %766 {offsets = [24, 0], sizes = [8, 32], strides = [1, 1]} : vector<32x32xf32> to vector<8x32xf32>
    %cst_254 = arith.constant dense<0.000000e+00> : vector<8x32xf32>
    %845 = tpu.matmul %843, %844, %cst_254 {dimension_numbers = #tpu.dot_dimension_numbers<[1], [0], [0], [1], [0, 0, 1, 1], [], []>} : vector<8x8xf32>, vector<8x32xf32>, vector<8x32xf32> -> vector<8x32xf32>
    %846 = arith.addf %826, %845 : vector<8x32xf32>
    %847 = vector.broadcast %767 : vector<1x32xf32> to vector<8x32xf32>
    %848 = arith.addf %846, %847 : vector<8x32xf32>
    %849 = arith.addf %734, %848 : vector<8x32xf32>
    %850 = vector.extract_strided_slice %621 {offsets = [2, 0], sizes = [1, 32], strides = [1, 1]} : vector<3x32xf32> to vector<1x32xf32>
    %851 = vector.extract_strided_slice %622 {offsets = [2, 0], sizes = [1, 32], strides = [1, 1]} : vector<3x32xf32> to vector<1x32xf32>
    %cst_255 = arith.constant dense<0.000000e+00> : vector<8xf32>
    %852 = vector.multi_reduction <add>, %849, %cst_255 [1] : vector<8x32xf32> to vector<8xf32>
    %853 = vector.shape_cast %852 : vector<8xf32> to vector<8x1xf32>
    %cst_256 = arith.constant 3.200000e+01 : f32
    %854 = vector.broadcast %cst_256 : f32 to vector<8x1xf32>
    %855 = arith.divf %853, %854 : vector<8x1xf32>
    %856 = vector.broadcast %855 : vector<8x1xf32> to vector<8x32xf32>
    %857 = arith.subf %849, %856 : vector<8x32xf32>
    %858 = arith.mulf %857, %857 : vector<8x32xf32>
    %cst_257 = arith.constant dense<0.000000e+00> : vector<8xf32>
    %859 = vector.multi_reduction <add>, %858, %cst_257 [1] : vector<8x32xf32> to vector<8xf32>
    %860 = vector.shape_cast %859 : vector<8xf32> to vector<8x1xf32>
    %cst_258 = arith.constant 0.0322580636 : f32
    %861 = vector.broadcast %cst_258 : f32 to vector<8x1xf32>
    %862 = arith.mulf %860, %861 : vector<8x1xf32>
    %863 = math.sqrt %862 : vector<8x1xf32>
    %864 = vector.broadcast %850 : vector<1x32xf32> to vector<8x32xf32>
    %865 = arith.mulf %864, %857 : vector<8x32xf32>
    %cst_259 = arith.constant 9.99999997E-7 : f32
    %866 = vector.broadcast %cst_259 : f32 to vector<8x1xf32>
    %867 = arith.addf %863, %866 : vector<8x1xf32>
    %868 = vector.broadcast %867 : vector<8x1xf32> to vector<8x32xf32>
    %869 = arith.divf %865, %868 : vector<8x32xf32>
    %870 = vector.broadcast %851 : vector<1x32xf32> to vector<8x32xf32>
    %871 = arith.addf %869, %870 : vector<8x32xf32>
    %c1008 = arith.constant 1008 : index
    %c0_260 = arith.constant 0 : index
    %872 = vector.load %arg5[%c1008, %c0_260] : memref<1152x128xf32, #tpu.memory_space<vmem>>, vector<32x64xf32>
    %c1040 = arith.constant 1040 : index
    %c0_261 = arith.constant 0 : index
    %873 = vector.load %arg5[%c1040, %c0_261] : memref<1152x128xf32, #tpu.memory_space<vmem>>, vector<1x64xf32>
    %c1048 = arith.constant 1048 : index
    %c0_262 = arith.constant 0 : index
    %874 = vector.load %arg5[%c1048, %c0_262] : memref<1152x128xf32, #tpu.memory_space<vmem>>, vector<64x32xf32>
    %c1112 = arith.constant 1112 : index
    %c0_263 = arith.constant 0 : index
    %875 = vector.load %arg5[%c1112, %c0_263] : memref<1152x128xf32, #tpu.memory_space<vmem>>, vector<1x32xf32>
    %cst_264 = arith.constant dense<0.000000e+00> : vector<8x64xf32>
    %876 = tpu.matmul %871, %872, %cst_264 {dimension_numbers = #tpu.dot_dimension_numbers<[1], [0], [0], [1], [0, 0, 1, 1], [], []>} : vector<8x32xf32>, vector<32x64xf32>, vector<8x64xf32> -> vector<8x64xf32>
    %877 = vector.broadcast %873 : vector<1x64xf32> to vector<8x64xf32>
    %878 = arith.addf %876, %877 : vector<8x64xf32>
    %cst_265 = arith.constant 0.000000e+00 : f32
    %879 = vector.broadcast %cst_265 : f32 to vector<8x64xf32>
    %880 = arith.maximumf %878, %879 : vector<8x64xf32>
    %cst_266 = arith.constant dense<0.000000e+00> : vector<8x32xf32>
    %881 = tpu.matmul %880, %874, %cst_266 {dimension_numbers = #tpu.dot_dimension_numbers<[1], [0], [0], [1], [0, 0, 1, 1], [], []>} : vector<8x64xf32>, vector<64x32xf32>, vector<8x32xf32> -> vector<8x32xf32>
    %882 = vector.broadcast %875 : vector<1x32xf32> to vector<8x32xf32>
    %883 = arith.addf %881, %882 : vector<8x32xf32>
    %884 = arith.addf %849, %883 : vector<8x32xf32>
    %c1136 = arith.constant 1136 : index
    %c0_267 = arith.constant 0 : index
    %885 = vector.load %arg5[%c1136, %c0_267] : memref<1152x128xf32, #tpu.memory_space<vmem>>, vector<1x32xf32>
    %c1144 = arith.constant 1144 : index
    %c0_268 = arith.constant 0 : index
    %886 = vector.load %arg5[%c1144, %c0_268] : memref<1152x128xf32, #tpu.memory_space<vmem>>, vector<1x32xf32>
    %cst_269 = arith.constant dense<0.000000e+00> : vector<8xf32>
    %887 = vector.multi_reduction <add>, %884, %cst_269 [1] : vector<8x32xf32> to vector<8xf32>
    %888 = vector.shape_cast %887 : vector<8xf32> to vector<8x1xf32>
    %cst_270 = arith.constant 3.200000e+01 : f32
    %889 = vector.broadcast %cst_270 : f32 to vector<8x1xf32>
    %890 = arith.divf %888, %889 : vector<8x1xf32>
    %891 = vector.broadcast %890 : vector<8x1xf32> to vector<8x32xf32>
    %892 = arith.subf %884, %891 : vector<8x32xf32>
    %893 = arith.mulf %892, %892 : vector<8x32xf32>
    %cst_271 = arith.constant dense<0.000000e+00> : vector<8xf32>
    %894 = vector.multi_reduction <add>, %893, %cst_271 [1] : vector<8x32xf32> to vector<8xf32>
    %895 = vector.shape_cast %894 : vector<8xf32> to vector<8x1xf32>
    %cst_272 = arith.constant 0.0322580636 : f32
    %896 = vector.broadcast %cst_272 : f32 to vector<8x1xf32>
    %897 = arith.mulf %895, %896 : vector<8x1xf32>
    %898 = math.sqrt %897 : vector<8x1xf32>
    %899 = vector.broadcast %885 : vector<1x32xf32> to vector<8x32xf32>
    %900 = arith.mulf %899, %892 : vector<8x32xf32>
    %cst_273 = arith.constant 9.99999997E-7 : f32
    %901 = vector.broadcast %cst_273 : f32 to vector<8x1xf32>
    %902 = arith.addf %898, %901 : vector<8x1xf32>
    %903 = vector.broadcast %902 : vector<8x1xf32> to vector<8x32xf32>
    %904 = arith.divf %900, %903 : vector<8x32xf32>
    %905 = vector.broadcast %886 : vector<1x32xf32> to vector<8x32xf32>
    %906 = arith.addf %904, %905 : vector<8x32xf32>
    %c0_274 = arith.constant 0 : index
    %c0_275 = arith.constant 0 : index
    %907 = vector.load %arg6[%c0_274, %c0_275] : memref<8x32xf32, #tpu.memory_space<vmem>>, vector<8x32xf32>
    tpu.vector_store %arg6[%c0_274, %c0_275], %906 {strides = array<i32>} : memref<8x32xf32, #tpu.memory_space<vmem>>, vector<8x32xf32>,
    return
  }
  func.func @transform_0(%arg0: i32) -> (i32, i32) {
    %c0_i32 = arith.constant 0 : i32
    %c0_i32_0 = arith.constant 0 : i32
    return %arg0, %c0_i32 : i32, i32
  }
  func.func @transform_1(%arg0: i32) -> (i32, i32) {
    %c0_i32 = arith.constant 0 : i32
    %c0_i32_0 = arith.constant 0 : i32
    return %arg0, %c0_i32 : i32, i32
  }
  func.func @transform_2(%arg0: i32) -> (i32, i32, i32) {
    %c0_i32 = arith.constant 0 : i32
    %c0_i32_0 = arith.constant 0 : i32
    %c0_i32_1 = arith.constant 0 : i32
    return %arg0, %c0_i32, %c0_i32_0 : i32, i32, i32
  }
  func.func @transform_3(%arg0: i32) -> (i32, i32, i32) {
    %c0_i32 = arith.constant 0 : i32
    %c0_i32_0 = arith.constant 0 : i32
    %c0_i32_1 = arith.constant 0 : i32
    return %arg0, %c0_i32, %c0_i32_0 : i32, i32, i32
  }
  func.func @transform_4(%arg0: i32) -> (i32, i32) {
    %c0_i32 = arith.constant 0 : i32
    %c0_i32_0 = arith.constant 0 : i32
    %c0_i32_1 = arith.constant 0 : i32
    return %c0_i32, %c0_i32_0 : i32, i32
  }
  func.func @transform_5(%arg0: i32) -> (i32, i32) {
    %c0_i32 = arith.constant 0 : i32
    %c0_i32_0 = arith.constant 0 : i32
    return %arg0, %c0_i32 : i32, i32
  }
}

</mosaic_0001>

<llo_original>
// kernel: encoder_decoder_forward.1
$region0: #{encoder_decoder_forward.1}
  #allocation0 [shape = 'u32[]', space=smem, size = 0x4, offset = 0x4, fixed_abs, tag = 'smem constant byte address 0x4 - core index']
  #allocation1 [shape = 'u32[144,128]{1,0:T(1,128)}', space=vmem, size = 0x12000, scoped, tag = 'internal scratch']
  %s0 = inlined_call_operand.vmem [shape: s32[16,1], index: 0, kind: input, shape index: {}]
  %s1 = inlined_call_operand.vmem [shape: s32[16,1], index: 1, kind: input, shape index: {}]
  %s2 = inlined_call_operand.vmem [shape: f32[2,1,8], index: 2, kind: input, shape index: {}]
  %s3 = inlined_call_operand.vmem [shape: f32[2,8,8], index: 3, kind: input, shape index: {}]
  %s4 = inlined_call_operand.hbm [shape: f32[1152,128], index: 4, kind: input, shape index: {}]
  %s5 = inlined_call_operand.hbm [shape: f32[16,32], index: 5, kind: output, shape index: {}]
  %s6 = sld [smem:[#allocation0]]
  $region57: #{encoder_decoder_forward.1} parent=0
    _
  %s8 = ssub.s32 1, %s6
  %s9 = scalar_select 0, %s8, %s6
  $region1: #{encoder_decoder_forward.1} parent=0
    #allocation2 [shape = 'u8[589824]{0}', space=vmem, size = 0x90000, scoped, tag = 'input window, operand 4, single buffered']
    #allocation3 [shape = 's32[2]{0}', space=sflag, size = 0x8, scoped, tag = 'scoped memory for encoder_decoder_forward.1']
    #allocation4 [shape = 's32[2]{0}', space=sflag, size = 0x8, scoped, tag = 'scoped memory for encoder_decoder_forward.1']
    #allocation5 [shape = 'u8[8192]{0}', space=vmem, size = 0x2000, scoped, tag = 'output window, operand 0']
    %10 = vsyncpa [#allocation3], 0
    %11 = vsyncpa [#allocation4], 0
    %s12 = scalar_lea.sflag [#allocation4], 1
    %13 = vsyncpa %s12, 0
    loop: start=0, step=1, limit=4
    $region2: #{encoder_decoder_forward.1} parent=1 // loop_pre_header
      _
    $region3: #{encoder_decoder_forward.1} parent=1 // loop_header
      %s15 = sphi 0, %s19
      %p16 = scmp.ge.s32.totalorder %s15, 4
      %s25 = sphi 0, %s27
      %s28 = sphi 0, %s25
      %s29 = sphi 0, %s28
      %s45 = sphi 0, %s29
      %s51 = sphi 0, %s53
      %s54 = sphi 0, %s51
      %s55 = sphi 0, %s54
      %s71 = sphi 0, %s55
      %s77 = sphi 0, %s79
      %s80 = sphi 0, %s77
      %s81 = sphi 0, %s80
      %s97 = sphi 0, %s81
      %s103 = sphi 0, %s105
      %s106 = sphi 0, %s103
      %s107 = sphi 0, %s106
      %s123 = sphi 0, %s107
      %s127 = sphi 0, %s127
      %s129 = sphi 0, %s127
      %s130 = sphi 0, %s129
      %s144 = sphi 0, %s130
      %s150 = sphi 0, %s152
      %s153 = sphi 0, %s150
      %s154 = sphi 0, %s153
      %s170 = sphi 0, %s154
    $region4: #{encoder_decoder_forward.1} parent=1 // loop_header_branch
      %18 = sbr.rel (%p16) target = $region8
    $region5: #{encoder_decoder_forward.1} parent=1 // loop_body
      %s20 = ssub.s32 %s15, 1
      %s21 = ssub.s32 %s15, 2
      %s22 = sadd.s32 %s15, 1
      %s23 = ssub.s32 %s15, %s22
      %p24 = scmp.eq.s32.totalorder %s23, 0
      %s26 = sadd.s32 %s25, 1
      %s27 = scalar_select %p24, %s25, %s26
      %p30 = pneg %p24
      %p31 = scmp.eq.s32.totalorder %s15, 1
      %p32 = por %p30, %p31
      %p33 = scmp.ne.s32.totalorder %s25, %s28
      %p34 = scmp.eq.s32.totalorder %s15, 0
      %p35 = por %p33, %p34
      %p36 = scmp.ne.s32.totalorder %s25, %s28
      %p37 = scmp.eq.s32.totalorder %s20, 1
      %p38 = por %p36, %p37
      %p39 = scmp.ne.s32.totalorder %s28, %s29
      %p40 = scmp.eq.s32.totalorder %s20, 0
      %p41 = por %p39, %p40
      %p42 = scmp.ne.s32.totalorder %s28, %s29
      %p43 = scmp.eq.s32.totalorder %s21, 1
      %p44 = por %p42, %p43
      %p46 = scmp.ne.s32.totalorder %s29, %s45
      %p47 = scmp.eq.s32.totalorder %s21, 0
      %p48 = por %p46, %p47
      %s49 = ssub.s32 %s15, %s22
      %p50 = scmp.eq.s32.totalorder %s49, 0
      %s52 = sadd.s32 %s51, 1
      %s53 = scalar_select %p50, %s51, %s52
      %p56 = pneg %p50
      %p57 = scmp.eq.s32.totalorder %s15, 1
      %p58 = por %p56, %p57
      %p59 = scmp.ne.s32.totalorder %s51, %s54
      %p60 = scmp.eq.s32.totalorder %s15, 0
      %p61 = por %p59, %p60
      %p62 = scmp.ne.s32.totalorder %s51, %s54
      %p63 = scmp.eq.s32.totalorder %s20, 1
      %p64 = por %p62, %p63
      %p65 = scmp.ne.s32.totalorder %s54, %s55
      %p66 = scmp.eq.s32.totalorder %s20, 0
      %p67 = por %p65, %p66
      %p68 = scmp.ne.s32.totalorder %s54, %s55
      %p69 = scmp.eq.s32.totalorder %s21, 1
      %p70 = por %p68, %p69
      %p72 = scmp.ne.s32.totalorder %s55, %s71
      %p73 = scmp.eq.s32.totalorder %s21, 0
      %p74 = por %p72, %p73
      %s75 = ssub.s32 %s15, %s22
      %p76 = scmp.eq.s32.totalorder %s75, 0
      %s78 = sadd.s32 %s77, 1
      %s79 = scalar_select %p76, %s77, %s78
      %p82 = pneg %p76
      %p83 = scmp.eq.s32.totalorder %s15, 1
      %p84 = por %p82, %p83
      %p85 = scmp.ne.s32.totalorder %s77, %s80
      %p86 = scmp.eq.s32.totalorder %s15, 0
      %p87 = por %p85, %p86
      %p88 = scmp.ne.s32.totalorder %s77, %s80
      %p89 = scmp.eq.s32.totalorder %s20, 1
      %p90 = por %p88, %p89
      %p91 = scmp.ne.s32.totalorder %s80, %s81
      %p92 = scmp.eq.s32.totalorder %s20, 0
      %p93 = por %p91, %p92
      %p94 = scmp.ne.s32.totalorder %s80, %s81
      %p95 = scmp.eq.s32.totalorder %s21, 1
      %p96 = por %p94, %p95
      %p98 = scmp.ne.s32.totalorder %s81, %s97
      %p99 = scmp.eq.s32.totalorder %s21, 0
      %p100 = por %p98, %p99
      %s101 = ssub.s32 %s15, %s22
      %p102 = scmp.eq.s32.totalorder %s101, 0
      %s104 = sadd.s32 %s103, 1
      %s105 = scalar_select %p102, %s103, %s104
      %p108 = pneg %p102
      %p109 = scmp.eq.s32.totalorder %s15, 1
      %p110 = por %p108, %p109
      %p111 = scmp.ne.s32.totalorder %s103, %s106
      %p112 = scmp.eq.s32.totalorder %s15, 0
      %p113 = por %p111, %p112
      %p114 = scmp.ne.s32.totalorder %s103, %s106
      %p115 = scmp.eq.s32.totalorder %s20, 1
      %p116 = por %p114, %p115
      %p117 = scmp.ne.s32.totalorder %s106, %s107
      %p118 = scmp.eq.s32.totalorder %s20, 0
      %p119 = por %p117, %p118
      %p120 = scmp.ne.s32.totalorder %s106, %s107
      %p121 = scmp.eq.s32.totalorder %s21, 1
      %p122 = por %p120, %p121
      %p124 = scmp.ne.s32.totalorder %s107, %s123
      %p125 = scmp.eq.s32.totalorder %s21, 0
      %p126 = por %p124, %p125
      %s128 = sadd.s32 %s127, 1
      %p131 = scmp.eq.s32.totalorder %s15, 1
      %p132 = scmp.ne.s32.totalorder %s127, %s129
      %p133 = scmp.eq.s32.totalorder %s15, 0
      %p134 = por %p132, %p133
      %p135 = scmp.ne.s32.totalorder %s127, %s129
      %p136 = scmp.eq.s32.totalorder %s20, 1
      %p137 = por %p135, %p136
      %p138 = scmp.ne.s32.totalorder %s129, %s130
      %p139 = scmp.eq.s32.totalorder %s20, 0
      %p140 = por %p138, %p139
      %p141 = scmp.ne.s32.totalorder %s129, %s130
      %p142 = scmp.eq.s32.totalorder %s21, 1
      %p143 = por %p141, %p142
      %p145 = scmp.ne.s32.totalorder %s130, %s144
      %p146 = scmp.eq.s32.totalorder %s21, 0
      %p147 = por %p145, %p146
      %s148 = ssub.s32 %s15, %s22
      %p149 = scmp.eq.s32.totalorder %s148, 0
      %s151 = sadd.s32 %s150, 1
      %s152 = scalar_select %p149, %s150, %s151
      %p155 = pneg %p149
      %p156 = scmp.eq.s32.totalorder %s15, 1
      %p157 = por %p155, %p156
      %p158 = scmp.ne.s32.totalorder %s150, %s153
      %p159 = scmp.eq.s32.totalorder %s15, 0
      %p160 = por %p158, %p159
      %p161 = scmp.ne.s32.totalorder %s150, %s153
      %p162 = scmp.eq.s32.totalorder %s20, 1
      %p163 = por %p161, %p162
      %p164 = scmp.ne.s32.totalorder %s153, %s154
      %p165 = scmp.eq.s32.totalorder %s20, 0
      %p166 = por %p164, %p165
      %p167 = scmp.ne.s32.totalorder %s153, %s154
      %p168 = scmp.eq.s32.totalorder %s21, 1
      %p169 = por %p167, %p168
      %p171 = scmp.ne.s32.totalorder %s154, %s170
      %p172 = scmp.eq.s32.totalorder %s21, 0
      %p173 = por %p171, %p172
      %p174 = scmp.le.s32.totalorder 1, %s15
      %p175 = scmp.lt.s32.totalorder %s15, 3
      %p176 = pnand %p174, %p175
      %p177 = pneg %p176
      // Predicated region
      $region9: #{encoder_decoder_forward.1} parent=5 // pred_check
        _
      $region10: #{encoder_decoder_forward.1} parent=5 // pred_check_branch
        %179 = sbr.rel (%p176) target = $region12
      $region11: #{encoder_decoder_forward.1} parent=5 // pred_region
        %s180 = ssub.s32 %s15, 1
        // Predicated region
        $region13: #{encoder_decoder_forward.1} parent=11 // pred_check
          %p181 = pneg %p140
        $region14: #{encoder_decoder_forward.1} parent=11 // pred_check_branch
          %183 = sbr.rel (%p181) target = $region16
        $region15: #{encoder_decoder_forward.1} parent=11 // pred_region
          %s185 = ssub.s32 18432, 18432
          %186 = vsyncadd [#allocation3], %s185
          %s187 = sshll.u32 [#allocation2], 4
          %s188 = int_to_ptr.vmem [resolvable:$true] %s187
          %193 = dma.hbm_to_vmem [thread:$0]  %s4, 18432, %s188, [#allocation3], 128, 128, 8
        $region16: #{encoder_decoder_forward.1} parent=11 // pred_fallthru
          _
      $region12: #{encoder_decoder_forward.1} parent=5 // pred_fallthru
        _
      %p194 = scmp.lt.s32.totalorder %s15, 2
      // Predicated region
      $region17: #{encoder_decoder_forward.1} parent=5 // pred_check
        %p195 = pneg %p194
      $region18: #{encoder_decoder_forward.1} parent=5 // pred_check_branch
        %197 = sbr.rel (%p195) target = $region20
      $region19: #{encoder_decoder_forward.1} parent=5 // pred_region
        // Predicated region
        $region21: #{encoder_decoder_forward.1} parent=19 // pred_check
          %p198 = pneg %p35
        $region22: #{encoder_decoder_forward.1} parent=19 // pred_check_branch
          %200 = sbr.rel (%p198) target = $region24
        $region23: #{encoder_decoder_forward.1} parent=19 // pred_region
          %p201 = scmp.lt.s32.totalorder %s15, 1
          %s202 = scalar_select %p201, %s15, 1
          %s203 = smul.addr %s202, 8
          %s204 = scalar_lea.vmem %s0, %s203
        $region24: #{encoder_decoder_forward.1} parent=19 // pred_fallthru
          _
        // Predicated region
        $region25: #{encoder_decoder_forward.1} parent=19 // pred_check
          %p205 = pneg %p61
        $region26: #{encoder_decoder_forward.1} parent=19 // pred_check_branch
          %207 = sbr.rel (%p205) target = $region28
        $region27: #{encoder_decoder_forward.1} parent=19 // pred_region
          %p208 = scmp.lt.s32.totalorder %s15, 1
          %s209 = scalar_select %p208, %s15, 1
          %s210 = smul.addr %s209, 8
          %s211 = scalar_lea.vmem %s1, %s210
        $region28: #{encoder_decoder_forward.1} parent=19 // pred_fallthru
          _
        // Predicated region
        $region29: #{encoder_decoder_forward.1} parent=19 // pred_check
          %p212 = pneg %p87
        $region30: #{encoder_decoder_forward.1} parent=19 // pred_check_branch
          %214 = sbr.rel (%p212) target = $region32
        $region31: #{encoder_decoder_forward.1} parent=19 // pred_region
          %p215 = scmp.lt.s32.totalorder %s15, 1
          %s216 = scalar_select %p215, %s15, 1
          %s217 = scalar_lea.vmem %s2, %s216
        $region32: #{encoder_decoder_forward.1} parent=19 // pred_fallthru
          _
        // Predicated region
        $region33: #{encoder_decoder_forward.1} parent=19 // pred_check
          %p218 = pneg %p113
        $region34: #{encoder_decoder_forward.1} parent=19 // pred_check_branch
          %220 = sbr.rel (%p218) target = $region36
        $region35: #{encoder_decoder_forward.1} parent=19 // pred_region
          %p221 = scmp.lt.s32.totalorder %s15, 1
          %s222 = scalar_select %p221, %s15, 1
          %s223 = smul.addr %s222, 8
          %s224 = scalar_lea.vmem %s3, %s223
        $region36: #{encoder_decoder_forward.1} parent=19 // pred_fallthru
          _
      $region20: #{encoder_decoder_forward.1} parent=5 // pred_fallthru
        _
      %p225 = scmp.le.s32.totalorder 1, %s15
      %p226 = scmp.lt.s32.totalorder %s15, 3
      %p227 = pnand %p225, %p226
      %p228 = pneg %p227
      // Predicated region
      $region37: #{encoder_decoder_forward.1} parent=5 // pred_check
        _
      $region38: #{encoder_decoder_forward.1} parent=5 // pred_check_branch
        %230 = sbr.rel (%p227) target = $region40
      $region39: #{encoder_decoder_forward.1} parent=5 // pred_region
        %s231 = ssub.s32 %s15, 1
        // Predicated region
        $region41: #{encoder_decoder_forward.1} parent=39 // pred_check
          %p232 = pneg %p140
        $region42: #{encoder_decoder_forward.1} parent=39 // pred_check_branch
          %234 = sbr.rel (%p232) target = $region44
        $region43: #{encoder_decoder_forward.1} parent=39 // pred_region
          %235 = dma.done [#allocation3], 18432
        $region44: #{encoder_decoder_forward.1} parent=39 // pred_fallthru
          _
        %p236 = scmp.lt.s32.totalorder %s20, 1
        %s237 = scalar_select %p236, %s20, 1
        %s238 = smul.addr %s237, 8
        %s239 = scalar_lea.vmem %s0, %s238
        %p240 = pneg %p41
        %p241 = pneg %p38
        %p242 = scmp.lt.s32.totalorder %s20, 1
        %s243 = scalar_select %p242, %s20, 1
        %s244 = smul.addr %s243, 8
        %s245 = scalar_lea.vmem %s1, %s244
        %p246 = pneg %p67
        %p247 = pneg %p64
        %p248 = scmp.lt.s32.totalorder %s20, 1
        %s249 = scalar_select %p248, %s20, 1
        %s250 = scalar_lea.vmem %s2, %s249
        %p251 = pneg %p93
        %p252 = pneg %p90
        %p253 = scmp.lt.s32.totalorder %s20, 1
        %s254 = scalar_select %p253, %s20, 1
        %s255 = smul.addr %s254, 8
        %s256 = scalar_lea.vmem %s3, %s255
        %p257 = pneg %p119
        %p258 = pneg %p116
        %p259 = pneg %p140
        %p260 = pneg %p137
        %p261 = pneg %p166
        %p262 = pneg %p163
        %s263 = sand.u32 %s153, 1
        %s264 = scalar_lea.sflag [#allocation4], %s263
        %s265 = sand.u32 %s153, 1
        %s266 = smul.addr %s265, 8
        %s267 = scalar_lea.vmem [#allocation5], %s266
        %p268 = scmp.lt.s32.totalorder %s20, 1
        %s269 = scalar_select %p268, %s20, 1
        %s270 = smul.addr %s269, 8
        %s271 = scalar_lea.vmem %s0, %s270
        %p272 = scmp.lt.s32.totalorder %s20, 1
        %s273 = scalar_select %p272, %s20, 1
        %s274 = smul.addr %s273, 8
        %s275 = scalar_lea.vmem %s1, %s274
        %p276 = scmp.lt.s32.totalorder %s20, 1
        %s277 = scalar_select %p276, %s20, 1
        %s278 = scalar_lea.vmem %s2, %s277
        %p279 = scmp.lt.s32.totalorder %s20, 1
        %s280 = scalar_select %p279, %s20, 1
        %s281 = smul.addr %s280, 8
        %s282 = scalar_lea.vmem %s3, %s281
        %v283 = vld [vmem:[%s278] sm:$0x1]
        %v284 = vld [vmem:[%s282] sm:$0xff]
        %v285 = vld [vmem:[%s271] sm:$0xff]
        %v286 = vld [vmem:[#allocation2] sm:$0xff]
        %v287 = vld [vmem:[#allocation2 + $0x8] sm:$0xff]
        %v288 = vld [vmem:[#allocation2 + $0x10] sm:$0xff]
        %v289 = vld [vmem:[#allocation2 + $0x18] sm:$0xff]
        %v290 = vld [vmem:[#allocation2 + $0x20] sm:$0xff]
        %v291 = vld [vmem:[#allocation2 + $0x28] sm:$0xff]
        %v292 = vlaneseq
        %v293 = vand.u32 %v292, 127
        %294 = vset.pattern.permute.xlu0 0
        %295 = vperm.xlu0 %294, %v285
        %v296 = vpop.permute.xlu0 %295
        %vm297 = vcmp.eq.s32.totalorder %v293, %v296
        %v298 = vsel %vm297, 1, 0
        %v299 = vcvt.s32.f32 %v298
        %vm300 = vcmask 392192
        %v302 = vsel %vm300, %v299, 0
        %304 = vmatprep.subr.mxu0 0.0
        %305 = vmatpush1.msra.mxu0 %v286
        %306 = vmatprep.subr.mxu0 0.0
        %307 = vmatpush1.msra.mxu0 %v287
        %308 = vmatprep.subr.mxu0 0.0
        %309 = vmatpush1.msra.mxu0 %v288
        %310 = vmatprep.subr.mxu0 0.0
        %311 = vmatpush1.msra.mxu0 %v289
        %312 = vmatprep.subr.mxu0 0.0
        %313 = vmatpush1.msra.mxu0 %v290
        %314 = vmatprep.subr.mxu0 0.0
        %315 = vmatpush1.msra.mxu0 %v291
        %316 = vmatprep.subr.mxu0 0.0
        %317 = vmatpush1.msra.mxu0 0.0
        %318 = vmatprep.subr.mxu0 0.0
        %319 = vmatpush1.msra.mxu0 0.0
        %320 = vmatprep.subr.mxu0 0.0
        %321 = vmatpush1.msra.mxu0 0.0
        %322 = vmatprep.subr.mxu0 0.0
        %323 = vmatpush1.msra.mxu0 0.0
        %324 = vmatprep.subr.mxu0 0.0
        %325 = vmatpush1.msra.mxu0 0.0
        %326 = vmatprep.subr.mxu0 0.0
        %327 = vmatpush1.msra.mxu0 0.0
        %328 = vmatprep.subr.mxu0 0.0
        %329 = vmatpush1.msra.mxu0 0.0
        %330 = vmatprep.subr.mxu0 0.0
        %331 = vmatpush1.msra.mxu0 0.0
        %332 = vmatprep.subr.mxu0 0.0
        %333 = vmatpush1.msra.mxu0 0.0
        %334 = vmatprep.subr.mxu0 0.0
        %335 = vmatpush1.msra.mxu0 0.0
        %336 = vmatprep.subr.mxu0 0.0
        %337 = vmatpush1.msra.mxu0 0.0
        %338 = vmatprep.subr.mxu0 0.0
        %339 = vmatpush1.msra.mxu0 0.0
        %340 = vmatprep.subr.mxu0 0.0
        %341 = vmatpush1.msra.mxu0 0.0
        %342 = vmatprep.subr.mxu0 0.0
        %343 = vmatpush1.msra.mxu0 0.0
        %344 = vmatprep.subr.mxu0 0.0
        %345 = vmatpush1.msra.mxu0 0.0
        %346 = vmatprep.subr.mxu0 0.0
        %347 = vmatpush1.msra.mxu0 0.0
        %348 = vmatprep.subr.mxu0 0.0
        %349 = vmatpush1.msra.mxu0 0.0
        %350 = vmatprep.subr.mxu0 0.0
        %351 = vmatpush1.msra.mxu0 0.0
        %352 = vmatprep.subr.mxu0 0.0
        %353 = vmatpush1.msra.mxu0 0.0
        %354 = vmatprep.subr.mxu0 0.0
        %355 = vmatpush1.msra.mxu0 0.0
        %356 = vmatprep.subr.mxu0 0.0
        %357 = vmatpush1.msra.mxu0 0.0
        %358 = vmatprep.subr.mxu0 0.0
        %359 = vmatpush1.msra.mxu0 0.0
        %360 = vmatprep.subr.mxu0 0.0
        %361 = vmatpush1.msra.mxu0 0.0
        %362 = vmatprep.subr.mxu0 0.0
        %363 = vmatpush1.msra.mxu0 0.0
        %364 = vmatprep.subr.mxu0 0.0
        %365 = vmatpush1.msra.mxu0 0.0
        %366 = vmatprep.subr.mxu0 0.0
        %367 = vmatpush1.msra.mxu0 0.0
        %368 = vmatprep.mubr.f32.mxu0 0.0
        %369 = vmatmul.mubr.f32.gmra.mrb[0].mxu0 %v302
        %v370 = vpop.f32.mrb[0].mxu0
        %v371 = vadd.f32 0.0, %v370
        %v372 = vpop.f32.mrb[0].mxu0
        %373 = vdwg.mxu0
        %v374 = vmul.f32 %v371, 5.656854
        %v375 = vld [vmem:[#allocation2 + $0x118] sm:$0x3]
        %v376 = vld [vmem:[#allocation2 + $0x120] sm:$0x3]
        %vm377 = vcmask 261120
        %v378 = vsel %vm377, %v374, 0.0
        %379 = vadd.xlane.f32.xlu0 %v378
        %v380 = vpop.xlane.xlu0 %379
        %v381 = vrcp.pop 32.0
        %v382 = vmul.f32 %v380, %v381
        %v383 = vsub.f32 %v374, %v382
        %v384 = vmul.f32 %v383, %v383
        %v385 = vsel %vm377, %v384, 0.0
        %386 = vadd.xlane.f32.xlu0 %v385
        %v387 = vpop.xlane.xlu0 %386
        %v388 = vmul.f32 %v387, 0.032258064
        %v389 = vrsqrt.pop %v388
        %v390 = vmul.f32 %v388, %v389
        %vm391 = vcmp.eq.f32.partialorder %v388, inf
        %v392 = vsel %vm391, %v388, %v390
        %vm393 = vcmp.eq.f32.partialorder %v388, 0.0
        %v394 = vand.u32 %v388, 2147483648
        %v395 = vsel %vm393, %v394, %v392
        %v396 = vlaneseq
        %v397 = vshrl.u32 %v396, 7
        %v398 = vsub.s32 0, %v397
        %v399 = vrot.slane %v375, %v398
        %v400 = vmul.f32 %v399, %v383
        %v401 = vadd.f32 %v395, 1e-06
        %v402 = vrcp.pop %v401
        %v403 = vmul.f32 %v400, %v402
        %v404 = vlaneseq
        %v405 = vshrl.u32 %v404, 7
        %v406 = vsub.s32 0, %v405
        %v407 = vrot.slane %v376, %v406
        %v408 = vadd.f32 %v403, %v407
        %v409 = vld [vmem:[#allocation2 + $0x58] sm:$0xff]
        %v410 = vld [vmem:[#allocation2 + $0x60] sm:$0xff]
        %v411 = vld [vmem:[#allocation2 + $0x68] sm:$0xff]
        %v412 = vld [vmem:[#allocation2 + $0x70] sm:$0xff]
        %v413 = vld [vmem:[#allocation2 + $0x78] sm:$0x1]
        %v414 = vld [vmem:[#allocation2 + $0x80] sm:$0xff]
        %v415 = vld [vmem:[#allocation2 + $0x88] sm:$0xff]
        %v416 = vld [vmem:[#allocation2 + $0x90] sm:$0xff]
        %v417 = vld [vmem:[#allocation2 + $0x98] sm:$0xff]
        %v418 = vld [vmem:[#allocation2 + $0xa0] sm:$0x1]
        %v419 = vlaneseq
        %v420 = vshrl.u32 %v419, 7
        %v421 = vsub.s32 0, %v420
        %v422 = vrot.slane %v413, %v421
        %v424 = vsel %vm377, %v408, 0
        %426 = vmatprep.subr.mxu0 0.0
        %427 = vmatpush1.msra.mxu0 %v409
        %428 = vmatprep.subr.mxu0 0.0
        %429 = vmatpush1.msra.mxu0 %v410
        %430 = vmatprep.subr.mxu0 0.0
        %431 = vmatpush1.msra.mxu0 %v411
        %432 = vmatprep.subr.mxu0 0.0
        %433 = vmatpush1.msra.mxu0 %v412
        %434 = vmatprep.subr.mxu0 0.0
        %435 = vmatpush1.msra.mxu0 0.0
        %436 = vmatprep.subr.mxu0 0.0
        %437 = vmatpush1.msra.mxu0 0.0
        %438 = vmatprep.subr.mxu0 0.0
        %439 = vmatpush1.msra.mxu0 0.0
        %440 = vmatprep.subr.mxu0 0.0
        %441 = vmatpush1.msra.mxu0 0.0
        %442 = vmatprep.subr.mxu0 0.0
        %443 = vmatpush1.msra.mxu0 0.0
        %444 = vmatprep.subr.mxu0 0.0
        %445 = vmatpush1.msra.mxu0 0.0
        %446 = vmatprep.subr.mxu0 0.0
        %447 = vmatpush1.msra.mxu0 0.0
        %448 = vmatprep.subr.mxu0 0.0
        %449 = vmatpush1.msra.mxu0 0.0
        %450 = vmatprep.subr.mxu0 0.0
        %451 = vmatpush1.msra.mxu0 0.0
        %452 = vmatprep.subr.mxu0 0.0
        %453 = vmatpush1.msra.mxu0 0.0
        %454 = vmatprep.subr.mxu0 0.0
        %455 = vmatpush1.msra.mxu0 0.0
        %456 = vmatprep.subr.mxu0 0.0
        %457 = vmatpush1.msra.mxu0 0.0
        %458 = vmatprep.subr.mxu0 0.0
        %459 = vmatpush1.msra.mxu0 0.0
        %460 = vmatprep.subr.mxu0 0.0
        %461 = vmatpush1.msra.mxu0 0.0
        %462 = vmatprep.subr.mxu0 0.0
        %463 = vmatpush1.msra.mxu0 0.0
        %464 = vmatprep.subr.mxu0 0.0
        %465 = vmatpush1.msra.mxu0 0.0
        %466 = vmatprep.subr.mxu0 0.0
        %467 = vmatpush1.msra.mxu0 0.0
        %468 = vmatprep.subr.mxu0 0.0
        %469 = vmatpush1.msra.mxu0 0.0
        %470 = vmatprep.subr.mxu0 0.0
        %471 = vmatpush1.msra.mxu0 0.0
        %472 = vmatprep.subr.mxu0 0.0
        %473 = vmatpush1.msra.mxu0 0.0
        %474 = vmatprep.subr.mxu0 0.0
        %475 = vmatpush1.msra.mxu0 0.0
        %476 = vmatprep.subr.mxu0 0.0
        %477 = vmatpush1.msra.mxu0 0.0
        %478 = vmatprep.subr.mxu0 0.0
        %479 = vmatpush1.msra.mxu0 0.0
        %480 = vmatprep.subr.mxu0 0.0
        %481 = vmatpush1.msra.mxu0 0.0
        %482 = vmatprep.subr.mxu0 0.0
        %483 = vmatpush1.msra.mxu0 0.0
        %484 = vmatprep.subr.mxu0 0.0
        %485 = vmatpush1.msra.mxu0 0.0
        %486 = vmatprep.subr.mxu0 0.0
        %487 = vmatpush1.msra.mxu0 0.0
        %488 = vmatprep.subr.mxu0 0.0
        %489 = vmatpush1.msra.mxu0 0.0
        %490 = vmatprep.mubr.f32.mxu0 0.0
        %491 = vmatmul.mubr.f32.gmra.mrb[0].mxu0 %v424
        %v492 = vpop.f32.mrb[0].mxu0
        %v493 = vadd.f32 %v422, %v492
        %v494 = vpop.f32.mrb[0].mxu0
        %495 = vdwg.mxu0
        %v496 = vmul.f32 %v493, 0.35355338
        %v498 = vlaneseq
        %v499 = vshrl.u32 %v498, 7
        %v500 = vsub.s32 0, %v499
        %v501 = vrot.slane %v283, %v500
        %504 = vrot.lane.b32.xlu0 %v493, 96
        %v505 = vpop.permute.xlu0 %504
        %vm506 = vcmask 64512
        %v508 = vsel %vm506, %v496, 0
        %v510 = vsel %vm506, %v505, 0
        %512 = vmatprep.subr.mxu0 0.0
        %513 = vmatpush1.xpose.msra.mxu0 %v510
        %514 = vmatprep.subr.mxu0 0.0
        %515 = vmatpush1.xpose.msra.mxu0 0.0
        %516 = vmatprep.subr.mxu0 0.0
        %517 = vmatpush1.xpose.msra.mxu0 0.0
        %518 = vmatprep.subr.mxu0 0.0
        %519 = vmatpush1.xpose.msra.mxu0 0.0
        %520 = vmatprep.subr.mxu0 0.0
        %521 = vmatpush1.xpose.msra.mxu0 0.0
        %522 = vmatprep.subr.mxu0 0.0
        %523 = vmatpush1.xpose.msra.mxu0 0.0
        %524 = vmatprep.subr.mxu0 0.0
        %525 = vmatpush1.xpose.msra.mxu0 0.0
        %526 = vmatprep.subr.mxu0 0.0
        %527 = vmatpush1.xpose.msra.mxu0 0.0
        %528 = vmatprep.subr.mxu0 0.0
        %529 = vmatpush1.xpose.msra.mxu0 0.0
        %530 = vmatprep.subr.mxu0 0.0
        %531 = vmatpush1.xpose.msra.mxu0 0.0
        %532 = vmatprep.subr.mxu0 0.0
        %533 = vmatpush1.xpose.msra.mxu0 0.0
        %534 = vmatprep.subr.mxu0 0.0
        %535 = vmatpush1.xpose.msra.mxu0 0.0
        %536 = vmatprep.subr.mxu0 0.0
        %537 = vmatpush1.xpose.msra.mxu0 0.0
        %538 = vmatprep.subr.mxu0 0.0
        %539 = vmatpush1.xpose.msra.mxu0 0.0
        %540 = vmatprep.subr.mxu0 0.0
        %541 = vmatpush1.xpose.msra.mxu0 0.0
        %542 = vmatprep.subr.mxu0 0.0
        %543 = vmatpush1.xpose.msra.mxu0 0.0
        %544 = vmatprep.subr.mxu0 0.0
        %545 = vmatpush1.xpose.msra.mxu0 0.0
        %546 = vmatprep.subr.mxu0 0.0
        %547 = vmatpush1.xpose.msra.mxu0 0.0
        %548 = vmatprep.subr.mxu0 0.0
        %549 = vmatpush1.xpose.msra.mxu0 0.0
        %550 = vmatprep.subr.mxu0 0.0
        %551 = vmatpush1.xpose.msra.mxu0 0.0
        %552 = vmatprep.subr.mxu0 0.0
        %553 = vmatpush1.xpose.msra.mxu0 0.0
        %554 = vmatprep.subr.mxu0 0.0
        %555 = vmatpush1.xpose.msra.mxu0 0.0
        %556 = vmatprep.subr.mxu0 0.0
        %557 = vmatpush1.xpose.msra.mxu0 0.0
        %558 = vmatprep.subr.mxu0 0.0
        %559 = vmatpush1.xpose.msra.mxu0 0.0
        %560 = vmatprep.subr.mxu0 0.0
        %561 = vmatpush1.xpose.msra.mxu0 0.0
        %562 = vmatprep.subr.mxu0 0.0
        %563 = vmatpush1.xpose.msra.mxu0 0.0
        %564 = vmatprep.subr.mxu0 0.0
        %565 = vmatpush1.xpose.msra.mxu0 0.0
        %566 = vmatprep.subr.mxu0 0.0
        %567 = vmatpush1.xpose.msra.mxu0 0.0
        %568 = vmatprep.subr.mxu0 0.0
        %569 = vmatpush1.xpose.msra.mxu0 0.0
        %570 = vmatprep.subr.mxu0 0.0
        %571 = vmatpush1.xpose.msra.mxu0 0.0
        %572 = vmatprep.subr.mxu0 0.0
        %573 = vmatpush1.xpose.msra.mxu0 0.0
        %574 = vmatprep.subr.mxu0 0.0
        %575 = vmatpush1.xpose.msra.mxu0 0.0
        %576 = vmatprep.mubr.f32.mxu0 0.0
        %577 = vmatmul.mubr.f32.gmra.mrb[0].mxu0 %v508
        %v578 = vpop.f32.mrb[0].mxu0
        %v579 = vadd.f32 %v501, %v578
        %v580 = vpop.f32.mrb[0].mxu0
        %581 = vdwg.mxu0
        %v582 = vsel %vm506, %v579, -inf
        %583 = vmax.xlane.f32.xlu0 %v582
        %v584 = vpop.xlane.xlu0 %583
        %v585 = vsub.f32 %v579, %v584
        %v586 = vmul.f32 %v585, 1.442695
        %v587 = vpow.pop %v586
        %v588 = vsel %vm506, %v587, 0.0
        %589 = vadd.xlane.f32.xlu0 %v588
        %v590 = vpop.xlane.xlu0 %589
        %v591 = vrcp.pop %v590
        %v592 = vmul.f32 %v587, %v591
        %593 = vrot.lane.b32.xlu0 %v493, 64
        %v594 = vpop.permute.xlu0 %593
        %v597 = vsel %vm506, %v592, 0
        %599 = vmatprep.subr.mxu0 0.0
        %600 = vmatpush1.msra.mxu0 %v594
        %601 = vmatprep.subr.mxu0 0.0
        %602 = vmatpush1.msra.mxu0 0.0
        %603 = vmatprep.subr.mxu0 0.0
        %604 = vmatpush1.msra.mxu0 0.0
        %605 = vmatprep.subr.mxu0 0.0
        %606 = vmatpush1.msra.mxu0 0.0
        %607 = vmatprep.subr.mxu0 0.0
        %608 = vmatpush1.msra.mxu0 0.0
        %609 = vmatprep.subr.mxu0 0.0
        %610 = vmatpush1.msra.mxu0 0.0
        %611 = vmatprep.subr.mxu0 0.0
        %612 = vmatpush1.msra.mxu0 0.0
        %613 = vmatprep.subr.mxu0 0.0
        %614 = vmatpush1.msra.mxu0 0.0
        %615 = vmatprep.subr.mxu0 0.0
        %616 = vmatpush1.msra.mxu0 0.0
        %617 = vmatprep.subr.mxu0 0.0
        %618 = vmatpush1.msra.mxu0 0.0
        %619 = vmatprep.subr.mxu0 0.0
        %620 = vmatpush1.msra.mxu0 0.0
        %621 = vmatprep.subr.mxu0 0.0
        %622 = vmatpush1.msra.mxu0 0.0
        %623 = vmatprep.subr.mxu0 0.0
        %624 = vmatpush1.msra.mxu0 0.0
        %625 = vmatprep.subr.mxu0 0.0
        %626 = vmatpush1.msra.mxu0 0.0
        %627 = vmatprep.subr.mxu0 0.0
        %628 = vmatpush1.msra.mxu0 0.0
        %629 = vmatprep.subr.mxu0 0.0
        %630 = vmatpush1.msra.mxu0 0.0
        %631 = vmatprep.subr.mxu0 0.0
        %632 = vmatpush1.msra.mxu0 0.0
        %633 = vmatprep.subr.mxu0 0.0
        %634 = vmatpush1.msra.mxu0 0.0
        %635 = vmatprep.subr.mxu0 0.0
        %636 = vmatpush1.msra.mxu0 0.0
        %637 = vmatprep.subr.mxu0 0.0
        %638 = vmatpush1.msra.mxu0 0.0
        %639 = vmatprep.subr.mxu0 0.0
        %640 = vmatpush1.msra.mxu0 0.0
        %641 = vmatprep.subr.mxu0 0.0
        %642 = vmatpush1.msra.mxu0 0.0
        %643 = vmatprep.subr.mxu0 0.0
        %644 = vmatpush1.msra.mxu0 0.0
        %645 = vmatprep.subr.mxu0 0.0
        %646 = vmatpush1.msra.mxu0 0.0
        %647 = vmatprep.subr.mxu0 0.0
        %648 = vmatpush1.msra.mxu0 0.0
        %649 = vmatprep.subr.mxu0 0.0
        %650 = vmatpush1.msra.mxu0 0.0
        %651 = vmatprep.subr.mxu0 0.0
        %652 = vmatpush1.msra.mxu0 0.0
        %653 = vmatprep.subr.mxu0 0.0
        %654 = vmatpush1.msra.mxu0 0.0
        %655 = vmatprep.subr.mxu0 0.0
        %656 = vmatpush1.msra.mxu0 0.0
        %657 = vmatprep.subr.mxu0 0.0
        %658 = vmatpush1.msra.mxu0 0.0
        %659 = vmatprep.subr.mxu0 0.0
        %660 = vmatpush1.msra.mxu0 0.0
        %661 = vmatprep.subr.mxu0 0.0
        %662 = vmatpush1.msra.mxu0 0.0
        %663 = vmatprep.mubr.f32.mxu0 0.0
        %664 = vmatmul.mubr.f32.gmra.mrb[0].mxu0 %v597
        %v665 = vpop.f32.mrb[0].mxu0
        %v666 = vadd.f32 0.0, %v665
        %v667 = vpop.f32.mrb[0].mxu0
        %668 = vdwg.mxu0
        %669 = vrot.lane.b32.xlu0 %v496, 120
        %v670 = vpop.permute.xlu0 %669
        %671 = vrot.lane.b32.xlu0 %v493, 88
        %v672 = vpop.permute.xlu0 %671
        %v673 = vsel %vm506, %v670, 0
        %v675 = vsel %vm506, %v672, 0
        %677 = vmatprep.subr.mxu0 0.0
        %678 = vmatpush1.xpose.msra.mxu0 %v675
        %679 = vmatprep.subr.mxu0 0.0
        %680 = vmatpush1.xpose.msra.mxu0 0.0
        %681 = vmatprep.subr.mxu0 0.0
        %682 = vmatpush1.xpose.msra.mxu0 0.0
        %683 = vmatprep.subr.mxu0 0.0
        %684 = vmatpush1.xpose.msra.mxu0 0.0
        %685 = vmatprep.subr.mxu0 0.0
        %686 = vmatpush1.xpose.msra.mxu0 0.0
        %687 = vmatprep.subr.mxu0 0.0
        %688 = vmatpush1.xpose.msra.mxu0 0.0
        %689 = vmatprep.subr.mxu0 0.0
        %690 = vmatpush1.xpose.msra.mxu0 0.0
        %691 = vmatprep.subr.mxu0 0.0
        %692 = vmatpush1.xpose.msra.mxu0 0.0
        %693 = vmatprep.subr.mxu0 0.0
        %694 = vmatpush1.xpose.msra.mxu0 0.0
        %695 = vmatprep.subr.mxu0 0.0
        %696 = vmatpush1.xpose.msra.mxu0 0.0
        %697 = vmatprep.subr.mxu0 0.0
        %698 = vmatpush1.xpose.msra.mxu0 0.0
        %699 = vmatprep.subr.mxu0 0.0
        %700 = vmatpush1.xpose.msra.mxu0 0.0
        %701 = vmatprep.subr.mxu0 0.0
        %702 = vmatpush1.xpose.msra.mxu0 0.0
        %703 = vmatprep.subr.mxu0 0.0
        %704 = vmatpush1.xpose.msra.mxu0 0.0
        %705 = vmatprep.subr.mxu0 0.0
        %706 = vmatpush1.xpose.msra.mxu0 0.0
        %707 = vmatprep.subr.mxu0 0.0
        %708 = vmatpush1.xpose.msra.mxu0 0.0
        %709 = vmatprep.subr.mxu0 0.0
        %710 = vmatpush1.xpose.msra.mxu0 0.0
        %711 = vmatprep.subr.mxu0 0.0
        %712 = vmatpush1.xpose.msra.mxu0 0.0
        %713 = vmatprep.subr.mxu0 0.0
        %714 = vmatpush1.xpose.msra.mxu0 0.0
        %715 = vmatprep.subr.mxu0 0.0
        %716 = vmatpush1.xpose.msra.mxu0 0.0
        %717 = vmatprep.subr.mxu0 0.0
        %718 = vmatpush1.xpose.msra.mxu0 0.0
        %719 = vmatprep.subr.mxu0 0.0
        %720 = vmatpush1.xpose.msra.mxu0 0.0
        %721 = vmatprep.subr.mxu0 0.0
        %722 = vmatpush1.xpose.msra.mxu0 0.0
        %723 = vmatprep.subr.mxu0 0.0
        %724 = vmatpush1.xpose.msra.mxu0 0.0
        %725 = vmatprep.subr.mxu0 0.0
        %726 = vmatpush1.xpose.msra.mxu0 0.0
        %727 = vmatprep.subr.mxu0 0.0
        %728 = vmatpush1.xpose.msra.mxu0 0.0
        %729 = vmatprep.subr.mxu0 0.0
        %730 = vmatpush1.xpose.msra.mxu0 0.0
        %731 = vmatprep.subr.mxu0 0.0
        %732 = vmatpush1.xpose.msra.mxu0 0.0
        %733 = vmatprep.subr.mxu0 0.0
        %734 = vmatpush1.xpose.msra.mxu0 0.0
        %735 = vmatprep.subr.mxu0 0.0
        %736 = vmatpush1.xpose.msra.mxu0 0.0
        %737 = vmatprep.subr.mxu0 0.0
        %738 = vmatpush1.xpose.msra.mxu0 0.0
        %739 = vmatprep.subr.mxu0 0.0
        %740 = vmatpush1.xpose.msra.mxu0 0.0
        %741 = vmatprep.mubr.f32.mxu0 0.0
        %742 = vmatmul.mubr.f32.gmra.mrb[0].mxu0 %v673
        %v743 = vpop.f32.mrb[0].mxu0
        %v744 = vadd.f32 %v501, %v743
        %v745 = vpop.f32.mrb[0].mxu0
        %746 = vdwg.mxu0
        %v747 = vsel %vm506, %v744, -inf
        %748 = vmax.xlane.f32.xlu0 %v747
        %v749 = vpop.xlane.xlu0 %748
        %v750 = vsub.f32 %v744, %v749
        %v751 = vmul.f32 %v750, 1.442695
        %v752 = vpow.pop %v751
        %v753 = vsel %vm506, %v752, 0.0
        %754 = vadd.xlane.f32.xlu0 %v753
        %v755 = vpop.xlane.xlu0 %754
        %v756 = vrcp.pop %v755
        %v757 = vmul.f32 %v752, %v756
        %758 = vrot.lane.b32.xlu0 %v493, 56
        %v759 = vpop.permute.xlu0 %758
        %v762 = vsel %vm506, %v757, 0
        %764 = vmatprep.subr.mxu0 0.0
        %765 = vmatpush1.msra.mxu0 %v759
        %766 = vmatprep.subr.mxu0 0.0
        %767 = vmatpush1.msra.mxu0 0.0
        %768 = vmatprep.subr.mxu0 0.0
        %769 = vmatpush1.msra.mxu0 0.0
        %770 = vmatprep.subr.mxu0 0.0
        %771 = vmatpush1.msra.mxu0 0.0
        %772 = vmatprep.subr.mxu0 0.0
        %773 = vmatpush1.msra.mxu0 0.0
        %774 = vmatprep.subr.mxu0 0.0
        %775 = vmatpush1.msra.mxu0 0.0
        %776 = vmatprep.subr.mxu0 0.0
        %777 = vmatpush1.msra.mxu0 0.0
        %778 = vmatprep.subr.mxu0 0.0
        %779 = vmatpush1.msra.mxu0 0.0
        %780 = vmatprep.subr.mxu0 0.0
        %781 = vmatpush1.msra.mxu0 0.0
        %782 = vmatprep.subr.mxu0 0.0
        %783 = vmatpush1.msra.mxu0 0.0
        %784 = vmatprep.subr.mxu0 0.0
        %785 = vmatpush1.msra.mxu0 0.0
        %786 = vmatprep.subr.mxu0 0.0
        %787 = vmatpush1.msra.mxu0 0.0
        %788 = vmatprep.subr.mxu0 0.0
        %789 = vmatpush1.msra.mxu0 0.0
        %790 = vmatprep.subr.mxu0 0.0
        %791 = vmatpush1.msra.mxu0 0.0
        %792 = vmatprep.subr.mxu0 0.0
        %793 = vmatpush1.msra.mxu0 0.0
        %794 = vmatprep.subr.mxu0 0.0
        %795 = vmatpush1.msra.mxu0 0.0
        %796 = vmatprep.subr.mxu0 0.0
        %797 = vmatpush1.msra.mxu0 0.0
        %798 = vmatprep.subr.mxu0 0.0
        %799 = vmatpush1.msra.mxu0 0.0
        %800 = vmatprep.subr.mxu0 0.0
        %801 = vmatpush1.msra.mxu0 0.0
        %802 = vmatprep.subr.mxu0 0.0
        %803 = vmatpush1.msra.mxu0 0.0
        %804 = vmatprep.subr.mxu0 0.0
        %805 = vmatpush1.msra.mxu0 0.0
        %806 = vmatprep.subr.mxu0 0.0
        %807 = vmatpush1.msra.mxu0 0.0
        %808 = vmatprep.subr.mxu0 0.0
        %809 = vmatpush1.msra.mxu0 0.0
        %810 = vmatprep.subr.mxu0 0.0
        %811 = vmatpush1.msra.mxu0 0.0
        %812 = vmatprep.subr.mxu0 0.0
        %813 = vmatpush1.msra.mxu0 0.0
        %814 = vmatprep.subr.mxu0 0.0
        %815 = vmatpush1.msra.mxu0 0.0
        %816 = vmatprep.subr.mxu0 0.0
        %817 = vmatpush1.msra.mxu0 0.0
        %818 = vmatprep.subr.mxu0 0.0
        %819 = vmatpush1.msra.mxu0 0.0
        %820 = vmatprep.subr.mxu0 0.0
        %821 = vmatpush1.msra.mxu0 0.0
        %822 = vmatprep.subr.mxu0 0.0
        %823 = vmatpush1.msra.mxu0 0.0
        %824 = vmatprep.subr.mxu0 0.0
        %825 = vmatpush1.msra.mxu0 0.0
        %826 = vmatprep.subr.mxu0 0.0
        %827 = vmatpush1.msra.mxu0 0.0
        %828 = vmatprep.mubr.f32.mxu0 0.0
        %829 = vmatmul.mubr.f32.gmra.mrb[0].mxu0 %v762
        %v830 = vpop.f32.mrb[0].mxu0
        %v831 = vadd.f32 0.0, %v830
        %v832 = vpop.f32.mrb[0].mxu0
        %833 = vdwg.mxu0
        %v835 = vsel %vm506, %v831, 0
        %837 = vmatprep.subr.mxu0 0.0
        %838 = vmatpush1.msra.mxu0 %v415
        %839 = vmatprep.subr.mxu0 0.0
        %840 = vmatpush1.msra.mxu0 0.0
        %841 = vmatprep.subr.mxu0 0.0
        %842 = vmatpush1.msra.mxu0 0.0
        %843 = vmatprep.subr.mxu0 0.0
        %844 = vmatpush1.msra.mxu0 0.0
        %845 = vmatprep.subr.mxu0 0.0
        %846 = vmatpush1.msra.mxu0 0.0
        %847 = vmatprep.subr.mxu0 0.0
        %848 = vmatpush1.msra.mxu0 0.0
        %849 = vmatprep.subr.mxu0 0.0
        %850 = vmatpush1.msra.mxu0 0.0
        %851 = vmatprep.subr.mxu0 0.0
        %852 = vmatpush1.msra.mxu0 0.0
        %853 = vmatprep.subr.mxu0 0.0
        %854 = vmatpush1.msra.mxu0 0.0
        %855 = vmatprep.subr.mxu0 0.0
        %856 = vmatpush1.msra.mxu0 0.0
        %857 = vmatprep.subr.mxu0 0.0
        %858 = vmatpush1.msra.mxu0 0.0
        %859 = vmatprep.subr.mxu0 0.0
        %860 = vmatpush1.msra.mxu0 0.0
        %861 = vmatprep.subr.mxu0 0.0
        %862 = vmatpush1.msra.mxu0 0.0
        %863 = vmatprep.subr.mxu0 0.0
        %864 = vmatpush1.msra.mxu0 0.0
        %865 = vmatprep.subr.mxu0 0.0
        %866 = vmatpush1.msra.mxu0 0.0
        %867 = vmatprep.subr.mxu0 0.0
        %868 = vmatpush1.msra.mxu0 0.0
        %869 = vmatprep.subr.mxu0 0.0
        %870 = vmatpush1.msra.mxu0 0.0
        %871 = vmatprep.subr.mxu0 0.0
        %872 = vmatpush1.msra.mxu0 0.0
        %873 = vmatprep.subr.mxu0 0.0
        %874 = vmatpush1.msra.mxu0 0.0
        %875 = vmatprep.subr.mxu0 0.0
        %876 = vmatpush1.msra.mxu0 0.0
        %877 = vmatprep.subr.mxu0 0.0
        %878 = vmatpush1.msra.mxu0 0.0
        %879 = vmatprep.subr.mxu0 0.0
        %880 = vmatpush1.msra.mxu0 0.0
        %881 = vmatprep.subr.mxu0 0.0
        %882 = vmatpush1.msra.mxu0 0.0
        %883 = vmatprep.subr.mxu0 0.0
        %884 = vmatpush1.msra.mxu0 0.0
        %885 = vmatprep.subr.mxu0 0.0
        %886 = vmatpush1.msra.mxu0 0.0
        %887 = vmatprep.subr.mxu0 0.0
        %888 = vmatpush1.msra.mxu0 0.0
        %889 = vmatprep.subr.mxu0 0.0
        %890 = vmatpush1.msra.mxu0 0.0
        %891 = vmatprep.subr.mxu0 0.0
        %892 = vmatpush1.msra.mxu0 0.0
        %893 = vmatprep.subr.mxu0 0.0
        %894 = vmatpush1.msra.mxu0 0.0
        %895 = vmatprep.subr.mxu0 0.0
        %896 = vmatpush1.msra.mxu0 0.0
        %897 = vmatprep.subr.mxu0 0.0
        %898 = vmatpush1.msra.mxu0 0.0
        %899 = vmatprep.subr.mxu0 0.0
        %900 = vmatpush1.msra.mxu0 0.0
        %901 = vmatprep.mubr.f32.mxu0 0.0
        %902 = vmatmul.mubr.f32.gmra.mrb[0].mxu0 %v835
        %v903 = vpop.f32.mrb[0].mxu0
        %v904 = vadd.f32 0.0, %v903
        %v905 = vpop.f32.mrb[0].mxu0
        %906 = vdwg.mxu0
        %v908 = vsel %vm506, %v666, 0
        %910 = vmatprep.subr.mxu0 0.0
        %911 = vmatpush1.msra.mxu0 %v414
        %912 = vmatprep.subr.mxu0 0.0
        %913 = vmatpush1.msra.mxu0 0.0
        %914 = vmatprep.subr.mxu0 0.0
        %915 = vmatpush1.msra.mxu0 0.0
        %916 = vmatprep.subr.mxu0 0.0
        %917 = vmatpush1.msra.mxu0 0.0
        %918 = vmatprep.subr.mxu0 0.0
        %919 = vmatpush1.msra.mxu0 0.0
        %920 = vmatprep.subr.mxu0 0.0
        %921 = vmatpush1.msra.mxu0 0.0
        %922 = vmatprep.subr.mxu0 0.0
        %923 = vmatpush1.msra.mxu0 0.0
        %924 = vmatprep.subr.mxu0 0.0
        %925 = vmatpush1.msra.mxu0 0.0
        %926 = vmatprep.subr.mxu0 0.0
        %927 = vmatpush1.msra.mxu0 0.0
        %928 = vmatprep.subr.mxu0 0.0
        %929 = vmatpush1.msra.mxu0 0.0
        %930 = vmatprep.subr.mxu0 0.0
        %931 = vmatpush1.msra.mxu0 0.0
        %932 = vmatprep.subr.mxu0 0.0
        %933 = vmatpush1.msra.mxu0 0.0
        %934 = vmatprep.subr.mxu0 0.0
        %935 = vmatpush1.msra.mxu0 0.0
        %936 = vmatprep.subr.mxu0 0.0
        %937 = vmatpush1.msra.mxu0 0.0
        %938 = vmatprep.subr.mxu0 0.0
        %939 = vmatpush1.msra.mxu0 0.0
        %940 = vmatprep.subr.mxu0 0.0
        %941 = vmatpush1.msra.mxu0 0.0
        %942 = vmatprep.subr.mxu0 0.0
        %943 = vmatpush1.msra.mxu0 0.0
        %944 = vmatprep.subr.mxu0 0.0
        %945 = vmatpush1.msra.mxu0 0.0
        %946 = vmatprep.subr.mxu0 0.0
        %947 = vmatpush1.msra.mxu0 0.0
        %948 = vmatprep.subr.mxu0 0.0
        %949 = vmatpush1.msra.mxu0 0.0
        %950 = vmatprep.subr.mxu0 0.0
        %951 = vmatpush1.msra.mxu0 0.0
        %952 = vmatprep.subr.mxu0 0.0
        %953 = vmatpush1.msra.mxu0 0.0
        %954 = vmatprep.subr.mxu0 0.0
        %955 = vmatpush1.msra.mxu0 0.0
        %956 = vmatprep.subr.mxu0 0.0
        %957 = vmatpush1.msra.mxu0 0.0
        %958 = vmatprep.subr.mxu0 0.0
        %959 = vmatpush1.msra.mxu0 0.0
        %960 = vmatprep.subr.mxu0 0.0
        %961 = vmatpush1.msra.mxu0 0.0
        %962 = vmatprep.subr.mxu0 0.0
        %963 = vmatpush1.msra.mxu0 0.0
        %964 = vmatprep.subr.mxu0 0.0
        %965 = vmatpush1.msra.mxu0 0.0
        %966 = vmatprep.subr.mxu0 0.0
        %967 = vmatpush1.msra.mxu0 0.0
        %968 = vmatprep.subr.mxu0 0.0
        %969 = vmatpush1.msra.mxu0 0.0
        %970 = vmatprep.subr.mxu0 0.0
        %971 = vmatpush1.msra.mxu0 0.0
        %972 = vmatprep.subr.mxu0 0.0
        %973 = vmatpush1.msra.mxu0 0.0
        %974 = vmatprep.mubr.f32.mxu0 0.0
        %975 = vmatmul.mubr.f32.gmra.mrb[0].mxu0 %v908
        %v976 = vpop.f32.mrb[0].mxu0
        %v977 = vadd.f32 %v904, %v976
        %v978 = vpop.f32.mrb[0].mxu0
        %979 = vdwg.mxu0
        %980 = vrot.lane.b32.xlu0 %v496, 112
        %v981 = vpop.permute.xlu0 %980
        %982 = vrot.lane.b32.xlu0 %v493, 80
        %v983 = vpop.permute.xlu0 %982
        %v984 = vsel %vm506, %v981, 0
        %v986 = vsel %vm506, %v983, 0
        %988 = vmatprep.subr.mxu0 0.0
        %989 = vmatpush1.xpose.msra.mxu0 %v986
        %990 = vmatprep.subr.mxu0 0.0
        %991 = vmatpush1.xpose.msra.mxu0 0.0
        %992 = vmatprep.subr.mxu0 0.0
        %993 = vmatpush1.xpose.msra.mxu0 0.0
        %994 = vmatprep.subr.mxu0 0.0
        %995 = vmatpush1.xpose.msra.mxu0 0.0
        %996 = vmatprep.subr.mxu0 0.0
        %997 = vmatpush1.xpose.msra.mxu0 0.0
        %998 = vmatprep.subr.mxu0 0.0
        %999 = vmatpush1.xpose.msra.mxu0 0.0
        %1000 = vmatprep.subr.mxu0 0.0
        %1001 = vmatpush1.xpose.msra.mxu0 0.0
        %1002 = vmatprep.subr.mxu0 0.0
        %1003 = vmatpush1.xpose.msra.mxu0 0.0
        %1004 = vmatprep.subr.mxu0 0.0
        %1005 = vmatpush1.xpose.msra.mxu0 0.0
        %1006 = vmatprep.subr.mxu0 0.0
        %1007 = vmatpush1.xpose.msra.mxu0 0.0
        %1008 = vmatprep.subr.mxu0 0.0
        %1009 = vmatpush1.xpose.msra.mxu0 0.0
        %1010 = vmatprep.subr.mxu0 0.0
        %1011 = vmatpush1.xpose.msra.mxu0 0.0
        %1012 = vmatprep.subr.mxu0 0.0
        %1013 = vmatpush1.xpose.msra.mxu0 0.0
        %1014 = vmatprep.subr.mxu0 0.0
        %1015 = vmatpush1.xpose.msra.mxu0 0.0
        %1016 = vmatprep.subr.mxu0 0.0
        %1017 = vmatpush1.xpose.msra.mxu0 0.0
        %1018 = vmatprep.subr.mxu0 0.0
        %1019 = vmatpush1.xpose.msra.mxu0 0.0
        %1020 = vmatprep.subr.mxu0 0.0
        %1021 = vmatpush1.xpose.msra.mxu0 0.0
        %1022 = vmatprep.subr.mxu0 0.0
        %1023 = vmatpush1.xpose.msra.mxu0 0.0
        %1024 = vmatprep.subr.mxu0 0.0
        %1025 = vmatpush1.xpose.msra.mxu0 0.0
        %1026 = vmatprep.subr.mxu0 0.0
        %1027 = vmatpush1.xpose.msra.mxu0 0.0
        %1028 = vmatprep.subr.mxu0 0.0
        %1029 = vmatpush1.xpose.msra.mxu0 0.0
        %1030 = vmatprep.subr.mxu0 0.0
        %1031 = vmatpush1.xpose.msra.mxu0 0.0
        %1032 = vmatprep.subr.mxu0 0.0
        %1033 = vmatpush1.xpose.msra.mxu0 0.0
        %1034 = vmatprep.subr.mxu0 0.0
        %1035 = vmatpush1.xpose.msra.mxu0 0.0
        %1036 = vmatprep.subr.mxu0 0.0
        %1037 = vmatpush1.xpose.msra.mxu0 0.0
        %1038 = vmatprep.subr.mxu0 0.0
        %1039 = vmatpush1.xpose.msra.mxu0 0.0
        %1040 = vmatprep.subr.mxu0 0.0
        %1041 = vmatpush1.xpose.msra.mxu0 0.0
        %1042 = vmatprep.subr.mxu0 0.0
        %1043 = vmatpush1.xpose.msra.mxu0 0.0
        %1044 = vmatprep.subr.mxu0 0.0
        %1045 = vmatpush1.xpose.msra.mxu0 0.0
        %1046 = vmatprep.subr.mxu0 0.0
        %1047 = vmatpush1.xpose.msra.mxu0 0.0
        %1048 = vmatprep.subr.mxu0 0.0
        %1049 = vmatpush1.xpose.msra.mxu0 0.0
        %1050 = vmatprep.subr.mxu0 0.0
        %1051 = vmatpush1.xpose.msra.mxu0 0.0
        %1052 = vmatprep.mubr.f32.mxu0 0.0
        %1053 = vmatmul.mubr.f32.gmra.mrb[0].mxu0 %v984
        %v1054 = vpop.f32.mrb[0].mxu0
        %v1055 = vadd.f32 %v501, %v1054
        %v1056 = vpop.f32.mrb[0].mxu0
        %1057 = vdwg.mxu0
        %v1058 = vsel %vm506, %v1055, -inf
        %1059 = vmax.xlane.f32.xlu0 %v1058
        %v1060 = vpop.xlane.xlu0 %1059
        %v1061 = vsub.f32 %v1055, %v1060
        %v1062 = vmul.f32 %v1061, 1.442695
        %v1063 = vpow.pop %v1062
        %v1064 = vsel %vm506, %v1063, 0.0
        %1065 = vadd.xlane.f32.xlu0 %v1064
        %v1066 = vpop.xlane.xlu0 %1065
        %v1067 = vrcp.pop %v1066
        %v1068 = vmul.f32 %v1063, %v1067
        %1069 = vrot.lane.b32.xlu0 %v493, 48
        %v1070 = vpop.permute.xlu0 %1069
        %v1073 = vsel %vm506, %v1068, 0
        %1075 = vmatprep.subr.mxu0 0.0
        %1076 = vmatpush1.msra.mxu0 %v1070
        %1077 = vmatprep.subr.mxu0 0.0
        %1078 = vmatpush1.msra.mxu0 0.0
        %1079 = vmatprep.subr.mxu0 0.0
        %1080 = vmatpush1.msra.mxu0 0.0
        %1081 = vmatprep.subr.mxu0 0.0
        %1082 = vmatpush1.msra.mxu0 0.0
        %1083 = vmatprep.subr.mxu0 0.0
        %1084 = vmatpush1.msra.mxu0 0.0
        %1085 = vmatprep.subr.mxu0 0.0
        %1086 = vmatpush1.msra.mxu0 0.0
        %1087 = vmatprep.subr.mxu0 0.0
        %1088 = vmatpush1.msra.mxu0 0.0
        %1089 = vmatprep.subr.mxu0 0.0
        %1090 = vmatpush1.msra.mxu0 0.0
        %1091 = vmatprep.subr.mxu0 0.0
        %1092 = vmatpush1.msra.mxu0 0.0
        %1093 = vmatprep.subr.mxu0 0.0
        %1094 = vmatpush1.msra.mxu0 0.0
        %1095 = vmatprep.subr.mxu0 0.0
        %1096 = vmatpush1.msra.mxu0 0.0
        %1097 = vmatprep.subr.mxu0 0.0
        %1098 = vmatpush1.msra.mxu0 0.0
        %1099 = vmatprep.subr.mxu0 0.0
        %1100 = vmatpush1.msra.mxu0 0.0
        %1101 = vmatprep.subr.mxu0 0.0
        %1102 = vmatpush1.msra.mxu0 0.0
        %1103 = vmatprep.subr.mxu0 0.0
        %1104 = vmatpush1.msra.mxu0 0.0
        %1105 = vmatprep.subr.mxu0 0.0
        %1106 = vmatpush1.msra.mxu0 0.0
        %1107 = vmatprep.subr.mxu0 0.0
        %1108 = vmatpush1.msra.mxu0 0.0
        %1109 = vmatprep.subr.mxu0 0.0
        %1110 = vmatpush1.msra.mxu0 0.0
        %1111 = vmatprep.subr.mxu0 0.0
        %1112 = vmatpush1.msra.mxu0 0.0
        %1113 = vmatprep.subr.mxu0 0.0
        %1114 = vmatpush1.msra.mxu0 0.0
        %1115 = vmatprep.subr.mxu0 0.0
        %1116 = vmatpush1.msra.mxu0 0.0
        %1117 = vmatprep.subr.mxu0 0.0
        %1118 = vmatpush1.msra.mxu0 0.0
        %1119 = vmatprep.subr.mxu0 0.0
        %1120 = vmatpush1.msra.mxu0 0.0
        %1121 = vmatprep.subr.mxu0 0.0
        %1122 = vmatpush1.msra.mxu0 0.0
        %1123 = vmatprep.subr.mxu0 0.0
        %1124 = vmatpush1.msra.mxu0 0.0
        %1125 = vmatprep.subr.mxu0 0.0
        %1126 = vmatpush1.msra.mxu0 0.0
        %1127 = vmatprep.subr.mxu0 0.0
        %1128 = vmatpush1.msra.mxu0 0.0
        %1129 = vmatprep.subr.mxu0 0.0
        %1130 = vmatpush1.msra.mxu0 0.0
        %1131 = vmatprep.subr.mxu0 0.0
        %1132 = vmatpush1.msra.mxu0 0.0
        %1133 = vmatprep.subr.mxu0 0.0
        %1134 = vmatpush1.msra.mxu0 0.0
        %1135 = vmatprep.subr.mxu0 0.0
        %1136 = vmatpush1.msra.mxu0 0.0
        %1137 = vmatprep.subr.mxu0 0.0
        %1138 = vmatpush1.msra.mxu0 0.0
        %1139 = vmatprep.mubr.f32.mxu0 0.0
        %1140 = vmatmul.mubr.f32.gmra.mrb[0].mxu0 %v1073
        %v1141 = vpop.f32.mrb[0].mxu0
        %v1142 = vadd.f32 0.0, %v1141
        %v1143 = vpop.f32.mrb[0].mxu0
        %1144 = vdwg.mxu0
        %v1146 = vsel %vm506, %v1142, 0
        %1148 = vmatprep.subr.mxu0 0.0
        %1149 = vmatpush1.msra.mxu0 %v416
        %1150 = vmatprep.subr.mxu0 0.0
        %1151 = vmatpush1.msra.mxu0 0.0
        %1152 = vmatprep.subr.mxu0 0.0
        %1153 = vmatpush1.msra.mxu0 0.0
        %1154 = vmatprep.subr.mxu0 0.0
        %1155 = vmatpush1.msra.mxu0 0.0
        %1156 = vmatprep.subr.mxu0 0.0
        %1157 = vmatpush1.msra.mxu0 0.0
        %1158 = vmatprep.subr.mxu0 0.0
        %1159 = vmatpush1.msra.mxu0 0.0
        %1160 = vmatprep.subr.mxu0 0.0
        %1161 = vmatpush1.msra.mxu0 0.0
        %1162 = vmatprep.subr.mxu0 0.0
        %1163 = vmatpush1.msra.mxu0 0.0
        %1164 = vmatprep.subr.mxu0 0.0
        %1165 = vmatpush1.msra.mxu0 0.0
        %1166 = vmatprep.subr.mxu0 0.0
        %1167 = vmatpush1.msra.mxu0 0.0
        %1168 = vmatprep.subr.mxu0 0.0
        %1169 = vmatpush1.msra.mxu0 0.0
        %1170 = vmatprep.subr.mxu0 0.0
        %1171 = vmatpush1.msra.mxu0 0.0
        %1172 = vmatprep.subr.mxu0 0.0
        %1173 = vmatpush1.msra.mxu0 0.0
        %1174 = vmatprep.subr.mxu0 0.0
        %1175 = vmatpush1.msra.mxu0 0.0
        %1176 = vmatprep.subr.mxu0 0.0
        %1177 = vmatpush1.msra.mxu0 0.0
        %1178 = vmatprep.subr.mxu0 0.0
        %1179 = vmatpush1.msra.mxu0 0.0
        %1180 = vmatprep.subr.mxu0 0.0
        %1181 = vmatpush1.msra.mxu0 0.0
        %1182 = vmatprep.subr.mxu0 0.0
        %1183 = vmatpush1.msra.mxu0 0.0
        %1184 = vmatprep.subr.mxu0 0.0
        %1185 = vmatpush1.msra.mxu0 0.0
        %1186 = vmatprep.subr.mxu0 0.0
        %1187 = vmatpush1.msra.mxu0 0.0
        %1188 = vmatprep.subr.mxu0 0.0
        %1189 = vmatpush1.msra.mxu0 0.0
        %1190 = vmatprep.subr.mxu0 0.0
        %1191 = vmatpush1.msra.mxu0 0.0
        %1192 = vmatprep.subr.mxu0 0.0
        %1193 = vmatpush1.msra.mxu0 0.0
        %1194 = vmatprep.subr.mxu0 0.0
        %1195 = vmatpush1.msra.mxu0 0.0
        %1196 = vmatprep.subr.mxu0 0.0
        %1197 = vmatpush1.msra.mxu0 0.0
        %1198 = vmatprep.subr.mxu0 0.0
        %1199 = vmatpush1.msra.mxu0 0.0
        %1200 = vmatprep.subr.mxu0 0.0
        %1201 = vmatpush1.msra.mxu0 0.0
        %1202 = vmatprep.subr.mxu0 0.0
        %1203 = vmatpush1.msra.mxu0 0.0
        %1204 = vmatprep.subr.mxu0 0.0
        %1205 = vmatpush1.msra.mxu0 0.0
        %1206 = vmatprep.subr.mxu0 0.0
        %1207 = vmatpush1.msra.mxu0 0.0
        %1208 = vmatprep.subr.mxu0 0.0
        %1209 = vmatpush1.msra.mxu0 0.0
        %1210 = vmatprep.subr.mxu0 0.0
        %1211 = vmatpush1.msra.mxu0 0.0
        %1212 = vmatprep.mubr.f32.mxu0 0.0
        %1213 = vmatmul.mubr.f32.gmra.mrb[0].mxu0 %v1146
        %v1214 = vpop.f32.mrb[0].mxu0
        %v1215 = vadd.f32 0.0, %v1214
        %v1216 = vpop.f32.mrb[0].mxu0
        %1217 = vdwg.mxu0
        %v1218 = vadd.f32 %v977, %v1215
        %1219 = vrot.lane.b32.xlu0 %v496, 104
        %v1220 = vpop.permute.xlu0 %1219
        %1221 = vrot.lane.b32.xlu0 %v493, 72
        %v1222 = vpop.permute.xlu0 %1221
        %v1223 = vsel %vm506, %v1220, 0
        %v1225 = vsel %vm506, %v1222, 0
        %1227 = vmatprep.subr.mxu0 0.0
        %1228 = vmatpush1.xpose.msra.mxu0 %v1225
        %1229 = vmatprep.subr.mxu0 0.0
        %1230 = vmatpush1.xpose.msra.mxu0 0.0
        %1231 = vmatprep.subr.mxu0 0.0
        %1232 = vmatpush1.xpose.msra.mxu0 0.0
        %1233 = vmatprep.subr.mxu0 0.0
        %1234 = vmatpush1.xpose.msra.mxu0 0.0
        %1235 = vmatprep.subr.mxu0 0.0
        %1236 = vmatpush1.xpose.msra.mxu0 0.0
        %1237 = vmatprep.subr.mxu0 0.0
        %1238 = vmatpush1.xpose.msra.mxu0 0.0
        %1239 = vmatprep.subr.mxu0 0.0
        %1240 = vmatpush1.xpose.msra.mxu0 0.0
        %1241 = vmatprep.subr.mxu0 0.0
        %1242 = vmatpush1.xpose.msra.mxu0 0.0
        %1243 = vmatprep.subr.mxu0 0.0
        %1244 = vmatpush1.xpose.msra.mxu0 0.0
        %1245 = vmatprep.subr.mxu0 0.0
        %1246 = vmatpush1.xpose.msra.mxu0 0.0
        %1247 = vmatprep.subr.mxu0 0.0
        %1248 = vmatpush1.xpose.msra.mxu0 0.0
        %1249 = vmatprep.subr.mxu0 0.0
        %1250 = vmatpush1.xpose.msra.mxu0 0.0
        %1251 = vmatprep.subr.mxu0 0.0
        %1252 = vmatpush1.xpose.msra.mxu0 0.0
        %1253 = vmatprep.subr.mxu0 0.0
        %1254 = vmatpush1.xpose.msra.mxu0 0.0
        %1255 = vmatprep.subr.mxu0 0.0
        %1256 = vmatpush1.xpose.msra.mxu0 0.0
        %1257 = vmatprep.subr.mxu0 0.0
        %1258 = vmatpush1.xpose.msra.mxu0 0.0
        %1259 = vmatprep.subr.mxu0 0.0
        %1260 = vmatpush1.xpose.msra.mxu0 0.0
        %1261 = vmatprep.subr.mxu0 0.0
        %1262 = vmatpush1.xpose.msra.mxu0 0.0
        %1263 = vmatprep.subr.mxu0 0.0
        %1264 = vmatpush1.xpose.msra.mxu0 0.0
        %1265 = vmatprep.subr.mxu0 0.0
        %1266 = vmatpush1.xpose.msra.mxu0 0.0
        %1267 = vmatprep.subr.mxu0 0.0
        %1268 = vmatpush1.xpose.msra.mxu0 0.0
        %1269 = vmatprep.subr.mxu0 0.0
        %1270 = vmatpush1.xpose.msra.mxu0 0.0
        %1271 = vmatprep.subr.mxu0 0.0
        %1272 = vmatpush1.xpose.msra.mxu0 0.0
        %1273 = vmatprep.subr.mxu0 0.0
        %1274 = vmatpush1.xpose.msra.mxu0 0.0
        %1275 = vmatprep.subr.mxu0 0.0
        %1276 = vmatpush1.xpose.msra.mxu0 0.0
        %1277 = vmatprep.subr.mxu0 0.0
        %1278 = vmatpush1.xpose.msra.mxu0 0.0
        %1279 = vmatprep.subr.mxu0 0.0
        %1280 = vmatpush1.xpose.msra.mxu0 0.0
        %1281 = vmatprep.subr.mxu0 0.0
        %1282 = vmatpush1.xpose.msra.mxu0 0.0
        %1283 = vmatprep.subr.mxu0 0.0
        %1284 = vmatpush1.xpose.msra.mxu0 0.0
        %1285 = vmatprep.subr.mxu0 0.0
        %1286 = vmatpush1.xpose.msra.mxu0 0.0
        %1287 = vmatprep.subr.mxu0 0.0
        %1288 = vmatpush1.xpose.msra.mxu0 0.0
        %1289 = vmatprep.subr.mxu0 0.0
        %1290 = vmatpush1.xpose.msra.mxu0 0.0
        %1291 = vmatprep.mubr.f32.mxu0 0.0
        %1292 = vmatmul.mubr.f32.gmra.mrb[0].mxu0 %v1223
        %v1293 = vpop.f32.mrb[0].mxu0
        %v1294 = vadd.f32 %v501, %v1293
        %v1295 = vpop.f32.mrb[0].mxu0
        %1296 = vdwg.mxu0
        %v1297 = vsel %vm506, %v1294, -inf
        %1298 = vmax.xlane.f32.xlu0 %v1297
        %v1299 = vpop.xlane.xlu0 %1298
        %v1300 = vsub.f32 %v1294, %v1299
        %v1301 = vmul.f32 %v1300, 1.442695
        %v1302 = vpow.pop %v1301
        %v1303 = vsel %vm506, %v1302, 0.0
        %1304 = vadd.xlane.f32.xlu0 %v1303
        %v1305 = vpop.xlane.xlu0 %1304
        %v1306 = vrcp.pop %v1305
        %v1307 = vmul.f32 %v1302, %v1306
        %1308 = vrot.lane.b32.xlu0 %v493, 40
        %v1309 = vpop.permute.xlu0 %1308
        %v1312 = vsel %vm506, %v1307, 0
        %1314 = vmatprep.subr.mxu0 0.0
        %1315 = vmatpush1.msra.mxu0 %v1309
        %1316 = vmatprep.subr.mxu0 0.0
        %1317 = vmatpush1.msra.mxu0 0.0
        %1318 = vmatprep.subr.mxu0 0.0
        %1319 = vmatpush1.msra.mxu0 0.0
        %1320 = vmatprep.subr.mxu0 0.0
        %1321 = vmatpush1.msra.mxu0 0.0
        %1322 = vmatprep.subr.mxu0 0.0
        %1323 = vmatpush1.msra.mxu0 0.0
        %1324 = vmatprep.subr.mxu0 0.0
        %1325 = vmatpush1.msra.mxu0 0.0
        %1326 = vmatprep.subr.mxu0 0.0
        %1327 = vmatpush1.msra.mxu0 0.0
        %1328 = vmatprep.subr.mxu0 0.0
        %1329 = vmatpush1.msra.mxu0 0.0
        %1330 = vmatprep.subr.mxu0 0.0
        %1331 = vmatpush1.msra.mxu0 0.0
        %1332 = vmatprep.subr.mxu0 0.0
        %1333 = vmatpush1.msra.mxu0 0.0
        %1334 = vmatprep.subr.mxu0 0.0
        %1335 = vmatpush1.msra.mxu0 0.0
        %1336 = vmatprep.subr.mxu0 0.0
        %1337 = vmatpush1.msra.mxu0 0.0
        %1338 = vmatprep.subr.mxu0 0.0
        %1339 = vmatpush1.msra.mxu0 0.0
        %1340 = vmatprep.subr.mxu0 0.0
        %1341 = vmatpush1.msra.mxu0 0.0
        %1342 = vmatprep.subr.mxu0 0.0
        %1343 = vmatpush1.msra.mxu0 0.0
        %1344 = vmatprep.subr.mxu0 0.0
        %1345 = vmatpush1.msra.mxu0 0.0
        %1346 = vmatprep.subr.mxu0 0.0
        %1347 = vmatpush1.msra.mxu0 0.0
        %1348 = vmatprep.subr.mxu0 0.0
        %1349 = vmatpush1.msra.mxu0 0.0
        %1350 = vmatprep.subr.mxu0 0.0
        %1351 = vmatpush1.msra.mxu0 0.0
        %1352 = vmatprep.subr.mxu0 0.0
        %1353 = vmatpush1.msra.mxu0 0.0
        %1354 = vmatprep.subr.mxu0 0.0
        %1355 = vmatpush1.msra.mxu0 0.0
        %1356 = vmatprep.subr.mxu0 0.0
        %1357 = vmatpush1.msra.mxu0 0.0
        %1358 = vmatprep.subr.mxu0 0.0
        %1359 = vmatpush1.msra.mxu0 0.0
        %1360 = vmatprep.subr.mxu0 0.0
        %1361 = vmatpush1.msra.mxu0 0.0
        %1362 = vmatprep.subr.mxu0 0.0
        %1363 = vmatpush1.msra.mxu0 0.0
        %1364 = vmatprep.subr.mxu0 0.0
        %1365 = vmatpush1.msra.mxu0 0.0
        %1366 = vmatprep.subr.mxu0 0.0
        %1367 = vmatpush1.msra.mxu0 0.0
        %1368 = vmatprep.subr.mxu0 0.0
        %1369 = vmatpush1.msra.mxu0 0.0
        %1370 = vmatprep.subr.mxu0 0.0
        %1371 = vmatpush1.msra.mxu0 0.0
        %1372 = vmatprep.subr.mxu0 0.0
        %1373 = vmatpush1.msra.mxu0 0.0
        %1374 = vmatprep.subr.mxu0 0.0
        %1375 = vmatpush1.msra.mxu0 0.0
        %1376 = vmatprep.subr.mxu0 0.0
        %1377 = vmatpush1.msra.mxu0 0.0
        %1378 = vmatprep.mubr.f32.mxu0 0.0
        %1379 = vmatmul.mubr.f32.gmra.mrb[0].mxu0 %v1312
        %v1380 = vpop.f32.mrb[0].mxu0
        %v1381 = vadd.f32 0.0, %v1380
        %v1382 = vpop.f32.mrb[0].mxu0
        %1383 = vdwg.mxu0
        %v1385 = vsel %vm506, %v1381, 0
        %1387 = vmatprep.subr.mxu0 0.0
        %1388 = vmatpush1.msra.mxu0 %v417
        %1389 = vmatprep.subr.mxu0 0.0
        %1390 = vmatpush1.msra.mxu0 0.0
        %1391 = vmatprep.subr.mxu0 0.0
        %1392 = vmatpush1.msra.mxu0 0.0
        %1393 = vmatprep.subr.mxu0 0.0
        %1394 = vmatpush1.msra.mxu0 0.0
        %1395 = vmatprep.subr.mxu0 0.0
        %1396 = vmatpush1.msra.mxu0 0.0
        %1397 = vmatprep.subr.mxu0 0.0
        %1398 = vmatpush1.msra.mxu0 0.0
        %1399 = vmatprep.subr.mxu0 0.0
        %1400 = vmatpush1.msra.mxu0 0.0
        %1401 = vmatprep.subr.mxu0 0.0
        %1402 = vmatpush1.msra.mxu0 0.0
        %1403 = vmatprep.subr.mxu0 0.0
        %1404 = vmatpush1.msra.mxu0 0.0
        %1405 = vmatprep.subr.mxu0 0.0
        %1406 = vmatpush1.msra.mxu0 0.0
        %1407 = vmatprep.subr.mxu0 0.0
        %1408 = vmatpush1.msra.mxu0 0.0
        %1409 = vmatprep.subr.mxu0 0.0
        %1410 = vmatpush1.msra.mxu0 0.0
        %1411 = vmatprep.subr.mxu0 0.0
        %1412 = vmatpush1.msra.mxu0 0.0
        %1413 = vmatprep.subr.mxu0 0.0
        %1414 = vmatpush1.msra.mxu0 0.0
        %1415 = vmatprep.subr.mxu0 0.0
        %1416 = vmatpush1.msra.mxu0 0.0
        %1417 = vmatprep.subr.mxu0 0.0
        %1418 = vmatpush1.msra.mxu0 0.0
        %1419 = vmatprep.subr.mxu0 0.0
        %1420 = vmatpush1.msra.mxu0 0.0
        %1421 = vmatprep.subr.mxu0 0.0
        %1422 = vmatpush1.msra.mxu0 0.0
        %1423 = vmatprep.subr.mxu0 0.0
        %1424 = vmatpush1.msra.mxu0 0.0
        %1425 = vmatprep.subr.mxu0 0.0
        %1426 = vmatpush1.msra.mxu0 0.0
        %1427 = vmatprep.subr.mxu0 0.0
        %1428 = vmatpush1.msra.mxu0 0.0
        %1429 = vmatprep.subr.mxu0 0.0
        %1430 = vmatpush1.msra.mxu0 0.0
        %1431 = vmatprep.subr.mxu0 0.0
        %1432 = vmatpush1.msra.mxu0 0.0
        %1433 = vmatprep.subr.mxu0 0.0
        %1434 = vmatpush1.msra.mxu0 0.0
        %1435 = vmatprep.subr.mxu0 0.0
        %1436 = vmatpush1.msra.mxu0 0.0
        %1437 = vmatprep.subr.mxu0 0.0
        %1438 = vmatpush1.msra.mxu0 0.0
        %1439 = vmatprep.subr.mxu0 0.0
        %1440 = vmatpush1.msra.mxu0 0.0
        %1441 = vmatprep.subr.mxu0 0.0
        %1442 = vmatpush1.msra.mxu0 0.0
        %1443 = vmatprep.subr.mxu0 0.0
        %1444 = vmatpush1.msra.mxu0 0.0
        %1445 = vmatprep.subr.mxu0 0.0
        %1446 = vmatpush1.msra.mxu0 0.0
        %1447 = vmatprep.subr.mxu0 0.0
        %1448 = vmatpush1.msra.mxu0 0.0
        %1449 = vmatprep.subr.mxu0 0.0
        %1450 = vmatpush1.msra.mxu0 0.0
        %1451 = vmatprep.mubr.f32.mxu0 0.0
        %1452 = vmatmul.mubr.f32.gmra.mrb[0].mxu0 %v1385
        %v1453 = vpop.f32.mrb[0].mxu0
        %v1454 = vadd.f32 0.0, %v1453
        %v1455 = vpop.f32.mrb[0].mxu0
        %1456 = vdwg.mxu0
        %v1457 = vadd.f32 %v1218, %v1454
        %v1458 = vlaneseq
        %v1459 = vshrl.u32 %v1458, 7
        %v1460 = vsub.s32 0, %v1459
        %v1461 = vrot.slane %v418, %v1460
        %v1462 = vadd.f32 %v1457, %v1461
        %v1463 = vadd.f32 %v374, %v1462
        %v1464 = vsel %vm377, %v1463, 0.0
        %1465 = vadd.xlane.f32.xlu0 %v1464
        %v1466 = vpop.xlane.xlu0 %1465
        %v1467 = vmul.f32 %v1466, %v381
        %v1468 = vsub.f32 %v1463, %v1467
        %v1469 = vmul.f32 %v1468, %v1468
        %v1470 = vsel %vm377, %v1469, 0.0
        %1471 = vadd.xlane.f32.xlu0 %v1470
        %v1472 = vpop.xlane.xlu0 %1471
        %v1473 = vmul.f32 %v1472, 0.032258064
        %v1474 = vrsqrt.pop %v1473
        %v1475 = vmul.f32 %v1473, %v1474
        %vm1476 = vcmp.eq.f32.partialorder %v1473, inf
        %v1477 = vsel %vm1476, %v1473, %v1475
        %vm1478 = vcmp.eq.f32.partialorder %v1473, 0.0
        %v1479 = vand.u32 %v1473, 2147483648
        %v1480 = vsel %vm1478, %v1479, %v1477
        %v1481 = vlaneseq
        %v1482 = vshrl.u32 %v1481, 7
        %v1483 = vsub.s32 1, %v1482
        %v1484 = vrot.slane %v375, %v1483
        %v1485 = vmul.f32 %v1484, %v1468
        %v1486 = vadd.f32 %v1480, 1e-06
        %v1487 = vrcp.pop %v1486
        %v1488 = vmul.f32 %v1485, %v1487
        %v1489 = vlaneseq
        %v1490 = vshrl.u32 %v1489, 7
        %v1491 = vsub.s32 1, %v1490
        %v1492 = vrot.slane %v376, %v1491
        %v1493 = vadd.f32 %v1488, %v1492
        %v1494 = vld [vmem:[#allocation2 + $0xa8] sm:$0xff]
        %v1495 = vld [vmem:[#allocation2 + $0xb0] sm:$0xff]
        %v1496 = vld [vmem:[#allocation2 + $0xb8] sm:$0xff]
        %v1497 = vld [vmem:[#allocation2 + $0xc0] sm:$0xff]
        %v1498 = vld [vmem:[#allocation2 + $0xc8] sm:$0x1]
        %v1499 = vld [vmem:[#allocation2 + $0xd0] sm:$0xff]
        %v1500 = vld [vmem:[#allocation2 + $0xd8] sm:$0xff]
        %v1501 = vld [vmem:[#allocation2 + $0xe0] sm:$0xff]
        %v1502 = vld [vmem:[#allocation2 + $0xe8] sm:$0xff]
        %v1503 = vld [vmem:[#allocation2 + $0xf0] sm:$0xff]
        %v1504 = vld [vmem:[#allocation2 + $0xf8] sm:$0xff]
        %v1505 = vld [vmem:[#allocation2 + $0x100] sm:$0xff]
        %v1506 = vld [vmem:[#allocation2 + $0x108] sm:$0xff]
        %v1507 = vld [vmem:[#allocation2 + $0x110] sm:$0x1]
        %v1508 = vlaneseq
        %v1509 = vshrl.u32 %v1508, 7
        %v1510 = vsub.s32 0, %v1509
        %v1511 = vrot.slane %v1498, %v1510
        %v1513 = vsel %vm377, %v1493, 0
        %1515 = vmatprep.subr.mxu0 0.0
        %1516 = vmatpush1.msra.mxu0 %v1494
        %1517 = vmatprep.subr.mxu0 0.0
        %1518 = vmatpush1.msra.mxu0 %v1495
        %1519 = vmatprep.subr.mxu0 0.0
        %1520 = vmatpush1.msra.mxu0 %v1496
        %1521 = vmatprep.subr.mxu0 0.0
        %1522 = vmatpush1.msra.mxu0 %v1497
        %1523 = vmatprep.subr.mxu0 0.0
        %1524 = vmatpush1.msra.mxu0 0.0
        %1525 = vmatprep.subr.mxu0 0.0
        %1526 = vmatpush1.msra.mxu0 0.0
        %1527 = vmatprep.subr.mxu0 0.0
        %1528 = vmatpush1.msra.mxu0 0.0
        %1529 = vmatprep.subr.mxu0 0.0
        %1530 = vmatpush1.msra.mxu0 0.0
        %1531 = vmatprep.subr.mxu0 0.0
        %1532 = vmatpush1.msra.mxu0 0.0
        %1533 = vmatprep.subr.mxu0 0.0
        %1534 = vmatpush1.msra.mxu0 0.0
        %1535 = vmatprep.subr.mxu0 0.0
        %1536 = vmatpush1.msra.mxu0 0.0
        %1537 = vmatprep.subr.mxu0 0.0
        %1538 = vmatpush1.msra.mxu0 0.0
        %1539 = vmatprep.subr.mxu0 0.0
        %1540 = vmatpush1.msra.mxu0 0.0
        %1541 = vmatprep.subr.mxu0 0.0
        %1542 = vmatpush1.msra.mxu0 0.0
        %1543 = vmatprep.subr.mxu0 0.0
        %1544 = vmatpush1.msra.mxu0 0.0
        %1545 = vmatprep.subr.mxu0 0.0
        %1546 = vmatpush1.msra.mxu0 0.0
        %1547 = vmatprep.subr.mxu0 0.0
        %1548 = vmatpush1.msra.mxu0 0.0
        %1549 = vmatprep.subr.mxu0 0.0
        %1550 = vmatpush1.msra.mxu0 0.0
        %1551 = vmatprep.subr.mxu0 0.0
        %1552 = vmatpush1.msra.mxu0 0.0
        %1553 = vmatprep.subr.mxu0 0.0
        %1554 = vmatpush1.msra.mxu0 0.0
        %1555 = vmatprep.subr.mxu0 0.0
        %1556 = vmatpush1.msra.mxu0 0.0
        %1557 = vmatprep.subr.mxu0 0.0
        %1558 = vmatpush1.msra.mxu0 0.0
        %1559 = vmatprep.subr.mxu0 0.0
        %1560 = vmatpush1.msra.mxu0 0.0
        %1561 = vmatprep.subr.mxu0 0.0
        %1562 = vmatpush1.msra.mxu0 0.0
        %1563 = vmatprep.subr.mxu0 0.0
        %1564 = vmatpush1.msra.mxu0 0.0
        %1565 = vmatprep.subr.mxu0 0.0
        %1566 = vmatpush1.msra.mxu0 0.0
        %1567 = vmatprep.subr.mxu0 0.0
        %1568 = vmatpush1.msra.mxu0 0.0
        %1569 = vmatprep.subr.mxu0 0.0
        %1570 = vmatpush1.msra.mxu0 0.0
        %1571 = vmatprep.subr.mxu0 0.0
        %1572 = vmatpush1.msra.mxu0 0.0
        %1573 = vmatprep.subr.mxu0 0.0
        %1574 = vmatpush1.msra.mxu0 0.0
        %1575 = vmatprep.subr.mxu0 0.0
        %1576 = vmatpush1.msra.mxu0 0.0
        %1577 = vmatprep.subr.mxu0 0.0
        %1578 = vmatpush1.msra.mxu0 0.0
        %1579 = vmatprep.mubr.f32.mxu0 0.0
        %1580 = vmatmul.mubr.f32.gmra.mrb[0].mxu0 %v1513
        %v1581 = vpop.f32.mrb[0].mxu0
        %v1582 = vadd.f32 %v1511, %v1581
        %v1583 = vpop.f32.mrb[0].mxu0
        %1584 = vdwg.mxu0
        %v1585 = vmax.f32 %v1582, 0.0
        %v1586 = vlaneseq
        %v1587 = vshrl.u32 %v1586, 7
        %v1588 = vsub.s32 0, %v1587
        %v1589 = vrot.slane %v1507, %v1588
        %vm1590 = vcmask 523264
        %v1592 = vsel %vm1590, %v1585, 0
        %1594 = vmatprep.subr.mxu0 0.0
        %1595 = vmatpush1.msra.mxu0 %v1499
        %1596 = vmatprep.subr.mxu0 0.0
        %1597 = vmatpush1.msra.mxu0 %v1500
        %1598 = vmatprep.subr.mxu0 0.0
        %1599 = vmatpush1.msra.mxu0 %v1501
        %1600 = vmatprep.subr.mxu0 0.0
        %1601 = vmatpush1.msra.mxu0 %v1502
        %1602 = vmatprep.subr.mxu0 0.0
        %1603 = vmatpush1.msra.mxu0 %v1503
        %1604 = vmatprep.subr.mxu0 0.0
        %1605 = vmatpush1.msra.mxu0 %v1504
        %1606 = vmatprep.subr.mxu0 0.0
        %1607 = vmatpush1.msra.mxu0 %v1505
        %1608 = vmatprep.subr.mxu0 0.0
        %1609 = vmatpush1.msra.mxu0 %v1506
        %1610 = vmatprep.subr.mxu0 0.0
        %1611 = vmatpush1.msra.mxu0 0.0
        %1612 = vmatprep.subr.mxu0 0.0
        %1613 = vmatpush1.msra.mxu0 0.0
        %1614 = vmatprep.subr.mxu0 0.0
        %1615 = vmatpush1.msra.mxu0 0.0
        %1616 = vmatprep.subr.mxu0 0.0
        %1617 = vmatpush1.msra.mxu0 0.0
        %1618 = vmatprep.subr.mxu0 0.0
        %1619 = vmatpush1.msra.mxu0 0.0
        %1620 = vmatprep.subr.mxu0 0.0
        %1621 = vmatpush1.msra.mxu0 0.0
        %1622 = vmatprep.subr.mxu0 0.0
        %1623 = vmatpush1.msra.mxu0 0.0
        %1624 = vmatprep.subr.mxu0 0.0
        %1625 = vmatpush1.msra.mxu0 0.0
        %1626 = vmatprep.subr.mxu0 0.0
        %1627 = vmatpush1.msra.mxu0 0.0
        %1628 = vmatprep.subr.mxu0 0.0
        %1629 = vmatpush1.msra.mxu0 0.0
        %1630 = vmatprep.subr.mxu0 0.0
        %1631 = vmatpush1.msra.mxu0 0.0
        %1632 = vmatprep.subr.mxu0 0.0
        %1633 = vmatpush1.msra.mxu0 0.0
        %1634 = vmatprep.subr.mxu0 0.0
        %1635 = vmatpush1.msra.mxu0 0.0
        %1636 = vmatprep.subr.mxu0 0.0
        %1637 = vmatpush1.msra.mxu0 0.0
        %1638 = vmatprep.subr.mxu0 0.0
        %1639 = vmatpush1.msra.mxu0 0.0
        %1640 = vmatprep.subr.mxu0 0.0
        %1641 = vmatpush1.msra.mxu0 0.0
        %1642 = vmatprep.subr.mxu0 0.0
        %1643 = vmatpush1.msra.mxu0 0.0
        %1644 = vmatprep.subr.mxu0 0.0
        %1645 = vmatpush1.msra.mxu0 0.0
        %1646 = vmatprep.subr.mxu0 0.0
        %1647 = vmatpush1.msra.mxu0 0.0
        %1648 = vmatprep.subr.mxu0 0.0
        %1649 = vmatpush1.msra.mxu0 0.0
        %1650 = vmatprep.subr.mxu0 0.0
        %1651 = vmatpush1.msra.mxu0 0.0
        %1652 = vmatprep.subr.mxu0 0.0
        %1653 = vmatpush1.msra.mxu0 0.0
        %1654 = vmatprep.subr.mxu0 0.0
        %1655 = vmatpush1.msra.mxu0 0.0
        %1656 = vmatprep.subr.mxu0 0.0
        %1657 = vmatpush1.msra.mxu0 0.0
        %1658 = vmatprep.mubr.f32.mxu0 0.0
        %1659 = vmatmul.mubr.f32.gmra.mrb[0].mxu0 %v1592
        %v1660 = vpop.f32.mrb[0].mxu0
        %v1661 = vadd.f32 %v1589, %v1660
        %v1662 = vpop.f32.mrb[0].mxu0
        %1663 = vdwg.mxu0
        %v1664 = vadd.f32 %v1463, %v1661
        %v1665 = vld [vmem:[#allocation2 + $0x1e8] sm:$0x3]
        %v1666 = vld [vmem:[#allocation2 + $0x1f0] sm:$0x3]
        %v1667 = vsel %vm377, %v1664, 0.0
        %1668 = vadd.xlane.f32.xlu0 %v1667
        %v1669 = vpop.xlane.xlu0 %1668
        %v1670 = vmul.f32 %v1669, %v381
        %v1671 = vsub.f32 %v1664, %v1670
        %v1672 = vmul.f32 %v1671, %v1671
        %v1673 = vsel %vm377, %v1672, 0.0
        %1674 = vadd.xlane.f32.xlu0 %v1673
        %v1675 = vpop.xlane.xlu0 %1674
        %v1676 = vmul.f32 %v1675, 0.032258064
        %v1677 = vrsqrt.pop %v1676
        %v1678 = vmul.f32 %v1676, %v1677
        %vm1679 = vcmp.eq.f32.partialorder %v1676, inf
        %v1680 = vsel %vm1679, %v1676, %v1678
        %vm1681 = vcmp.eq.f32.partialorder %v1676, 0.0
        %v1682 = vand.u32 %v1676, 2147483648
        %v1683 = vsel %vm1681, %v1682, %v1680
        %v1684 = vlaneseq
        %v1685 = vshrl.u32 %v1684, 7
        %v1686 = vsub.s32 0, %v1685
        %v1687 = vrot.slane %v1665, %v1686
        %v1688 = vmul.f32 %v1687, %v1671
        %v1689 = vadd.f32 %v1683, 1e-06
        %v1690 = vrcp.pop %v1689
        %v1691 = vmul.f32 %v1688, %v1690
        %v1692 = vlaneseq
        %v1693 = vshrl.u32 %v1692, 7
        %v1694 = vsub.s32 0, %v1693
        %v1695 = vrot.slane %v1666, %v1694
        %v1696 = vadd.f32 %v1691, %v1695
        %v1697 = vld [vmem:[#allocation2 + $0x128] sm:$0xff]
        %v1698 = vld [vmem:[#allocation2 + $0x130] sm:$0xff]
        %v1699 = vld [vmem:[#allocation2 + $0x138] sm:$0xff]
        %v1700 = vld [vmem:[#allocation2 + $0x140] sm:$0xff]
        %v1701 = vld [vmem:[#allocation2 + $0x148] sm:$0x1]
        %v1702 = vld [vmem:[#allocation2 + $0x150] sm:$0xff]
        %v1703 = vld [vmem:[#allocation2 + $0x158] sm:$0xff]
        %v1704 = vld [vmem:[#allocation2 + $0x160] sm:$0xff]
        %v1705 = vld [vmem:[#allocation2 + $0x168] sm:$0xff]
        %v1706 = vld [vmem:[#allocation2 + $0x170] sm:$0x1]
        %v1707 = vlaneseq
        %v1708 = vshrl.u32 %v1707, 7
        %v1709 = vsub.s32 0, %v1708
        %v1710 = vrot.slane %v1701, %v1709
        %v1712 = vsel %vm377, %v1696, 0
        %1714 = vmatprep.subr.mxu0 0.0
        %1715 = vmatpush1.msra.mxu0 %v1697
        %1716 = vmatprep.subr.mxu0 0.0
        %1717 = vmatpush1.msra.mxu0 %v1698
        %1718 = vmatprep.subr.mxu0 0.0
        %1719 = vmatpush1.msra.mxu0 %v1699
        %1720 = vmatprep.subr.mxu0 0.0
        %1721 = vmatpush1.msra.mxu0 %v1700
        %1722 = vmatprep.subr.mxu0 0.0
        %1723 = vmatpush1.msra.mxu0 0.0
        %1724 = vmatprep.subr.mxu0 0.0
        %1725 = vmatpush1.msra.mxu0 0.0
        %1726 = vmatprep.subr.mxu0 0.0
        %1727 = vmatpush1.msra.mxu0 0.0
        %1728 = vmatprep.subr.mxu0 0.0
        %1729 = vmatpush1.msra.mxu0 0.0
        %1730 = vmatprep.subr.mxu0 0.0
        %1731 = vmatpush1.msra.mxu0 0.0
        %1732 = vmatprep.subr.mxu0 0.0
        %1733 = vmatpush1.msra.mxu0 0.0
        %1734 = vmatprep.subr.mxu0 0.0
        %1735 = vmatpush1.msra.mxu0 0.0
        %1736 = vmatprep.subr.mxu0 0.0
        %1737 = vmatpush1.msra.mxu0 0.0
        %1738 = vmatprep.subr.mxu0 0.0
        %1739 = vmatpush1.msra.mxu0 0.0
        %1740 = vmatprep.subr.mxu0 0.0
        %1741 = vmatpush1.msra.mxu0 0.0
        %1742 = vmatprep.subr.mxu0 0.0
        %1743 = vmatpush1.msra.mxu0 0.0
        %1744 = vmatprep.subr.mxu0 0.0
        %1745 = vmatpush1.msra.mxu0 0.0
        %1746 = vmatprep.subr.mxu0 0.0
        %1747 = vmatpush1.msra.mxu0 0.0
        %1748 = vmatprep.subr.mxu0 0.0
        %1749 = vmatpush1.msra.mxu0 0.0
        %1750 = vmatprep.subr.mxu0 0.0
        %1751 = vmatpush1.msra.mxu0 0.0
        %1752 = vmatprep.subr.mxu0 0.0
        %1753 = vmatpush1.msra.mxu0 0.0
        %1754 = vmatprep.subr.mxu0 0.0
        %1755 = vmatpush1.msra.mxu0 0.0
        %1756 = vmatprep.subr.mxu0 0.0
        %1757 = vmatpush1.msra.mxu0 0.0
        %1758 = vmatprep.subr.mxu0 0.0
        %1759 = vmatpush1.msra.mxu0 0.0
        %1760 = vmatprep.subr.mxu0 0.0
        %1761 = vmatpush1.msra.mxu0 0.0
        %1762 = vmatprep.subr.mxu0 0.0
        %1763 = vmatpush1.msra.mxu0 0.0
        %1764 = vmatprep.subr.mxu0 0.0
        %1765 = vmatpush1.msra.mxu0 0.0
        %1766 = vmatprep.subr.mxu0 0.0
        %1767 = vmatpush1.msra.mxu0 0.0
        %1768 = vmatprep.subr.mxu0 0.0
        %1769 = vmatpush1.msra.mxu0 0.0
        %1770 = vmatprep.subr.mxu0 0.0
        %1771 = vmatpush1.msra.mxu0 0.0
        %1772 = vmatprep.subr.mxu0 0.0
        %1773 = vmatpush1.msra.mxu0 0.0
        %1774 = vmatprep.subr.mxu0 0.0
        %1775 = vmatpush1.msra.mxu0 0.0
        %1776 = vmatprep.subr.mxu0 0.0
        %1777 = vmatpush1.msra.mxu0 0.0
        %1778 = vmatprep.mubr.f32.mxu0 0.0
        %1779 = vmatmul.mubr.f32.gmra.mrb[0].mxu0 %v1712
        %v1780 = vpop.f32.mrb[0].mxu0
        %v1781 = vadd.f32 %v1710, %v1780
        %v1782 = vpop.f32.mrb[0].mxu0
        %1783 = vdwg.mxu0
        %v1784 = vmul.f32 %v1781, 0.35355338
        %1786 = vrot.lane.b32.xlu0 %v1781, 96
        %v1787 = vpop.permute.xlu0 %1786
        %v1789 = vsel %vm506, %v1784, 0
        %v1791 = vsel %vm506, %v1787, 0
        %1793 = vmatprep.subr.mxu0 0.0
        %1794 = vmatpush1.xpose.msra.mxu0 %v1791
        %1795 = vmatprep.subr.mxu0 0.0
        %1796 = vmatpush1.xpose.msra.mxu0 0.0
        %1797 = vmatprep.subr.mxu0 0.0
        %1798 = vmatpush1.xpose.msra.mxu0 0.0
        %1799 = vmatprep.subr.mxu0 0.0
        %1800 = vmatpush1.xpose.msra.mxu0 0.0
        %1801 = vmatprep.subr.mxu0 0.0
        %1802 = vmatpush1.xpose.msra.mxu0 0.0
        %1803 = vmatprep.subr.mxu0 0.0
        %1804 = vmatpush1.xpose.msra.mxu0 0.0
        %1805 = vmatprep.subr.mxu0 0.0
        %1806 = vmatpush1.xpose.msra.mxu0 0.0
        %1807 = vmatprep.subr.mxu0 0.0
        %1808 = vmatpush1.xpose.msra.mxu0 0.0
        %1809 = vmatprep.subr.mxu0 0.0
        %1810 = vmatpush1.xpose.msra.mxu0 0.0
        %1811 = vmatprep.subr.mxu0 0.0
        %1812 = vmatpush1.xpose.msra.mxu0 0.0
        %1813 = vmatprep.subr.mxu0 0.0
        %1814 = vmatpush1.xpose.msra.mxu0 0.0
        %1815 = vmatprep.subr.mxu0 0.0
        %1816 = vmatpush1.xpose.msra.mxu0 0.0
        %1817 = vmatprep.subr.mxu0 0.0
        %1818 = vmatpush1.xpose.msra.mxu0 0.0
        %1819 = vmatprep.subr.mxu0 0.0
        %1820 = vmatpush1.xpose.msra.mxu0 0.0
        %1821 = vmatprep.subr.mxu0 0.0
        %1822 = vmatpush1.xpose.msra.mxu0 0.0
        %1823 = vmatprep.subr.mxu0 0.0
        %1824 = vmatpush1.xpose.msra.mxu0 0.0
        %1825 = vmatprep.subr.mxu0 0.0
        %1826 = vmatpush1.xpose.msra.mxu0 0.0
        %1827 = vmatprep.subr.mxu0 0.0
        %1828 = vmatpush1.xpose.msra.mxu0 0.0
        %1829 = vmatprep.subr.mxu0 0.0
        %1830 = vmatpush1.xpose.msra.mxu0 0.0
        %1831 = vmatprep.subr.mxu0 0.0
        %1832 = vmatpush1.xpose.msra.mxu0 0.0
        %1833 = vmatprep.subr.mxu0 0.0
        %1834 = vmatpush1.xpose.msra.mxu0 0.0
        %1835 = vmatprep.subr.mxu0 0.0
        %1836 = vmatpush1.xpose.msra.mxu0 0.0
        %1837 = vmatprep.subr.mxu0 0.0
        %1838 = vmatpush1.xpose.msra.mxu0 0.0
        %1839 = vmatprep.subr.mxu0 0.0
        %1840 = vmatpush1.xpose.msra.mxu0 0.0
        %1841 = vmatprep.subr.mxu0 0.0
        %1842 = vmatpush1.xpose.msra.mxu0 0.0
        %1843 = vmatprep.subr.mxu0 0.0
        %1844 = vmatpush1.xpose.msra.mxu0 0.0
        %1845 = vmatprep.subr.mxu0 0.0
        %1846 = vmatpush1.xpose.msra.mxu0 0.0
        %1847 = vmatprep.subr.mxu0 0.0
        %1848 = vmatpush1.xpose.msra.mxu0 0.0
        %1849 = vmatprep.subr.mxu0 0.0
        %1850 = vmatpush1.xpose.msra.mxu0 0.0
        %1851 = vmatprep.subr.mxu0 0.0
        %1852 = vmatpush1.xpose.msra.mxu0 0.0
        %1853 = vmatprep.subr.mxu0 0.0
        %1854 = vmatpush1.xpose.msra.mxu0 0.0
        %1855 = vmatprep.subr.mxu0 0.0
        %1856 = vmatpush1.xpose.msra.mxu0 0.0
        %1857 = vmatprep.mubr.f32.mxu0 0.0
        %1858 = vmatmul.mubr.f32.gmra.mrb[0].mxu0 %v1789
        %v1859 = vpop.f32.mrb[0].mxu0
        %v1860 = vadd.f32 %v501, %v1859
        %v1861 = vpop.f32.mrb[0].mxu0
        %1862 = vdwg.mxu0
        %v1863 = vsel %vm506, %v1860, -inf
        %1864 = vmax.xlane.f32.xlu0 %v1863
        %v1865 = vpop.xlane.xlu0 %1864
        %v1866 = vsub.f32 %v1860, %v1865
        %v1867 = vmul.f32 %v1866, 1.442695
        %v1868 = vpow.pop %v1867
        %v1869 = vsel %vm506, %v1868, 0.0
        %1870 = vadd.xlane.f32.xlu0 %v1869
        %v1871 = vpop.xlane.xlu0 %1870
        %v1872 = vrcp.pop %v1871
        %v1873 = vmul.f32 %v1868, %v1872
        %1874 = vrot.lane.b32.xlu0 %v1781, 64
        %v1875 = vpop.permute.xlu0 %1874
        %v1878 = vsel %vm506, %v1873, 0
        %1880 = vmatprep.subr.mxu0 0.0
        %1881 = vmatpush1.msra.mxu0 %v1875
        %1882 = vmatprep.subr.mxu0 0.0
        %1883 = vmatpush1.msra.mxu0 0.0
        %1884 = vmatprep.subr.mxu0 0.0
        %1885 = vmatpush1.msra.mxu0 0.0
        %1886 = vmatprep.subr.mxu0 0.0
        %1887 = vmatpush1.msra.mxu0 0.0
        %1888 = vmatprep.subr.mxu0 0.0
        %1889 = vmatpush1.msra.mxu0 0.0
        %1890 = vmatprep.subr.mxu0 0.0
        %1891 = vmatpush1.msra.mxu0 0.0
        %1892 = vmatprep.subr.mxu0 0.0
        %1893 = vmatpush1.msra.mxu0 0.0
        %1894 = vmatprep.subr.mxu0 0.0
        %1895 = vmatpush1.msra.mxu0 0.0
        %1896 = vmatprep.subr.mxu0 0.0
        %1897 = vmatpush1.msra.mxu0 0.0
        %1898 = vmatprep.subr.mxu0 0.0
        %1899 = vmatpush1.msra.mxu0 0.0
        %1900 = vmatprep.subr.mxu0 0.0
        %1901 = vmatpush1.msra.mxu0 0.0
        %1902 = vmatprep.subr.mxu0 0.0
        %1903 = vmatpush1.msra.mxu0 0.0
        %1904 = vmatprep.subr.mxu0 0.0
        %1905 = vmatpush1.msra.mxu0 0.0
        %1906 = vmatprep.subr.mxu0 0.0
        %1907 = vmatpush1.msra.mxu0 0.0
        %1908 = vmatprep.subr.mxu0 0.0
        %1909 = vmatpush1.msra.mxu0 0.0
        %1910 = vmatprep.subr.mxu0 0.0
        %1911 = vmatpush1.msra.mxu0 0.0
        %1912 = vmatprep.subr.mxu0 0.0
        %1913 = vmatpush1.msra.mxu0 0.0
        %1914 = vmatprep.subr.mxu0 0.0
        %1915 = vmatpush1.msra.mxu0 0.0
        %1916 = vmatprep.subr.mxu0 0.0
        %1917 = vmatpush1.msra.mxu0 0.0
        %1918 = vmatprep.subr.mxu0 0.0
        %1919 = vmatpush1.msra.mxu0 0.0
        %1920 = vmatprep.subr.mxu0 0.0
        %1921 = vmatpush1.msra.mxu0 0.0
        %1922 = vmatprep.subr.mxu0 0.0
        %1923 = vmatpush1.msra.mxu0 0.0
        %1924 = vmatprep.subr.mxu0 0.0
        %1925 = vmatpush1.msra.mxu0 0.0
        %1926 = vmatprep.subr.mxu0 0.0
        %1927 = vmatpush1.msra.mxu0 0.0
        %1928 = vmatprep.subr.mxu0 0.0
        %1929 = vmatpush1.msra.mxu0 0.0
        %1930 = vmatprep.subr.mxu0 0.0
        %1931 = vmatpush1.msra.mxu0 0.0
        %1932 = vmatprep.subr.mxu0 0.0
        %1933 = vmatpush1.msra.mxu0 0.0
        %1934 = vmatprep.subr.mxu0 0.0
        %1935 = vmatpush1.msra.mxu0 0.0
        %1936 = vmatprep.subr.mxu0 0.0
        %1937 = vmatpush1.msra.mxu0 0.0
        %1938 = vmatprep.subr.mxu0 0.0
        %1939 = vmatpush1.msra.mxu0 0.0
        %1940 = vmatprep.subr.mxu0 0.0
        %1941 = vmatpush1.msra.mxu0 0.0
        %1942 = vmatprep.subr.mxu0 0.0
        %1943 = vmatpush1.msra.mxu0 0.0
        %1944 = vmatprep.mubr.f32.mxu0 0.0
        %1945 = vmatmul.mubr.f32.gmra.mrb[0].mxu0 %v1878
        %v1946 = vpop.f32.mrb[0].mxu0
        %v1947 = vadd.f32 0.0, %v1946
        %v1948 = vpop.f32.mrb[0].mxu0
        %1949 = vdwg.mxu0
        %1950 = vrot.lane.b32.xlu0 %v1784, 120
        %v1951 = vpop.permute.xlu0 %1950
        %1952 = vrot.lane.b32.xlu0 %v1781, 88
        %v1953 = vpop.permute.xlu0 %1952
        %v1954 = vsel %vm506, %v1951, 0
        %v1956 = vsel %vm506, %v1953, 0
        %1958 = vmatprep.subr.mxu0 0.0
        %1959 = vmatpush1.xpose.msra.mxu0 %v1956
        %1960 = vmatprep.subr.mxu0 0.0
        %1961 = vmatpush1.xpose.msra.mxu0 0.0
        %1962 = vmatprep.subr.mxu0 0.0
        %1963 = vmatpush1.xpose.msra.mxu0 0.0
        %1964 = vmatprep.subr.mxu0 0.0
        %1965 = vmatpush1.xpose.msra.mxu0 0.0
        %1966 = vmatprep.subr.mxu0 0.0
        %1967 = vmatpush1.xpose.msra.mxu0 0.0
        %1968 = vmatprep.subr.mxu0 0.0
        %1969 = vmatpush1.xpose.msra.mxu0 0.0
        %1970 = vmatprep.subr.mxu0 0.0
        %1971 = vmatpush1.xpose.msra.mxu0 0.0
        %1972 = vmatprep.subr.mxu0 0.0
        %1973 = vmatpush1.xpose.msra.mxu0 0.0
        %1974 = vmatprep.subr.mxu0 0.0
        %1975 = vmatpush1.xpose.msra.mxu0 0.0
        %1976 = vmatprep.subr.mxu0 0.0
        %1977 = vmatpush1.xpose.msra.mxu0 0.0
        %1978 = vmatprep.subr.mxu0 0.0
        %1979 = vmatpush1.xpose.msra.mxu0 0.0
        %1980 = vmatprep.subr.mxu0 0.0
        %1981 = vmatpush1.xpose.msra.mxu0 0.0
        %1982 = vmatprep.subr.mxu0 0.0
        %1983 = vmatpush1.xpose.msra.mxu0 0.0
        %1984 = vmatprep.subr.mxu0 0.0
        %1985 = vmatpush1.xpose.msra.mxu0 0.0
        %1986 = vmatprep.subr.mxu0 0.0
        %1987 = vmatpush1.xpose.msra.mxu0 0.0
        %1988 = vmatprep.subr.mxu0 0.0
        %1989 = vmatpush1.xpose.msra.mxu0 0.0
        %1990 = vmatprep.subr.mxu0 0.0
        %1991 = vmatpush1.xpose.msra.mxu0 0.0
        %1992 = vmatprep.subr.mxu0 0.0
        %1993 = vmatpush1.xpose.msra.mxu0 0.0
        %1994 = vmatprep.subr.mxu0 0.0
        %1995 = vmatpush1.xpose.msra.mxu0 0.0
        %1996 = vmatprep.subr.mxu0 0.0
        %1997 = vmatpush1.xpose.msra.mxu0 0.0
        %1998 = vmatprep.subr.mxu0 0.0
        %1999 = vmatpush1.xpose.msra.mxu0 0.0
        %2000 = vmatprep.subr.mxu0 0.0
        %2001 = vmatpush1.xpose.msra.mxu0 0.0
        %2002 = vmatprep.subr.mxu0 0.0
        %2003 = vmatpush1.xpose.msra.mxu0 0.0
        %2004 = vmatprep.subr.mxu0 0.0
        %2005 = vmatpush1.xpose.msra.mxu0 0.0
        %2006 = vmatprep.subr.mxu0 0.0
        %2007 = vmatpush1.xpose.msra.mxu0 0.0
        %2008 = vmatprep.subr.mxu0 0.0
        %2009 = vmatpush1.xpose.msra.mxu0 0.0
        %2010 = vmatprep.subr.mxu0 0.0
        %2011 = vmatpush1.xpose.msra.mxu0 0.0
        %2012 = vmatprep.subr.mxu0 0.0
        %2013 = vmatpush1.xpose.msra.mxu0 0.0
        %2014 = vmatprep.subr.mxu0 0.0
        %2015 = vmatpush1.xpose.msra.mxu0 0.0
        %2016 = vmatprep.subr.mxu0 0.0
        %2017 = vmatpush1.xpose.msra.mxu0 0.0
        %2018 = vmatprep.subr.mxu0 0.0
        %2019 = vmatpush1.xpose.msra.mxu0 0.0
        %2020 = vmatprep.subr.mxu0 0.0
        %2021 = vmatpush1.xpose.msra.mxu0 0.0
        %2022 = vmatprep.mubr.f32.mxu0 0.0
        %2023 = vmatmul.mubr.f32.gmra.mrb[0].mxu0 %v1954
        %v2024 = vpop.f32.mrb[0].mxu0
        %v2025 = vadd.f32 %v501, %v2024
        %v2026 = vpop.f32.mrb[0].mxu0
        %2027 = vdwg.mxu0
        %v2028 = vsel %vm506, %v2025, -inf
        %2029 = vmax.xlane.f32.xlu0 %v2028
        %v2030 = vpop.xlane.xlu0 %2029
        %v2031 = vsub.f32 %v2025, %v2030
        %v2032 = vmul.f32 %v2031, 1.442695
        %v2033 = vpow.pop %v2032
        %v2034 = vsel %vm506, %v2033, 0.0
        %2035 = vadd.xlane.f32.xlu0 %v2034
        %v2036 = vpop.xlane.xlu0 %2035
        %v2037 = vrcp.pop %v2036
        %v2038 = vmul.f32 %v2033, %v2037
        %2039 = vrot.lane.b32.xlu0 %v1781, 56
        %v2040 = vpop.permute.xlu0 %2039
        %v2043 = vsel %vm506, %v2038, 0
        %2045 = vmatprep.subr.mxu0 0.0
        %2046 = vmatpush1.msra.mxu0 %v2040
        %2047 = vmatprep.subr.mxu0 0.0
        %2048 = vmatpush1.msra.mxu0 0.0
        %2049 = vmatprep.subr.mxu0 0.0
        %2050 = vmatpush1.msra.mxu0 0.0
        %2051 = vmatprep.subr.mxu0 0.0
        %2052 = vmatpush1.msra.mxu0 0.0
        %2053 = vmatprep.subr.mxu0 0.0
        %2054 = vmatpush1.msra.mxu0 0.0
        %2055 = vmatprep.subr.mxu0 0.0
        %2056 = vmatpush1.msra.mxu0 0.0
        %2057 = vmatprep.subr.mxu0 0.0
        %2058 = vmatpush1.msra.mxu0 0.0
        %2059 = vmatprep.subr.mxu0 0.0
        %2060 = vmatpush1.msra.mxu0 0.0
        %2061 = vmatprep.subr.mxu0 0.0
        %2062 = vmatpush1.msra.mxu0 0.0
        %2063 = vmatprep.subr.mxu0 0.0
        %2064 = vmatpush1.msra.mxu0 0.0
        %2065 = vmatprep.subr.mxu0 0.0
        %2066 = vmatpush1.msra.mxu0 0.0
        %2067 = vmatprep.subr.mxu0 0.0
        %2068 = vmatpush1.msra.mxu0 0.0
        %2069 = vmatprep.subr.mxu0 0.0
        %2070 = vmatpush1.msra.mxu0 0.0
        %2071 = vmatprep.subr.mxu0 0.0
        %2072 = vmatpush1.msra.mxu0 0.0
        %2073 = vmatprep.subr.mxu0 0.0
        %2074 = vmatpush1.msra.mxu0 0.0
        %2075 = vmatprep.subr.mxu0 0.0
        %2076 = vmatpush1.msra.mxu0 0.0
        %2077 = vmatprep.subr.mxu0 0.0
        %2078 = vmatpush1.msra.mxu0 0.0
        %2079 = vmatprep.subr.mxu0 0.0
        %2080 = vmatpush1.msra.mxu0 0.0
        %2081 = vmatprep.subr.mxu0 0.0
        %2082 = vmatpush1.msra.mxu0 0.0
        %2083 = vmatprep.subr.mxu0 0.0
        %2084 = vmatpush1.msra.mxu0 0.0
        %2085 = vmatprep.subr.mxu0 0.0
        %2086 = vmatpush1.msra.mxu0 0.0
        %2087 = vmatprep.subr.mxu0 0.0
        %2088 = vmatpush1.msra.mxu0 0.0
        %2089 = vmatprep.subr.mxu0 0.0
        %2090 = vmatpush1.msra.mxu0 0.0
        %2091 = vmatprep.subr.mxu0 0.0
        %2092 = vmatpush1.msra.mxu0 0.0
        %2093 = vmatprep.subr.mxu0 0.0
        %2094 = vmatpush1.msra.mxu0 0.0
        %2095 = vmatprep.subr.mxu0 0.0
        %2096 = vmatpush1.msra.mxu0 0.0
        %2097 = vmatprep.subr.mxu0 0.0
        %2098 = vmatpush1.msra.mxu0 0.0
        %2099 = vmatprep.subr.mxu0 0.0
        %2100 = vmatpush1.msra.mxu0 0.0
        %2101 = vmatprep.subr.mxu0 0.0
        %2102 = vmatpush1.msra.mxu0 0.0
        %2103 = vmatprep.subr.mxu0 0.0
        %2104 = vmatpush1.msra.mxu0 0.0
        %2105 = vmatprep.subr.mxu0 0.0
        %2106 = vmatpush1.msra.mxu0 0.0
        %2107 = vmatprep.subr.mxu0 0.0
        %2108 = vmatpush1.msra.mxu0 0.0
        %2109 = vmatprep.mubr.f32.mxu0 0.0
        %2110 = vmatmul.mubr.f32.gmra.mrb[0].mxu0 %v2043
        %v2111 = vpop.f32.mrb[0].mxu0
        %v2112 = vadd.f32 0.0, %v2111
        %v2113 = vpop.f32.mrb[0].mxu0
        %2114 = vdwg.mxu0
        %v2116 = vsel %vm506, %v2112, 0
        %2118 = vmatprep.subr.mxu0 0.0
        %2119 = vmatpush1.msra.mxu0 %v1703
        %2120 = vmatprep.subr.mxu0 0.0
        %2121 = vmatpush1.msra.mxu0 0.0
        %2122 = vmatprep.subr.mxu0 0.0
        %2123 = vmatpush1.msra.mxu0 0.0
        %2124 = vmatprep.subr.mxu0 0.0
        %2125 = vmatpush1.msra.mxu0 0.0
        %2126 = vmatprep.subr.mxu0 0.0
        %2127 = vmatpush1.msra.mxu0 0.0
        %2128 = vmatprep.subr.mxu0 0.0
        %2129 = vmatpush1.msra.mxu0 0.0
        %2130 = vmatprep.subr.mxu0 0.0
        %2131 = vmatpush1.msra.mxu0 0.0
        %2132 = vmatprep.subr.mxu0 0.0
        %2133 = vmatpush1.msra.mxu0 0.0
        %2134 = vmatprep.subr.mxu0 0.0
        %2135 = vmatpush1.msra.mxu0 0.0
        %2136 = vmatprep.subr.mxu0 0.0
        %2137 = vmatpush1.msra.mxu0 0.0
        %2138 = vmatprep.subr.mxu0 0.0
        %2139 = vmatpush1.msra.mxu0 0.0
        %2140 = vmatprep.subr.mxu0 0.0
        %2141 = vmatpush1.msra.mxu0 0.0
        %2142 = vmatprep.subr.mxu0 0.0
        %2143 = vmatpush1.msra.mxu0 0.0
        %2144 = vmatprep.subr.mxu0 0.0
        %2145 = vmatpush1.msra.mxu0 0.0
        %2146 = vmatprep.subr.mxu0 0.0
        %2147 = vmatpush1.msra.mxu0 0.0
        %2148 = vmatprep.subr.mxu0 0.0
        %2149 = vmatpush1.msra.mxu0 0.0
        %2150 = vmatprep.subr.mxu0 0.0
        %2151 = vmatpush1.msra.mxu0 0.0
        %2152 = vmatprep.subr.mxu0 0.0
        %2153 = vmatpush1.msra.mxu0 0.0
        %2154 = vmatprep.subr.mxu0 0.0
        %2155 = vmatpush1.msra.mxu0 0.0
        %2156 = vmatprep.subr.mxu0 0.0
        %2157 = vmatpush1.msra.mxu0 0.0
        %2158 = vmatprep.subr.mxu0 0.0
        %2159 = vmatpush1.msra.mxu0 0.0
        %2160 = vmatprep.subr.mxu0 0.0
        %2161 = vmatpush1.msra.mxu0 0.0
        %2162 = vmatprep.subr.mxu0 0.0
        %2163 = vmatpush1.msra.mxu0 0.0
        %2164 = vmatprep.subr.mxu0 0.0
        %2165 = vmatpush1.msra.mxu0 0.0
        %2166 = vmatprep.subr.mxu0 0.0
        %2167 = vmatpush1.msra.mxu0 0.0
        %2168 = vmatprep.subr.mxu0 0.0
        %2169 = vmatpush1.msra.mxu0 0.0
        %2170 = vmatprep.subr.mxu0 0.0
        %2171 = vmatpush1.msra.mxu0 0.0
        %2172 = vmatprep.subr.mxu0 0.0
        %2173 = vmatpush1.msra.mxu0 0.0
        %2174 = vmatprep.subr.mxu0 0.0
        %2175 = vmatpush1.msra.mxu0 0.0
        %2176 = vmatprep.subr.mxu0 0.0
        %2177 = vmatpush1.msra.mxu0 0.0
        %2178 = vmatprep.subr.mxu0 0.0
        %2179 = vmatpush1.msra.mxu0 0.0
        %2180 = vmatprep.subr.mxu0 0.0
        %2181 = vmatpush1.msra.mxu0 0.0
        %2182 = vmatprep.mubr.f32.mxu0 0.0
        %2183 = vmatmul.mubr.f32.gmra.mrb[0].mxu0 %v2116
        %v2184 = vpop.f32.mrb[0].mxu0
        %v2185 = vadd.f32 0.0, %v2184
        %v2186 = vpop.f32.mrb[0].mxu0
        %2187 = vdwg.mxu0
        %v2189 = vsel %vm506, %v1947, 0
        %2191 = vmatprep.subr.mxu0 0.0
        %2192 = vmatpush1.msra.mxu0 %v1702
        %2193 = vmatprep.subr.mxu0 0.0
        %2194 = vmatpush1.msra.mxu0 0.0
        %2195 = vmatprep.subr.mxu0 0.0
        %2196 = vmatpush1.msra.mxu0 0.0
        %2197 = vmatprep.subr.mxu0 0.0
        %2198 = vmatpush1.msra.mxu0 0.0
        %2199 = vmatprep.subr.mxu0 0.0
        %2200 = vmatpush1.msra.mxu0 0.0
        %2201 = vmatprep.subr.mxu0 0.0
        %2202 = vmatpush1.msra.mxu0 0.0
        %2203 = vmatprep.subr.mxu0 0.0
        %2204 = vmatpush1.msra.mxu0 0.0
        %2205 = vmatprep.subr.mxu0 0.0
        %2206 = vmatpush1.msra.mxu0 0.0
        %2207 = vmatprep.subr.mxu0 0.0
        %2208 = vmatpush1.msra.mxu0 0.0
        %2209 = vmatprep.subr.mxu0 0.0
        %2210 = vmatpush1.msra.mxu0 0.0
        %2211 = vmatprep.subr.mxu0 0.0
        %2212 = vmatpush1.msra.mxu0 0.0
        %2213 = vmatprep.subr.mxu0 0.0
        %2214 = vmatpush1.msra.mxu0 0.0
        %2215 = vmatprep.subr.mxu0 0.0
        %2216 = vmatpush1.msra.mxu0 0.0
        %2217 = vmatprep.subr.mxu0 0.0
        %2218 = vmatpush1.msra.mxu0 0.0
        %2219 = vmatprep.subr.mxu0 0.0
        %2220 = vmatpush1.msra.mxu0 0.0
        %2221 = vmatprep.subr.mxu0 0.0
        %2222 = vmatpush1.msra.mxu0 0.0
        %2223 = vmatprep.subr.mxu0 0.0
        %2224 = vmatpush1.msra.mxu0 0.0
        %2225 = vmatprep.subr.mxu0 0.0
        %2226 = vmatpush1.msra.mxu0 0.0
        %2227 = vmatprep.subr.mxu0 0.0
        %2228 = vmatpush1.msra.mxu0 0.0
        %2229 = vmatprep.subr.mxu0 0.0
        %2230 = vmatpush1.msra.mxu0 0.0
        %2231 = vmatprep.subr.mxu0 0.0
        %2232 = vmatpush1.msra.mxu0 0.0
        %2233 = vmatprep.subr.mxu0 0.0
        %2234 = vmatpush1.msra.mxu0 0.0
        %2235 = vmatprep.subr.mxu0 0.0
        %2236 = vmatpush1.msra.mxu0 0.0
        %2237 = vmatprep.subr.mxu0 0.0
        %2238 = vmatpush1.msra.mxu0 0.0
        %2239 = vmatprep.subr.mxu0 0.0
        %2240 = vmatpush1.msra.mxu0 0.0
        %2241 = vmatprep.subr.mxu0 0.0
        %2242 = vmatpush1.msra.mxu0 0.0
        %2243 = vmatprep.subr.mxu0 0.0
        %2244 = vmatpush1.msra.mxu0 0.0
        %2245 = vmatprep.subr.mxu0 0.0
        %2246 = vmatpush1.msra.mxu0 0.0
        %2247 = vmatprep.subr.mxu0 0.0
        %2248 = vmatpush1.msra.mxu0 0.0
        %2249 = vmatprep.subr.mxu0 0.0
        %2250 = vmatpush1.msra.mxu0 0.0
        %2251 = vmatprep.subr.mxu0 0.0
        %2252 = vmatpush1.msra.mxu0 0.0
        %2253 = vmatprep.subr.mxu0 0.0
        %2254 = vmatpush1.msra.mxu0 0.0
        %2255 = vmatprep.mubr.f32.mxu0 0.0
        %2256 = vmatmul.mubr.f32.gmra.mrb[0].mxu0 %v2189
        %v2257 = vpop.f32.mrb[0].mxu0
        %v2258 = vadd.f32 %v2185, %v2257
        %v2259 = vpop.f32.mrb[0].mxu0
        %2260 = vdwg.mxu0
        %2261 = vrot.lane.b32.xlu0 %v1784, 112
        %v2262 = vpop.permute.xlu0 %2261
        %2263 = vrot.lane.b32.xlu0 %v1781, 80
        %v2264 = vpop.permute.xlu0 %2263
        %v2265 = vsel %vm506, %v2262, 0
        %v2267 = vsel %vm506, %v2264, 0
        %2269 = vmatprep.subr.mxu0 0.0
        %2270 = vmatpush1.xpose.msra.mxu0 %v2267
        %2271 = vmatprep.subr.mxu0 0.0
        %2272 = vmatpush1.xpose.msra.mxu0 0.0
        %2273 = vmatprep.subr.mxu0 0.0
        %2274 = vmatpush1.xpose.msra.mxu0 0.0
        %2275 = vmatprep.subr.mxu0 0.0
        %2276 = vmatpush1.xpose.msra.mxu0 0.0
        %2277 = vmatprep.subr.mxu0 0.0
        %2278 = vmatpush1.xpose.msra.mxu0 0.0
        %2279 = vmatprep.subr.mxu0 0.0
        %2280 = vmatpush1.xpose.msra.mxu0 0.0
        %2281 = vmatprep.subr.mxu0 0.0
        %2282 = vmatpush1.xpose.msra.mxu0 0.0
        %2283 = vmatprep.subr.mxu0 0.0
        %2284 = vmatpush1.xpose.msra.mxu0 0.0
        %2285 = vmatprep.subr.mxu0 0.0
        %2286 = vmatpush1.xpose.msra.mxu0 0.0
        %2287 = vmatprep.subr.mxu0 0.0
        %2288 = vmatpush1.xpose.msra.mxu0 0.0
        %2289 = vmatprep.subr.mxu0 0.0
        %2290 = vmatpush1.xpose.msra.mxu0 0.0
        %2291 = vmatprep.subr.mxu0 0.0
        %2292 = vmatpush1.xpose.msra.mxu0 0.0
        %2293 = vmatprep.subr.mxu0 0.0
        %2294 = vmatpush1.xpose.msra.mxu0 0.0
        %2295 = vmatprep.subr.mxu0 0.0
        %2296 = vmatpush1.xpose.msra.mxu0 0.0
        %2297 = vmatprep.subr.mxu0 0.0
        %2298 = vmatpush1.xpose.msra.mxu0 0.0
        %2299 = vmatprep.subr.mxu0 0.0
        %2300 = vmatpush1.xpose.msra.mxu0 0.0
        %2301 = vmatprep.subr.mxu0 0.0
        %2302 = vmatpush1.xpose.msra.mxu0 0.0
        %2303 = vmatprep.subr.mxu0 0.0
        %2304 = vmatpush1.xpose.msra.mxu0 0.0
        %2305 = vmatprep.subr.mxu0 0.0
        %2306 = vmatpush1.xpose.msra.mxu0 0.0
        %2307 = vmatprep.subr.mxu0 0.0
        %2308 = vmatpush1.xpose.msra.mxu0 0.0
        %2309 = vmatprep.subr.mxu0 0.0
        %2310 = vmatpush1.xpose.msra.mxu0 0.0
        %2311 = vmatprep.subr.mxu0 0.0
        %2312 = vmatpush1.xpose.msra.mxu0 0.0
        %2313 = vmatprep.subr.mxu0 0.0
        %2314 = vmatpush1.xpose.msra.mxu0 0.0
        %2315 = vmatprep.subr.mxu0 0.0
        %2316 = vmatpush1.xpose.msra.mxu0 0.0
        %2317 = vmatprep.subr.mxu0 0.0
        %2318 = vmatpush1.xpose.msra.mxu0 0.0
        %2319 = vmatprep.subr.mxu0 0.0
        %2320 = vmatpush1.xpose.msra.mxu0 0.0
        %2321 = vmatprep.subr.mxu0 0.0
        %2322 = vmatpush1.xpose.msra.mxu0 0.0
        %2323 = vmatprep.subr.mxu0 0.0
        %2324 = vmatpush1.xpose.msra.mxu0 0.0
        %2325 = vmatprep.subr.mxu0 0.0
        %2326 = vmatpush1.xpose.msra.mxu0 0.0
        %2327 = vmatprep.subr.mxu0 0.0
        %2328 = vmatpush1.xpose.msra.mxu0 0.0
        %2329 = vmatprep.subr.mxu0 0.0
        %2330 = vmatpush1.xpose.msra.mxu0 0.0
        %2331 = vmatprep.subr.mxu0 0.0
        %2332 = vmatpush1.xpose.msra.mxu0 0.0
        %2333 = vmatprep.mubr.f32.mxu0 0.0
        %2334 = vmatmul.mubr.f32.gmra.mrb[0].mxu0 %v2265
        %v2335 = vpop.f32.mrb[0].mxu0
        %v2336 = vadd.f32 %v501, %v2335
        %v2337 = vpop.f32.mrb[0].mxu0
        %2338 = vdwg.mxu0
        %v2339 = vsel %vm506, %v2336, -inf
        %2340 = vmax.xlane.f32.xlu0 %v2339
        %v2341 = vpop.xlane.xlu0 %2340
        %v2342 = vsub.f32 %v2336, %v2341
        %v2343 = vmul.f32 %v2342, 1.442695
        %v2344 = vpow.pop %v2343
        %v2345 = vsel %vm506, %v2344, 0.0
        %2346 = vadd.xlane.f32.xlu0 %v2345
        %v2347 = vpop.xlane.xlu0 %2346
        %v2348 = vrcp.pop %v2347
        %v2349 = vmul.f32 %v2344, %v2348
        %2350 = vrot.lane.b32.xlu0 %v1781, 48
        %v2351 = vpop.permute.xlu0 %2350
        %v2354 = vsel %vm506, %v2349, 0
        %2356 = vmatprep.subr.mxu0 0.0
        %2357 = vmatpush1.msra.mxu0 %v2351
        %2358 = vmatprep.subr.mxu0 0.0
        %2359 = vmatpush1.msra.mxu0 0.0
        %2360 = vmatprep.subr.mxu0 0.0
        %2361 = vmatpush1.msra.mxu0 0.0
        %2362 = vmatprep.subr.mxu0 0.0
        %2363 = vmatpush1.msra.mxu0 0.0
        %2364 = vmatprep.subr.mxu0 0.0
        %2365 = vmatpush1.msra.mxu0 0.0
        %2366 = vmatprep.subr.mxu0 0.0
        %2367 = vmatpush1.msra.mxu0 0.0
        %2368 = vmatprep.subr.mxu0 0.0
        %2369 = vmatpush1.msra.mxu0 0.0
        %2370 = vmatprep.subr.mxu0 0.0
        %2371 = vmatpush1.msra.mxu0 0.0
        %2372 = vmatprep.subr.mxu0 0.0
        %2373 = vmatpush1.msra.mxu0 0.0
        %2374 = vmatprep.subr.mxu0 0.0
        %2375 = vmatpush1.msra.mxu0 0.0
        %2376 = vmatprep.subr.mxu0 0.0
        %2377 = vmatpush1.msra.mxu0 0.0
        %2378 = vmatprep.subr.mxu0 0.0
        %2379 = vmatpush1.msra.mxu0 0.0
        %2380 = vmatprep.subr.mxu0 0.0
        %2381 = vmatpush1.msra.mxu0 0.0
        %2382 = vmatprep.subr.mxu0 0.0
        %2383 = vmatpush1.msra.mxu0 0.0
        %2384 = vmatprep.subr.mxu0 0.0
        %2385 = vmatpush1.msra.mxu0 0.0
        %2386 = vmatprep.subr.mxu0 0.0
        %2387 = vmatpush1.msra.mxu0 0.0
        %2388 = vmatprep.subr.mxu0 0.0
        %2389 = vmatpush1.msra.mxu0 0.0
        %2390 = vmatprep.subr.mxu0 0.0
        %2391 = vmatpush1.msra.mxu0 0.0
        %2392 = vmatprep.subr.mxu0 0.0
        %2393 = vmatpush1.msra.mxu0 0.0
        %2394 = vmatprep.subr.mxu0 0.0
        %2395 = vmatpush1.msra.mxu0 0.0
        %2396 = vmatprep.subr.mxu0 0.0
        %2397 = vmatpush1.msra.mxu0 0.0
        %2398 = vmatprep.subr.mxu0 0.0
        %2399 = vmatpush1.msra.mxu0 0.0
        %2400 = vmatprep.subr.mxu0 0.0
        %2401 = vmatpush1.msra.mxu0 0.0
        %2402 = vmatprep.subr.mxu0 0.0
        %2403 = vmatpush1.msra.mxu0 0.0
        %2404 = vmatprep.subr.mxu0 0.0
        %2405 = vmatpush1.msra.mxu0 0.0
        %2406 = vmatprep.subr.mxu0 0.0
        %2407 = vmatpush1.msra.mxu0 0.0
        %2408 = vmatprep.subr.mxu0 0.0
        %2409 = vmatpush1.msra.mxu0 0.0
        %2410 = vmatprep.subr.mxu0 0.0
        %2411 = vmatpush1.msra.mxu0 0.0
        %2412 = vmatprep.subr.mxu0 0.0
        %2413 = vmatpush1.msra.mxu0 0.0
        %2414 = vmatprep.subr.mxu0 0.0
        %2415 = vmatpush1.msra.mxu0 0.0
        %2416 = vmatprep.subr.mxu0 0.0
        %2417 = vmatpush1.msra.mxu0 0.0
        %2418 = vmatprep.subr.mxu0 0.0
        %2419 = vmatpush1.msra.mxu0 0.0
        %2420 = vmatprep.mubr.f32.mxu0 0.0
        %2421 = vmatmul.mubr.f32.gmra.mrb[0].mxu0 %v2354
        %v2422 = vpop.f32.mrb[0].mxu0
        %v2423 = vadd.f32 0.0, %v2422
        %v2424 = vpop.f32.mrb[0].mxu0
        %2425 = vdwg.mxu0
        %v2427 = vsel %vm506, %v2423, 0
        %2429 = vmatprep.subr.mxu0 0.0
        %2430 = vmatpush1.msra.mxu0 %v1704
        %2431 = vmatprep.subr.mxu0 0.0
        %2432 = vmatpush1.msra.mxu0 0.0
        %2433 = vmatprep.subr.mxu0 0.0
        %2434 = vmatpush1.msra.mxu0 0.0
        %2435 = vmatprep.subr.mxu0 0.0
        %2436 = vmatpush1.msra.mxu0 0.0
        %2437 = vmatprep.subr.mxu0 0.0
        %2438 = vmatpush1.msra.mxu0 0.0
        %2439 = vmatprep.subr.mxu0 0.0
        %2440 = vmatpush1.msra.mxu0 0.0
        %2441 = vmatprep.subr.mxu0 0.0
        %2442 = vmatpush1.msra.mxu0 0.0
        %2443 = vmatprep.subr.mxu0 0.0
        %2444 = vmatpush1.msra.mxu0 0.0
        %2445 = vmatprep.subr.mxu0 0.0
        %2446 = vmatpush1.msra.mxu0 0.0
        %2447 = vmatprep.subr.mxu0 0.0
        %2448 = vmatpush1.msra.mxu0 0.0
        %2449 = vmatprep.subr.mxu0 0.0
        %2450 = vmatpush1.msra.mxu0 0.0
        %2451 = vmatprep.subr.mxu0 0.0
        %2452 = vmatpush1.msra.mxu0 0.0
        %2453 = vmatprep.subr.mxu0 0.0
        %2454 = vmatpush1.msra.mxu0 0.0
        %2455 = vmatprep.subr.mxu0 0.0
        %2456 = vmatpush1.msra.mxu0 0.0
        %2457 = vmatprep.subr.mxu0 0.0
        %2458 = vmatpush1.msra.mxu0 0.0
        %2459 = vmatprep.subr.mxu0 0.0
        %2460 = vmatpush1.msra.mxu0 0.0
        %2461 = vmatprep.subr.mxu0 0.0
        %2462 = vmatpush1.msra.mxu0 0.0
        %2463 = vmatprep.subr.mxu0 0.0
        %2464 = vmatpush1.msra.mxu0 0.0
        %2465 = vmatprep.subr.mxu0 0.0
        %2466 = vmatpush1.msra.mxu0 0.0
        %2467 = vmatprep.subr.mxu0 0.0
        %2468 = vmatpush1.msra.mxu0 0.0
        %2469 = vmatprep.subr.mxu0 0.0
        %2470 = vmatpush1.msra.mxu0 0.0
        %2471 = vmatprep.subr.mxu0 0.0
        %2472 = vmatpush1.msra.mxu0 0.0
        %2473 = vmatprep.subr.mxu0 0.0
        %2474 = vmatpush1.msra.mxu0 0.0
        %2475 = vmatprep.subr.mxu0 0.0
        %2476 = vmatpush1.msra.mxu0 0.0
        %2477 = vmatprep.subr.mxu0 0.0
        %2478 = vmatpush1.msra.mxu0 0.0
        %2479 = vmatprep.subr.mxu0 0.0
        %2480 = vmatpush1.msra.mxu0 0.0
        %2481 = vmatprep.subr.mxu0 0.0
        %2482 = vmatpush1.msra.mxu0 0.0
        %2483 = vmatprep.subr.mxu0 0.0
        %2484 = vmatpush1.msra.mxu0 0.0
        %2485 = vmatprep.subr.mxu0 0.0
        %2486 = vmatpush1.msra.mxu0 0.0
        %2487 = vmatprep.subr.mxu0 0.0
        %2488 = vmatpush1.msra.mxu0 0.0
        %2489 = vmatprep.subr.mxu0 0.0
        %2490 = vmatpush1.msra.mxu0 0.0
        %2491 = vmatprep.subr.mxu0 0.0
        %2492 = vmatpush1.msra.mxu0 0.0
        %2493 = vmatprep.mubr.f32.mxu0 0.0
        %2494 = vmatmul.mubr.f32.gmra.mrb[0].mxu0 %v2427
        %v2495 = vpop.f32.mrb[0].mxu0
        %v2496 = vadd.f32 0.0, %v2495
        %v2497 = vpop.f32.mrb[0].mxu0
        %2498 = vdwg.mxu0
        %v2499 = vadd.f32 %v2258, %v2496
        %2500 = vrot.lane.b32.xlu0 %v1784, 104
        %v2501 = vpop.permute.xlu0 %2500
        %2502 = vrot.lane.b32.xlu0 %v1781, 72
        %v2503 = vpop.permute.xlu0 %2502
        %v2504 = vsel %vm506, %v2501, 0
        %v2506 = vsel %vm506, %v2503, 0
        %2508 = vmatprep.subr.mxu0 0.0
        %2509 = vmatpush1.xpose.msra.mxu0 %v2506
        %2510 = vmatprep.subr.mxu0 0.0
        %2511 = vmatpush1.xpose.msra.mxu0 0.0
        %2512 = vmatprep.subr.mxu0 0.0
        %2513 = vmatpush1.xpose.msra.mxu0 0.0
        %2514 = vmatprep.subr.mxu0 0.0
        %2515 = vmatpush1.xpose.msra.mxu0 0.0
        %2516 = vmatprep.subr.mxu0 0.0
        %2517 = vmatpush1.xpose.msra.mxu0 0.0
        %2518 = vmatprep.subr.mxu0 0.0
        %2519 = vmatpush1.xpose.msra.mxu0 0.0
        %2520 = vmatprep.subr.mxu0 0.0
        %2521 = vmatpush1.xpose.msra.mxu0 0.0
        %2522 = vmatprep.subr.mxu0 0.0
        %2523 = vmatpush1.xpose.msra.mxu0 0.0
        %2524 = vmatprep.subr.mxu0 0.0
        %2525 = vmatpush1.xpose.msra.mxu0 0.0
        %2526 = vmatprep.subr.mxu0 0.0
        %2527 = vmatpush1.xpose.msra.mxu0 0.0
        %2528 = vmatprep.subr.mxu0 0.0
        %2529 = vmatpush1.xpose.msra.mxu0 0.0
        %2530 = vmatprep.subr.mxu0 0.0
        %2531 = vmatpush1.xpose.msra.mxu0 0.0
        %2532 = vmatprep.subr.mxu0 0.0
        %2533 = vmatpush1.xpose.msra.mxu0 0.0
        %2534 = vmatprep.subr.mxu0 0.0
        %2535 = vmatpush1.xpose.msra.mxu0 0.0
        %2536 = vmatprep.subr.mxu0 0.0
        %2537 = vmatpush1.xpose.msra.mxu0 0.0
        %2538 = vmatprep.subr.mxu0 0.0
        %2539 = vmatpush1.xpose.msra.mxu0 0.0
        %2540 = vmatprep.subr.mxu0 0.0
        %2541 = vmatpush1.xpose.msra.mxu0 0.0
        %2542 = vmatprep.subr.mxu0 0.0
        %2543 = vmatpush1.xpose.msra.mxu0 0.0
        %2544 = vmatprep.subr.mxu0 0.0
        %2545 = vmatpush1.xpose.msra.mxu0 0.0
        %2546 = vmatprep.subr.mxu0 0.0
        %2547 = vmatpush1.xpose.msra.mxu0 0.0
        %2548 = vmatprep.subr.mxu0 0.0
        %2549 = vmatpush1.xpose.msra.mxu0 0.0
        %2550 = vmatprep.subr.mxu0 0.0
        %2551 = vmatpush1.xpose.msra.mxu0 0.0
        %2552 = vmatprep.subr.mxu0 0.0
        %2553 = vmatpush1.xpose.msra.mxu0 0.0
        %2554 = vmatprep.subr.mxu0 0.0
        %2555 = vmatpush1.xpose.msra.mxu0 0.0
        %2556 = vmatprep.subr.mxu0 0.0
        %2557 = vmatpush1.xpose.msra.mxu0 0.0
        %2558 = vmatprep.subr.mxu0 0.0
        %2559 = vmatpush1.xpose.msra.mxu0 0.0
        %2560 = vmatprep.subr.mxu0 0.0
        %2561 = vmatpush1.xpose.msra.mxu0 0.0
        %2562 = vmatprep.subr.mxu0 0.0
        %2563 = vmatpush1.xpose.msra.mxu0 0.0
        %2564 = vmatprep.subr.mxu0 0.0
        %2565 = vmatpush1.xpose.msra.mxu0 0.0
        %2566 = vmatprep.subr.mxu0 0.0
        %2567 = vmatpush1.xpose.msra.mxu0 0.0
        %2568 = vmatprep.subr.mxu0 0.0
        %2569 = vmatpush1.xpose.msra.mxu0 0.0
        %2570 = vmatprep.subr.mxu0 0.0
        %2571 = vmatpush1.xpose.msra.mxu0 0.0
        %2572 = vmatprep.mubr.f32.mxu0 0.0
        %2573 = vmatmul.mubr.f32.gmra.mrb[0].mxu0 %v2504
        %v2574 = vpop.f32.mrb[0].mxu0
        %v2575 = vadd.f32 %v501, %v2574
        %v2576 = vpop.f32.mrb[0].mxu0
        %2577 = vdwg.mxu0
        %v2578 = vsel %vm506, %v2575, -inf
        %2579 = vmax.xlane.f32.xlu0 %v2578
        %v2580 = vpop.xlane.xlu0 %2579
        %v2581 = vsub.f32 %v2575, %v2580
        %v2582 = vmul.f32 %v2581, 1.442695
        %v2583 = vpow.pop %v2582
        %v2584 = vsel %vm506, %v2583, 0.0
        %2585 = vadd.xlane.f32.xlu0 %v2584
        %v2586 = vpop.xlane.xlu0 %2585
        %v2587 = vrcp.pop %v2586
        %v2588 = vmul.f32 %v2583, %v2587
        %2589 = vrot.lane.b32.xlu0 %v1781, 40
        %v2590 = vpop.permute.xlu0 %2589
        %v2593 = vsel %vm506, %v2588, 0
        %2595 = vmatprep.subr.mxu0 0.0
        %2596 = vmatpush1.msra.mxu0 %v2590
        %2597 = vmatprep.subr.mxu0 0.0
        %2598 = vmatpush1.msra.mxu0 0.0
        %2599 = vmatprep.subr.mxu0 0.0
        %2600 = vmatpush1.msra.mxu0 0.0
        %2601 = vmatprep.subr.mxu0 0.0
        %2602 = vmatpush1.msra.mxu0 0.0
        %2603 = vmatprep.subr.mxu0 0.0
        %2604 = vmatpush1.msra.mxu0 0.0
        %2605 = vmatprep.subr.mxu0 0.0
        %2606 = vmatpush1.msra.mxu0 0.0
        %2607 = vmatprep.subr.mxu0 0.0
        %2608 = vmatpush1.msra.mxu0 0.0
        %2609 = vmatprep.subr.mxu0 0.0
        %2610 = vmatpush1.msra.mxu0 0.0
        %2611 = vmatprep.subr.mxu0 0.0
        %2612 = vmatpush1.msra.mxu0 0.0
        %2613 = vmatprep.subr.mxu0 0.0
        %2614 = vmatpush1.msra.mxu0 0.0
        %2615 = vmatprep.subr.mxu0 0.0
        %2616 = vmatpush1.msra.mxu0 0.0
        %2617 = vmatprep.subr.mxu0 0.0
        %2618 = vmatpush1.msra.mxu0 0.0
        %2619 = vmatprep.subr.mxu0 0.0
        %2620 = vmatpush1.msra.mxu0 0.0
        %2621 = vmatprep.subr.mxu0 0.0
        %2622 = vmatpush1.msra.mxu0 0.0
        %2623 = vmatprep.subr.mxu0 0.0
        %2624 = vmatpush1.msra.mxu0 0.0
        %2625 = vmatprep.subr.mxu0 0.0
        %2626 = vmatpush1.msra.mxu0 0.0
        %2627 = vmatprep.subr.mxu0 0.0
        %2628 = vmatpush1.msra.mxu0 0.0
        %2629 = vmatprep.subr.mxu0 0.0
        %2630 = vmatpush1.msra.mxu0 0.0
        %2631 = vmatprep.subr.mxu0 0.0
        %2632 = vmatpush1.msra.mxu0 0.0
        %2633 = vmatprep.subr.mxu0 0.0
        %2634 = vmatpush1.msra.mxu0 0.0
        %2635 = vmatprep.subr.mxu0 0.0
        %2636 = vmatpush1.msra.mxu0 0.0
        %2637 = vmatprep.subr.mxu0 0.0
        %2638 = vmatpush1.msra.mxu0 0.0
        %2639 = vmatprep.subr.mxu0 0.0
        %2640 = vmatpush1.msra.mxu0 0.0
        %2641 = vmatprep.subr.mxu0 0.0
        %2642 = vmatpush1.msra.mxu0 0.0
        %2643 = vmatprep.subr.mxu0 0.0
        %2644 = vmatpush1.msra.mxu0 0.0
        %2645 = vmatprep.subr.mxu0 0.0
        %2646 = vmatpush1.msra.mxu0 0.0
        %2647 = vmatprep.subr.mxu0 0.0
        %2648 = vmatpush1.msra.mxu0 0.0
        %2649 = vmatprep.subr.mxu0 0.0
        %2650 = vmatpush1.msra.mxu0 0.0
        %2651 = vmatprep.subr.mxu0 0.0
        %2652 = vmatpush1.msra.mxu0 0.0
        %2653 = vmatprep.subr.mxu0 0.0
        %2654 = vmatpush1.msra.mxu0 0.0
        %2655 = vmatprep.subr.mxu0 0.0
        %2656 = vmatpush1.msra.mxu0 0.0
        %2657 = vmatprep.subr.mxu0 0.0
        %2658 = vmatpush1.msra.mxu0 0.0
        %2659 = vmatprep.mubr.f32.mxu0 0.0
        %2660 = vmatmul.mubr.f32.gmra.mrb[0].mxu0 %v2593
        %v2661 = vpop.f32.mrb[0].mxu0
        %v2662 = vadd.f32 0.0, %v2661
        %v2663 = vpop.f32.mrb[0].mxu0
        %2664 = vdwg.mxu0
        %v2666 = vsel %vm506, %v2662, 0
        %2668 = vmatprep.subr.mxu0 0.0
        %2669 = vmatpush1.msra.mxu0 %v1705
        %2670 = vmatprep.subr.mxu0 0.0
        %2671 = vmatpush1.msra.mxu0 0.0
        %2672 = vmatprep.subr.mxu0 0.0
        %2673 = vmatpush1.msra.mxu0 0.0
        %2674 = vmatprep.subr.mxu0 0.0
        %2675 = vmatpush1.msra.mxu0 0.0
        %2676 = vmatprep.subr.mxu0 0.0
        %2677 = vmatpush1.msra.mxu0 0.0
        %2678 = vmatprep.subr.mxu0 0.0
        %2679 = vmatpush1.msra.mxu0 0.0
        %2680 = vmatprep.subr.mxu0 0.0
        %2681 = vmatpush1.msra.mxu0 0.0
        %2682 = vmatprep.subr.mxu0 0.0
        %2683 = vmatpush1.msra.mxu0 0.0
        %2684 = vmatprep.subr.mxu0 0.0
        %2685 = vmatpush1.msra.mxu0 0.0
        %2686 = vmatprep.subr.mxu0 0.0
        %2687 = vmatpush1.msra.mxu0 0.0
        %2688 = vmatprep.subr.mxu0 0.0
        %2689 = vmatpush1.msra.mxu0 0.0
        %2690 = vmatprep.subr.mxu0 0.0
        %2691 = vmatpush1.msra.mxu0 0.0
        %2692 = vmatprep.subr.mxu0 0.0
        %2693 = vmatpush1.msra.mxu0 0.0
        %2694 = vmatprep.subr.mxu0 0.0
        %2695 = vmatpush1.msra.mxu0 0.0
        %2696 = vmatprep.subr.mxu0 0.0
        %2697 = vmatpush1.msra.mxu0 0.0
        %2698 = vmatprep.subr.mxu0 0.0
        %2699 = vmatpush1.msra.mxu0 0.0
        %2700 = vmatprep.subr.mxu0 0.0
        %2701 = vmatpush1.msra.mxu0 0.0
        %2702 = vmatprep.subr.mxu0 0.0
        %2703 = vmatpush1.msra.mxu0 0.0
        %2704 = vmatprep.subr.mxu0 0.0
        %2705 = vmatpush1.msra.mxu0 0.0
        %2706 = vmatprep.subr.mxu0 0.0
        %2707 = vmatpush1.msra.mxu0 0.0
        %2708 = vmatprep.subr.mxu0 0.0
        %2709 = vmatpush1.msra.mxu0 0.0
        %2710 = vmatprep.subr.mxu0 0.0
        %2711 = vmatpush1.msra.mxu0 0.0
        %2712 = vmatprep.subr.mxu0 0.0
        %2713 = vmatpush1.msra.mxu0 0.0
        %2714 = vmatprep.subr.mxu0 0.0
        %2715 = vmatpush1.msra.mxu0 0.0
        %2716 = vmatprep.subr.mxu0 0.0
        %2717 = vmatpush1.msra.mxu0 0.0
        %2718 = vmatprep.subr.mxu0 0.0
        %2719 = vmatpush1.msra.mxu0 0.0
        %2720 = vmatprep.subr.mxu0 0.0
        %2721 = vmatpush1.msra.mxu0 0.0
        %2722 = vmatprep.subr.mxu0 0.0
        %2723 = vmatpush1.msra.mxu0 0.0
        %2724 = vmatprep.subr.mxu0 0.0
        %2725 = vmatpush1.msra.mxu0 0.0
        %2726 = vmatprep.subr.mxu0 0.0
        %2727 = vmatpush1.msra.mxu0 0.0
        %2728 = vmatprep.subr.mxu0 0.0
        %2729 = vmatpush1.msra.mxu0 0.0
        %2730 = vmatprep.subr.mxu0 0.0
        %2731 = vmatpush1.msra.mxu0 0.0
        %2732 = vmatprep.mubr.f32.mxu0 0.0
        %2733 = vmatmul.mubr.f32.gmra.mrb[0].mxu0 %v2666
        %v2734 = vpop.f32.mrb[0].mxu0
        %v2735 = vadd.f32 0.0, %v2734
        %v2736 = vpop.f32.mrb[0].mxu0
        %2737 = vdwg.mxu0
        %v2738 = vadd.f32 %v2499, %v2735
        %v2739 = vlaneseq
        %v2740 = vshrl.u32 %v2739, 7
        %v2741 = vsub.s32 0, %v2740
        %v2742 = vrot.slane %v1706, %v2741
        %v2743 = vadd.f32 %v2738, %v2742
        %v2744 = vadd.f32 %v1664, %v2743
        %v2745 = vsel %vm377, %v2744, 0.0
        %2746 = vadd.xlane.f32.xlu0 %v2745
        %v2747 = vpop.xlane.xlu0 %2746
        %v2748 = vmul.f32 %v2747, %v381
        %v2749 = vsub.f32 %v2744, %v2748
        %v2750 = vmul.f32 %v2749, %v2749
        %v2751 = vsel %vm377, %v2750, 0.0
        %2752 = vadd.xlane.f32.xlu0 %v2751
        %v2753 = vpop.xlane.xlu0 %2752
        %v2754 = vmul.f32 %v2753, 0.032258064
        %v2755 = vrsqrt.pop %v2754
        %v2756 = vmul.f32 %v2754, %v2755
        %vm2757 = vcmp.eq.f32.partialorder %v2754, inf
        %v2758 = vsel %vm2757, %v2754, %v2756
        %vm2759 = vcmp.eq.f32.partialorder %v2754, 0.0
        %v2760 = vand.u32 %v2754, 2147483648
        %v2761 = vsel %vm2759, %v2760, %v2758
        %v2762 = vlaneseq
        %v2763 = vshrl.u32 %v2762, 7
        %v2764 = vsub.s32 1, %v2763
        %v2765 = vrot.slane %v1665, %v2764
        %v2766 = vmul.f32 %v2765, %v2749
        %v2767 = vadd.f32 %v2761, 1e-06
        %v2768 = vrcp.pop %v2767
        %v2769 = vmul.f32 %v2766, %v2768
        %v2770 = vlaneseq
        %v2771 = vshrl.u32 %v2770, 7
        %v2772 = vsub.s32 1, %v2771
        %v2773 = vrot.slane %v1666, %v2772
        %v2774 = vadd.f32 %v2769, %v2773
        %v2775 = vld [vmem:[#allocation2 + $0x178] sm:$0xff]
        %v2776 = vld [vmem:[#allocation2 + $0x180] sm:$0xff]
        %v2777 = vld [vmem:[#allocation2 + $0x188] sm:$0xff]
        %v2778 = vld [vmem:[#allocation2 + $0x190] sm:$0xff]
        %v2779 = vld [vmem:[#allocation2 + $0x198] sm:$0x1]
        %v2780 = vld [vmem:[#allocation2 + $0x1a0] sm:$0xff]
        %v2781 = vld [vmem:[#allocation2 + $0x1a8] sm:$0xff]
        %v2782 = vld [vmem:[#allocation2 + $0x1b0] sm:$0xff]
        %v2783 = vld [vmem:[#allocation2 + $0x1b8] sm:$0xff]
        %v2784 = vld [vmem:[#allocation2 + $0x1c0] sm:$0xff]
        %v2785 = vld [vmem:[#allocation2 + $0x1c8] sm:$0xff]
        %v2786 = vld [vmem:[#allocation2 + $0x1d0] sm:$0xff]
        %v2787 = vld [vmem:[#allocation2 + $0x1d8] sm:$0xff]
        %v2788 = vld [vmem:[#allocation2 + $0x1e0] sm:$0x1]
        %v2789 = vlaneseq
        %v2790 = vshrl.u32 %v2789, 7
        %v2791 = vsub.s32 0, %v2790
        %v2792 = vrot.slane %v2779, %v2791
        %v2794 = vsel %vm377, %v2774, 0
        %2796 = vmatprep.subr.mxu0 0.0
        %2797 = vmatpush1.msra.mxu0 %v2775
        %2798 = vmatprep.subr.mxu0 0.0
        %2799 = vmatpush1.msra.mxu0 %v2776
        %2800 = vmatprep.subr.mxu0 0.0
        %2801 = vmatpush1.msra.mxu0 %v2777
        %2802 = vmatprep.subr.mxu0 0.0
        %2803 = vmatpush1.msra.mxu0 %v2778
        %2804 = vmatprep.subr.mxu0 0.0
        %2805 = vmatpush1.msra.mxu0 0.0
        %2806 = vmatprep.subr.mxu0 0.0
        %2807 = vmatpush1.msra.mxu0 0.0
        %2808 = vmatprep.subr.mxu0 0.0
        %2809 = vmatpush1.msra.mxu0 0.0
        %2810 = vmatprep.subr.mxu0 0.0
        %2811 = vmatpush1.msra.mxu0 0.0
        %2812 = vmatprep.subr.mxu0 0.0
        %2813 = vmatpush1.msra.mxu0 0.0
        %2814 = vmatprep.subr.mxu0 0.0
        %2815 = vmatpush1.msra.mxu0 0.0
        %2816 = vmatprep.subr.mxu0 0.0
        %2817 = vmatpush1.msra.mxu0 0.0
        %2818 = vmatprep.subr.mxu0 0.0
        %2819 = vmatpush1.msra.mxu0 0.0
        %2820 = vmatprep.subr.mxu0 0.0
        %2821 = vmatpush1.msra.mxu0 0.0
        %2822 = vmatprep.subr.mxu0 0.0
        %2823 = vmatpush1.msra.mxu0 0.0
        %2824 = vmatprep.subr.mxu0 0.0
        %2825 = vmatpush1.msra.mxu0 0.0
        %2826 = vmatprep.subr.mxu0 0.0
        %2827 = vmatpush1.msra.mxu0 0.0
        %2828 = vmatprep.subr.mxu0 0.0
        %2829 = vmatpush1.msra.mxu0 0.0
        %2830 = vmatprep.subr.mxu0 0.0
        %2831 = vmatpush1.msra.mxu0 0.0
        %2832 = vmatprep.subr.mxu0 0.0
        %2833 = vmatpush1.msra.mxu0 0.0
        %2834 = vmatprep.subr.mxu0 0.0
        %2835 = vmatpush1.msra.mxu0 0.0
        %2836 = vmatprep.subr.mxu0 0.0
        %2837 = vmatpush1.msra.mxu0 0.0
        %2838 = vmatprep.subr.mxu0 0.0
        %2839 = vmatpush1.msra.mxu0 0.0
        %2840 = vmatprep.subr.mxu0 0.0
        %2841 = vmatpush1.msra.mxu0 0.0
        %2842 = vmatprep.subr.mxu0 0.0
        %2843 = vmatpush1.msra.mxu0 0.0
        %2844 = vmatprep.subr.mxu0 0.0
        %2845 = vmatpush1.msra.mxu0 0.0
        %2846 = vmatprep.subr.mxu0 0.0
        %2847 = vmatpush1.msra.mxu0 0.0
        %2848 = vmatprep.subr.mxu0 0.0
        %2849 = vmatpush1.msra.mxu0 0.0
        %2850 = vmatprep.subr.mxu0 0.0
        %2851 = vmatpush1.msra.mxu0 0.0
        %2852 = vmatprep.subr.mxu0 0.0
        %2853 = vmatpush1.msra.mxu0 0.0
        %2854 = vmatprep.subr.mxu0 0.0
        %2855 = vmatpush1.msra.mxu0 0.0
        %2856 = vmatprep.subr.mxu0 0.0
        %2857 = vmatpush1.msra.mxu0 0.0
        %2858 = vmatprep.subr.mxu0 0.0
        %2859 = vmatpush1.msra.mxu0 0.0
        %2860 = vmatprep.mubr.f32.mxu0 0.0
        %2861 = vmatmul.mubr.f32.gmra.mrb[0].mxu0 %v2794
        %v2862 = vpop.f32.mrb[0].mxu0
        %v2863 = vadd.f32 %v2792, %v2862
        %v2864 = vpop.f32.mrb[0].mxu0
        %2865 = vdwg.mxu0
        %v2866 = vmax.f32 %v2863, 0.0
        %v2867 = vlaneseq
        %v2868 = vshrl.u32 %v2867, 7
        %v2869 = vsub.s32 0, %v2868
        %v2870 = vrot.slane %v2788, %v2869
        %v2872 = vsel %vm1590, %v2866, 0
        %2874 = vmatprep.subr.mxu0 0.0
        %2875 = vmatpush1.msra.mxu0 %v2780
        %2876 = vmatprep.subr.mxu0 0.0
        %2877 = vmatpush1.msra.mxu0 %v2781
        %2878 = vmatprep.subr.mxu0 0.0
        %2879 = vmatpush1.msra.mxu0 %v2782
        %2880 = vmatprep.subr.mxu0 0.0
        %2881 = vmatpush1.msra.mxu0 %v2783
        %2882 = vmatprep.subr.mxu0 0.0
        %2883 = vmatpush1.msra.mxu0 %v2784
        %2884 = vmatprep.subr.mxu0 0.0
        %2885 = vmatpush1.msra.mxu0 %v2785
        %2886 = vmatprep.subr.mxu0 0.0
        %2887 = vmatpush1.msra.mxu0 %v2786
        %2888 = vmatprep.subr.mxu0 0.0
        %2889 = vmatpush1.msra.mxu0 %v2787
        %2890 = vmatprep.subr.mxu0 0.0
        %2891 = vmatpush1.msra.mxu0 0.0
        %2892 = vmatprep.subr.mxu0 0.0
        %2893 = vmatpush1.msra.mxu0 0.0
        %2894 = vmatprep.subr.mxu0 0.0
        %2895 = vmatpush1.msra.mxu0 0.0
        %2896 = vmatprep.subr.mxu0 0.0
        %2897 = vmatpush1.msra.mxu0 0.0
        %2898 = vmatprep.subr.mxu0 0.0
        %2899 = vmatpush1.msra.mxu0 0.0
        %2900 = vmatprep.subr.mxu0 0.0
        %2901 = vmatpush1.msra.mxu0 0.0
        %2902 = vmatprep.subr.mxu0 0.0
        %2903 = vmatpush1.msra.mxu0 0.0
        %2904 = vmatprep.subr.mxu0 0.0
        %2905 = vmatpush1.msra.mxu0 0.0
        %2906 = vmatprep.subr.mxu0 0.0
        %2907 = vmatpush1.msra.mxu0 0.0
        %2908 = vmatprep.subr.mxu0 0.0
        %2909 = vmatpush1.msra.mxu0 0.0
        %2910 = vmatprep.subr.mxu0 0.0
        %2911 = vmatpush1.msra.mxu0 0.0
        %2912 = vmatprep.subr.mxu0 0.0
        %2913 = vmatpush1.msra.mxu0 0.0
        %2914 = vmatprep.subr.mxu0 0.0
        %2915 = vmatpush1.msra.mxu0 0.0
        %2916 = vmatprep.subr.mxu0 0.0
        %2917 = vmatpush1.msra.mxu0 0.0
        %2918 = vmatprep.subr.mxu0 0.0
        %2919 = vmatpush1.msra.mxu0 0.0
        %2920 = vmatprep.subr.mxu0 0.0
        %2921 = vmatpush1.msra.mxu0 0.0
        %2922 = vmatprep.subr.mxu0 0.0
        %2923 = vmatpush1.msra.mxu0 0.0
        %2924 = vmatprep.subr.mxu0 0.0
        %2925 = vmatpush1.msra.mxu0 0.0
        %2926 = vmatprep.subr.mxu0 0.0
        %2927 = vmatpush1.msra.mxu0 0.0
        %2928 = vmatprep.subr.mxu0 0.0
        %2929 = vmatpush1.msra.mxu0 0.0
        %2930 = vmatprep.subr.mxu0 0.0
        %2931 = vmatpush1.msra.mxu0 0.0
        %2932 = vmatprep.subr.mxu0 0.0
        %2933 = vmatpush1.msra.mxu0 0.0
        %2934 = vmatprep.subr.mxu0 0.0
        %2935 = vmatpush1.msra.mxu0 0.0
        %2936 = vmatprep.subr.mxu0 0.0
        %2937 = vmatpush1.msra.mxu0 0.0
        %2938 = vmatprep.mubr.f32.mxu0 0.0
        %2939 = vmatmul.mubr.f32.gmra.mrb[0].mxu0 %v2872
        %v2940 = vpop.f32.mrb[0].mxu0
        %v2941 = vadd.f32 %v2870, %v2940
        %v2942 = vpop.f32.mrb[0].mxu0
        %2943 = vdwg.mxu0
        %v2944 = vadd.f32 %v2744, %v2941
        %v2945 = vld [vmem:[#allocation2 + $0x1f8] sm:$0x1]
        %v2946 = vld [vmem:[#allocation2 + $0x200] sm:$0x1]
        %v2947 = vsel %vm377, %v2944, 0.0
        %2948 = vadd.xlane.f32.xlu0 %v2947
        %v2949 = vpop.xlane.xlu0 %2948
        %v2950 = vmul.f32 %v2949, %v381
        %v2951 = vsub.f32 %v2944, %v2950
        %v2952 = vmul.f32 %v2951, %v2951
        %v2953 = vsel %vm377, %v2952, 0.0
        %2954 = vadd.xlane.f32.xlu0 %v2953
        %v2955 = vpop.xlane.xlu0 %2954
        %v2956 = vmul.f32 %v2955, 0.032258064
        %v2957 = vrsqrt.pop %v2956
        %v2958 = vmul.f32 %v2956, %v2957
        %vm2959 = vcmp.eq.f32.partialorder %v2956, inf
        %v2960 = vsel %vm2959, %v2956, %v2958
        %vm2961 = vcmp.eq.f32.partialorder %v2956, 0.0
        %v2962 = vand.u32 %v2956, 2147483648
        %v2963 = vsel %vm2961, %v2962, %v2960
        %v2964 = vlaneseq
        %v2965 = vshrl.u32 %v2964, 7
        %v2966 = vsub.s32 0, %v2965
        %v2967 = vrot.slane %v2945, %v2966
        %v2968 = vmul.f32 %v2967, %v2951
        %v2969 = vadd.f32 %v2963, 1e-06
        %v2970 = vrcp.pop %v2969
        %v2971 = vmul.f32 %v2968, %v2970
        %v2972 = vlaneseq
        %v2973 = vshrl.u32 %v2972, 7
        %v2974 = vsub.s32 0, %v2973
        %v2975 = vrot.slane %v2946, %v2974
        %v2976 = vadd.f32 %v2971, %v2975
        %v2977 = vld [vmem:[#allocation2 + $0x208] sm:$0xff]
        %v2978 = vld [vmem:[#allocation2 + $0x210] sm:$0xff]
        %v2979 = vld [vmem:[#allocation2 + $0x218] sm:$0xff]
        %v2980 = vld [vmem:[#allocation2 + $0x220] sm:$0xff]
        %v2981 = vld [vmem:[#allocation2 + $0x228] sm:$0x1]
        %v2982 = vlaneseq
        %v2983 = vshrl.u32 %v2982, 7
        %v2984 = vsub.s32 0, %v2983
        %v2985 = vrot.slane %v2981, %v2984
        %v2987 = vsel %vm377, %v2976, 0
        %2989 = vmatprep.subr.mxu0 0.0
        %2990 = vmatpush1.msra.mxu0 %v2977
        %2991 = vmatprep.subr.mxu0 0.0
        %2992 = vmatpush1.msra.mxu0 %v2978
        %2993 = vmatprep.subr.mxu0 0.0
        %2994 = vmatpush1.msra.mxu0 %v2979
        %2995 = vmatprep.subr.mxu0 0.0
        %2996 = vmatpush1.msra.mxu0 %v2980
        %2997 = vmatprep.subr.mxu0 0.0
        %2998 = vmatpush1.msra.mxu0 0.0
        %2999 = vmatprep.subr.mxu0 0.0
        %3000 = vmatpush1.msra.mxu0 0.0
        %3001 = vmatprep.subr.mxu0 0.0
        %3002 = vmatpush1.msra.mxu0 0.0
        %3003 = vmatprep.subr.mxu0 0.0
        %3004 = vmatpush1.msra.mxu0 0.0
        %3005 = vmatprep.subr.mxu0 0.0
        %3006 = vmatpush1.msra.mxu0 0.0
        %3007 = vmatprep.subr.mxu0 0.0
        %3008 = vmatpush1.msra.mxu0 0.0
        %3009 = vmatprep.subr.mxu0 0.0
        %3010 = vmatpush1.msra.mxu0 0.0
        %3011 = vmatprep.subr.mxu0 0.0
        %3012 = vmatpush1.msra.mxu0 0.0
        %3013 = vmatprep.subr.mxu0 0.0
        %3014 = vmatpush1.msra.mxu0 0.0
        %3015 = vmatprep.subr.mxu0 0.0
        %3016 = vmatpush1.msra.mxu0 0.0
        %3017 = vmatprep.subr.mxu0 0.0
        %3018 = vmatpush1.msra.mxu0 0.0
        %3019 = vmatprep.subr.mxu0 0.0
        %3020 = vmatpush1.msra.mxu0 0.0
        %3021 = vmatprep.subr.mxu0 0.0
        %3022 = vmatpush1.msra.mxu0 0.0
        %3023 = vmatprep.subr.mxu0 0.0
        %3024 = vmatpush1.msra.mxu0 0.0
        %3025 = vmatprep.subr.mxu0 0.0
        %3026 = vmatpush1.msra.mxu0 0.0
        %3027 = vmatprep.subr.mxu0 0.0
        %3028 = vmatpush1.msra.mxu0 0.0
        %3029 = vmatprep.subr.mxu0 0.0
        %3030 = vmatpush1.msra.mxu0 0.0
        %3031 = vmatprep.subr.mxu0 0.0
        %3032 = vmatpush1.msra.mxu0 0.0
        %3033 = vmatprep.subr.mxu0 0.0
        %3034 = vmatpush1.msra.mxu0 0.0
        %3035 = vmatprep.subr.mxu0 0.0
        %3036 = vmatpush1.msra.mxu0 0.0
        %3037 = vmatprep.subr.mxu0 0.0
        %3038 = vmatpush1.msra.mxu0 0.0
        %3039 = vmatprep.subr.mxu0 0.0
        %3040 = vmatpush1.msra.mxu0 0.0
        %3041 = vmatprep.subr.mxu0 0.0
        %3042 = vmatpush1.msra.mxu0 0.0
        %3043 = vmatprep.subr.mxu0 0.0
        %3044 = vmatpush1.msra.mxu0 0.0
        %3045 = vmatprep.subr.mxu0 0.0
        %3046 = vmatpush1.msra.mxu0 0.0
        %3047 = vmatprep.subr.mxu0 0.0
        %3048 = vmatpush1.msra.mxu0 0.0
        %3049 = vmatprep.subr.mxu0 0.0
        %3050 = vmatpush1.msra.mxu0 0.0
        %3051 = vmatprep.subr.mxu0 0.0
        %3052 = vmatpush1.msra.mxu0 0.0
        %3053 = vmatprep.mubr.f32.mxu0 0.0
        %3054 = vmatmul.mubr.f32.gmra.mrb[0].mxu0 %v2987
        %v3055 = vpop.f32.mrb[0].mxu0
        %v3056 = vadd.f32 %v2985, %v3055
        %v3057 = vpop.f32.mrb[0].mxu0
        %3058 = vdwg.mxu0
        %v3059 = vld [vmem:[%s275] sm:$0xff]
        %v3060 = vld [vmem:[#allocation2 + $0x30] sm:$0xff]
        %v3061 = vld [vmem:[#allocation2 + $0x38] sm:$0xff]
        %v3062 = vld [vmem:[#allocation2 + $0x40] sm:$0xff]
        %v3063 = vld [vmem:[#allocation2 + $0x48] sm:$0xff]
        %v3064 = vld [vmem:[#allocation2 + $0x50] sm:$0xff]
        %3065 = vset.pattern.permute.xlu0 0
        %3066 = vperm.xlu0 %3065, %v3059
        %v3067 = vpop.permute.xlu0 %3066
        %vm3068 = vcmp.eq.s32.totalorder %v293, %v3067
        %v3069 = vsel %vm3068, 1, 0
        %v3070 = vcvt.s32.f32 %v3069
        %vm3071 = vcmask 326656
        %v3073 = vsel %vm3071, %v3070, 0
        %3075 = vmatprep.subr.mxu0 0.0
        %3076 = vmatpush1.msra.mxu0 %v3060
        %3077 = vmatprep.subr.mxu0 0.0
        %3078 = vmatpush1.msra.mxu0 %v3061
        %3079 = vmatprep.subr.mxu0 0.0
        %3080 = vmatpush1.msra.mxu0 %v3062
        %3081 = vmatprep.subr.mxu0 0.0
        %3082 = vmatpush1.msra.mxu0 %v3063
        %3083 = vmatprep.subr.mxu0 0.0
        %3084 = vmatpush1.msra.mxu0 %v3064
        %3085 = vmatprep.subr.mxu0 0.0
        %3086 = vmatpush1.msra.mxu0 0.0
        %3087 = vmatprep.subr.mxu0 0.0
        %3088 = vmatpush1.msra.mxu0 0.0
        %3089 = vmatprep.subr.mxu0 0.0
        %3090 = vmatpush1.msra.mxu0 0.0
        %3091 = vmatprep.subr.mxu0 0.0
        %3092 = vmatpush1.msra.mxu0 0.0
        %3093 = vmatprep.subr.mxu0 0.0
        %3094 = vmatpush1.msra.mxu0 0.0
        %3095 = vmatprep.subr.mxu0 0.0
        %3096 = vmatpush1.msra.mxu0 0.0
        %3097 = vmatprep.subr.mxu0 0.0
        %3098 = vmatpush1.msra.mxu0 0.0
        %3099 = vmatprep.subr.mxu0 0.0
        %3100 = vmatpush1.msra.mxu0 0.0
        %3101 = vmatprep.subr.mxu0 0.0
        %3102 = vmatpush1.msra.mxu0 0.0
        %3103 = vmatprep.subr.mxu0 0.0
        %3104 = vmatpush1.msra.mxu0 0.0
        %3105 = vmatprep.subr.mxu0 0.0
        %3106 = vmatpush1.msra.mxu0 0.0
        %3107 = vmatprep.subr.mxu0 0.0
        %3108 = vmatpush1.msra.mxu0 0.0
        %3109 = vmatprep.subr.mxu0 0.0
        %3110 = vmatpush1.msra.mxu0 0.0
        %3111 = vmatprep.subr.mxu0 0.0
        %3112 = vmatpush1.msra.mxu0 0.0
        %3113 = vmatprep.subr.mxu0 0.0
        %3114 = vmatpush1.msra.mxu0 0.0
        %3115 = vmatprep.subr.mxu0 0.0
        %3116 = vmatpush1.msra.mxu0 0.0
        %3117 = vmatprep.subr.mxu0 0.0
        %3118 = vmatpush1.msra.mxu0 0.0
        %3119 = vmatprep.subr.mxu0 0.0
        %3120 = vmatpush1.msra.mxu0 0.0
        %3121 = vmatprep.subr.mxu0 0.0
        %3122 = vmatpush1.msra.mxu0 0.0
        %3123 = vmatprep.subr.mxu0 0.0
        %3124 = vmatpush1.msra.mxu0 0.0
        %3125 = vmatprep.subr.mxu0 0.0
        %3126 = vmatpush1.msra.mxu0 0.0
        %3127 = vmatprep.subr.mxu0 0.0
        %3128 = vmatpush1.msra.mxu0 0.0
        %3129 = vmatprep.subr.mxu0 0.0
        %3130 = vmatpush1.msra.mxu0 0.0
        %3131 = vmatprep.subr.mxu0 0.0
        %3132 = vmatpush1.msra.mxu0 0.0
        %3133 = vmatprep.subr.mxu0 0.0
        %3134 = vmatpush1.msra.mxu0 0.0
        %3135 = vmatprep.subr.mxu0 0.0
        %3136 = vmatpush1.msra.mxu0 0.0
        %3137 = vmatprep.subr.mxu0 0.0
        %3138 = vmatpush1.msra.mxu0 0.0
        %3139 = vmatprep.mubr.f32.mxu0 0.0
        %3140 = vmatmul.mubr.f32.gmra.mrb[0].mxu0 %v3073
        %v3141 = vpop.f32.mrb[0].mxu0
        %v3142 = vadd.f32 0.0, %v3141
        %v3143 = vpop.f32.mrb[0].mxu0
        %3144 = vdwg.mxu0
        %v3145 = vmul.f32 %v3142, 5.656854
        %v3146 = vld [vmem:[#allocation2 + $0x340] sm:$0x7]
        %v3147 = vld [vmem:[#allocation2 + $0x348] sm:$0x7]
        %v3148 = vsel %vm377, %v3145, 0.0
        %3149 = vadd.xlane.f32.xlu0 %v3148
        %v3150 = vpop.xlane.xlu0 %3149
        %v3151 = vmul.f32 %v3150, %v381
        %v3152 = vsub.f32 %v3145, %v3151
        %v3153 = vmul.f32 %v3152, %v3152
        %v3154 = vsel %vm377, %v3153, 0.0
        %3155 = vadd.xlane.f32.xlu0 %v3154
        %v3156 = vpop.xlane.xlu0 %3155
        %v3157 = vmul.f32 %v3156, 0.032258064
        %v3158 = vrsqrt.pop %v3157
        %v3159 = vmul.f32 %v3157, %v3158
        %vm3160 = vcmp.eq.f32.partialorder %v3157, inf
        %v3161 = vsel %vm3160, %v3157, %v3159
        %vm3162 = vcmp.eq.f32.partialorder %v3157, 0.0
        %v3163 = vand.u32 %v3157, 2147483648
        %v3164 = vsel %vm3162, %v3163, %v3161
        %v3165 = vlaneseq
        %v3166 = vshrl.u32 %v3165, 7
        %v3167 = vsub.s32 0, %v3166
        %v3168 = vrot.slane %v3146, %v3167
        %v3169 = vmul.f32 %v3168, %v3152
        %v3170 = vadd.f32 %v3164, 1e-06
        %v3171 = vrcp.pop %v3170
        %v3172 = vmul.f32 %v3169, %v3171
        %v3173 = vlaneseq
        %v3174 = vshrl.u32 %v3173, 7
        %v3175 = vsub.s32 0, %v3174
        %v3176 = vrot.slane %v3147, %v3175
        %v3177 = vadd.f32 %v3172, %v3176
        %v3178 = vld [vmem:[#allocation2 + $0x230] sm:$0xff]
        %v3179 = vld [vmem:[#allocation2 + $0x238] sm:$0xff]
        %v3180 = vld [vmem:[#allocation2 + $0x240] sm:$0xff]
        %v3181 = vld [vmem:[#allocation2 + $0x248] sm:$0xff]
        %v3182 = vld [vmem:[#allocation2 + $0x250] sm:$0x1]
        %v3183 = vld [vmem:[#allocation2 + $0x258] sm:$0xff]
        %v3184 = vld [vmem:[#allocation2 + $0x260] sm:$0xff]
        %v3185 = vld [vmem:[#allocation2 + $0x268] sm:$0xff]
        %v3186 = vld [vmem:[#allocation2 + $0x270] sm:$0xff]
        %v3187 = vld [vmem:[#allocation2 + $0x278] sm:$0x1]
        %v3188 = vlaneseq
        %v3189 = vshrl.u32 %v3188, 7
        %v3190 = vsub.s32 0, %v3189
        %v3191 = vrot.slane %v3182, %v3190
        %v3193 = vsel %vm377, %v3177, 0
        %3195 = vmatprep.subr.mxu0 0.0
        %3196 = vmatpush1.msra.mxu0 %v3178
        %3197 = vmatprep.subr.mxu0 0.0
        %3198 = vmatpush1.msra.mxu0 %v3179
        %3199 = vmatprep.subr.mxu0 0.0
        %3200 = vmatpush1.msra.mxu0 %v3180
        %3201 = vmatprep.subr.mxu0 0.0
        %3202 = vmatpush1.msra.mxu0 %v3181
        %3203 = vmatprep.subr.mxu0 0.0
        %3204 = vmatpush1.msra.mxu0 0.0
        %3205 = vmatprep.subr.mxu0 0.0
        %3206 = vmatpush1.msra.mxu0 0.0
        %3207 = vmatprep.subr.mxu0 0.0
        %3208 = vmatpush1.msra.mxu0 0.0
        %3209 = vmatprep.subr.mxu0 0.0
        %3210 = vmatpush1.msra.mxu0 0.0
        %3211 = vmatprep.subr.mxu0 0.0
        %3212 = vmatpush1.msra.mxu0 0.0
        %3213 = vmatprep.subr.mxu0 0.0
        %3214 = vmatpush1.msra.mxu0 0.0
        %3215 = vmatprep.subr.mxu0 0.0
        %3216 = vmatpush1.msra.mxu0 0.0
        %3217 = vmatprep.subr.mxu0 0.0
        %3218 = vmatpush1.msra.mxu0 0.0
        %3219 = vmatprep.subr.mxu0 0.0
        %3220 = vmatpush1.msra.mxu0 0.0
        %3221 = vmatprep.subr.mxu0 0.0
        %3222 = vmatpush1.msra.mxu0 0.0
        %3223 = vmatprep.subr.mxu0 0.0
        %3224 = vmatpush1.msra.mxu0 0.0
        %3225 = vmatprep.subr.mxu0 0.0
        %3226 = vmatpush1.msra.mxu0 0.0
        %3227 = vmatprep.subr.mxu0 0.0
        %3228 = vmatpush1.msra.mxu0 0.0
        %3229 = vmatprep.subr.mxu0 0.0
        %3230 = vmatpush1.msra.mxu0 0.0
        %3231 = vmatprep.subr.mxu0 0.0
        %3232 = vmatpush1.msra.mxu0 0.0
        %3233 = vmatprep.subr.mxu0 0.0
        %3234 = vmatpush1.msra.mxu0 0.0
        %3235 = vmatprep.subr.mxu0 0.0
        %3236 = vmatpush1.msra.mxu0 0.0
        %3237 = vmatprep.subr.mxu0 0.0
        %3238 = vmatpush1.msra.mxu0 0.0
        %3239 = vmatprep.subr.mxu0 0.0
        %3240 = vmatpush1.msra.mxu0 0.0
        %3241 = vmatprep.subr.mxu0 0.0
        %3242 = vmatpush1.msra.mxu0 0.0
        %3243 = vmatprep.subr.mxu0 0.0
        %3244 = vmatpush1.msra.mxu0 0.0
        %3245 = vmatprep.subr.mxu0 0.0
        %3246 = vmatpush1.msra.mxu0 0.0
        %3247 = vmatprep.subr.mxu0 0.0
        %3248 = vmatpush1.msra.mxu0 0.0
        %3249 = vmatprep.subr.mxu0 0.0
        %3250 = vmatpush1.msra.mxu0 0.0
        %3251 = vmatprep.subr.mxu0 0.0
        %3252 = vmatpush1.msra.mxu0 0.0
        %3253 = vmatprep.subr.mxu0 0.0
        %3254 = vmatpush1.msra.mxu0 0.0
        %3255 = vmatprep.subr.mxu0 0.0
        %3256 = vmatpush1.msra.mxu0 0.0
        %3257 = vmatprep.subr.mxu0 0.0
        %3258 = vmatpush1.msra.mxu0 0.0
        %3259 = vmatprep.mubr.f32.mxu0 0.0
        %3260 = vmatmul.mubr.f32.gmra.mrb[0].mxu0 %v3193
        %v3261 = vpop.f32.mrb[0].mxu0
        %v3262 = vadd.f32 %v3191, %v3261
        %v3263 = vpop.f32.mrb[0].mxu0
        %3264 = vdwg.mxu0
        %v3265 = vmul.f32 %v3262, 0.35355338
        %3267 = vrot.lane.b32.xlu0 %v3262, 96
        %v3268 = vpop.permute.xlu0 %3267
        %v3270 = vsel %vm506, %v3265, 0
        %v3272 = vsel %vm506, %v3268, 0
        %3274 = vmatprep.subr.mxu0 0.0
        %3275 = vmatpush1.xpose.msra.mxu0 %v3272
        %3276 = vmatprep.subr.mxu0 0.0
        %3277 = vmatpush1.xpose.msra.mxu0 0.0
        %3278 = vmatprep.subr.mxu0 0.0
        %3279 = vmatpush1.xpose.msra.mxu0 0.0
        %3280 = vmatprep.subr.mxu0 0.0
        %3281 = vmatpush1.xpose.msra.mxu0 0.0
        %3282 = vmatprep.subr.mxu0 0.0
        %3283 = vmatpush1.xpose.msra.mxu0 0.0
        %3284 = vmatprep.subr.mxu0 0.0
        %3285 = vmatpush1.xpose.msra.mxu0 0.0
        %3286 = vmatprep.subr.mxu0 0.0
        %3287 = vmatpush1.xpose.msra.mxu0 0.0
        %3288 = vmatprep.subr.mxu0 0.0
        %3289 = vmatpush1.xpose.msra.mxu0 0.0
        %3290 = vmatprep.subr.mxu0 0.0
        %3291 = vmatpush1.xpose.msra.mxu0 0.0
        %3292 = vmatprep.subr.mxu0 0.0
        %3293 = vmatpush1.xpose.msra.mxu0 0.0
        %3294 = vmatprep.subr.mxu0 0.0
        %3295 = vmatpush1.xpose.msra.mxu0 0.0
        %3296 = vmatprep.subr.mxu0 0.0
        %3297 = vmatpush1.xpose.msra.mxu0 0.0
        %3298 = vmatprep.subr.mxu0 0.0
        %3299 = vmatpush1.xpose.msra.mxu0 0.0
        %3300 = vmatprep.subr.mxu0 0.0
        %3301 = vmatpush1.xpose.msra.mxu0 0.0
        %3302 = vmatprep.subr.mxu0 0.0
        %3303 = vmatpush1.xpose.msra.mxu0 0.0
        %3304 = vmatprep.subr.mxu0 0.0
        %3305 = vmatpush1.xpose.msra.mxu0 0.0
        %3306 = vmatprep.subr.mxu0 0.0
        %3307 = vmatpush1.xpose.msra.mxu0 0.0
        %3308 = vmatprep.subr.mxu0 0.0
        %3309 = vmatpush1.xpose.msra.mxu0 0.0
        %3310 = vmatprep.subr.mxu0 0.0
        %3311 = vmatpush1.xpose.msra.mxu0 0.0
        %3312 = vmatprep.subr.mxu0 0.0
        %3313 = vmatpush1.xpose.msra.mxu0 0.0
        %3314 = vmatprep.subr.mxu0 0.0
        %3315 = vmatpush1.xpose.msra.mxu0 0.0
        %3316 = vmatprep.subr.mxu0 0.0
        %3317 = vmatpush1.xpose.msra.mxu0 0.0
        %3318 = vmatprep.subr.mxu0 0.0
        %3319 = vmatpush1.xpose.msra.mxu0 0.0
        %3320 = vmatprep.subr.mxu0 0.0
        %3321 = vmatpush1.xpose.msra.mxu0 0.0
        %3322 = vmatprep.subr.mxu0 0.0
        %3323 = vmatpush1.xpose.msra.mxu0 0.0
        %3324 = vmatprep.subr.mxu0 0.0
        %3325 = vmatpush1.xpose.msra.mxu0 0.0
        %3326 = vmatprep.subr.mxu0 0.0
        %3327 = vmatpush1.xpose.msra.mxu0 0.0
        %3328 = vmatprep.subr.mxu0 0.0
        %3329 = vmatpush1.xpose.msra.mxu0 0.0
        %3330 = vmatprep.subr.mxu0 0.0
        %3331 = vmatpush1.xpose.msra.mxu0 0.0
        %3332 = vmatprep.subr.mxu0 0.0
        %3333 = vmatpush1.xpose.msra.mxu0 0.0
        %3334 = vmatprep.subr.mxu0 0.0
        %3335 = vmatpush1.xpose.msra.mxu0 0.0
        %3336 = vmatprep.subr.mxu0 0.0
        %3337 = vmatpush1.xpose.msra.mxu0 0.0
        %3338 = vmatprep.mubr.f32.mxu0 0.0
        %3339 = vmatmul.mubr.f32.gmra.mrb[0].mxu0 %v3270
        %v3340 = vpop.f32.mrb[0].mxu0
        %v3341 = vadd.f32 %v284, %v3340
        %v3342 = vpop.f32.mrb[0].mxu0
        %3343 = vdwg.mxu0
        %v3344 = vsel %vm506, %v3341, -inf
        %3345 = vmax.xlane.f32.xlu0 %v3344
        %v3346 = vpop.xlane.xlu0 %3345
        %v3347 = vsub.f32 %v3341, %v3346
        %v3348 = vmul.f32 %v3347, 1.442695
        %v3349 = vpow.pop %v3348
        %v3350 = vsel %vm506, %v3349, 0.0
        %3351 = vadd.xlane.f32.xlu0 %v3350
        %v3352 = vpop.xlane.xlu0 %3351
        %v3353 = vrcp.pop %v3352
        %v3354 = vmul.f32 %v3349, %v3353
        %3355 = vrot.lane.b32.xlu0 %v3262, 64
        %v3356 = vpop.permute.xlu0 %3355
        %v3359 = vsel %vm506, %v3354, 0
        %3361 = vmatprep.subr.mxu0 0.0
        %3362 = vmatpush1.msra.mxu0 %v3356
        %3363 = vmatprep.subr.mxu0 0.0
        %3364 = vmatpush1.msra.mxu0 0.0
        %3365 = vmatprep.subr.mxu0 0.0
        %3366 = vmatpush1.msra.mxu0 0.0
        %3367 = vmatprep.subr.mxu0 0.0
        %3368 = vmatpush1.msra.mxu0 0.0
        %3369 = vmatprep.subr.mxu0 0.0
        %3370 = vmatpush1.msra.mxu0 0.0
        %3371 = vmatprep.subr.mxu0 0.0
        %3372 = vmatpush1.msra.mxu0 0.0
        %3373 = vmatprep.subr.mxu0 0.0
        %3374 = vmatpush1.msra.mxu0 0.0
        %3375 = vmatprep.subr.mxu0 0.0
        %3376 = vmatpush1.msra.mxu0 0.0
        %3377 = vmatprep.subr.mxu0 0.0
        %3378 = vmatpush1.msra.mxu0 0.0
        %3379 = vmatprep.subr.mxu0 0.0
        %3380 = vmatpush1.msra.mxu0 0.0
        %3381 = vmatprep.subr.mxu0 0.0
        %3382 = vmatpush1.msra.mxu0 0.0
        %3383 = vmatprep.subr.mxu0 0.0
        %3384 = vmatpush1.msra.mxu0 0.0
        %3385 = vmatprep.subr.mxu0 0.0
        %3386 = vmatpush1.msra.mxu0 0.0
        %3387 = vmatprep.subr.mxu0 0.0
        %3388 = vmatpush1.msra.mxu0 0.0
        %3389 = vmatprep.subr.mxu0 0.0
        %3390 = vmatpush1.msra.mxu0 0.0
        %3391 = vmatprep.subr.mxu0 0.0
        %3392 = vmatpush1.msra.mxu0 0.0
        %3393 = vmatprep.subr.mxu0 0.0
        %3394 = vmatpush1.msra.mxu0 0.0
        %3395 = vmatprep.subr.mxu0 0.0
        %3396 = vmatpush1.msra.mxu0 0.0
        %3397 = vmatprep.subr.mxu0 0.0
        %3398 = vmatpush1.msra.mxu0 0.0
        %3399 = vmatprep.subr.mxu0 0.0
        %3400 = vmatpush1.msra.mxu0 0.0
        %3401 = vmatprep.subr.mxu0 0.0
        %3402 = vmatpush1.msra.mxu0 0.0
        %3403 = vmatprep.subr.mxu0 0.0
        %3404 = vmatpush1.msra.mxu0 0.0
        %3405 = vmatprep.subr.mxu0 0.0
        %3406 = vmatpush1.msra.mxu0 0.0
        %3407 = vmatprep.subr.mxu0 0.0
        %3408 = vmatpush1.msra.mxu0 0.0
        %3409 = vmatprep.subr.mxu0 0.0
        %3410 = vmatpush1.msra.mxu0 0.0
        %3411 = vmatprep.subr.mxu0 0.0
        %3412 = vmatpush1.msra.mxu0 0.0
        %3413 = vmatprep.subr.mxu0 0.0
        %3414 = vmatpush1.msra.mxu0 0.0
        %3415 = vmatprep.subr.mxu0 0.0
        %3416 = vmatpush1.msra.mxu0 0.0
        %3417 = vmatprep.subr.mxu0 0.0
        %3418 = vmatpush1.msra.mxu0 0.0
        %3419 = vmatprep.subr.mxu0 0.0
        %3420 = vmatpush1.msra.mxu0 0.0
        %3421 = vmatprep.subr.mxu0 0.0
        %3422 = vmatpush1.msra.mxu0 0.0
        %3423 = vmatprep.subr.mxu0 0.0
        %3424 = vmatpush1.msra.mxu0 0.0
        %3425 = vmatprep.mubr.f32.mxu0 0.0
        %3426 = vmatmul.mubr.f32.gmra.mrb[0].mxu0 %v3359
        %v3427 = vpop.f32.mrb[0].mxu0
        %v3428 = vadd.f32 0.0, %v3427
        %v3429 = vpop.f32.mrb[0].mxu0
        %3430 = vdwg.mxu0
        %3431 = vrot.lane.b32.xlu0 %v3265, 120
        %v3432 = vpop.permute.xlu0 %3431
        %3433 = vrot.lane.b32.xlu0 %v3262, 88
        %v3434 = vpop.permute.xlu0 %3433
        %v3435 = vsel %vm506, %v3432, 0
        %v3437 = vsel %vm506, %v3434, 0
        %3439 = vmatprep.subr.mxu0 0.0
        %3440 = vmatpush1.xpose.msra.mxu0 %v3437
        %3441 = vmatprep.subr.mxu0 0.0
        %3442 = vmatpush1.xpose.msra.mxu0 0.0
        %3443 = vmatprep.subr.mxu0 0.0
        %3444 = vmatpush1.xpose.msra.mxu0 0.0
        %3445 = vmatprep.subr.mxu0 0.0
        %3446 = vmatpush1.xpose.msra.mxu0 0.0
        %3447 = vmatprep.subr.mxu0 0.0
        %3448 = vmatpush1.xpose.msra.mxu0 0.0
        %3449 = vmatprep.subr.mxu0 0.0
        %3450 = vmatpush1.xpose.msra.mxu0 0.0
        %3451 = vmatprep.subr.mxu0 0.0
        %3452 = vmatpush1.xpose.msra.mxu0 0.0
        %3453 = vmatprep.subr.mxu0 0.0
        %3454 = vmatpush1.xpose.msra.mxu0 0.0
        %3455 = vmatprep.subr.mxu0 0.0
        %3456 = vmatpush1.xpose.msra.mxu0 0.0
        %3457 = vmatprep.subr.mxu0 0.0
        %3458 = vmatpush1.xpose.msra.mxu0 0.0
        %3459 = vmatprep.subr.mxu0 0.0
        %3460 = vmatpush1.xpose.msra.mxu0 0.0
        %3461 = vmatprep.subr.mxu0 0.0
        %3462 = vmatpush1.xpose.msra.mxu0 0.0
        %3463 = vmatprep.subr.mxu0 0.0
        %3464 = vmatpush1.xpose.msra.mxu0 0.0
        %3465 = vmatprep.subr.mxu0 0.0
        %3466 = vmatpush1.xpose.msra.mxu0 0.0
        %3467 = vmatprep.subr.mxu0 0.0
        %3468 = vmatpush1.xpose.msra.mxu0 0.0
        %3469 = vmatprep.subr.mxu0 0.0
        %3470 = vmatpush1.xpose.msra.mxu0 0.0
        %3471 = vmatprep.subr.mxu0 0.0
        %3472 = vmatpush1.xpose.msra.mxu0 0.0
        %3473 = vmatprep.subr.mxu0 0.0
        %3474 = vmatpush1.xpose.msra.mxu0 0.0
        %3475 = vmatprep.subr.mxu0 0.0
        %3476 = vmatpush1.xpose.msra.mxu0 0.0
        %3477 = vmatprep.subr.mxu0 0.0
        %3478 = vmatpush1.xpose.msra.mxu0 0.0
        %3479 = vmatprep.subr.mxu0 0.0
        %3480 = vmatpush1.xpose.msra.mxu0 0.0
        %3481 = vmatprep.subr.mxu0 0.0
        %3482 = vmatpush1.xpose.msra.mxu0 0.0
        %3483 = vmatprep.subr.mxu0 0.0
        %3484 = vmatpush1.xpose.msra.mxu0 0.0
        %3485 = vmatprep.subr.mxu0 0.0
        %3486 = vmatpush1.xpose.msra.mxu0 0.0
        %3487 = vmatprep.subr.mxu0 0.0
        %3488 = vmatpush1.xpose.msra.mxu0 0.0
        %3489 = vmatprep.subr.mxu0 0.0
        %3490 = vmatpush1.xpose.msra.mxu0 0.0
        %3491 = vmatprep.subr.mxu0 0.0
        %3492 = vmatpush1.xpose.msra.mxu0 0.0
        %3493 = vmatprep.subr.mxu0 0.0
        %3494 = vmatpush1.xpose.msra.mxu0 0.0
        %3495 = vmatprep.subr.mxu0 0.0
        %3496 = vmatpush1.xpose.msra.mxu0 0.0
        %3497 = vmatprep.subr.mxu0 0.0
        %3498 = vmatpush1.xpose.msra.mxu0 0.0
        %3499 = vmatprep.subr.mxu0 0.0
        %3500 = vmatpush1.xpose.msra.mxu0 0.0
        %3501 = vmatprep.subr.mxu0 0.0
        %3502 = vmatpush1.xpose.msra.mxu0 0.0
        %3503 = vmatprep.mubr.f32.mxu0 0.0
        %3504 = vmatmul.mubr.f32.gmra.mrb[0].mxu0 %v3435
        %v3505 = vpop.f32.mrb[0].mxu0
        %v3506 = vadd.f32 %v284, %v3505
        %v3507 = vpop.f32.mrb[0].mxu0
        %3508 = vdwg.mxu0
        %v3509 = vsel %vm506, %v3506, -inf
        %3510 = vmax.xlane.f32.xlu0 %v3509
        %v3511 = vpop.xlane.xlu0 %3510
        %v3512 = vsub.f32 %v3506, %v3511
        %v3513 = vmul.f32 %v3512, 1.442695
        %v3514 = vpow.pop %v3513
        %v3515 = vsel %vm506, %v3514, 0.0
        %3516 = vadd.xlane.f32.xlu0 %v3515
        %v3517 = vpop.xlane.xlu0 %3516
        %v3518 = vrcp.pop %v3517
        %v3519 = vmul.f32 %v3514, %v3518
        %3520 = vrot.lane.b32.xlu0 %v3262, 56
        %v3521 = vpop.permute.xlu0 %3520
        %v3524 = vsel %vm506, %v3519, 0
        %3526 = vmatprep.subr.mxu0 0.0
        %3527 = vmatpush1.msra.mxu0 %v3521
        %3528 = vmatprep.subr.mxu0 0.0
        %3529 = vmatpush1.msra.mxu0 0.0
        %3530 = vmatprep.subr.mxu0 0.0
        %3531 = vmatpush1.msra.mxu0 0.0
        %3532 = vmatprep.subr.mxu0 0.0
        %3533 = vmatpush1.msra.mxu0 0.0
        %3534 = vmatprep.subr.mxu0 0.0
        %3535 = vmatpush1.msra.mxu0 0.0
        %3536 = vmatprep.subr.mxu0 0.0
        %3537 = vmatpush1.msra.mxu0 0.0
        %3538 = vmatprep.subr.mxu0 0.0
        %3539 = vmatpush1.msra.mxu0 0.0
        %3540 = vmatprep.subr.mxu0 0.0
        %3541 = vmatpush1.msra.mxu0 0.0
        %3542 = vmatprep.subr.mxu0 0.0
        %3543 = vmatpush1.msra.mxu0 0.0
        %3544 = vmatprep.subr.mxu0 0.0
        %3545 = vmatpush1.msra.mxu0 0.0
        %3546 = vmatprep.subr.mxu0 0.0
        %3547 = vmatpush1.msra.mxu0 0.0
        %3548 = vmatprep.subr.mxu0 0.0
        %3549 = vmatpush1.msra.mxu0 0.0
        %3550 = vmatprep.subr.mxu0 0.0
        %3551 = vmatpush1.msra.mxu0 0.0
        %3552 = vmatprep.subr.mxu0 0.0
        %3553 = vmatpush1.msra.mxu0 0.0
        %3554 = vmatprep.subr.mxu0 0.0
        %3555 = vmatpush1.msra.mxu0 0.0
        %3556 = vmatprep.subr.mxu0 0.0
        %3557 = vmatpush1.msra.mxu0 0.0
        %3558 = vmatprep.subr.mxu0 0.0
        %3559 = vmatpush1.msra.mxu0 0.0
        %3560 = vmatprep.subr.mxu0 0.0
        %3561 = vmatpush1.msra.mxu0 0.0
        %3562 = vmatprep.subr.mxu0 0.0
        %3563 = vmatpush1.msra.mxu0 0.0
        %3564 = vmatprep.subr.mxu0 0.0
        %3565 = vmatpush1.msra.mxu0 0.0
        %3566 = vmatprep.subr.mxu0 0.0
        %3567 = vmatpush1.msra.mxu0 0.0
        %3568 = vmatprep.subr.mxu0 0.0
        %3569 = vmatpush1.msra.mxu0 0.0
        %3570 = vmatprep.subr.mxu0 0.0
        %3571 = vmatpush1.msra.mxu0 0.0
        %3572 = vmatprep.subr.mxu0 0.0
        %3573 = vmatpush1.msra.mxu0 0.0
        %3574 = vmatprep.subr.mxu0 0.0
        %3575 = vmatpush1.msra.mxu0 0.0
        %3576 = vmatprep.subr.mxu0 0.0
        %3577 = vmatpush1.msra.mxu0 0.0
        %3578 = vmatprep.subr.mxu0 0.0
        %3579 = vmatpush1.msra.mxu0 0.0
        %3580 = vmatprep.subr.mxu0 0.0
        %3581 = vmatpush1.msra.mxu0 0.0
        %3582 = vmatprep.subr.mxu0 0.0
        %3583 = vmatpush1.msra.mxu0 0.0
        %3584 = vmatprep.subr.mxu0 0.0
        %3585 = vmatpush1.msra.mxu0 0.0
        %3586 = vmatprep.subr.mxu0 0.0
        %3587 = vmatpush1.msra.mxu0 0.0
        %3588 = vmatprep.subr.mxu0 0.0
        %3589 = vmatpush1.msra.mxu0 0.0
        %3590 = vmatprep.mubr.f32.mxu0 0.0
        %3591 = vmatmul.mubr.f32.gmra.mrb[0].mxu0 %v3524
        %v3592 = vpop.f32.mrb[0].mxu0
        %v3593 = vadd.f32 0.0, %v3592
        %v3594 = vpop.f32.mrb[0].mxu0
        %3595 = vdwg.mxu0
        %v3597 = vsel %vm506, %v3593, 0
        %3599 = vmatprep.subr.mxu0 0.0
        %3600 = vmatpush1.msra.mxu0 %v3184
        %3601 = vmatprep.subr.mxu0 0.0
        %3602 = vmatpush1.msra.mxu0 0.0
        %3603 = vmatprep.subr.mxu0 0.0
        %3604 = vmatpush1.msra.mxu0 0.0
        %3605 = vmatprep.subr.mxu0 0.0
        %3606 = vmatpush1.msra.mxu0 0.0
        %3607 = vmatprep.subr.mxu0 0.0
        %3608 = vmatpush1.msra.mxu0 0.0
        %3609 = vmatprep.subr.mxu0 0.0
        %3610 = vmatpush1.msra.mxu0 0.0
        %3611 = vmatprep.subr.mxu0 0.0
        %3612 = vmatpush1.msra.mxu0 0.0
        %3613 = vmatprep.subr.mxu0 0.0
        %3614 = vmatpush1.msra.mxu0 0.0
        %3615 = vmatprep.subr.mxu0 0.0
        %3616 = vmatpush1.msra.mxu0 0.0
        %3617 = vmatprep.subr.mxu0 0.0
        %3618 = vmatpush1.msra.mxu0 0.0
        %3619 = vmatprep.subr.mxu0 0.0
        %3620 = vmatpush1.msra.mxu0 0.0
        %3621 = vmatprep.subr.mxu0 0.0
        %3622 = vmatpush1.msra.mxu0 0.0
        %3623 = vmatprep.subr.mxu0 0.0
        %3624 = vmatpush1.msra.mxu0 0.0
        %3625 = vmatprep.subr.mxu0 0.0
        %3626 = vmatpush1.msra.mxu0 0.0
        %3627 = vmatprep.subr.mxu0 0.0
        %3628 = vmatpush1.msra.mxu0 0.0
        %3629 = vmatprep.subr.mxu0 0.0
        %3630 = vmatpush1.msra.mxu0 0.0
        %3631 = vmatprep.subr.mxu0 0.0
        %3632 = vmatpush1.msra.mxu0 0.0
        %3633 = vmatprep.subr.mxu0 0.0
        %3634 = vmatpush1.msra.mxu0 0.0
        %3635 = vmatprep.subr.mxu0 0.0
        %3636 = vmatpush1.msra.mxu0 0.0
        %3637 = vmatprep.subr.mxu0 0.0
        %3638 = vmatpush1.msra.mxu0 0.0
        %3639 = vmatprep.subr.mxu0 0.0
        %3640 = vmatpush1.msra.mxu0 0.0
        %3641 = vmatprep.subr.mxu0 0.0
        %3642 = vmatpush1.msra.mxu0 0.0
        %3643 = vmatprep.subr.mxu0 0.0
        %3644 = vmatpush1.msra.mxu0 0.0
        %3645 = vmatprep.subr.mxu0 0.0
        %3646 = vmatpush1.msra.mxu0 0.0
        %3647 = vmatprep.subr.mxu0 0.0
        %3648 = vmatpush1.msra.mxu0 0.0
        %3649 = vmatprep.subr.mxu0 0.0
        %3650 = vmatpush1.msra.mxu0 0.0
        %3651 = vmatprep.subr.mxu0 0.0
        %3652 = vmatpush1.msra.mxu0 0.0
        %3653 = vmatprep.subr.mxu0 0.0
        %3654 = vmatpush1.msra.mxu0 0.0
        %3655 = vmatprep.subr.mxu0 0.0
        %3656 = vmatpush1.msra.mxu0 0.0
        %3657 = vmatprep.subr.mxu0 0.0
        %3658 = vmatpush1.msra.mxu0 0.0
        %3659 = vmatprep.subr.mxu0 0.0
        %3660 = vmatpush1.msra.mxu0 0.0
        %3661 = vmatprep.subr.mxu0 0.0
        %3662 = vmatpush1.msra.mxu0 0.0
        %3663 = vmatprep.mubr.f32.mxu0 0.0
        %3664 = vmatmul.mubr.f32.gmra.mrb[0].mxu0 %v3597
        %v3665 = vpop.f32.mrb[0].mxu0
        %v3666 = vadd.f32 0.0, %v3665
        %v3667 = vpop.f32.mrb[0].mxu0
        %3668 = vdwg.mxu0
        %v3670 = vsel %vm506, %v3428, 0
        %3672 = vmatprep.subr.mxu0 0.0
        %3673 = vmatpush1.msra.mxu0 %v3183
        %3674 = vmatprep.subr.mxu0 0.0
        %3675 = vmatpush1.msra.mxu0 0.0
        %3676 = vmatprep.subr.mxu0 0.0
        %3677 = vmatpush1.msra.mxu0 0.0
        %3678 = vmatprep.subr.mxu0 0.0
        %3679 = vmatpush1.msra.mxu0 0.0
        %3680 = vmatprep.subr.mxu0 0.0
        %3681 = vmatpush1.msra.mxu0 0.0
        %3682 = vmatprep.subr.mxu0 0.0
        %3683 = vmatpush1.msra.mxu0 0.0
        %3684 = vmatprep.subr.mxu0 0.0
        %3685 = vmatpush1.msra.mxu0 0.0
        %3686 = vmatprep.subr.mxu0 0.0
        %3687 = vmatpush1.msra.mxu0 0.0
        %3688 = vmatprep.subr.mxu0 0.0
        %3689 = vmatpush1.msra.mxu0 0.0
        %3690 = vmatprep.subr.mxu0 0.0
        %3691 = vmatpush1.msra.mxu0 0.0
        %3692 = vmatprep.subr.mxu0 0.0
        %3693 = vmatpush1.msra.mxu0 0.0
        %3694 = vmatprep.subr.mxu0 0.0
        %3695 = vmatpush1.msra.mxu0 0.0
        %3696 = vmatprep.subr.mxu0 0.0
        %3697 = vmatpush1.msra.mxu0 0.0
        %3698 = vmatprep.subr.mxu0 0.0
        %3699 = vmatpush1.msra.mxu0 0.0
        %3700 = vmatprep.subr.mxu0 0.0
        %3701 = vmatpush1.msra.mxu0 0.0
        %3702 = vmatprep.subr.mxu0 0.0
        %3703 = vmatpush1.msra.mxu0 0.0
        %3704 = vmatprep.subr.mxu0 0.0
        %3705 = vmatpush1.msra.mxu0 0.0
        %3706 = vmatprep.subr.mxu0 0.0
        %3707 = vmatpush1.msra.mxu0 0.0
        %3708 = vmatprep.subr.mxu0 0.0
        %3709 = vmatpush1.msra.mxu0 0.0
        %3710 = vmatprep.subr.mxu0 0.0
        %3711 = vmatpush1.msra.mxu0 0.0
        %3712 = vmatprep.subr.mxu0 0.0
        %3713 = vmatpush1.msra.mxu0 0.0
        %3714 = vmatprep.subr.mxu0 0.0
        %3715 = vmatpush1.msra.mxu0 0.0
        %3716 = vmatprep.subr.mxu0 0.0
        %3717 = vmatpush1.msra.mxu0 0.0
        %3718 = vmatprep.subr.mxu0 0.0
        %3719 = vmatpush1.msra.mxu0 0.0
        %3720 = vmatprep.subr.mxu0 0.0
        %3721 = vmatpush1.msra.mxu0 0.0
        %3722 = vmatprep.subr.mxu0 0.0
        %3723 = vmatpush1.msra.mxu0 0.0
        %3724 = vmatprep.subr.mxu0 0.0
        %3725 = vmatpush1.msra.mxu0 0.0
        %3726 = vmatprep.subr.mxu0 0.0
        %3727 = vmatpush1.msra.mxu0 0.0
        %3728 = vmatprep.subr.mxu0 0.0
        %3729 = vmatpush1.msra.mxu0 0.0
        %3730 = vmatprep.subr.mxu0 0.0
        %3731 = vmatpush1.msra.mxu0 0.0
        %3732 = vmatprep.subr.mxu0 0.0
        %3733 = vmatpush1.msra.mxu0 0.0
        %3734 = vmatprep.subr.mxu0 0.0
        %3735 = vmatpush1.msra.mxu0 0.0
        %3736 = vmatprep.mubr.f32.mxu0 0.0
        %3737 = vmatmul.mubr.f32.gmra.mrb[0].mxu0 %v3670
        %v3738 = vpop.f32.mrb[0].mxu0
        %v3739 = vadd.f32 %v3666, %v3738
        %v3740 = vpop.f32.mrb[0].mxu0
        %3741 = vdwg.mxu0
        %3742 = vrot.lane.b32.xlu0 %v3265, 112
        %v3743 = vpop.permute.xlu0 %3742
        %3744 = vrot.lane.b32.xlu0 %v3262, 80
        %v3745 = vpop.permute.xlu0 %3744
        %v3746 = vsel %vm506, %v3743, 0
        %v3748 = vsel %vm506, %v3745, 0
        %3750 = vmatprep.subr.mxu0 0.0
        %3751 = vmatpush1.xpose.msra.mxu0 %v3748
        %3752 = vmatprep.subr.mxu0 0.0
        %3753 = vmatpush1.xpose.msra.mxu0 0.0
        %3754 = vmatprep.subr.mxu0 0.0
        %3755 = vmatpush1.xpose.msra.mxu0 0.0
        %3756 = vmatprep.subr.mxu0 0.0
        %3757 = vmatpush1.xpose.msra.mxu0 0.0
        %3758 = vmatprep.subr.mxu0 0.0
        %3759 = vmatpush1.xpose.msra.mxu0 0.0
        %3760 = vmatprep.subr.mxu0 0.0
        %3761 = vmatpush1.xpose.msra.mxu0 0.0
        %3762 = vmatprep.subr.mxu0 0.0
        %3763 = vmatpush1.xpose.msra.mxu0 0.0
        %3764 = vmatprep.subr.mxu0 0.0
        %3765 = vmatpush1.xpose.msra.mxu0 0.0
        %3766 = vmatprep.subr.mxu0 0.0
        %3767 = vmatpush1.xpose.msra.mxu0 0.0
        %3768 = vmatprep.subr.mxu0 0.0
        %3769 = vmatpush1.xpose.msra.mxu0 0.0
        %3770 = vmatprep.subr.mxu0 0.0
        %3771 = vmatpush1.xpose.msra.mxu0 0.0
        %3772 = vmatprep.subr.mxu0 0.0
        %3773 = vmatpush1.xpose.msra.mxu0 0.0
        %3774 = vmatprep.subr.mxu0 0.0
        %3775 = vmatpush1.xpose.msra.mxu0 0.0
        %3776 = vmatprep.subr.mxu0 0.0
        %3777 = vmatpush1.xpose.msra.mxu0 0.0
        %3778 = vmatprep.subr.mxu0 0.0
        %3779 = vmatpush1.xpose.msra.mxu0 0.0
        %3780 = vmatprep.subr.mxu0 0.0
        %3781 = vmatpush1.xpose.msra.mxu0 0.0
        %3782 = vmatprep.subr.mxu0 0.0
        %3783 = vmatpush1.xpose.msra.mxu0 0.0
        %3784 = vmatprep.subr.mxu0 0.0
        %3785 = vmatpush1.xpose.msra.mxu0 0.0
        %3786 = vmatprep.subr.mxu0 0.0
        %3787 = vmatpush1.xpose.msra.mxu0 0.0
        %3788 = vmatprep.subr.mxu0 0.0
        %3789 = vmatpush1.xpose.msra.mxu0 0.0
        %3790 = vmatprep.subr.mxu0 0.0
        %3791 = vmatpush1.xpose.msra.mxu0 0.0
        %3792 = vmatprep.subr.mxu0 0.0
        %3793 = vmatpush1.xpose.msra.mxu0 0.0
        %3794 = vmatprep.subr.mxu0 0.0
        %3795 = vmatpush1.xpose.msra.mxu0 0.0
        %3796 = vmatprep.subr.mxu0 0.0
        %3797 = vmatpush1.xpose.msra.mxu0 0.0
        %3798 = vmatprep.subr.mxu0 0.0
        %3799 = vmatpush1.xpose.msra.mxu0 0.0
        %3800 = vmatprep.subr.mxu0 0.0
        %3801 = vmatpush1.xpose.msra.mxu0 0.0
        %3802 = vmatprep.subr.mxu0 0.0
        %3803 = vmatpush1.xpose.msra.mxu0 0.0
        %3804 = vmatprep.subr.mxu0 0.0
        %3805 = vmatpush1.xpose.msra.mxu0 0.0
        %3806 = vmatprep.subr.mxu0 0.0
        %3807 = vmatpush1.xpose.msra.mxu0 0.0
        %3808 = vmatprep.subr.mxu0 0.0
        %3809 = vmatpush1.xpose.msra.mxu0 0.0
        %3810 = vmatprep.subr.mxu0 0.0
        %3811 = vmatpush1.xpose.msra.mxu0 0.0
        %3812 = vmatprep.subr.mxu0 0.0
        %3813 = vmatpush1.xpose.msra.mxu0 0.0
        %3814 = vmatprep.mubr.f32.mxu0 0.0
        %3815 = vmatmul.mubr.f32.gmra.mrb[0].mxu0 %v3746
        %v3816 = vpop.f32.mrb[0].mxu0
        %v3817 = vadd.f32 %v284, %v3816
        %v3818 = vpop.f32.mrb[0].mxu0
        %3819 = vdwg.mxu0
        %v3820 = vsel %vm506, %v3817, -inf
        %3821 = vmax.xlane.f32.xlu0 %v3820
        %v3822 = vpop.xlane.xlu0 %3821
        %v3823 = vsub.f32 %v3817, %v3822
        %v3824 = vmul.f32 %v3823, 1.442695
        %v3825 = vpow.pop %v3824
        %v3826 = vsel %vm506, %v3825, 0.0
        %3827 = vadd.xlane.f32.xlu0 %v3826
        %v3828 = vpop.xlane.xlu0 %3827
        %v3829 = vrcp.pop %v3828
        %v3830 = vmul.f32 %v3825, %v3829
        %3831 = vrot.lane.b32.xlu0 %v3262, 48
        %v3832 = vpop.permute.xlu0 %3831
        %v3835 = vsel %vm506, %v3830, 0
        %3837 = vmatprep.subr.mxu0 0.0
        %3838 = vmatpush1.msra.mxu0 %v3832
        %3839 = vmatprep.subr.mxu0 0.0
        %3840 = vmatpush1.msra.mxu0 0.0
        %3841 = vmatprep.subr.mxu0 0.0
        %3842 = vmatpush1.msra.mxu0 0.0
        %3843 = vmatprep.subr.mxu0 0.0
        %3844 = vmatpush1.msra.mxu0 0.0
        %3845 = vmatprep.subr.mxu0 0.0
        %3846 = vmatpush1.msra.mxu0 0.0
        %3847 = vmatprep.subr.mxu0 0.0
        %3848 = vmatpush1.msra.mxu0 0.0
        %3849 = vmatprep.subr.mxu0 0.0
        %3850 = vmatpush1.msra.mxu0 0.0
        %3851 = vmatprep.subr.mxu0 0.0
        %3852 = vmatpush1.msra.mxu0 0.0
        %3853 = vmatprep.subr.mxu0 0.0
        %3854 = vmatpush1.msra.mxu0 0.0
        %3855 = vmatprep.subr.mxu0 0.0
        %3856 = vmatpush1.msra.mxu0 0.0
        %3857 = vmatprep.subr.mxu0 0.0
        %3858 = vmatpush1.msra.mxu0 0.0
        %3859 = vmatprep.subr.mxu0 0.0
        %3860 = vmatpush1.msra.mxu0 0.0
        %3861 = vmatprep.subr.mxu0 0.0
        %3862 = vmatpush1.msra.mxu0 0.0
        %3863 = vmatprep.subr.mxu0 0.0
        %3864 = vmatpush1.msra.mxu0 0.0
        %3865 = vmatprep.subr.mxu0 0.0
        %3866 = vmatpush1.msra.mxu0 0.0
        %3867 = vmatprep.subr.mxu0 0.0
        %3868 = vmatpush1.msra.mxu0 0.0
        %3869 = vmatprep.subr.mxu0 0.0
        %3870 = vmatpush1.msra.mxu0 0.0
        %3871 = vmatprep.subr.mxu0 0.0
        %3872 = vmatpush1.msra.mxu0 0.0
        %3873 = vmatprep.subr.mxu0 0.0
        %3874 = vmatpush1.msra.mxu0 0.0
        %3875 = vmatprep.subr.mxu0 0.0
        %3876 = vmatpush1.msra.mxu0 0.0
        %3877 = vmatprep.subr.mxu0 0.0
        %3878 = vmatpush1.msra.mxu0 0.0
        %3879 = vmatprep.subr.mxu0 0.0
        %3880 = vmatpush1.msra.mxu0 0.0
        %3881 = vmatprep.subr.mxu0 0.0
        %3882 = vmatpush1.msra.mxu0 0.0
        %3883 = vmatprep.subr.mxu0 0.0
        %3884 = vmatpush1.msra.mxu0 0.0
        %3885 = vmatprep.subr.mxu0 0.0
        %3886 = vmatpush1.msra.mxu0 0.0
        %3887 = vmatprep.subr.mxu0 0.0
        %3888 = vmatpush1.msra.mxu0 0.0
        %3889 = vmatprep.subr.mxu0 0.0
        %3890 = vmatpush1.msra.mxu0 0.0
        %3891 = vmatprep.subr.mxu0 0.0
        %3892 = vmatpush1.msra.mxu0 0.0
        %3893 = vmatprep.subr.mxu0 0.0
        %3894 = vmatpush1.msra.mxu0 0.0
        %3895 = vmatprep.subr.mxu0 0.0
        %3896 = vmatpush1.msra.mxu0 0.0
        %3897 = vmatprep.subr.mxu0 0.0
        %3898 = vmatpush1.msra.mxu0 0.0
        %3899 = vmatprep.subr.mxu0 0.0
        %3900 = vmatpush1.msra.mxu0 0.0
        %3901 = vmatprep.mubr.f32.mxu0 0.0
        %3902 = vmatmul.mubr.f32.gmra.mrb[0].mxu0 %v3835
        %v3903 = vpop.f32.mrb[0].mxu0
        %v3904 = vadd.f32 0.0, %v3903
        %v3905 = vpop.f32.mrb[0].mxu0
        %3906 = vdwg.mxu0
        %v3908 = vsel %vm506, %v3904, 0
        %3910 = vmatprep.subr.mxu0 0.0
        %3911 = vmatpush1.msra.mxu0 %v3185
        %3912 = vmatprep.subr.mxu0 0.0
        %3913 = vmatpush1.msra.mxu0 0.0
        %3914 = vmatprep.subr.mxu0 0.0
        %3915 = vmatpush1.msra.mxu0 0.0
        %3916 = vmatprep.subr.mxu0 0.0
        %3917 = vmatpush1.msra.mxu0 0.0
        %3918 = vmatprep.subr.mxu0 0.0
        %3919 = vmatpush1.msra.mxu0 0.0
        %3920 = vmatprep.subr.mxu0 0.0
        %3921 = vmatpush1.msra.mxu0 0.0
        %3922 = vmatprep.subr.mxu0 0.0
        %3923 = vmatpush1.msra.mxu0 0.0
        %3924 = vmatprep.subr.mxu0 0.0
        %3925 = vmatpush1.msra.mxu0 0.0
        %3926 = vmatprep.subr.mxu0 0.0
        %3927 = vmatpush1.msra.mxu0 0.0
        %3928 = vmatprep.subr.mxu0 0.0
        %3929 = vmatpush1.msra.mxu0 0.0
        %3930 = vmatprep.subr.mxu0 0.0
        %3931 = vmatpush1.msra.mxu0 0.0
        %3932 = vmatprep.subr.mxu0 0.0
        %3933 = vmatpush1.msra.mxu0 0.0
        %3934 = vmatprep.subr.mxu0 0.0
        %3935 = vmatpush1.msra.mxu0 0.0
        %3936 = vmatprep.subr.mxu0 0.0
        %3937 = vmatpush1.msra.mxu0 0.0
        %3938 = vmatprep.subr.mxu0 0.0
        %3939 = vmatpush1.msra.mxu0 0.0
        %3940 = vmatprep.subr.mxu0 0.0
        %3941 = vmatpush1.msra.mxu0 0.0
        %3942 = vmatprep.subr.mxu0 0.0
        %3943 = vmatpush1.msra.mxu0 0.0
        %3944 = vmatprep.subr.mxu0 0.0
        %3945 = vmatpush1.msra.mxu0 0.0
        %3946 = vmatprep.subr.mxu0 0.0
        %3947 = vmatpush1.msra.mxu0 0.0
        %3948 = vmatprep.subr.mxu0 0.0
        %3949 = vmatpush1.msra.mxu0 0.0
        %3950 = vmatprep.subr.mxu0 0.0
        %3951 = vmatpush1.msra.mxu0 0.0
        %3952 = vmatprep.subr.mxu0 0.0
        %3953 = vmatpush1.msra.mxu0 0.0
        %3954 = vmatprep.subr.mxu0 0.0
        %3955 = vmatpush1.msra.mxu0 0.0
        %3956 = vmatprep.subr.mxu0 0.0
        %3957 = vmatpush1.msra.mxu0 0.0
        %3958 = vmatprep.subr.mxu0 0.0
        %3959 = vmatpush1.msra.mxu0 0.0
        %3960 = vmatprep.subr.mxu0 0.0
        %3961 = vmatpush1.msra.mxu0 0.0
        %3962 = vmatprep.subr.mxu0 0.0
        %3963 = vmatpush1.msra.mxu0 0.0
        %3964 = vmatprep.subr.mxu0 0.0
        %3965 = vmatpush1.msra.mxu0 0.0
        %3966 = vmatprep.subr.mxu0 0.0
        %3967 = vmatpush1.msra.mxu0 0.0
        %3968 = vmatprep.subr.mxu0 0.0
        %3969 = vmatpush1.msra.mxu0 0.0
        %3970 = vmatprep.subr.mxu0 0.0
        %3971 = vmatpush1.msra.mxu0 0.0
        %3972 = vmatprep.subr.mxu0 0.0
        %3973 = vmatpush1.msra.mxu0 0.0
        %3974 = vmatprep.mubr.f32.mxu0 0.0
        %3975 = vmatmul.mubr.f32.gmra.mrb[0].mxu0 %v3908
        %v3976 = vpop.f32.mrb[0].mxu0
        %v3977 = vadd.f32 0.0, %v3976
        %v3978 = vpop.f32.mrb[0].mxu0
        %3979 = vdwg.mxu0
        %v3980 = vadd.f32 %v3739, %v3977
        %3981 = vrot.lane.b32.xlu0 %v3265, 104
        %v3982 = vpop.permute.xlu0 %3981
        %3983 = vrot.lane.b32.xlu0 %v3262, 72
        %v3984 = vpop.permute.xlu0 %3983
        %v3985 = vsel %vm506, %v3982, 0
        %v3987 = vsel %vm506, %v3984, 0
        %3989 = vmatprep.subr.mxu0 0.0
        %3990 = vmatpush1.xpose.msra.mxu0 %v3987
        %3991 = vmatprep.subr.mxu0 0.0
        %3992 = vmatpush1.xpose.msra.mxu0 0.0
        %3993 = vmatprep.subr.mxu0 0.0
        %3994 = vmatpush1.xpose.msra.mxu0 0.0
        %3995 = vmatprep.subr.mxu0 0.0
        %3996 = vmatpush1.xpose.msra.mxu0 0.0
        %3997 = vmatprep.subr.mxu0 0.0
        %3998 = vmatpush1.xpose.msra.mxu0 0.0
        %3999 = vmatprep.subr.mxu0 0.0
        %4000 = vmatpush1.xpose.msra.mxu0 0.0
        %4001 = vmatprep.subr.mxu0 0.0
        %4002 = vmatpush1.xpose.msra.mxu0 0.0
        %4003 = vmatprep.subr.mxu0 0.0
        %4004 = vmatpush1.xpose.msra.mxu0 0.0
        %4005 = vmatprep.subr.mxu0 0.0
        %4006 = vmatpush1.xpose.msra.mxu0 0.0
        %4007 = vmatprep.subr.mxu0 0.0
        %4008 = vmatpush1.xpose.msra.mxu0 0.0
        %4009 = vmatprep.subr.mxu0 0.0
        %4010 = vmatpush1.xpose.msra.mxu0 0.0
        %4011 = vmatprep.subr.mxu0 0.0
        %4012 = vmatpush1.xpose.msra.mxu0 0.0
        %4013 = vmatprep.subr.mxu0 0.0
        %4014 = vmatpush1.xpose.msra.mxu0 0.0
        %4015 = vmatprep.subr.mxu0 0.0
        %4016 = vmatpush1.xpose.msra.mxu0 0.0
        %4017 = vmatprep.subr.mxu0 0.0
        %4018 = vmatpush1.xpose.msra.mxu0 0.0
        %4019 = vmatprep.subr.mxu0 0.0
        %4020 = vmatpush1.xpose.msra.mxu0 0.0
        %4021 = vmatprep.subr.mxu0 0.0
        %4022 = vmatpush1.xpose.msra.mxu0 0.0
        %4023 = vmatprep.subr.mxu0 0.0
        %4024 = vmatpush1.xpose.msra.mxu0 0.0
        %4025 = vmatprep.subr.mxu0 0.0
        %4026 = vmatpush1.xpose.msra.mxu0 0.0
        %4027 = vmatprep.subr.mxu0 0.0
        %4028 = vmatpush1.xpose.msra.mxu0 0.0
        %4029 = vmatprep.subr.mxu0 0.0
        %4030 = vmatpush1.xpose.msra.mxu0 0.0
        %4031 = vmatprep.subr.mxu0 0.0
        %4032 = vmatpush1.xpose.msra.mxu0 0.0
        %4033 = vmatprep.subr.mxu0 0.0
        %4034 = vmatpush1.xpose.msra.mxu0 0.0
        %4035 = vmatprep.subr.mxu0 0.0
        %4036 = vmatpush1.xpose.msra.mxu0 0.0
        %4037 = vmatprep.subr.mxu0 0.0
        %4038 = vmatpush1.xpose.msra.mxu0 0.0
        %4039 = vmatprep.subr.mxu0 0.0
        %4040 = vmatpush1.xpose.msra.mxu0 0.0
        %4041 = vmatprep.subr.mxu0 0.0
        %4042 = vmatpush1.xpose.msra.mxu0 0.0
        %4043 = vmatprep.subr.mxu0 0.0
        %4044 = vmatpush1.xpose.msra.mxu0 0.0
        %4045 = vmatprep.subr.mxu0 0.0
        %4046 = vmatpush1.xpose.msra.mxu0 0.0
        %4047 = vmatprep.subr.mxu0 0.0
        %4048 = vmatpush1.xpose.msra.mxu0 0.0
        %4049 = vmatprep.subr.mxu0 0.0
        %4050 = vmatpush1.xpose.msra.mxu0 0.0
        %4051 = vmatprep.subr.mxu0 0.0
        %4052 = vmatpush1.xpose.msra.mxu0 0.0
        %4053 = vmatprep.mubr.f32.mxu0 0.0
        %4054 = vmatmul.mubr.f32.gmra.mrb[0].mxu0 %v3985
        %v4055 = vpop.f32.mrb[0].mxu0
        %v4056 = vadd.f32 %v284, %v4055
        %v4057 = vpop.f32.mrb[0].mxu0
        %4058 = vdwg.mxu0
        %v4059 = vsel %vm506, %v4056, -inf
        %4060 = vmax.xlane.f32.xlu0 %v4059
        %v4061 = vpop.xlane.xlu0 %4060
        %v4062 = vsub.f32 %v4056, %v4061
        %v4063 = vmul.f32 %v4062, 1.442695
        %v4064 = vpow.pop %v4063
        %v4065 = vsel %vm506, %v4064, 0.0
        %4066 = vadd.xlane.f32.xlu0 %v4065
        %v4067 = vpop.xlane.xlu0 %4066
        %v4068 = vrcp.pop %v4067
        %v4069 = vmul.f32 %v4064, %v4068
        %4070 = vrot.lane.b32.xlu0 %v3262, 40
        %v4071 = vpop.permute.xlu0 %4070
        %v4074 = vsel %vm506, %v4069, 0
        %4076 = vmatprep.subr.mxu0 0.0
        %4077 = vmatpush1.msra.mxu0 %v4071
        %4078 = vmatprep.subr.mxu0 0.0
        %4079 = vmatpush1.msra.mxu0 0.0
        %4080 = vmatprep.subr.mxu0 0.0
        %4081 = vmatpush1.msra.mxu0 0.0
        %4082 = vmatprep.subr.mxu0 0.0
        %4083 = vmatpush1.msra.mxu0 0.0
        %4084 = vmatprep.subr.mxu0 0.0
        %4085 = vmatpush1.msra.mxu0 0.0
        %4086 = vmatprep.subr.mxu0 0.0
        %4087 = vmatpush1.msra.mxu0 0.0
        %4088 = vmatprep.subr.mxu0 0.0
        %4089 = vmatpush1.msra.mxu0 0.0
        %4090 = vmatprep.subr.mxu0 0.0
        %4091 = vmatpush1.msra.mxu0 0.0
        %4092 = vmatprep.subr.mxu0 0.0
        %4093 = vmatpush1.msra.mxu0 0.0
        %4094 = vmatprep.subr.mxu0 0.0
        %4095 = vmatpush1.msra.mxu0 0.0
        %4096 = vmatprep.subr.mxu0 0.0
        %4097 = vmatpush1.msra.mxu0 0.0
        %4098 = vmatprep.subr.mxu0 0.0
        %4099 = vmatpush1.msra.mxu0 0.0
        %4100 = vmatprep.subr.mxu0 0.0
        %4101 = vmatpush1.msra.mxu0 0.0
        %4102 = vmatprep.subr.mxu0 0.0
        %4103 = vmatpush1.msra.mxu0 0.0
        %4104 = vmatprep.subr.mxu0 0.0
        %4105 = vmatpush1.msra.mxu0 0.0
        %4106 = vmatprep.subr.mxu0 0.0
        %4107 = vmatpush1.msra.mxu0 0.0
        %4108 = vmatprep.subr.mxu0 0.0
        %4109 = vmatpush1.msra.mxu0 0.0
        %4110 = vmatprep.subr.mxu0 0.0
        %4111 = vmatpush1.msra.mxu0 0.0
        %4112 = vmatprep.subr.mxu0 0.0
        %4113 = vmatpush1.msra.mxu0 0.0
        %4114 = vmatprep.subr.mxu0 0.0
        %4115 = vmatpush1.msra.mxu0 0.0
        %4116 = vmatprep.subr.mxu0 0.0
        %4117 = vmatpush1.msra.mxu0 0.0
        %4118 = vmatprep.subr.mxu0 0.0
        %4119 = vmatpush1.msra.mxu0 0.0
        %4120 = vmatprep.subr.mxu0 0.0
        %4121 = vmatpush1.msra.mxu0 0.0
        %4122 = vmatprep.subr.mxu0 0.0
        %4123 = vmatpush1.msra.mxu0 0.0
        %4124 = vmatprep.subr.mxu0 0.0
        %4125 = vmatpush1.msra.mxu0 0.0
        %4126 = vmatprep.subr.mxu0 0.0
        %4127 = vmatpush1.msra.mxu0 0.0
        %4128 = vmatprep.subr.mxu0 0.0
        %4129 = vmatpush1.msra.mxu0 0.0
        %4130 = vmatprep.subr.mxu0 0.0
        %4131 = vmatpush1.msra.mxu0 0.0
        %4132 = vmatprep.subr.mxu0 0.0
        %4133 = vmatpush1.msra.mxu0 0.0
        %4134 = vmatprep.subr.mxu0 0.0
        %4135 = vmatpush1.msra.mxu0 0.0
        %4136 = vmatprep.subr.mxu0 0.0
        %4137 = vmatpush1.msra.mxu0 0.0
        %4138 = vmatprep.subr.mxu0 0.0
        %4139 = vmatpush1.msra.mxu0 0.0
        %4140 = vmatprep.mubr.f32.mxu0 0.0
        %4141 = vmatmul.mubr.f32.gmra.mrb[0].mxu0 %v4074
        %v4142 = vpop.f32.mrb[0].mxu0
        %v4143 = vadd.f32 0.0, %v4142
        %v4144 = vpop.f32.mrb[0].mxu0
        %4145 = vdwg.mxu0
        %v4147 = vsel %vm506, %v4143, 0
        %4149 = vmatprep.subr.mxu0 0.0
        %4150 = vmatpush1.msra.mxu0 %v3186
        %4151 = vmatprep.subr.mxu0 0.0
        %4152 = vmatpush1.msra.mxu0 0.0
        %4153 = vmatprep.subr.mxu0 0.0
        %4154 = vmatpush1.msra.mxu0 0.0
        %4155 = vmatprep.subr.mxu0 0.0
        %4156 = vmatpush1.msra.mxu0 0.0
        %4157 = vmatprep.subr.mxu0 0.0
        %4158 = vmatpush1.msra.mxu0 0.0
        %4159 = vmatprep.subr.mxu0 0.0
        %4160 = vmatpush1.msra.mxu0 0.0
        %4161 = vmatprep.subr.mxu0 0.0
        %4162 = vmatpush1.msra.mxu0 0.0
        %4163 = vmatprep.subr.mxu0 0.0
        %4164 = vmatpush1.msra.mxu0 0.0
        %4165 = vmatprep.subr.mxu0 0.0
        %4166 = vmatpush1.msra.mxu0 0.0
        %4167 = vmatprep.subr.mxu0 0.0
        %4168 = vmatpush1.msra.mxu0 0.0
        %4169 = vmatprep.subr.mxu0 0.0
        %4170 = vmatpush1.msra.mxu0 0.0
        %4171 = vmatprep.subr.mxu0 0.0
        %4172 = vmatpush1.msra.mxu0 0.0
        %4173 = vmatprep.subr.mxu0 0.0
        %4174 = vmatpush1.msra.mxu0 0.0
        %4175 = vmatprep.subr.mxu0 0.0
        %4176 = vmatpush1.msra.mxu0 0.0
        %4177 = vmatprep.subr.mxu0 0.0
        %4178 = vmatpush1.msra.mxu0 0.0
        %4179 = vmatprep.subr.mxu0 0.0
        %4180 = vmatpush1.msra.mxu0 0.0
        %4181 = vmatprep.subr.mxu0 0.0
        %4182 = vmatpush1.msra.mxu0 0.0
        %4183 = vmatprep.subr.mxu0 0.0
        %4184 = vmatpush1.msra.mxu0 0.0
        %4185 = vmatprep.subr.mxu0 0.0
        %4186 = vmatpush1.msra.mxu0 0.0
        %4187 = vmatprep.subr.mxu0 0.0
        %4188 = vmatpush1.msra.mxu0 0.0
        %4189 = vmatprep.subr.mxu0 0.0
        %4190 = vmatpush1.msra.mxu0 0.0
        %4191 = vmatprep.subr.mxu0 0.0
        %4192 = vmatpush1.msra.mxu0 0.0
        %4193 = vmatprep.subr.mxu0 0.0
        %4194 = vmatpush1.msra.mxu0 0.0
        %4195 = vmatprep.subr.mxu0 0.0
        %4196 = vmatpush1.msra.mxu0 0.0
        %4197 = vmatprep.subr.mxu0 0.0
        %4198 = vmatpush1.msra.mxu0 0.0
        %4199 = vmatprep.subr.mxu0 0.0
        %4200 = vmatpush1.msra.mxu0 0.0
        %4201 = vmatprep.subr.mxu0 0.0
        %4202 = vmatpush1.msra.mxu0 0.0
        %4203 = vmatprep.subr.mxu0 0.0
        %4204 = vmatpush1.msra.mxu0 0.0
        %4205 = vmatprep.subr.mxu0 0.0
        %4206 = vmatpush1.msra.mxu0 0.0
        %4207 = vmatprep.subr.mxu0 0.0
        %4208 = vmatpush1.msra.mxu0 0.0
        %4209 = vmatprep.subr.mxu0 0.0
        %4210 = vmatpush1.msra.mxu0 0.0
        %4211 = vmatprep.subr.mxu0 0.0
        %4212 = vmatpush1.msra.mxu0 0.0
        %4213 = vmatprep.mubr.f32.mxu0 0.0
        %4214 = vmatmul.mubr.f32.gmra.mrb[0].mxu0 %v4147
        %v4215 = vpop.f32.mrb[0].mxu0
        %v4216 = vadd.f32 0.0, %v4215
        %v4217 = vpop.f32.mrb[0].mxu0
        %4218 = vdwg.mxu0
        %v4219 = vadd.f32 %v3980, %v4216
        %v4220 = vlaneseq
        %v4221 = vshrl.u32 %v4220, 7
        %v4222 = vsub.s32 0, %v4221
        %v4223 = vrot.slane %v3187, %v4222
        %v4224 = vadd.f32 %v4219, %v4223
        %v4225 = vadd.f32 %v3145, %v4224
        %v4226 = vsel %vm377, %v4225, 0.0
        %4227 = vadd.xlane.f32.xlu0 %v4226
        %v4228 = vpop.xlane.xlu0 %4227
        %v4229 = vmul.f32 %v4228, %v381
        %v4230 = vsub.f32 %v4225, %v4229
        %v4231 = vmul.f32 %v4230, %v4230
        %v4232 = vsel %vm377, %v4231, 0.0
        %4233 = vadd.xlane.f32.xlu0 %v4232
        %v4234 = vpop.xlane.xlu0 %4233
        %v4235 = vmul.f32 %v4234, 0.032258064
        %v4236 = vrsqrt.pop %v4235
        %v4237 = vmul.f32 %v4235, %v4236
        %vm4238 = vcmp.eq.f32.partialorder %v4235, inf
        %v4239 = vsel %vm4238, %v4235, %v4237
        %vm4240 = vcmp.eq.f32.partialorder %v4235, 0.0
        %v4241 = vand.u32 %v4235, 2147483648
        %v4242 = vsel %vm4240, %v4241, %v4239
        %v4243 = vlaneseq
        %v4244 = vshrl.u32 %v4243, 7
        %v4245 = vsub.s32 1, %v4244
        %v4246 = vrot.slane %v3146, %v4245
        %v4247 = vmul.f32 %v4246, %v4230
        %v4248 = vadd.f32 %v4242, 1e-06
        %v4249 = vrcp.pop %v4248
        %v4250 = vmul.f32 %v4247, %v4249
        %v4251 = vlaneseq
        %v4252 = vshrl.u32 %v4251, 7
        %v4253 = vsub.s32 1, %v4252
        %v4254 = vrot.slane %v3147, %v4253
        %v4255 = vadd.f32 %v4250, %v4254
        %v4256 = vld [vmem:[#allocation2 + $0x280] sm:$0xff]
        %v4257 = vld [vmem:[#allocation2 + $0x288] sm:$0xff]
        %v4258 = vld [vmem:[#allocation2 + $0x290] sm:$0xff]
        %v4259 = vld [vmem:[#allocation2 + $0x298] sm:$0xff]
        %v4260 = vld [vmem:[#allocation2 + $0x2a0] sm:$0x1]
        %v4261 = vlaneseq
        %v4262 = vshrl.u32 %v4261, 7
        %v4263 = vsub.s32 0, %v4262
        %v4264 = vrot.slane %v4260, %v4263
        %v4266 = vsel %vm377, %v4255, 0
        %4268 = vmatprep.subr.mxu0 0.0
        %4269 = vmatpush1.msra.mxu0 %v4256
        %4270 = vmatprep.subr.mxu0 0.0
        %4271 = vmatpush1.msra.mxu0 %v4257
        %4272 = vmatprep.subr.mxu0 0.0
        %4273 = vmatpush1.msra.mxu0 %v4258
        %4274 = vmatprep.subr.mxu0 0.0
        %4275 = vmatpush1.msra.mxu0 %v4259
        %4276 = vmatprep.subr.mxu0 0.0
        %4277 = vmatpush1.msra.mxu0 0.0
        %4278 = vmatprep.subr.mxu0 0.0
        %4279 = vmatpush1.msra.mxu0 0.0
        %4280 = vmatprep.subr.mxu0 0.0
        %4281 = vmatpush1.msra.mxu0 0.0
        %4282 = vmatprep.subr.mxu0 0.0
        %4283 = vmatpush1.msra.mxu0 0.0
        %4284 = vmatprep.subr.mxu0 0.0
        %4285 = vmatpush1.msra.mxu0 0.0
        %4286 = vmatprep.subr.mxu0 0.0
        %4287 = vmatpush1.msra.mxu0 0.0
        %4288 = vmatprep.subr.mxu0 0.0
        %4289 = vmatpush1.msra.mxu0 0.0
        %4290 = vmatprep.subr.mxu0 0.0
        %4291 = vmatpush1.msra.mxu0 0.0
        %4292 = vmatprep.subr.mxu0 0.0
        %4293 = vmatpush1.msra.mxu0 0.0
        %4294 = vmatprep.subr.mxu0 0.0
        %4295 = vmatpush1.msra.mxu0 0.0
        %4296 = vmatprep.subr.mxu0 0.0
        %4297 = vmatpush1.msra.mxu0 0.0
        %4298 = vmatprep.subr.mxu0 0.0
        %4299 = vmatpush1.msra.mxu0 0.0
        %4300 = vmatprep.subr.mxu0 0.0
        %4301 = vmatpush1.msra.mxu0 0.0
        %4302 = vmatprep.subr.mxu0 0.0
        %4303 = vmatpush1.msra.mxu0 0.0
        %4304 = vmatprep.subr.mxu0 0.0
        %4305 = vmatpush1.msra.mxu0 0.0
        %4306 = vmatprep.subr.mxu0 0.0
        %4307 = vmatpush1.msra.mxu0 0.0
        %4308 = vmatprep.subr.mxu0 0.0
        %4309 = vmatpush1.msra.mxu0 0.0
        %4310 = vmatprep.subr.mxu0 0.0
        %4311 = vmatpush1.msra.mxu0 0.0
        %4312 = vmatprep.subr.mxu0 0.0
        %4313 = vmatpush1.msra.mxu0 0.0
        %4314 = vmatprep.subr.mxu0 0.0
        %4315 = vmatpush1.msra.mxu0 0.0
        %4316 = vmatprep.subr.mxu0 0.0
        %4317 = vmatpush1.msra.mxu0 0.0
        %4318 = vmatprep.subr.mxu0 0.0
        %4319 = vmatpush1.msra.mxu0 0.0
        %4320 = vmatprep.subr.mxu0 0.0
        %4321 = vmatpush1.msra.mxu0 0.0
        %4322 = vmatprep.subr.mxu0 0.0
        %4323 = vmatpush1.msra.mxu0 0.0
        %4324 = vmatprep.subr.mxu0 0.0
        %4325 = vmatpush1.msra.mxu0 0.0
        %4326 = vmatprep.subr.mxu0 0.0
        %4327 = vmatpush1.msra.mxu0 0.0
        %4328 = vmatprep.subr.mxu0 0.0
        %4329 = vmatpush1.msra.mxu0 0.0
        %4330 = vmatprep.subr.mxu0 0.0
        %4331 = vmatpush1.msra.mxu0 0.0
        %4332 = vmatprep.mubr.f32.mxu0 0.0
        %4333 = vmatmul.mubr.f32.gmra.mrb[0].mxu0 %v4266
        %v4334 = vpop.f32.mrb[0].mxu0
        %v4335 = vadd.f32 %v4264, %v4334
        %v4336 = vpop.f32.mrb[0].mxu0
        %4337 = vdwg.mxu0
        %v4338 = vmul.f32 %v4335, 0.35355338
        %v4339 = vld [vmem:[#allocation2 + $0x2a8] sm:$0xff]
        %v4340 = vld [vmem:[#allocation2 + $0x2b0] sm:$0xff]
        %v4341 = vld [vmem:[#allocation2 + $0x2b8] sm:$0xff]
        %v4342 = vld [vmem:[#allocation2 + $0x2c0] sm:$0xff]
        %v4343 = vld [vmem:[#allocation2 + $0x2c8] sm:$0x1]
        %v4345 = vsel %vm506, %v4338, 0
        %v4348 = vsel %vm506, %v3056, 0
        %4350 = vmatprep.subr.mxu0 0.0
        %4351 = vmatpush1.xpose.msra.mxu0 %v4348
        %4352 = vmatprep.subr.mxu0 0.0
        %4353 = vmatpush1.xpose.msra.mxu0 0.0
        %4354 = vmatprep.subr.mxu0 0.0
        %4355 = vmatpush1.xpose.msra.mxu0 0.0
        %4356 = vmatprep.subr.mxu0 0.0
        %4357 = vmatpush1.xpose.msra.mxu0 0.0
        %4358 = vmatprep.subr.mxu0 0.0
        %4359 = vmatpush1.xpose.msra.mxu0 0.0
        %4360 = vmatprep.subr.mxu0 0.0
        %4361 = vmatpush1.xpose.msra.mxu0 0.0
        %4362 = vmatprep.subr.mxu0 0.0
        %4363 = vmatpush1.xpose.msra.mxu0 0.0
        %4364 = vmatprep.subr.mxu0 0.0
        %4365 = vmatpush1.xpose.msra.mxu0 0.0
        %4366 = vmatprep.subr.mxu0 0.0
        %4367 = vmatpush1.xpose.msra.mxu0 0.0
        %4368 = vmatprep.subr.mxu0 0.0
        %4369 = vmatpush1.xpose.msra.mxu0 0.0
        %4370 = vmatprep.subr.mxu0 0.0
        %4371 = vmatpush1.xpose.msra.mxu0 0.0
        %4372 = vmatprep.subr.mxu0 0.0
        %4373 = vmatpush1.xpose.msra.mxu0 0.0
        %4374 = vmatprep.subr.mxu0 0.0
        %4375 = vmatpush1.xpose.msra.mxu0 0.0
        %4376 = vmatprep.subr.mxu0 0.0
        %4377 = vmatpush1.xpose.msra.mxu0 0.0
        %4378 = vmatprep.subr.mxu0 0.0
        %4379 = vmatpush1.xpose.msra.mxu0 0.0
        %4380 = vmatprep.subr.mxu0 0.0
        %4381 = vmatpush1.xpose.msra.mxu0 0.0
        %4382 = vmatprep.subr.mxu0 0.0
        %4383 = vmatpush1.xpose.msra.mxu0 0.0
        %4384 = vmatprep.subr.mxu0 0.0
        %4385 = vmatpush1.xpose.msra.mxu0 0.0
        %4386 = vmatprep.subr.mxu0 0.0
        %4387 = vmatpush1.xpose.msra.mxu0 0.0
        %4388 = vmatprep.subr.mxu0 0.0
        %4389 = vmatpush1.xpose.msra.mxu0 0.0
        %4390 = vmatprep.subr.mxu0 0.0
        %4391 = vmatpush1.xpose.msra.mxu0 0.0
        %4392 = vmatprep.subr.mxu0 0.0
        %4393 = vmatpush1.xpose.msra.mxu0 0.0
        %4394 = vmatprep.subr.mxu0 0.0
        %4395 = vmatpush1.xpose.msra.mxu0 0.0
        %4396 = vmatprep.subr.mxu0 0.0
        %4397 = vmatpush1.xpose.msra.mxu0 0.0
        %4398 = vmatprep.subr.mxu0 0.0
        %4399 = vmatpush1.xpose.msra.mxu0 0.0
        %4400 = vmatprep.subr.mxu0 0.0
        %4401 = vmatpush1.xpose.msra.mxu0 0.0
        %4402 = vmatprep.subr.mxu0 0.0
        %4403 = vmatpush1.xpose.msra.mxu0 0.0
        %4404 = vmatprep.subr.mxu0 0.0
        %4405 = vmatpush1.xpose.msra.mxu0 0.0
        %4406 = vmatprep.subr.mxu0 0.0
        %4407 = vmatpush1.xpose.msra.mxu0 0.0
        %4408 = vmatprep.subr.mxu0 0.0
        %4409 = vmatpush1.xpose.msra.mxu0 0.0
        %4410 = vmatprep.subr.mxu0 0.0
        %4411 = vmatpush1.xpose.msra.mxu0 0.0
        %4412 = vmatprep.subr.mxu0 0.0
        %4413 = vmatpush1.xpose.msra.mxu0 0.0
        %4414 = vmatprep.mubr.f32.mxu0 0.0
        %4415 = vmatmul.mubr.f32.gmra.mrb[0].mxu0 %v4345
        %v4416 = vpop.f32.mrb[0].mxu0
        %v4417 = vadd.f32 %v501, %v4416
        %v4418 = vpop.f32.mrb[0].mxu0
        %4419 = vdwg.mxu0
        %v4420 = vsel %vm506, %v4417, -inf
        %4421 = vmax.xlane.f32.xlu0 %v4420
        %v4422 = vpop.xlane.xlu0 %4421
        %v4423 = vsub.f32 %v4417, %v4422
        %v4424 = vmul.f32 %v4423, 1.442695
        %v4425 = vpow.pop %v4424
        %v4426 = vsel %vm506, %v4425, 0.0
        %4427 = vadd.xlane.f32.xlu0 %v4426
        %v4428 = vpop.xlane.xlu0 %4427
        %v4429 = vrcp.pop %v4428
        %v4430 = vmul.f32 %v4425, %v4429
        %4431 = vrot.lane.b32.xlu0 %v3056, 96
        %v4432 = vpop.permute.xlu0 %4431
        %v4435 = vsel %vm506, %v4430, 0
        %4437 = vmatprep.subr.mxu0 0.0
        %4438 = vmatpush1.msra.mxu0 %v4432
        %4439 = vmatprep.subr.mxu0 0.0
        %4440 = vmatpush1.msra.mxu0 0.0
        %4441 = vmatprep.subr.mxu0 0.0
        %4442 = vmatpush1.msra.mxu0 0.0
        %4443 = vmatprep.subr.mxu0 0.0
        %4444 = vmatpush1.msra.mxu0 0.0
        %4445 = vmatprep.subr.mxu0 0.0
        %4446 = vmatpush1.msra.mxu0 0.0
        %4447 = vmatprep.subr.mxu0 0.0
        %4448 = vmatpush1.msra.mxu0 0.0
        %4449 = vmatprep.subr.mxu0 0.0
        %4450 = vmatpush1.msra.mxu0 0.0
        %4451 = vmatprep.subr.mxu0 0.0
        %4452 = vmatpush1.msra.mxu0 0.0
        %4453 = vmatprep.subr.mxu0 0.0
        %4454 = vmatpush1.msra.mxu0 0.0
        %4455 = vmatprep.subr.mxu0 0.0
        %4456 = vmatpush1.msra.mxu0 0.0
        %4457 = vmatprep.subr.mxu0 0.0
        %4458 = vmatpush1.msra.mxu0 0.0
        %4459 = vmatprep.subr.mxu0 0.0
        %4460 = vmatpush1.msra.mxu0 0.0
        %4461 = vmatprep.subr.mxu0 0.0
        %4462 = vmatpush1.msra.mxu0 0.0
        %4463 = vmatprep.subr.mxu0 0.0
        %4464 = vmatpush1.msra.mxu0 0.0
        %4465 = vmatprep.subr.mxu0 0.0
        %4466 = vmatpush1.msra.mxu0 0.0
        %4467 = vmatprep.subr.mxu0 0.0
        %4468 = vmatpush1.msra.mxu0 0.0
        %4469 = vmatprep.subr.mxu0 0.0
        %4470 = vmatpush1.msra.mxu0 0.0
        %4471 = vmatprep.subr.mxu0 0.0
        %4472 = vmatpush1.msra.mxu0 0.0
        %4473 = vmatprep.subr.mxu0 0.0
        %4474 = vmatpush1.msra.mxu0 0.0
        %4475 = vmatprep.subr.mxu0 0.0
        %4476 = vmatpush1.msra.mxu0 0.0
        %4477 = vmatprep.subr.mxu0 0.0
        %4478 = vmatpush1.msra.mxu0 0.0
        %4479 = vmatprep.subr.mxu0 0.0
        %4480 = vmatpush1.msra.mxu0 0.0
        %4481 = vmatprep.subr.mxu0 0.0
        %4482 = vmatpush1.msra.mxu0 0.0
        %4483 = vmatprep.subr.mxu0 0.0
        %4484 = vmatpush1.msra.mxu0 0.0
        %4485 = vmatprep.subr.mxu0 0.0
        %4486 = vmatpush1.msra.mxu0 0.0
        %4487 = vmatprep.subr.mxu0 0.0
        %4488 = vmatpush1.msra.mxu0 0.0
        %4489 = vmatprep.subr.mxu0 0.0
        %4490 = vmatpush1.msra.mxu0 0.0
        %4491 = vmatprep.subr.mxu0 0.0
        %4492 = vmatpush1.msra.mxu0 0.0
        %4493 = vmatprep.subr.mxu0 0.0
        %4494 = vmatpush1.msra.mxu0 0.0
        %4495 = vmatprep.subr.mxu0 0.0
        %4496 = vmatpush1.msra.mxu0 0.0
        %4497 = vmatprep.subr.mxu0 0.0
        %4498 = vmatpush1.msra.mxu0 0.0
        %4499 = vmatprep.subr.mxu0 0.0
        %4500 = vmatpush1.msra.mxu0 0.0
        %4501 = vmatprep.mubr.f32.mxu0 0.0
        %4502 = vmatmul.mubr.f32.gmra.mrb[0].mxu0 %v4435
        %v4503 = vpop.f32.mrb[0].mxu0
        %v4504 = vadd.f32 0.0, %v4503
        %v4505 = vpop.f32.mrb[0].mxu0
        %4506 = vdwg.mxu0
        %4507 = vrot.lane.b32.xlu0 %v4338, 120
        %v4508 = vpop.permute.xlu0 %4507
        %4509 = vrot.lane.b32.xlu0 %v3056, 120
        %v4510 = vpop.permute.xlu0 %4509
        %v4511 = vsel %vm506, %v4508, 0
        %v4513 = vsel %vm506, %v4510, 0
        %4515 = vmatprep.subr.mxu0 0.0
        %4516 = vmatpush1.xpose.msra.mxu0 %v4513
        %4517 = vmatprep.subr.mxu0 0.0
        %4518 = vmatpush1.xpose.msra.mxu0 0.0
        %4519 = vmatprep.subr.mxu0 0.0
        %4520 = vmatpush1.xpose.msra.mxu0 0.0
        %4521 = vmatprep.subr.mxu0 0.0
        %4522 = vmatpush1.xpose.msra.mxu0 0.0
        %4523 = vmatprep.subr.mxu0 0.0
        %4524 = vmatpush1.xpose.msra.mxu0 0.0
        %4525 = vmatprep.subr.mxu0 0.0
        %4526 = vmatpush1.xpose.msra.mxu0 0.0
        %4527 = vmatprep.subr.mxu0 0.0
        %4528 = vmatpush1.xpose.msra.mxu0 0.0
        %4529 = vmatprep.subr.mxu0 0.0
        %4530 = vmatpush1.xpose.msra.mxu0 0.0
        %4531 = vmatprep.subr.mxu0 0.0
        %4532 = vmatpush1.xpose.msra.mxu0 0.0
        %4533 = vmatprep.subr.mxu0 0.0
        %4534 = vmatpush1.xpose.msra.mxu0 0.0
        %4535 = vmatprep.subr.mxu0 0.0
        %4536 = vmatpush1.xpose.msra.mxu0 0.0
        %4537 = vmatprep.subr.mxu0 0.0
        %4538 = vmatpush1.xpose.msra.mxu0 0.0
        %4539 = vmatprep.subr.mxu0 0.0
        %4540 = vmatpush1.xpose.msra.mxu0 0.0
        %4541 = vmatprep.subr.mxu0 0.0
        %4542 = vmatpush1.xpose.msra.mxu0 0.0
        %4543 = vmatprep.subr.mxu0 0.0
        %4544 = vmatpush1.xpose.msra.mxu0 0.0
        %4545 = vmatprep.subr.mxu0 0.0
        %4546 = vmatpush1.xpose.msra.mxu0 0.0
        %4547 = vmatprep.subr.mxu0 0.0
        %4548 = vmatpush1.xpose.msra.mxu0 0.0
        %4549 = vmatprep.subr.mxu0 0.0
        %4550 = vmatpush1.xpose.msra.mxu0 0.0
        %4551 = vmatprep.subr.mxu0 0.0
        %4552 = vmatpush1.xpose.msra.mxu0 0.0
        %4553 = vmatprep.subr.mxu0 0.0
        %4554 = vmatpush1.xpose.msra.mxu0 0.0
        %4555 = vmatprep.subr.mxu0 0.0
        %4556 = vmatpush1.xpose.msra.mxu0 0.0
        %4557 = vmatprep.subr.mxu0 0.0
        %4558 = vmatpush1.xpose.msra.mxu0 0.0
        %4559 = vmatprep.subr.mxu0 0.0
        %4560 = vmatpush1.xpose.msra.mxu0 0.0
        %4561 = vmatprep.subr.mxu0 0.0
        %4562 = vmatpush1.xpose.msra.mxu0 0.0
        %4563 = vmatprep.subr.mxu0 0.0
        %4564 = vmatpush1.xpose.msra.mxu0 0.0
        %4565 = vmatprep.subr.mxu0 0.0
        %4566 = vmatpush1.xpose.msra.mxu0 0.0
        %4567 = vmatprep.subr.mxu0 0.0
        %4568 = vmatpush1.xpose.msra.mxu0 0.0
        %4569 = vmatprep.subr.mxu0 0.0
        %4570 = vmatpush1.xpose.msra.mxu0 0.0
        %4571 = vmatprep.subr.mxu0 0.0
        %4572 = vmatpush1.xpose.msra.mxu0 0.0
        %4573 = vmatprep.subr.mxu0 0.0
        %4574 = vmatpush1.xpose.msra.mxu0 0.0
        %4575 = vmatprep.subr.mxu0 0.0
        %4576 = vmatpush1.xpose.msra.mxu0 0.0
        %4577 = vmatprep.subr.mxu0 0.0
        %4578 = vmatpush1.xpose.msra.mxu0 0.0
        %4579 = vmatprep.mubr.f32.mxu0 0.0
        %4580 = vmatmul.mubr.f32.gmra.mrb[0].mxu0 %v4511
        %v4581 = vpop.f32.mrb[0].mxu0
        %v4582 = vadd.f32 %v501, %v4581
        %v4583 = vpop.f32.mrb[0].mxu0
        %4584 = vdwg.mxu0
        %v4585 = vsel %vm506, %v4582, -inf
        %4586 = vmax.xlane.f32.xlu0 %v4585
        %v4587 = vpop.xlane.xlu0 %4586
        %v4588 = vsub.f32 %v4582, %v4587
        %v4589 = vmul.f32 %v4588, 1.442695
        %v4590 = vpow.pop %v4589
        %v4591 = vsel %vm506, %v4590, 0.0
        %4592 = vadd.xlane.f32.xlu0 %v4591
        %v4593 = vpop.xlane.xlu0 %4592
        %v4594 = vrcp.pop %v4593
        %v4595 = vmul.f32 %v4590, %v4594
        %4596 = vrot.lane.b32.xlu0 %v3056, 88
        %v4597 = vpop.permute.xlu0 %4596
        %v4600 = vsel %vm506, %v4595, 0
        %4602 = vmatprep.subr.mxu0 0.0
        %4603 = vmatpush1.msra.mxu0 %v4597
        %4604 = vmatprep.subr.mxu0 0.0
        %4605 = vmatpush1.msra.mxu0 0.0
        %4606 = vmatprep.subr.mxu0 0.0
        %4607 = vmatpush1.msra.mxu0 0.0
        %4608 = vmatprep.subr.mxu0 0.0
        %4609 = vmatpush1.msra.mxu0 0.0
        %4610 = vmatprep.subr.mxu0 0.0
        %4611 = vmatpush1.msra.mxu0 0.0
        %4612 = vmatprep.subr.mxu0 0.0
        %4613 = vmatpush1.msra.mxu0 0.0
        %4614 = vmatprep.subr.mxu0 0.0
        %4615 = vmatpush1.msra.mxu0 0.0
        %4616 = vmatprep.subr.mxu0 0.0
        %4617 = vmatpush1.msra.mxu0 0.0
        %4618 = vmatprep.subr.mxu0 0.0
        %4619 = vmatpush1.msra.mxu0 0.0
        %4620 = vmatprep.subr.mxu0 0.0
        %4621 = vmatpush1.msra.mxu0 0.0
        %4622 = vmatprep.subr.mxu0 0.0
        %4623 = vmatpush1.msra.mxu0 0.0
        %4624 = vmatprep.subr.mxu0 0.0
        %4625 = vmatpush1.msra.mxu0 0.0
        %4626 = vmatprep.subr.mxu0 0.0
        %4627 = vmatpush1.msra.mxu0 0.0
        %4628 = vmatprep.subr.mxu0 0.0
        %4629 = vmatpush1.msra.mxu0 0.0
        %4630 = vmatprep.subr.mxu0 0.0
        %4631 = vmatpush1.msra.mxu0 0.0
        %4632 = vmatprep.subr.mxu0 0.0
        %4633 = vmatpush1.msra.mxu0 0.0
        %4634 = vmatprep.subr.mxu0 0.0
        %4635 = vmatpush1.msra.mxu0 0.0
        %4636 = vmatprep.subr.mxu0 0.0
        %4637 = vmatpush1.msra.mxu0 0.0
        %4638 = vmatprep.subr.mxu0 0.0
        %4639 = vmatpush1.msra.mxu0 0.0
        %4640 = vmatprep.subr.mxu0 0.0
        %4641 = vmatpush1.msra.mxu0 0.0
        %4642 = vmatprep.subr.mxu0 0.0
        %4643 = vmatpush1.msra.mxu0 0.0
        %4644 = vmatprep.subr.mxu0 0.0
        %4645 = vmatpush1.msra.mxu0 0.0
        %4646 = vmatprep.subr.mxu0 0.0
        %4647 = vmatpush1.msra.mxu0 0.0
        %4648 = vmatprep.subr.mxu0 0.0
        %4649 = vmatpush1.msra.mxu0 0.0
        %4650 = vmatprep.subr.mxu0 0.0
        %4651 = vmatpush1.msra.mxu0 0.0
        %4652 = vmatprep.subr.mxu0 0.0
        %4653 = vmatpush1.msra.mxu0 0.0
        %4654 = vmatprep.subr.mxu0 0.0
        %4655 = vmatpush1.msra.mxu0 0.0
        %4656 = vmatprep.subr.mxu0 0.0
        %4657 = vmatpush1.msra.mxu0 0.0
        %4658 = vmatprep.subr.mxu0 0.0
        %4659 = vmatpush1.msra.mxu0 0.0
        %4660 = vmatprep.subr.mxu0 0.0
        %4661 = vmatpush1.msra.mxu0 0.0
        %4662 = vmatprep.subr.mxu0 0.0
        %4663 = vmatpush1.msra.mxu0 0.0
        %4664 = vmatprep.subr.mxu0 0.0
        %4665 = vmatpush1.msra.mxu0 0.0
        %4666 = vmatprep.mubr.f32.mxu0 0.0
        %4667 = vmatmul.mubr.f32.gmra.mrb[0].mxu0 %v4600
        %v4668 = vpop.f32.mrb[0].mxu0
        %v4669 = vadd.f32 0.0, %v4668
        %v4670 = vpop.f32.mrb[0].mxu0
        %4671 = vdwg.mxu0
        %v4673 = vsel %vm506, %v4669, 0
        %4675 = vmatprep.subr.mxu0 0.0
        %4676 = vmatpush1.msra.mxu0 %v4340
        %4677 = vmatprep.subr.mxu0 0.0
        %4678 = vmatpush1.msra.mxu0 0.0
        %4679 = vmatprep.subr.mxu0 0.0
        %4680 = vmatpush1.msra.mxu0 0.0
        %4681 = vmatprep.subr.mxu0 0.0
        %4682 = vmatpush1.msra.mxu0 0.0
        %4683 = vmatprep.subr.mxu0 0.0
        %4684 = vmatpush1.msra.mxu0 0.0
        %4685 = vmatprep.subr.mxu0 0.0
        %4686 = vmatpush1.msra.mxu0 0.0
        %4687 = vmatprep.subr.mxu0 0.0
        %4688 = vmatpush1.msra.mxu0 0.0
        %4689 = vmatprep.subr.mxu0 0.0
        %4690 = vmatpush1.msra.mxu0 0.0
        %4691 = vmatprep.subr.mxu0 0.0
        %4692 = vmatpush1.msra.mxu0 0.0
        %4693 = vmatprep.subr.mxu0 0.0
        %4694 = vmatpush1.msra.mxu0 0.0
        %4695 = vmatprep.subr.mxu0 0.0
        %4696 = vmatpush1.msra.mxu0 0.0
        %4697 = vmatprep.subr.mxu0 0.0
        %4698 = vmatpush1.msra.mxu0 0.0
        %4699 = vmatprep.subr.mxu0 0.0
        %4700 = vmatpush1.msra.mxu0 0.0
        %4701 = vmatprep.subr.mxu0 0.0
        %4702 = vmatpush1.msra.mxu0 0.0
        %4703 = vmatprep.subr.mxu0 0.0
        %4704 = vmatpush1.msra.mxu0 0.0
        %4705 = vmatprep.subr.mxu0 0.0
        %4706 = vmatpush1.msra.mxu0 0.0
        %4707 = vmatprep.subr.mxu0 0.0
        %4708 = vmatpush1.msra.mxu0 0.0
        %4709 = vmatprep.subr.mxu0 0.0
        %4710 = vmatpush1.msra.mxu0 0.0
        %4711 = vmatprep.subr.mxu0 0.0
        %4712 = vmatpush1.msra.mxu0 0.0
        %4713 = vmatprep.subr.mxu0 0.0
        %4714 = vmatpush1.msra.mxu0 0.0
        %4715 = vmatprep.subr.mxu0 0.0
        %4716 = vmatpush1.msra.mxu0 0.0
        %4717 = vmatprep.subr.mxu0 0.0
        %4718 = vmatpush1.msra.mxu0 0.0
        %4719 = vmatprep.subr.mxu0 0.0
        %4720 = vmatpush1.msra.mxu0 0.0
        %4721 = vmatprep.subr.mxu0 0.0
        %4722 = vmatpush1.msra.mxu0 0.0
        %4723 = vmatprep.subr.mxu0 0.0
        %4724 = vmatpush1.msra.mxu0 0.0
        %4725 = vmatprep.subr.mxu0 0.0
        %4726 = vmatpush1.msra.mxu0 0.0
        %4727 = vmatprep.subr.mxu0 0.0
        %4728 = vmatpush1.msra.mxu0 0.0
        %4729 = vmatprep.subr.mxu0 0.0
        %4730 = vmatpush1.msra.mxu0 0.0
        %4731 = vmatprep.subr.mxu0 0.0
        %4732 = vmatpush1.msra.mxu0 0.0
        %4733 = vmatprep.subr.mxu0 0.0
        %4734 = vmatpush1.msra.mxu0 0.0
        %4735 = vmatprep.subr.mxu0 0.0
        %4736 = vmatpush1.msra.mxu0 0.0
        %4737 = vmatprep.subr.mxu0 0.0
        %4738 = vmatpush1.msra.mxu0 0.0
        %4739 = vmatprep.mubr.f32.mxu0 0.0
        %4740 = vmatmul.mubr.f32.gmra.mrb[0].mxu0 %v4673
        %v4741 = vpop.f32.mrb[0].mxu0
        %v4742 = vadd.f32 0.0, %v4741
        %v4743 = vpop.f32.mrb[0].mxu0
        %4744 = vdwg.mxu0
        %v4746 = vsel %vm506, %v4504, 0
        %4748 = vmatprep.subr.mxu0 0.0
        %4749 = vmatpush1.msra.mxu0 %v4339
        %4750 = vmatprep.subr.mxu0 0.0
        %4751 = vmatpush1.msra.mxu0 0.0
        %4752 = vmatprep.subr.mxu0 0.0
        %4753 = vmatpush1.msra.mxu0 0.0
        %4754 = vmatprep.subr.mxu0 0.0
        %4755 = vmatpush1.msra.mxu0 0.0
        %4756 = vmatprep.subr.mxu0 0.0
        %4757 = vmatpush1.msra.mxu0 0.0
        %4758 = vmatprep.subr.mxu0 0.0
        %4759 = vmatpush1.msra.mxu0 0.0
        %4760 = vmatprep.subr.mxu0 0.0
        %4761 = vmatpush1.msra.mxu0 0.0
        %4762 = vmatprep.subr.mxu0 0.0
        %4763 = vmatpush1.msra.mxu0 0.0
        %4764 = vmatprep.subr.mxu0 0.0
        %4765 = vmatpush1.msra.mxu0 0.0
        %4766 = vmatprep.subr.mxu0 0.0
        %4767 = vmatpush1.msra.mxu0 0.0
        %4768 = vmatprep.subr.mxu0 0.0
        %4769 = vmatpush1.msra.mxu0 0.0
        %4770 = vmatprep.subr.mxu0 0.0
        %4771 = vmatpush1.msra.mxu0 0.0
        %4772 = vmatprep.subr.mxu0 0.0
        %4773 = vmatpush1.msra.mxu0 0.0
        %4774 = vmatprep.subr.mxu0 0.0
        %4775 = vmatpush1.msra.mxu0 0.0
        %4776 = vmatprep.subr.mxu0 0.0
        %4777 = vmatpush1.msra.mxu0 0.0
        %4778 = vmatprep.subr.mxu0 0.0
        %4779 = vmatpush1.msra.mxu0 0.0
        %4780 = vmatprep.subr.mxu0 0.0
        %4781 = vmatpush1.msra.mxu0 0.0
        %4782 = vmatprep.subr.mxu0 0.0
        %4783 = vmatpush1.msra.mxu0 0.0
        %4784 = vmatprep.subr.mxu0 0.0
        %4785 = vmatpush1.msra.mxu0 0.0
        %4786 = vmatprep.subr.mxu0 0.0
        %4787 = vmatpush1.msra.mxu0 0.0
        %4788 = vmatprep.subr.mxu0 0.0
        %4789 = vmatpush1.msra.mxu0 0.0
        %4790 = vmatprep.subr.mxu0 0.0
        %4791 = vmatpush1.msra.mxu0 0.0
        %4792 = vmatprep.subr.mxu0 0.0
        %4793 = vmatpush1.msra.mxu0 0.0
        %4794 = vmatprep.subr.mxu0 0.0
        %4795 = vmatpush1.msra.mxu0 0.0
        %4796 = vmatprep.subr.mxu0 0.0
        %4797 = vmatpush1.msra.mxu0 0.0
        %4798 = vmatprep.subr.mxu0 0.0
        %4799 = vmatpush1.msra.mxu0 0.0
        %4800 = vmatprep.subr.mxu0 0.0
        %4801 = vmatpush1.msra.mxu0 0.0
        %4802 = vmatprep.subr.mxu0 0.0
        %4803 = vmatpush1.msra.mxu0 0.0
        %4804 = vmatprep.subr.mxu0 0.0
        %4805 = vmatpush1.msra.mxu0 0.0
        %4806 = vmatprep.subr.mxu0 0.0
        %4807 = vmatpush1.msra.mxu0 0.0
        %4808 = vmatprep.subr.mxu0 0.0
        %4809 = vmatpush1.msra.mxu0 0.0
        %4810 = vmatprep.subr.mxu0 0.0
        %4811 = vmatpush1.msra.mxu0 0.0
        %4812 = vmatprep.mubr.f32.mxu0 0.0
        %4813 = vmatmul.mubr.f32.gmra.mrb[0].mxu0 %v4746
        %v4814 = vpop.f32.mrb[0].mxu0
        %v4815 = vadd.f32 %v4742, %v4814
        %v4816 = vpop.f32.mrb[0].mxu0
        %4817 = vdwg.mxu0
        %4818 = vrot.lane.b32.xlu0 %v4338, 112
        %v4819 = vpop.permute.xlu0 %4818
        %4820 = vrot.lane.b32.xlu0 %v3056, 112
        %v4821 = vpop.permute.xlu0 %4820
        %v4822 = vsel %vm506, %v4819, 0
        %v4824 = vsel %vm506, %v4821, 0
        %4826 = vmatprep.subr.mxu0 0.0
        %4827 = vmatpush1.xpose.msra.mxu0 %v4824
        %4828 = vmatprep.subr.mxu0 0.0
        %4829 = vmatpush1.xpose.msra.mxu0 0.0
        %4830 = vmatprep.subr.mxu0 0.0
        %4831 = vmatpush1.xpose.msra.mxu0 0.0
        %4832 = vmatprep.subr.mxu0 0.0
        %4833 = vmatpush1.xpose.msra.mxu0 0.0
        %4834 = vmatprep.subr.mxu0 0.0
        %4835 = vmatpush1.xpose.msra.mxu0 0.0
        %4836 = vmatprep.subr.mxu0 0.0
        %4837 = vmatpush1.xpose.msra.mxu0 0.0
        %4838 = vmatprep.subr.mxu0 0.0
        %4839 = vmatpush1.xpose.msra.mxu0 0.0
        %4840 = vmatprep.subr.mxu0 0.0
        %4841 = vmatpush1.xpose.msra.mxu0 0.0
        %4842 = vmatprep.subr.mxu0 0.0
        %4843 = vmatpush1.xpose.msra.mxu0 0.0
        %4844 = vmatprep.subr.mxu0 0.0
        %4845 = vmatpush1.xpose.msra.mxu0 0.0
        %4846 = vmatprep.subr.mxu0 0.0
        %4847 = vmatpush1.xpose.msra.mxu0 0.0
        %4848 = vmatprep.subr.mxu0 0.0
        %4849 = vmatpush1.xpose.msra.mxu0 0.0
        %4850 = vmatprep.subr.mxu0 0.0
        %4851 = vmatpush1.xpose.msra.mxu0 0.0
        %4852 = vmatprep.subr.mxu0 0.0
        %4853 = vmatpush1.xpose.msra.mxu0 0.0
        %4854 = vmatprep.subr.mxu0 0.0
        %4855 = vmatpush1.xpose.msra.mxu0 0.0
        %4856 = vmatprep.subr.mxu0 0.0
        %4857 = vmatpush1.xpose.msra.mxu0 0.0
        %4858 = vmatprep.subr.mxu0 0.0
        %4859 = vmatpush1.xpose.msra.mxu0 0.0
        %4860 = vmatprep.subr.mxu0 0.0
        %4861 = vmatpush1.xpose.msra.mxu0 0.0
        %4862 = vmatprep.subr.mxu0 0.0
        %4863 = vmatpush1.xpose.msra.mxu0 0.0
        %4864 = vmatprep.subr.mxu0 0.0
        %4865 = vmatpush1.xpose.msra.mxu0 0.0
        %4866 = vmatprep.subr.mxu0 0.0
        %4867 = vmatpush1.xpose.msra.mxu0 0.0
        %4868 = vmatprep.subr.mxu0 0.0
        %4869 = vmatpush1.xpose.msra.mxu0 0.0
        %4870 = vmatprep.subr.mxu0 0.0
        %4871 = vmatpush1.xpose.msra.mxu0 0.0
        %4872 = vmatprep.subr.mxu0 0.0
        %4873 = vmatpush1.xpose.msra.mxu0 0.0
        %4874 = vmatprep.subr.mxu0 0.0
        %4875 = vmatpush1.xpose.msra.mxu0 0.0
        %4876 = vmatprep.subr.mxu0 0.0
        %4877 = vmatpush1.xpose.msra.mxu0 0.0
        %4878 = vmatprep.subr.mxu0 0.0
        %4879 = vmatpush1.xpose.msra.mxu0 0.0
        %4880 = vmatprep.subr.mxu0 0.0
        %4881 = vmatpush1.xpose.msra.mxu0 0.0
        %4882 = vmatprep.subr.mxu0 0.0
        %4883 = vmatpush1.xpose.msra.mxu0 0.0
        %4884 = vmatprep.subr.mxu0 0.0
        %4885 = vmatpush1.xpose.msra.mxu0 0.0
        %4886 = vmatprep.subr.mxu0 0.0
        %4887 = vmatpush1.xpose.msra.mxu0 0.0
        %4888 = vmatprep.subr.mxu0 0.0
        %4889 = vmatpush1.xpose.msra.mxu0 0.0
        %4890 = vmatprep.mubr.f32.mxu0 0.0
        %4891 = vmatmul.mubr.f32.gmra.mrb[0].mxu0 %v4822
        %v4892 = vpop.f32.mrb[0].mxu0
        %v4893 = vadd.f32 %v501, %v4892
        %v4894 = vpop.f32.mrb[0].mxu0
        %4895 = vdwg.mxu0
        %v4896 = vsel %vm506, %v4893, -inf
        %4897 = vmax.xlane.f32.xlu0 %v4896
        %v4898 = vpop.xlane.xlu0 %4897
        %v4899 = vsub.f32 %v4893, %v4898
        %v4900 = vmul.f32 %v4899, 1.442695
        %v4901 = vpow.pop %v4900
        %v4902 = vsel %vm506, %v4901, 0.0
        %4903 = vadd.xlane.f32.xlu0 %v4902
        %v4904 = vpop.xlane.xlu0 %4903
        %v4905 = vrcp.pop %v4904
        %v4906 = vmul.f32 %v4901, %v4905
        %4907 = vrot.lane.b32.xlu0 %v3056, 80
        %v4908 = vpop.permute.xlu0 %4907
        %v4911 = vsel %vm506, %v4906, 0
        %4913 = vmatprep.subr.mxu0 0.0
        %4914 = vmatpush1.msra.mxu0 %v4908
        %4915 = vmatprep.subr.mxu0 0.0
        %4916 = vmatpush1.msra.mxu0 0.0
        %4917 = vmatprep.subr.mxu0 0.0
        %4918 = vmatpush1.msra.mxu0 0.0
        %4919 = vmatprep.subr.mxu0 0.0
        %4920 = vmatpush1.msra.mxu0 0.0
        %4921 = vmatprep.subr.mxu0 0.0
        %4922 = vmatpush1.msra.mxu0 0.0
        %4923 = vmatprep.subr.mxu0 0.0
        %4924 = vmatpush1.msra.mxu0 0.0
        %4925 = vmatprep.subr.mxu0 0.0
        %4926 = vmatpush1.msra.mxu0 0.0
        %4927 = vmatprep.subr.mxu0 0.0
        %4928 = vmatpush1.msra.mxu0 0.0
        %4929 = vmatprep.subr.mxu0 0.0
        %4930 = vmatpush1.msra.mxu0 0.0
        %4931 = vmatprep.subr.mxu0 0.0
        %4932 = vmatpush1.msra.mxu0 0.0
        %4933 = vmatprep.subr.mxu0 0.0
        %4934 = vmatpush1.msra.mxu0 0.0
        %4935 = vmatprep.subr.mxu0 0.0
        %4936 = vmatpush1.msra.mxu0 0.0
        %4937 = vmatprep.subr.mxu0 0.0
        %4938 = vmatpush1.msra.mxu0 0.0
        %4939 = vmatprep.subr.mxu0 0.0
        %4940 = vmatpush1.msra.mxu0 0.0
        %4941 = vmatprep.subr.mxu0 0.0
        %4942 = vmatpush1.msra.mxu0 0.0
        %4943 = vmatprep.subr.mxu0 0.0
        %4944 = vmatpush1.msra.mxu0 0.0
        %4945 = vmatprep.subr.mxu0 0.0
        %4946 = vmatpush1.msra.mxu0 0.0
        %4947 = vmatprep.subr.mxu0 0.0
        %4948 = vmatpush1.msra.mxu0 0.0
        %4949 = vmatprep.subr.mxu0 0.0
        %4950 = vmatpush1.msra.mxu0 0.0
        %4951 = vmatprep.subr.mxu0 0.0
        %4952 = vmatpush1.msra.mxu0 0.0
        %4953 = vmatprep.subr.mxu0 0.0
        %4954 = vmatpush1.msra.mxu0 0.0
        %4955 = vmatprep.subr.mxu0 0.0
        %4956 = vmatpush1.msra.mxu0 0.0
        %4957 = vmatprep.subr.mxu0 0.0
        %4958 = vmatpush1.msra.mxu0 0.0
        %4959 = vmatprep.subr.mxu0 0.0
        %4960 = vmatpush1.msra.mxu0 0.0
        %4961 = vmatprep.subr.mxu0 0.0
        %4962 = vmatpush1.msra.mxu0 0.0
        %4963 = vmatprep.subr.mxu0 0.0
        %4964 = vmatpush1.msra.mxu0 0.0
        %4965 = vmatprep.subr.mxu0 0.0
        %4966 = vmatpush1.msra.mxu0 0.0
        %4967 = vmatprep.subr.mxu0 0.0
        %4968 = vmatpush1.msra.mxu0 0.0
        %4969 = vmatprep.subr.mxu0 0.0
        %4970 = vmatpush1.msra.mxu0 0.0
        %4971 = vmatprep.subr.mxu0 0.0
        %4972 = vmatpush1.msra.mxu0 0.0
        %4973 = vmatprep.subr.mxu0 0.0
        %4974 = vmatpush1.msra.mxu0 0.0
        %4975 = vmatprep.subr.mxu0 0.0
        %4976 = vmatpush1.msra.mxu0 0.0
        %4977 = vmatprep.mubr.f32.mxu0 0.0
        %4978 = vmatmul.mubr.f32.gmra.mrb[0].mxu0 %v4911
        %v4979 = vpop.f32.mrb[0].mxu0
        %v4980 = vadd.f32 0.0, %v4979
        %v4981 = vpop.f32.mrb[0].mxu0
        %4982 = vdwg.mxu0
        %v4984 = vsel %vm506, %v4980, 0
        %4986 = vmatprep.subr.mxu0 0.0
        %4987 = vmatpush1.msra.mxu0 %v4341
        %4988 = vmatprep.subr.mxu0 0.0
        %4989 = vmatpush1.msra.mxu0 0.0
        %4990 = vmatprep.subr.mxu0 0.0
        %4991 = vmatpush1.msra.mxu0 0.0
        %4992 = vmatprep.subr.mxu0 0.0
        %4993 = vmatpush1.msra.mxu0 0.0
        %4994 = vmatprep.subr.mxu0 0.0
        %4995 = vmatpush1.msra.mxu0 0.0
        %4996 = vmatprep.subr.mxu0 0.0
        %4997 = vmatpush1.msra.mxu0 0.0
        %4998 = vmatprep.subr.mxu0 0.0
        %4999 = vmatpush1.msra.mxu0 0.0
        %5000 = vmatprep.subr.mxu0 0.0
        %5001 = vmatpush1.msra.mxu0 0.0
        %5002 = vmatprep.subr.mxu0 0.0
        %5003 = vmatpush1.msra.mxu0 0.0
        %5004 = vmatprep.subr.mxu0 0.0
        %5005 = vmatpush1.msra.mxu0 0.0
        %5006 = vmatprep.subr.mxu0 0.0
        %5007 = vmatpush1.msra.mxu0 0.0
        %5008 = vmatprep.subr.mxu0 0.0
        %5009 = vmatpush1.msra.mxu0 0.0
        %5010 = vmatprep.subr.mxu0 0.0
        %5011 = vmatpush1.msra.mxu0 0.0
        %5012 = vmatprep.subr.mxu0 0.0
        %5013 = vmatpush1.msra.mxu0 0.0
        %5014 = vmatprep.subr.mxu0 0.0
        %5015 = vmatpush1.msra.mxu0 0.0
        %5016 = vmatprep.subr.mxu0 0.0
        %5017 = vmatpush1.msra.mxu0 0.0
        %5018 = vmatprep.subr.mxu0 0.0
        %5019 = vmatpush1.msra.mxu0 0.0
        %5020 = vmatprep.subr.mxu0 0.0
        %5021 = vmatpush1.msra.mxu0 0.0
        %5022 = vmatprep.subr.mxu0 0.0
        %5023 = vmatpush1.msra.mxu0 0.0
        %5024 = vmatprep.subr.mxu0 0.0
        %5025 = vmatpush1.msra.mxu0 0.0
        %5026 = vmatprep.subr.mxu0 0.0
        %5027 = vmatpush1.msra.mxu0 0.0
        %5028 = vmatprep.subr.mxu0 0.0
        %5029 = vmatpush1.msra.mxu0 0.0
        %5030 = vmatprep.subr.mxu0 0.0
        %5031 = vmatpush1.msra.mxu0 0.0
        %5032 = vmatprep.subr.mxu0 0.0
        %5033 = vmatpush1.msra.mxu0 0.0
        %5034 = vmatprep.subr.mxu0 0.0
        %5035 = vmatpush1.msra.mxu0 0.0
        %5036 = vmatprep.subr.mxu0 0.0
        %5037 = vmatpush1.msra.mxu0 0.0
        %5038 = vmatprep.subr.mxu0 0.0
        %5039 = vmatpush1.msra.mxu0 0.0
        %5040 = vmatprep.subr.mxu0 0.0
        %5041 = vmatpush1.msra.mxu0 0.0
        %5042 = vmatprep.subr.mxu0 0.0
        %5043 = vmatpush1.msra.mxu0 0.0
        %5044 = vmatprep.subr.mxu0 0.0
        %5045 = vmatpush1.msra.mxu0 0.0
        %5046 = vmatprep.subr.mxu0 0.0
        %5047 = vmatpush1.msra.mxu0 0.0
        %5048 = vmatprep.subr.mxu0 0.0
        %5049 = vmatpush1.msra.mxu0 0.0
        %5050 = vmatprep.mubr.f32.mxu0 0.0
        %5051 = vmatmul.mubr.f32.gmra.mrb[0].mxu0 %v4984
        %v5052 = vpop.f32.mrb[0].mxu0
        %v5053 = vadd.f32 0.0, %v5052
        %v5054 = vpop.f32.mrb[0].mxu0
        %5055 = vdwg.mxu0
        %v5056 = vadd.f32 %v4815, %v5053
        %5057 = vrot.lane.b32.xlu0 %v4338, 104
        %v5058 = vpop.permute.xlu0 %5057
        %5059 = vrot.lane.b32.xlu0 %v3056, 104
        %v5060 = vpop.permute.xlu0 %5059
        %v5061 = vsel %vm506, %v5058, 0
        %v5063 = vsel %vm506, %v5060, 0
        %5065 = vmatprep.subr.mxu0 0.0
        %5066 = vmatpush1.xpose.msra.mxu0 %v5063
        %5067 = vmatprep.subr.mxu0 0.0
        %5068 = vmatpush1.xpose.msra.mxu0 0.0
        %5069 = vmatprep.subr.mxu0 0.0
        %5070 = vmatpush1.xpose.msra.mxu0 0.0
        %5071 = vmatprep.subr.mxu0 0.0
        %5072 = vmatpush1.xpose.msra.mxu0 0.0
        %5073 = vmatprep.subr.mxu0 0.0
        %5074 = vmatpush1.xpose.msra.mxu0 0.0
        %5075 = vmatprep.subr.mxu0 0.0
        %5076 = vmatpush1.xpose.msra.mxu0 0.0
        %5077 = vmatprep.subr.mxu0 0.0
        %5078 = vmatpush1.xpose.msra.mxu0 0.0
        %5079 = vmatprep.subr.mxu0 0.0
        %5080 = vmatpush1.xpose.msra.mxu0 0.0
        %5081 = vmatprep.subr.mxu0 0.0
        %5082 = vmatpush1.xpose.msra.mxu0 0.0
        %5083 = vmatprep.subr.mxu0 0.0
        %5084 = vmatpush1.xpose.msra.mxu0 0.0
        %5085 = vmatprep.subr.mxu0 0.0
        %5086 = vmatpush1.xpose.msra.mxu0 0.0
        %5087 = vmatprep.subr.mxu0 0.0
        %5088 = vmatpush1.xpose.msra.mxu0 0.0
        %5089 = vmatprep.subr.mxu0 0.0
        %5090 = vmatpush1.xpose.msra.mxu0 0.0
        %5091 = vmatprep.subr.mxu0 0.0
        %5092 = vmatpush1.xpose.msra.mxu0 0.0
        %5093 = vmatprep.subr.mxu0 0.0
        %5094 = vmatpush1.xpose.msra.mxu0 0.0
        %5095 = vmatprep.subr.mxu0 0.0
        %5096 = vmatpush1.xpose.msra.mxu0 0.0
        %5097 = vmatprep.subr.mxu0 0.0
        %5098 = vmatpush1.xpose.msra.mxu0 0.0
        %5099 = vmatprep.subr.mxu0 0.0
        %5100 = vmatpush1.xpose.msra.mxu0 0.0
        %5101 = vmatprep.subr.mxu0 0.0
        %5102 = vmatpush1.xpose.msra.mxu0 0.0
        %5103 = vmatprep.subr.mxu0 0.0
        %5104 = vmatpush1.xpose.msra.mxu0 0.0
        %5105 = vmatprep.subr.mxu0 0.0
        %5106 = vmatpush1.xpose.msra.mxu0 0.0
        %5107 = vmatprep.subr.mxu0 0.0
        %5108 = vmatpush1.xpose.msra.mxu0 0.0
        %5109 = vmatprep.subr.mxu0 0.0
        %5110 = vmatpush1.xpose.msra.mxu0 0.0
        %5111 = vmatprep.subr.mxu0 0.0
        %5112 = vmatpush1.xpose.msra.mxu0 0.0
        %5113 = vmatprep.subr.mxu0 0.0
        %5114 = vmatpush1.xpose.msra.mxu0 0.0
        %5115 = vmatprep.subr.mxu0 0.0
        %5116 = vmatpush1.xpose.msra.mxu0 0.0
        %5117 = vmatprep.subr.mxu0 0.0
        %5118 = vmatpush1.xpose.msra.mxu0 0.0
        %5119 = vmatprep.subr.mxu0 0.0
        %5120 = vmatpush1.xpose.msra.mxu0 0.0
        %5121 = vmatprep.subr.mxu0 0.0
        %5122 = vmatpush1.xpose.msra.mxu0 0.0
        %5123 = vmatprep.subr.mxu0 0.0
        %5124 = vmatpush1.xpose.msra.mxu0 0.0
        %5125 = vmatprep.subr.mxu0 0.0
        %5126 = vmatpush1.xpose.msra.mxu0 0.0
        %5127 = vmatprep.subr.mxu0 0.0
        %5128 = vmatpush1.xpose.msra.mxu0 0.0
        %5129 = vmatprep.mubr.f32.mxu0 0.0
        %5130 = vmatmul.mubr.f32.gmra.mrb[0].mxu0 %v5061
        %v5131 = vpop.f32.mrb[0].mxu0
        %v5132 = vadd.f32 %v501, %v5131
        %v5133 = vpop.f32.mrb[0].mxu0
        %5134 = vdwg.mxu0
        %v5135 = vsel %vm506, %v5132, -inf
        %5136 = vmax.xlane.f32.xlu0 %v5135
        %v5137 = vpop.xlane.xlu0 %5136
        %v5138 = vsub.f32 %v5132, %v5137
        %v5139 = vmul.f32 %v5138, 1.442695
        %v5140 = vpow.pop %v5139
        %v5141 = vsel %vm506, %v5140, 0.0
        %5142 = vadd.xlane.f32.xlu0 %v5141
        %v5143 = vpop.xlane.xlu0 %5142
        %v5144 = vrcp.pop %v5143
        %v5145 = vmul.f32 %v5140, %v5144
        %5146 = vrot.lane.b32.xlu0 %v3056, 72
        %v5147 = vpop.permute.xlu0 %5146
        %v5150 = vsel %vm506, %v5145, 0
        %5152 = vmatprep.subr.mxu0 0.0
        %5153 = vmatpush1.msra.mxu0 %v5147
        %5154 = vmatprep.subr.mxu0 0.0
        %5155 = vmatpush1.msra.mxu0 0.0
        %5156 = vmatprep.subr.mxu0 0.0
        %5157 = vmatpush1.msra.mxu0 0.0
        %5158 = vmatprep.subr.mxu0 0.0
        %5159 = vmatpush1.msra.mxu0 0.0
        %5160 = vmatprep.subr.mxu0 0.0
        %5161 = vmatpush1.msra.mxu0 0.0
        %5162 = vmatprep.subr.mxu0 0.0
        %5163 = vmatpush1.msra.mxu0 0.0
        %5164 = vmatprep.subr.mxu0 0.0
        %5165 = vmatpush1.msra.mxu0 0.0
        %5166 = vmatprep.subr.mxu0 0.0
        %5167 = vmatpush1.msra.mxu0 0.0
        %5168 = vmatprep.subr.mxu0 0.0
        %5169 = vmatpush1.msra.mxu0 0.0
        %5170 = vmatprep.subr.mxu0 0.0
        %5171 = vmatpush1.msra.mxu0 0.0
        %5172 = vmatprep.subr.mxu0 0.0
        %5173 = vmatpush1.msra.mxu0 0.0
        %5174 = vmatprep.subr.mxu0 0.0
        %5175 = vmatpush1.msra.mxu0 0.0
        %5176 = vmatprep.subr.mxu0 0.0
        %5177 = vmatpush1.msra.mxu0 0.0
        %5178 = vmatprep.subr.mxu0 0.0
        %5179 = vmatpush1.msra.mxu0 0.0
        %5180 = vmatprep.subr.mxu0 0.0
        %5181 = vmatpush1.msra.mxu0 0.0
        %5182 = vmatprep.subr.mxu0 0.0
        %5183 = vmatpush1.msra.mxu0 0.0
        %5184 = vmatprep.subr.mxu0 0.0
        %5185 = vmatpush1.msra.mxu0 0.0
        %5186 = vmatprep.subr.mxu0 0.0
        %5187 = vmatpush1.msra.mxu0 0.0
        %5188 = vmatprep.subr.mxu0 0.0
        %5189 = vmatpush1.msra.mxu0 0.0
        %5190 = vmatprep.subr.mxu0 0.0
        %5191 = vmatpush1.msra.mxu0 0.0
        %5192 = vmatprep.subr.mxu0 0.0
        %5193 = vmatpush1.msra.mxu0 0.0
        %5194 = vmatprep.subr.mxu0 0.0
        %5195 = vmatpush1.msra.mxu0 0.0
        %5196 = vmatprep.subr.mxu0 0.0
        %5197 = vmatpush1.msra.mxu0 0.0
        %5198 = vmatprep.subr.mxu0 0.0
        %5199 = vmatpush1.msra.mxu0 0.0
        %5200 = vmatprep.subr.mxu0 0.0
        %5201 = vmatpush1.msra.mxu0 0.0
        %5202 = vmatprep.subr.mxu0 0.0
        %5203 = vmatpush1.msra.mxu0 0.0
        %5204 = vmatprep.subr.mxu0 0.0
        %5205 = vmatpush1.msra.mxu0 0.0
        %5206 = vmatprep.subr.mxu0 0.0
        %5207 = vmatpush1.msra.mxu0 0.0
        %5208 = vmatprep.subr.mxu0 0.0
        %5209 = vmatpush1.msra.mxu0 0.0
        %5210 = vmatprep.subr.mxu0 0.0
        %5211 = vmatpush1.msra.mxu0 0.0
        %5212 = vmatprep.subr.mxu0 0.0
        %5213 = vmatpush1.msra.mxu0 0.0
        %5214 = vmatprep.subr.mxu0 0.0
        %5215 = vmatpush1.msra.mxu0 0.0
        %5216 = vmatprep.mubr.f32.mxu0 0.0
        %5217 = vmatmul.mubr.f32.gmra.mrb[0].mxu0 %v5150
        %v5218 = vpop.f32.mrb[0].mxu0
        %v5219 = vadd.f32 0.0, %v5218
        %v5220 = vpop.f32.mrb[0].mxu0
        %5221 = vdwg.mxu0
        %v5223 = vsel %vm506, %v5219, 0
        %5225 = vmatprep.subr.mxu0 0.0
        %5226 = vmatpush1.msra.mxu0 %v4342
        %5227 = vmatprep.subr.mxu0 0.0
        %5228 = vmatpush1.msra.mxu0 0.0
        %5229 = vmatprep.subr.mxu0 0.0
        %5230 = vmatpush1.msra.mxu0 0.0
        %5231 = vmatprep.subr.mxu0 0.0
        %5232 = vmatpush1.msra.mxu0 0.0
        %5233 = vmatprep.subr.mxu0 0.0
        %5234 = vmatpush1.msra.mxu0 0.0
        %5235 = vmatprep.subr.mxu0 0.0
        %5236 = vmatpush1.msra.mxu0 0.0
        %5237 = vmatprep.subr.mxu0 0.0
        %5238 = vmatpush1.msra.mxu0 0.0
        %5239 = vmatprep.subr.mxu0 0.0
        %5240 = vmatpush1.msra.mxu0 0.0
        %5241 = vmatprep.subr.mxu0 0.0
        %5242 = vmatpush1.msra.mxu0 0.0
        %5243 = vmatprep.subr.mxu0 0.0
        %5244 = vmatpush1.msra.mxu0 0.0
        %5245 = vmatprep.subr.mxu0 0.0
        %5246 = vmatpush1.msra.mxu0 0.0
        %5247 = vmatprep.subr.mxu0 0.0
        %5248 = vmatpush1.msra.mxu0 0.0
        %5249 = vmatprep.subr.mxu0 0.0
        %5250 = vmatpush1.msra.mxu0 0.0
        %5251 = vmatprep.subr.mxu0 0.0
        %5252 = vmatpush1.msra.mxu0 0.0
        %5253 = vmatprep.subr.mxu0 0.0
        %5254 = vmatpush1.msra.mxu0 0.0
        %5255 = vmatprep.subr.mxu0 0.0
        %5256 = vmatpush1.msra.mxu0 0.0
        %5257 = vmatprep.subr.mxu0 0.0
        %5258 = vmatpush1.msra.mxu0 0.0
        %5259 = vmatprep.subr.mxu0 0.0
        %5260 = vmatpush1.msra.mxu0 0.0
        %5261 = vmatprep.subr.mxu0 0.0
        %5262 = vmatpush1.msra.mxu0 0.0
        %5263 = vmatprep.subr.mxu0 0.0
        %5264 = vmatpush1.msra.mxu0 0.0
        %5265 = vmatprep.subr.mxu0 0.0
        %5266 = vmatpush1.msra.mxu0 0.0
        %5267 = vmatprep.subr.mxu0 0.0
        %5268 = vmatpush1.msra.mxu0 0.0
        %5269 = vmatprep.subr.mxu0 0.0
        %5270 = vmatpush1.msra.mxu0 0.0
        %5271 = vmatprep.subr.mxu0 0.0
        %5272 = vmatpush1.msra.mxu0 0.0
        %5273 = vmatprep.subr.mxu0 0.0
        %5274 = vmatpush1.msra.mxu0 0.0
        %5275 = vmatprep.subr.mxu0 0.0
        %5276 = vmatpush1.msra.mxu0 0.0
        %5277 = vmatprep.subr.mxu0 0.0
        %5278 = vmatpush1.msra.mxu0 0.0
        %5279 = vmatprep.subr.mxu0 0.0
        %5280 = vmatpush1.msra.mxu0 0.0
        %5281 = vmatprep.subr.mxu0 0.0
        %5282 = vmatpush1.msra.mxu0 0.0
        %5283 = vmatprep.subr.mxu0 0.0
        %5284 = vmatpush1.msra.mxu0 0.0
        %5285 = vmatprep.subr.mxu0 0.0
        %5286 = vmatpush1.msra.mxu0 0.0
        %5287 = vmatprep.subr.mxu0 0.0
        %5288 = vmatpush1.msra.mxu0 0.0
        %5289 = vmatprep.mubr.f32.mxu0 0.0
        %5290 = vmatmul.mubr.f32.gmra.mrb[0].mxu0 %v5223
        %v5291 = vpop.f32.mrb[0].mxu0
        %v5292 = vadd.f32 0.0, %v5291
        %v5293 = vpop.f32.mrb[0].mxu0
        %5294 = vdwg.mxu0
        %v5295 = vadd.f32 %v5056, %v5292
        %v5296 = vlaneseq
        %v5297 = vshrl.u32 %v5296, 7
        %v5298 = vsub.s32 0, %v5297
        %v5299 = vrot.slane %v4343, %v5298
        %v5300 = vadd.f32 %v5295, %v5299
        %v5301 = vadd.f32 %v4225, %v5300
        %v5302 = vsel %vm377, %v5301, 0.0
        %5303 = vadd.xlane.f32.xlu0 %v5302
        %v5304 = vpop.xlane.xlu0 %5303
        %v5305 = vmul.f32 %v5304, %v381
        %v5306 = vsub.f32 %v5301, %v5305
        %v5307 = vmul.f32 %v5306, %v5306
        %v5308 = vsel %vm377, %v5307, 0.0
        %5309 = vadd.xlane.f32.xlu0 %v5308
        %v5310 = vpop.xlane.xlu0 %5309
        %v5311 = vmul.f32 %v5310, 0.032258064
        %v5312 = vrsqrt.pop %v5311
        %v5313 = vmul.f32 %v5311, %v5312
        %vm5314 = vcmp.eq.f32.partialorder %v5311, inf
        %v5315 = vsel %vm5314, %v5311, %v5313
        %vm5316 = vcmp.eq.f32.partialorder %v5311, 0.0
        %v5317 = vand.u32 %v5311, 2147483648
        %v5318 = vsel %vm5316, %v5317, %v5315
        %v5319 = vlaneseq
        %v5320 = vshrl.u32 %v5319, 7
        %v5321 = vsub.s32 2, %v5320
        %v5322 = vrot.slane %v3146, %v5321
        %v5323 = vmul.f32 %v5322, %v5306
        %v5324 = vadd.f32 %v5318, 1e-06
        %v5325 = vrcp.pop %v5324
        %v5326 = vmul.f32 %v5323, %v5325
        %v5327 = vlaneseq
        %v5328 = vshrl.u32 %v5327, 7
        %v5329 = vsub.s32 2, %v5328
        %v5330 = vrot.slane %v3147, %v5329
        %v5331 = vadd.f32 %v5326, %v5330
        %v5332 = vld [vmem:[#allocation2 + $0x2d0] sm:$0xff]
        %v5333 = vld [vmem:[#allocation2 + $0x2d8] sm:$0xff]
        %v5334 = vld [vmem:[#allocation2 + $0x2e0] sm:$0xff]
        %v5335 = vld [vmem:[#allocation2 + $0x2e8] sm:$0xff]
        %v5336 = vld [vmem:[#allocation2 + $0x2f0] sm:$0x1]
        %v5337 = vld [vmem:[#allocation2 + $0x2f8] sm:$0xff]
        %v5338 = vld [vmem:[#allocation2 + $0x300] sm:$0xff]
        %v5339 = vld [vmem:[#allocation2 + $0x308] sm:$0xff]
        %v5340 = vld [vmem:[#allocation2 + $0x310] sm:$0xff]
        %v5341 = vld [vmem:[#allocation2 + $0x318] sm:$0xff]
        %v5342 = vld [vmem:[#allocation2 + $0x320] sm:$0xff]
        %v5343 = vld [vmem:[#allocation2 + $0x328] sm:$0xff]
        %v5344 = vld [vmem:[#allocation2 + $0x330] sm:$0xff]
        %v5345 = vld [vmem:[#allocation2 + $0x338] sm:$0x1]
        %v5346 = vlaneseq
        %v5347 = vshrl.u32 %v5346, 7
        %v5348 = vsub.s32 0, %v5347
        %v5349 = vrot.slane %v5336, %v5348
        %v5351 = vsel %vm377, %v5331, 0
        %5353 = vmatprep.subr.mxu0 0.0
        %5354 = vmatpush1.msra.mxu0 %v5332
        %5355 = vmatprep.subr.mxu0 0.0
        %5356 = vmatpush1.msra.mxu0 %v5333
        %5357 = vmatprep.subr.mxu0 0.0
        %5358 = vmatpush1.msra.mxu0 %v5334
        %5359 = vmatprep.subr.mxu0 0.0
        %5360 = vmatpush1.msra.mxu0 %v5335
        %5361 = vmatprep.subr.mxu0 0.0
        %5362 = vmatpush1.msra.mxu0 0.0
        %5363 = vmatprep.subr.mxu0 0.0
        %5364 = vmatpush1.msra.mxu0 0.0
        %5365 = vmatprep.subr.mxu0 0.0
        %5366 = vmatpush1.msra.mxu0 0.0
        %5367 = vmatprep.subr.mxu0 0.0
        %5368 = vmatpush1.msra.mxu0 0.0
        %5369 = vmatprep.subr.mxu0 0.0
        %5370 = vmatpush1.msra.mxu0 0.0
        %5371 = vmatprep.subr.mxu0 0.0
        %5372 = vmatpush1.msra.mxu0 0.0
        %5373 = vmatprep.subr.mxu0 0.0
        %5374 = vmatpush1.msra.mxu0 0.0
        %5375 = vmatprep.subr.mxu0 0.0
        %5376 = vmatpush1.msra.mxu0 0.0
        %5377 = vmatprep.subr.mxu0 0.0
        %5378 = vmatpush1.msra.mxu0 0.0
        %5379 = vmatprep.subr.mxu0 0.0
        %5380 = vmatpush1.msra.mxu0 0.0
        %5381 = vmatprep.subr.mxu0 0.0
        %5382 = vmatpush1.msra.mxu0 0.0
        %5383 = vmatprep.subr.mxu0 0.0
        %5384 = vmatpush1.msra.mxu0 0.0
        %5385 = vmatprep.subr.mxu0 0.0
        %5386 = vmatpush1.msra.mxu0 0.0
        %5387 = vmatprep.subr.mxu0 0.0
        %5388 = vmatpush1.msra.mxu0 0.0
        %5389 = vmatprep.subr.mxu0 0.0
        %5390 = vmatpush1.msra.mxu0 0.0
        %5391 = vmatprep.subr.mxu0 0.0
        %5392 = vmatpush1.msra.mxu0 0.0
        %5393 = vmatprep.subr.mxu0 0.0
        %5394 = vmatpush1.msra.mxu0 0.0
        %5395 = vmatprep.subr.mxu0 0.0
        %5396 = vmatpush1.msra.mxu0 0.0
        %5397 = vmatprep.subr.mxu0 0.0
        %5398 = vmatpush1.msra.mxu0 0.0
        %5399 = vmatprep.subr.mxu0 0.0
        %5400 = vmatpush1.msra.mxu0 0.0
        %5401 = vmatprep.subr.mxu0 0.0
        %5402 = vmatpush1.msra.mxu0 0.0
        %5403 = vmatprep.subr.mxu0 0.0
        %5404 = vmatpush1.msra.mxu0 0.0
        %5405 = vmatprep.subr.mxu0 0.0
        %5406 = vmatpush1.msra.mxu0 0.0
        %5407 = vmatprep.subr.mxu0 0.0
        %5408 = vmatpush1.msra.mxu0 0.0
        %5409 = vmatprep.subr.mxu0 0.0
        %5410 = vmatpush1.msra.mxu0 0.0
        %5411 = vmatprep.subr.mxu0 0.0
        %5412 = vmatpush1.msra.mxu0 0.0
        %5413 = vmatprep.subr.mxu0 0.0
        %5414 = vmatpush1.msra.mxu0 0.0
        %5415 = vmatprep.subr.mxu0 0.0
        %5416 = vmatpush1.msra.mxu0 0.0
        %5417 = vmatprep.mubr.f32.mxu0 0.0
        %5418 = vmatmul.mubr.f32.gmra.mrb[0].mxu0 %v5351
        %v5419 = vpop.f32.mrb[0].mxu0
        %v5420 = vadd.f32 %v5349, %v5419
        %v5421 = vpop.f32.mrb[0].mxu0
        %5422 = vdwg.mxu0
        %v5423 = vmax.f32 %v5420, 0.0
        %v5424 = vlaneseq
        %v5425 = vshrl.u32 %v5424, 7
        %v5426 = vsub.s32 0, %v5425
        %v5427 = vrot.slane %v5345, %v5426
        %v5429 = vsel %vm1590, %v5423, 0
        %5431 = vmatprep.subr.mxu0 0.0
        %5432 = vmatpush1.msra.mxu0 %v5337
        %5433 = vmatprep.subr.mxu0 0.0
        %5434 = vmatpush1.msra.mxu0 %v5338
        %5435 = vmatprep.subr.mxu0 0.0
        %5436 = vmatpush1.msra.mxu0 %v5339
        %5437 = vmatprep.subr.mxu0 0.0
        %5438 = vmatpush1.msra.mxu0 %v5340
        %5439 = vmatprep.subr.mxu0 0.0
        %5440 = vmatpush1.msra.mxu0 %v5341
        %5441 = vmatprep.subr.mxu0 0.0
        %5442 = vmatpush1.msra.mxu0 %v5342
        %5443 = vmatprep.subr.mxu0 0.0
        %5444 = vmatpush1.msra.mxu0 %v5343
        %5445 = vmatprep.subr.mxu0 0.0
        %5446 = vmatpush1.msra.mxu0 %v5344
        %5447 = vmatprep.subr.mxu0 0.0
        %5448 = vmatpush1.msra.mxu0 0.0
        %5449 = vmatprep.subr.mxu0 0.0
        %5450 = vmatpush1.msra.mxu0 0.0
        %5451 = vmatprep.subr.mxu0 0.0
        %5452 = vmatpush1.msra.mxu0 0.0
        %5453 = vmatprep.subr.mxu0 0.0
        %5454 = vmatpush1.msra.mxu0 0.0
        %5455 = vmatprep.subr.mxu0 0.0
        %5456 = vmatpush1.msra.mxu0 0.0
        %5457 = vmatprep.subr.mxu0 0.0
        %5458 = vmatpush1.msra.mxu0 0.0
        %5459 = vmatprep.subr.mxu0 0.0
        %5460 = vmatpush1.msra.mxu0 0.0
        %5461 = vmatprep.subr.mxu0 0.0
        %5462 = vmatpush1.msra.mxu0 0.0
        %5463 = vmatprep.subr.mxu0 0.0
        %5464 = vmatpush1.msra.mxu0 0.0
        %5465 = vmatprep.subr.mxu0 0.0
        %5466 = vmatpush1.msra.mxu0 0.0
        %5467 = vmatprep.subr.mxu0 0.0
        %5468 = vmatpush1.msra.mxu0 0.0
        %5469 = vmatprep.subr.mxu0 0.0
        %5470 = vmatpush1.msra.mxu0 0.0
        %5471 = vmatprep.subr.mxu0 0.0
        %5472 = vmatpush1.msra.mxu0 0.0
        %5473 = vmatprep.subr.mxu0 0.0
        %5474 = vmatpush1.msra.mxu0 0.0
        %5475 = vmatprep.subr.mxu0 0.0
        %5476 = vmatpush1.msra.mxu0 0.0
        %5477 = vmatprep.subr.mxu0 0.0
        %5478 = vmatpush1.msra.mxu0 0.0
        %5479 = vmatprep.subr.mxu0 0.0
        %5480 = vmatpush1.msra.mxu0 0.0
        %5481 = vmatprep.subr.mxu0 0.0
        %5482 = vmatpush1.msra.mxu0 0.0
        %5483 = vmatprep.subr.mxu0 0.0
        %5484 = vmatpush1.msra.mxu0 0.0
        %5485 = vmatprep.subr.mxu0 0.0
        %5486 = vmatpush1.msra.mxu0 0.0
        %5487 = vmatprep.subr.mxu0 0.0
        %5488 = vmatpush1.msra.mxu0 0.0
        %5489 = vmatprep.subr.mxu0 0.0
        %5490 = vmatpush1.msra.mxu0 0.0
        %5491 = vmatprep.subr.mxu0 0.0
        %5492 = vmatpush1.msra.mxu0 0.0
        %5493 = vmatprep.subr.mxu0 0.0
        %5494 = vmatpush1.msra.mxu0 0.0
        %5495 = vmatprep.mubr.f32.mxu0 0.0
        %5496 = vmatmul.mubr.f32.gmra.mrb[0].mxu0 %v5429
        %v5497 = vpop.f32.mrb[0].mxu0
        %v5498 = vadd.f32 %v5427, %v5497
        %v5499 = vpop.f32.mrb[0].mxu0
        %5500 = vdwg.mxu0
        %v5501 = vadd.f32 %v5301, %v5498
        %v5502 = vld [vmem:[#allocation2 + $0x460] sm:$0x7]
        %v5503 = vld [vmem:[#allocation2 + $0x468] sm:$0x7]
        %v5504 = vsel %vm377, %v5501, 0.0
        %5505 = vadd.xlane.f32.xlu0 %v5504
        %v5506 = vpop.xlane.xlu0 %5505
        %v5507 = vmul.f32 %v5506, %v381
        %v5508 = vsub.f32 %v5501, %v5507
        %v5509 = vmul.f32 %v5508, %v5508
        %v5510 = vsel %vm377, %v5509, 0.0
        %5511 = vadd.xlane.f32.xlu0 %v5510
        %v5512 = vpop.xlane.xlu0 %5511
        %v5513 = vmul.f32 %v5512, 0.032258064
        %v5514 = vrsqrt.pop %v5513
        %v5515 = vmul.f32 %v5513, %v5514
        %vm5516 = vcmp.eq.f32.partialorder %v5513, inf
        %v5517 = vsel %vm5516, %v5513, %v5515
        %vm5518 = vcmp.eq.f32.partialorder %v5513, 0.0
        %v5519 = vand.u32 %v5513, 2147483648
        %v5520 = vsel %vm5518, %v5519, %v5517
        %v5521 = vlaneseq
        %v5522 = vshrl.u32 %v5521, 7
        %v5523 = vsub.s32 0, %v5522
        %v5524 = vrot.slane %v5502, %v5523
        %v5525 = vmul.f32 %v5524, %v5508
        %v5526 = vadd.f32 %v5520, 1e-06
        %v5527 = vrcp.pop %v5526
        %v5528 = vmul.f32 %v5525, %v5527
        %v5529 = vlaneseq
        %v5530 = vshrl.u32 %v5529, 7
        %v5531 = vsub.s32 0, %v5530
        %v5532 = vrot.slane %v5503, %v5531
        %v5533 = vadd.f32 %v5528, %v5532
        %v5534 = vld [vmem:[#allocation2 + $0x350] sm:$0xff]
        %v5535 = vld [vmem:[#allocation2 + $0x358] sm:$0xff]
        %v5536 = vld [vmem:[#allocation2 + $0x360] sm:$0xff]
        %v5537 = vld [vmem:[#allocation2 + $0x368] sm:$0xff]
        %v5538 = vld [vmem:[#allocation2 + $0x370] sm:$0x1]
        %v5539 = vld [vmem:[#allocation2 + $0x378] sm:$0xff]
        %v5540 = vld [vmem:[#allocation2 + $0x380] sm:$0xff]
        %v5541 = vld [vmem:[#allocation2 + $0x388] sm:$0xff]
        %v5542 = vld [vmem:[#allocation2 + $0x390] sm:$0xff]
        %v5543 = vld [vmem:[#allocation2 + $0x398] sm:$0x1]
        %v5544 = vlaneseq
        %v5545 = vshrl.u32 %v5544, 7
        %v5546 = vsub.s32 0, %v5545
        %v5547 = vrot.slane %v5538, %v5546
        %v5549 = vsel %vm377, %v5533, 0
        %5551 = vmatprep.subr.mxu0 0.0
        %5552 = vmatpush1.msra.mxu0 %v5534
        %5553 = vmatprep.subr.mxu0 0.0
        %5554 = vmatpush1.msra.mxu0 %v5535
        %5555 = vmatprep.subr.mxu0 0.0
        %5556 = vmatpush1.msra.mxu0 %v5536
        %5557 = vmatprep.subr.mxu0 0.0
        %5558 = vmatpush1.msra.mxu0 %v5537
        %5559 = vmatprep.subr.mxu0 0.0
        %5560 = vmatpush1.msra.mxu0 0.0
        %5561 = vmatprep.subr.mxu0 0.0
        %5562 = vmatpush1.msra.mxu0 0.0
        %5563 = vmatprep.subr.mxu0 0.0
        %5564 = vmatpush1.msra.mxu0 0.0
        %5565 = vmatprep.subr.mxu0 0.0
        %5566 = vmatpush1.msra.mxu0 0.0
        %5567 = vmatprep.subr.mxu0 0.0
        %5568 = vmatpush1.msra.mxu0 0.0
        %5569 = vmatprep.subr.mxu0 0.0
        %5570 = vmatpush1.msra.mxu0 0.0
        %5571 = vmatprep.subr.mxu0 0.0
        %5572 = vmatpush1.msra.mxu0 0.0
        %5573 = vmatprep.subr.mxu0 0.0
        %5574 = vmatpush1.msra.mxu0 0.0
        %5575 = vmatprep.subr.mxu0 0.0
        %5576 = vmatpush1.msra.mxu0 0.0
        %5577 = vmatprep.subr.mxu0 0.0
        %5578 = vmatpush1.msra.mxu0 0.0
        %5579 = vmatprep.subr.mxu0 0.0
        %5580 = vmatpush1.msra.mxu0 0.0
        %5581 = vmatprep.subr.mxu0 0.0
        %5582 = vmatpush1.msra.mxu0 0.0
        %5583 = vmatprep.subr.mxu0 0.0
        %5584 = vmatpush1.msra.mxu0 0.0
        %5585 = vmatprep.subr.mxu0 0.0
        %5586 = vmatpush1.msra.mxu0 0.0
        %5587 = vmatprep.subr.mxu0 0.0
        %5588 = vmatpush1.msra.mxu0 0.0
        %5589 = vmatprep.subr.mxu0 0.0
        %5590 = vmatpush1.msra.mxu0 0.0
        %5591 = vmatprep.subr.mxu0 0.0
        %5592 = vmatpush1.msra.mxu0 0.0
        %5593 = vmatprep.subr.mxu0 0.0
        %5594 = vmatpush1.msra.mxu0 0.0
        %5595 = vmatprep.subr.mxu0 0.0
        %5596 = vmatpush1.msra.mxu0 0.0
        %5597 = vmatprep.subr.mxu0 0.0
        %5598 = vmatpush1.msra.mxu0 0.0
        %5599 = vmatprep.subr.mxu0 0.0
        %5600 = vmatpush1.msra.mxu0 0.0
        %5601 = vmatprep.subr.mxu0 0.0
        %5602 = vmatpush1.msra.mxu0 0.0
        %5603 = vmatprep.subr.mxu0 0.0
        %5604 = vmatpush1.msra.mxu0 0.0
        %5605 = vmatprep.subr.mxu0 0.0
        %5606 = vmatpush1.msra.mxu0 0.0
        %5607 = vmatprep.subr.mxu0 0.0
        %5608 = vmatpush1.msra.mxu0 0.0
        %5609 = vmatprep.subr.mxu0 0.0
        %5610 = vmatpush1.msra.mxu0 0.0
        %5611 = vmatprep.subr.mxu0 0.0
        %5612 = vmatpush1.msra.mxu0 0.0
        %5613 = vmatprep.subr.mxu0 0.0
        %5614 = vmatpush1.msra.mxu0 0.0
        %5615 = vmatprep.mubr.f32.mxu0 0.0
        %5616 = vmatmul.mubr.f32.gmra.mrb[0].mxu0 %v5549
        %v5617 = vpop.f32.mrb[0].mxu0
        %v5618 = vadd.f32 %v5547, %v5617
        %v5619 = vpop.f32.mrb[0].mxu0
        %5620 = vdwg.mxu0
        %v5621 = vmul.f32 %v5618, 0.35355338
        %5623 = vrot.lane.b32.xlu0 %v5618, 96
        %v5624 = vpop.permute.xlu0 %5623
        %v5626 = vsel %vm506, %v5621, 0
        %v5628 = vsel %vm506, %v5624, 0
        %5630 = vmatprep.subr.mxu0 0.0
        %5631 = vmatpush1.xpose.msra.mxu0 %v5628
        %5632 = vmatprep.subr.mxu0 0.0
        %5633 = vmatpush1.xpose.msra.mxu0 0.0
        %5634 = vmatprep.subr.mxu0 0.0
        %5635 = vmatpush1.xpose.msra.mxu0 0.0
        %5636 = vmatprep.subr.mxu0 0.0
        %5637 = vmatpush1.xpose.msra.mxu0 0.0
        %5638 = vmatprep.subr.mxu0 0.0
        %5639 = vmatpush1.xpose.msra.mxu0 0.0
        %5640 = vmatprep.subr.mxu0 0.0
        %5641 = vmatpush1.xpose.msra.mxu0 0.0
        %5642 = vmatprep.subr.mxu0 0.0
        %5643 = vmatpush1.xpose.msra.mxu0 0.0
        %5644 = vmatprep.subr.mxu0 0.0
        %5645 = vmatpush1.xpose.msra.mxu0 0.0
        %5646 = vmatprep.subr.mxu0 0.0
        %5647 = vmatpush1.xpose.msra.mxu0 0.0
        %5648 = vmatprep.subr.mxu0 0.0
        %5649 = vmatpush1.xpose.msra.mxu0 0.0
        %5650 = vmatprep.subr.mxu0 0.0
        %5651 = vmatpush1.xpose.msra.mxu0 0.0
        %5652 = vmatprep.subr.mxu0 0.0
        %5653 = vmatpush1.xpose.msra.mxu0 0.0
        %5654 = vmatprep.subr.mxu0 0.0
        %5655 = vmatpush1.xpose.msra.mxu0 0.0
        %5656 = vmatprep.subr.mxu0 0.0
        %5657 = vmatpush1.xpose.msra.mxu0 0.0
        %5658 = vmatprep.subr.mxu0 0.0
        %5659 = vmatpush1.xpose.msra.mxu0 0.0
        %5660 = vmatprep.subr.mxu0 0.0
        %5661 = vmatpush1.xpose.msra.mxu0 0.0
        %5662 = vmatprep.subr.mxu0 0.0
        %5663 = vmatpush1.xpose.msra.mxu0 0.0
        %5664 = vmatprep.subr.mxu0 0.0
        %5665 = vmatpush1.xpose.msra.mxu0 0.0
        %5666 = vmatprep.subr.mxu0 0.0
        %5667 = vmatpush1.xpose.msra.mxu0 0.0
        %5668 = vmatprep.subr.mxu0 0.0
        %5669 = vmatpush1.xpose.msra.mxu0 0.0
        %5670 = vmatprep.subr.mxu0 0.0
        %5671 = vmatpush1.xpose.msra.mxu0 0.0
        %5672 = vmatprep.subr.mxu0 0.0
        %5673 = vmatpush1.xpose.msra.mxu0 0.0
        %5674 = vmatprep.subr.mxu0 0.0
        %5675 = vmatpush1.xpose.msra.mxu0 0.0
        %5676 = vmatprep.subr.mxu0 0.0
        %5677 = vmatpush1.xpose.msra.mxu0 0.0
        %5678 = vmatprep.subr.mxu0 0.0
        %5679 = vmatpush1.xpose.msra.mxu0 0.0
        %5680 = vmatprep.subr.mxu0 0.0
        %5681 = vmatpush1.xpose.msra.mxu0 0.0
        %5682 = vmatprep.subr.mxu0 0.0
        %5683 = vmatpush1.xpose.msra.mxu0 0.0
        %5684 = vmatprep.subr.mxu0 0.0
        %5685 = vmatpush1.xpose.msra.mxu0 0.0
        %5686 = vmatprep.subr.mxu0 0.0
        %5687 = vmatpush1.xpose.msra.mxu0 0.0
        %5688 = vmatprep.subr.mxu0 0.0
        %5689 = vmatpush1.xpose.msra.mxu0 0.0
        %5690 = vmatprep.subr.mxu0 0.0
        %5691 = vmatpush1.xpose.msra.mxu0 0.0
        %5692 = vmatprep.subr.mxu0 0.0
        %5693 = vmatpush1.xpose.msra.mxu0 0.0
        %5694 = vmatprep.mubr.f32.mxu0 0.0
        %5695 = vmatmul.mubr.f32.gmra.mrb[0].mxu0 %v5626
        %v5696 = vpop.f32.mrb[0].mxu0
        %v5697 = vadd.f32 %v284, %v5696
        %v5698 = vpop.f32.mrb[0].mxu0
        %5699 = vdwg.mxu0
        %v5700 = vsel %vm506, %v5697, -inf
        %5701 = vmax.xlane.f32.xlu0 %v5700
        %v5702 = vpop.xlane.xlu0 %5701
        %v5703 = vsub.f32 %v5697, %v5702
        %v5704 = vmul.f32 %v5703, 1.442695
        %v5705 = vpow.pop %v5704
        %v5706 = vsel %vm506, %v5705, 0.0
        %5707 = vadd.xlane.f32.xlu0 %v5706
        %v5708 = vpop.xlane.xlu0 %5707
        %v5709 = vrcp.pop %v5708
        %v5710 = vmul.f32 %v5705, %v5709
        %5711 = vrot.lane.b32.xlu0 %v5618, 64
        %v5712 = vpop.permute.xlu0 %5711
        %v5715 = vsel %vm506, %v5710, 0
        %5717 = vmatprep.subr.mxu0 0.0
        %5718 = vmatpush1.msra.mxu0 %v5712
        %5719 = vmatprep.subr.mxu0 0.0
        %5720 = vmatpush1.msra.mxu0 0.0
        %5721 = vmatprep.subr.mxu0 0.0
        %5722 = vmatpush1.msra.mxu0 0.0
        %5723 = vmatprep.subr.mxu0 0.0
        %5724 = vmatpush1.msra.mxu0 0.0
        %5725 = vmatprep.subr.mxu0 0.0
        %5726 = vmatpush1.msra.mxu0 0.0
        %5727 = vmatprep.subr.mxu0 0.0
        %5728 = vmatpush1.msra.mxu0 0.0
        %5729 = vmatprep.subr.mxu0 0.0
        %5730 = vmatpush1.msra.mxu0 0.0
        %5731 = vmatprep.subr.mxu0 0.0
        %5732 = vmatpush1.msra.mxu0 0.0
        %5733 = vmatprep.subr.mxu0 0.0
        %5734 = vmatpush1.msra.mxu0 0.0
        %5735 = vmatprep.subr.mxu0 0.0
        %5736 = vmatpush1.msra.mxu0 0.0
        %5737 = vmatprep.subr.mxu0 0.0
        %5738 = vmatpush1.msra.mxu0 0.0
        %5739 = vmatprep.subr.mxu0 0.0
        %5740 = vmatpush1.msra.mxu0 0.0
        %5741 = vmatprep.subr.mxu0 0.0
        %5742 = vmatpush1.msra.mxu0 0.0
        %5743 = vmatprep.subr.mxu0 0.0
        %5744 = vmatpush1.msra.mxu0 0.0
        %5745 = vmatprep.subr.mxu0 0.0
        %5746 = vmatpush1.msra.mxu0 0.0
        %5747 = vmatprep.subr.mxu0 0.0
        %5748 = vmatpush1.msra.mxu0 0.0
        %5749 = vmatprep.subr.mxu0 0.0
        %5750 = vmatpush1.msra.mxu0 0.0
        %5751 = vmatprep.subr.mxu0 0.0
        %5752 = vmatpush1.msra.mxu0 0.0
        %5753 = vmatprep.subr.mxu0 0.0
        %5754 = vmatpush1.msra.mxu0 0.0
        %5755 = vmatprep.subr.mxu0 0.0
        %5756 = vmatpush1.msra.mxu0 0.0
        %5757 = vmatprep.subr.mxu0 0.0
        %5758 = vmatpush1.msra.mxu0 0.0
        %5759 = vmatprep.subr.mxu0 0.0
        %5760 = vmatpush1.msra.mxu0 0.0
        %5761 = vmatprep.subr.mxu0 0.0
        %5762 = vmatpush1.msra.mxu0 0.0
        %5763 = vmatprep.subr.mxu0 0.0
        %5764 = vmatpush1.msra.mxu0 0.0
        %5765 = vmatprep.subr.mxu0 0.0
        %5766 = vmatpush1.msra.mxu0 0.0
        %5767 = vmatprep.subr.mxu0 0.0
        %5768 = vmatpush1.msra.mxu0 0.0
        %5769 = vmatprep.subr.mxu0 0.0
        %5770 = vmatpush1.msra.mxu0 0.0
        %5771 = vmatprep.subr.mxu0 0.0
        %5772 = vmatpush1.msra.mxu0 0.0
        %5773 = vmatprep.subr.mxu0 0.0
        %5774 = vmatpush1.msra.mxu0 0.0
        %5775 = vmatprep.subr.mxu0 0.0
        %5776 = vmatpush1.msra.mxu0 0.0
        %5777 = vmatprep.subr.mxu0 0.0
        %5778 = vmatpush1.msra.mxu0 0.0
        %5779 = vmatprep.subr.mxu0 0.0
        %5780 = vmatpush1.msra.mxu0 0.0
        %5781 = vmatprep.mubr.f32.mxu0 0.0
        %5782 = vmatmul.mubr.f32.gmra.mrb[0].mxu0 %v5715
        %v5783 = vpop.f32.mrb[0].mxu0
        %v5784 = vadd.f32 0.0, %v5783
        %v5785 = vpop.f32.mrb[0].mxu0
        %5786 = vdwg.mxu0
        %5787 = vrot.lane.b32.xlu0 %v5621, 120
        %v5788 = vpop.permute.xlu0 %5787
        %5789 = vrot.lane.b32.xlu0 %v5618, 88
        %v5790 = vpop.permute.xlu0 %5789
        %v5791 = vsel %vm506, %v5788, 0
        %v5793 = vsel %vm506, %v5790, 0
        %5795 = vmatprep.subr.mxu0 0.0
        %5796 = vmatpush1.xpose.msra.mxu0 %v5793
        %5797 = vmatprep.subr.mxu0 0.0
        %5798 = vmatpush1.xpose.msra.mxu0 0.0
        %5799 = vmatprep.subr.mxu0 0.0
        %5800 = vmatpush1.xpose.msra.mxu0 0.0
        %5801 = vmatprep.subr.mxu0 0.0
        %5802 = vmatpush1.xpose.msra.mxu0 0.0
        %5803 = vmatprep.subr.mxu0 0.0
        %5804 = vmatpush1.xpose.msra.mxu0 0.0
        %5805 = vmatprep.subr.mxu0 0.0
        %5806 = vmatpush1.xpose.msra.mxu0 0.0
        %5807 = vmatprep.subr.mxu0 0.0
        %5808 = vmatpush1.xpose.msra.mxu0 0.0
        %5809 = vmatprep.subr.mxu0 0.0
        %5810 = vmatpush1.xpose.msra.mxu0 0.0
        %5811 = vmatprep.subr.mxu0 0.0
        %5812 = vmatpush1.xpose.msra.mxu0 0.0
        %5813 = vmatprep.subr.mxu0 0.0
        %5814 = vmatpush1.xpose.msra.mxu0 0.0
        %5815 = vmatprep.subr.mxu0 0.0
        %5816 = vmatpush1.xpose.msra.mxu0 0.0
        %5817 = vmatprep.subr.mxu0 0.0
        %5818 = vmatpush1.xpose.msra.mxu0 0.0
        %5819 = vmatprep.subr.mxu0 0.0
        %5820 = vmatpush1.xpose.msra.mxu0 0.0
        %5821 = vmatprep.subr.mxu0 0.0
        %5822 = vmatpush1.xpose.msra.mxu0 0.0
        %5823 = vmatprep.subr.mxu0 0.0
        %5824 = vmatpush1.xpose.msra.mxu0 0.0
        %5825 = vmatprep.subr.mxu0 0.0
        %5826 = vmatpush1.xpose.msra.mxu0 0.0
        %5827 = vmatprep.subr.mxu0 0.0
        %5828 = vmatpush1.xpose.msra.mxu0 0.0
        %5829 = vmatprep.subr.mxu0 0.0
        %5830 = vmatpush1.xpose.msra.mxu0 0.0
        %5831 = vmatprep.subr.mxu0 0.0
        %5832 = vmatpush1.xpose.msra.mxu0 0.0
        %5833 = vmatprep.subr.mxu0 0.0
        %5834 = vmatpush1.xpose.msra.mxu0 0.0
        %5835 = vmatprep.subr.mxu0 0.0
        %5836 = vmatpush1.xpose.msra.mxu0 0.0
        %5837 = vmatprep.subr.mxu0 0.0
        %5838 = vmatpush1.xpose.msra.mxu0 0.0
        %5839 = vmatprep.subr.mxu0 0.0
        %5840 = vmatpush1.xpose.msra.mxu0 0.0
        %5841 = vmatprep.subr.mxu0 0.0
        %5842 = vmatpush1.xpose.msra.mxu0 0.0
        %5843 = vmatprep.subr.mxu0 0.0
        %5844 = vmatpush1.xpose.msra.mxu0 0.0
        %5845 = vmatprep.subr.mxu0 0.0
        %5846 = vmatpush1.xpose.msra.mxu0 0.0
        %5847 = vmatprep.subr.mxu0 0.0
        %5848 = vmatpush1.xpose.msra.mxu0 0.0
        %5849 = vmatprep.subr.mxu0 0.0
        %5850 = vmatpush1.xpose.msra.mxu0 0.0
        %5851 = vmatprep.subr.mxu0 0.0
        %5852 = vmatpush1.xpose.msra.mxu0 0.0
        %5853 = vmatprep.subr.mxu0 0.0
        %5854 = vmatpush1.xpose.msra.mxu0 0.0
        %5855 = vmatprep.subr.mxu0 0.0
        %5856 = vmatpush1.xpose.msra.mxu0 0.0
        %5857 = vmatprep.subr.mxu0 0.0
        %5858 = vmatpush1.xpose.msra.mxu0 0.0
        %5859 = vmatprep.mubr.f32.mxu0 0.0
        %5860 = vmatmul.mubr.f32.gmra.mrb[0].mxu0 %v5791
        %v5861 = vpop.f32.mrb[0].mxu0
        %v5862 = vadd.f32 %v284, %v5861
        %v5863 = vpop.f32.mrb[0].mxu0
        %5864 = vdwg.mxu0
        %v5865 = vsel %vm506, %v5862, -inf
        %5866 = vmax.xlane.f32.xlu0 %v5865
        %v5867 = vpop.xlane.xlu0 %5866
        %v5868 = vsub.f32 %v5862, %v5867
        %v5869 = vmul.f32 %v5868, 1.442695
        %v5870 = vpow.pop %v5869
        %v5871 = vsel %vm506, %v5870, 0.0
        %5872 = vadd.xlane.f32.xlu0 %v5871
        %v5873 = vpop.xlane.xlu0 %5872
        %v5874 = vrcp.pop %v5873
        %v5875 = vmul.f32 %v5870, %v5874
        %5876 = vrot.lane.b32.xlu0 %v5618, 56
        %v5877 = vpop.permute.xlu0 %5876
        %v5880 = vsel %vm506, %v5875, 0
        %5882 = vmatprep.subr.mxu0 0.0
        %5883 = vmatpush1.msra.mxu0 %v5877
        %5884 = vmatprep.subr.mxu0 0.0
        %5885 = vmatpush1.msra.mxu0 0.0
        %5886 = vmatprep.subr.mxu0 0.0
        %5887 = vmatpush1.msra.mxu0 0.0
        %5888 = vmatprep.subr.mxu0 0.0
        %5889 = vmatpush1.msra.mxu0 0.0
        %5890 = vmatprep.subr.mxu0 0.0
        %5891 = vmatpush1.msra.mxu0 0.0
        %5892 = vmatprep.subr.mxu0 0.0
        %5893 = vmatpush1.msra.mxu0 0.0
        %5894 = vmatprep.subr.mxu0 0.0
        %5895 = vmatpush1.msra.mxu0 0.0
        %5896 = vmatprep.subr.mxu0 0.0
        %5897 = vmatpush1.msra.mxu0 0.0
        %5898 = vmatprep.subr.mxu0 0.0
        %5899 = vmatpush1.msra.mxu0 0.0
        %5900 = vmatprep.subr.mxu0 0.0
        %5901 = vmatpush1.msra.mxu0 0.0
        %5902 = vmatprep.subr.mxu0 0.0
        %5903 = vmatpush1.msra.mxu0 0.0
        %5904 = vmatprep.subr.mxu0 0.0
        %5905 = vmatpush1.msra.mxu0 0.0
        %5906 = vmatprep.subr.mxu0 0.0
        %5907 = vmatpush1.msra.mxu0 0.0
        %5908 = vmatprep.subr.mxu0 0.0
        %5909 = vmatpush1.msra.mxu0 0.0
        %5910 = vmatprep.subr.mxu0 0.0
        %5911 = vmatpush1.msra.mxu0 0.0
        %5912 = vmatprep.subr.mxu0 0.0
        %5913 = vmatpush1.msra.mxu0 0.0
        %5914 = vmatprep.subr.mxu0 0.0
        %5915 = vmatpush1.msra.mxu0 0.0
        %5916 = vmatprep.subr.mxu0 0.0
        %5917 = vmatpush1.msra.mxu0 0.0
        %5918 = vmatprep.subr.mxu0 0.0
        %5919 = vmatpush1.msra.mxu0 0.0
        %5920 = vmatprep.subr.mxu0 0.0
        %5921 = vmatpush1.msra.mxu0 0.0
        %5922 = vmatprep.subr.mxu0 0.0
        %5923 = vmatpush1.msra.mxu0 0.0
        %5924 = vmatprep.subr.mxu0 0.0
        %5925 = vmatpush1.msra.mxu0 0.0
        %5926 = vmatprep.subr.mxu0 0.0
        %5927 = vmatpush1.msra.mxu0 0.0
        %5928 = vmatprep.subr.mxu0 0.0
        %5929 = vmatpush1.msra.mxu0 0.0
        %5930 = vmatprep.subr.mxu0 0.0
        %5931 = vmatpush1.msra.mxu0 0.0
        %5932 = vmatprep.subr.mxu0 0.0
        %5933 = vmatpush1.msra.mxu0 0.0
        %5934 = vmatprep.subr.mxu0 0.0
        %5935 = vmatpush1.msra.mxu0 0.0
        %5936 = vmatprep.subr.mxu0 0.0
        %5937 = vmatpush1.msra.mxu0 0.0
        %5938 = vmatprep.subr.mxu0 0.0
        %5939 = vmatpush1.msra.mxu0 0.0
        %5940 = vmatprep.subr.mxu0 0.0
        %5941 = vmatpush1.msra.mxu0 0.0
        %5942 = vmatprep.subr.mxu0 0.0
        %5943 = vmatpush1.msra.mxu0 0.0
        %5944 = vmatprep.subr.mxu0 0.0
        %5945 = vmatpush1.msra.mxu0 0.0
        %5946 = vmatprep.mubr.f32.mxu0 0.0
        %5947 = vmatmul.mubr.f32.gmra.mrb[0].mxu0 %v5880
        %v5948 = vpop.f32.mrb[0].mxu0
        %v5949 = vadd.f32 0.0, %v5948
        %v5950 = vpop.f32.mrb[0].mxu0
        %5951 = vdwg.mxu0
        %v5953 = vsel %vm506, %v5949, 0
        %5955 = vmatprep.subr.mxu0 0.0
        %5956 = vmatpush1.msra.mxu0 %v5540
        %5957 = vmatprep.subr.mxu0 0.0
        %5958 = vmatpush1.msra.mxu0 0.0
        %5959 = vmatprep.subr.mxu0 0.0
        %5960 = vmatpush1.msra.mxu0 0.0
        %5961 = vmatprep.subr.mxu0 0.0
        %5962 = vmatpush1.msra.mxu0 0.0
        %5963 = vmatprep.subr.mxu0 0.0
        %5964 = vmatpush1.msra.mxu0 0.0
        %5965 = vmatprep.subr.mxu0 0.0
        %5966 = vmatpush1.msra.mxu0 0.0
        %5967 = vmatprep.subr.mxu0 0.0
        %5968 = vmatpush1.msra.mxu0 0.0
        %5969 = vmatprep.subr.mxu0 0.0
        %5970 = vmatpush1.msra.mxu0 0.0
        %5971 = vmatprep.subr.mxu0 0.0
        %5972 = vmatpush1.msra.mxu0 0.0
        %5973 = vmatprep.subr.mxu0 0.0
        %5974 = vmatpush1.msra.mxu0 0.0
        %5975 = vmatprep.subr.mxu0 0.0
        %5976 = vmatpush1.msra.mxu0 0.0
        %5977 = vmatprep.subr.mxu0 0.0
        %5978 = vmatpush1.msra.mxu0 0.0
        %5979 = vmatprep.subr.mxu0 0.0
        %5980 = vmatpush1.msra.mxu0 0.0
        %5981 = vmatprep.subr.mxu0 0.0
        %5982 = vmatpush1.msra.mxu0 0.0
        %5983 = vmatprep.subr.mxu0 0.0
        %5984 = vmatpush1.msra.mxu0 0.0
        %5985 = vmatprep.subr.mxu0 0.0
        %5986 = vmatpush1.msra.mxu0 0.0
        %5987 = vmatprep.subr.mxu0 0.0
        %5988 = vmatpush1.msra.mxu0 0.0
        %5989 = vmatprep.subr.mxu0 0.0
        %5990 = vmatpush1.msra.mxu0 0.0
        %5991 = vmatprep.subr.mxu0 0.0
        %5992 = vmatpush1.msra.mxu0 0.0
        %5993 = vmatprep.subr.mxu0 0.0
        %5994 = vmatpush1.msra.mxu0 0.0
        %5995 = vmatprep.subr.mxu0 0.0
        %5996 = vmatpush1.msra.mxu0 0.0
        %5997 = vmatprep.subr.mxu0 0.0
        %5998 = vmatpush1.msra.mxu0 0.0
        %5999 = vmatprep.subr.mxu0 0.0
        %6000 = vmatpush1.msra.mxu0 0.0
        %6001 = vmatprep.subr.mxu0 0.0
        %6002 = vmatpush1.msra.mxu0 0.0
        %6003 = vmatprep.subr.mxu0 0.0
        %6004 = vmatpush1.msra.mxu0 0.0
        %6005 = vmatprep.subr.mxu0 0.0
        %6006 = vmatpush1.msra.mxu0 0.0
        %6007 = vmatprep.subr.mxu0 0.0
        %6008 = vmatpush1.msra.mxu0 0.0
        %6009 = vmatprep.subr.mxu0 0.0
        %6010 = vmatpush1.msra.mxu0 0.0
        %6011 = vmatprep.subr.mxu0 0.0
        %6012 = vmatpush1.msra.mxu0 0.0
        %6013 = vmatprep.subr.mxu0 0.0
        %6014 = vmatpush1.msra.mxu0 0.0
        %6015 = vmatprep.subr.mxu0 0.0
        %6016 = vmatpush1.msra.mxu0 0.0
        %6017 = vmatprep.subr.mxu0 0.0
        %6018 = vmatpush1.msra.mxu0 0.0
        %6019 = vmatprep.mubr.f32.mxu0 0.0
        %6020 = vmatmul.mubr.f32.gmra.mrb[0].mxu0 %v5953
        %v6021 = vpop.f32.mrb[0].mxu0
        %v6022 = vadd.f32 0.0, %v6021
        %v6023 = vpop.f32.mrb[0].mxu0
        %6024 = vdwg.mxu0
        %v6026 = vsel %vm506, %v5784, 0
        %6028 = vmatprep.subr.mxu0 0.0
        %6029 = vmatpush1.msra.mxu0 %v5539
        %6030 = vmatprep.subr.mxu0 0.0
        %6031 = vmatpush1.msra.mxu0 0.0
        %6032 = vmatprep.subr.mxu0 0.0
        %6033 = vmatpush1.msra.mxu0 0.0
        %6034 = vmatprep.subr.mxu0 0.0
        %6035 = vmatpush1.msra.mxu0 0.0
        %6036 = vmatprep.subr.mxu0 0.0
        %6037 = vmatpush1.msra.mxu0 0.0
        %6038 = vmatprep.subr.mxu0 0.0
        %6039 = vmatpush1.msra.mxu0 0.0
        %6040 = vmatprep.subr.mxu0 0.0
        %6041 = vmatpush1.msra.mxu0 0.0
        %6042 = vmatprep.subr.mxu0 0.0
        %6043 = vmatpush1.msra.mxu0 0.0
        %6044 = vmatprep.subr.mxu0 0.0
        %6045 = vmatpush1.msra.mxu0 0.0
        %6046 = vmatprep.subr.mxu0 0.0
        %6047 = vmatpush1.msra.mxu0 0.0
        %6048 = vmatprep.subr.mxu0 0.0
        %6049 = vmatpush1.msra.mxu0 0.0
        %6050 = vmatprep.subr.mxu0 0.0
        %6051 = vmatpush1.msra.mxu0 0.0
        %6052 = vmatprep.subr.mxu0 0.0
        %6053 = vmatpush1.msra.mxu0 0.0
        %6054 = vmatprep.subr.mxu0 0.0
        %6055 = vmatpush1.msra.mxu0 0.0
        %6056 = vmatprep.subr.mxu0 0.0
        %6057 = vmatpush1.msra.mxu0 0.0
        %6058 = vmatprep.subr.mxu0 0.0
        %6059 = vmatpush1.msra.mxu0 0.0
        %6060 = vmatprep.subr.mxu0 0.0
        %6061 = vmatpush1.msra.mxu0 0.0
        %6062 = vmatprep.subr.mxu0 0.0
        %6063 = vmatpush1.msra.mxu0 0.0
        %6064 = vmatprep.subr.mxu0 0.0
        %6065 = vmatpush1.msra.mxu0 0.0
        %6066 = vmatprep.subr.mxu0 0.0
        %6067 = vmatpush1.msra.mxu0 0.0
        %6068 = vmatprep.subr.mxu0 0.0
        %6069 = vmatpush1.msra.mxu0 0.0
        %6070 = vmatprep.subr.mxu0 0.0
        %6071 = vmatpush1.msra.mxu0 0.0
        %6072 = vmatprep.subr.mxu0 0.0
        %6073 = vmatpush1.msra.mxu0 0.0
        %6074 = vmatprep.subr.mxu0 0.0
        %6075 = vmatpush1.msra.mxu0 0.0
        %6076 = vmatprep.subr.mxu0 0.0
        %6077 = vmatpush1.msra.mxu0 0.0
        %6078 = vmatprep.subr.mxu0 0.0
        %6079 = vmatpush1.msra.mxu0 0.0
        %6080 = vmatprep.subr.mxu0 0.0
        %6081 = vmatpush1.msra.mxu0 0.0
        %6082 = vmatprep.subr.mxu0 0.0
        %6083 = vmatpush1.msra.mxu0 0.0
        %6084 = vmatprep.subr.mxu0 0.0
        %6085 = vmatpush1.msra.mxu0 0.0
        %6086 = vmatprep.subr.mxu0 0.0
        %6087 = vmatpush1.msra.mxu0 0.0
        %6088 = vmatprep.subr.mxu0 0.0
        %6089 = vmatpush1.msra.mxu0 0.0
        %6090 = vmatprep.subr.mxu0 0.0
        %6091 = vmatpush1.msra.mxu0 0.0
        %6092 = vmatprep.mubr.f32.mxu0 0.0
        %6093 = vmatmul.mubr.f32.gmra.mrb[0].mxu0 %v6026
        %v6094 = vpop.f32.mrb[0].mxu0
        %v6095 = vadd.f32 %v6022, %v6094
        %v6096 = vpop.f32.mrb[0].mxu0
        %6097 = vdwg.mxu0
        %6098 = vrot.lane.b32.xlu0 %v5621, 112
        %v6099 = vpop.permute.xlu0 %6098
        %6100 = vrot.lane.b32.xlu0 %v5618, 80
        %v6101 = vpop.permute.xlu0 %6100
        %v6102 = vsel %vm506, %v6099, 0
        %v6104 = vsel %vm506, %v6101, 0
        %6106 = vmatprep.subr.mxu0 0.0
        %6107 = vmatpush1.xpose.msra.mxu0 %v6104
        %6108 = vmatprep.subr.mxu0 0.0
        %6109 = vmatpush1.xpose.msra.mxu0 0.0
        %6110 = vmatprep.subr.mxu0 0.0
        %6111 = vmatpush1.xpose.msra.mxu0 0.0
        %6112 = vmatprep.subr.mxu0 0.0
        %6113 = vmatpush1.xpose.msra.mxu0 0.0
        %6114 = vmatprep.subr.mxu0 0.0
        %6115 = vmatpush1.xpose.msra.mxu0 0.0
        %6116 = vmatprep.subr.mxu0 0.0
        %6117 = vmatpush1.xpose.msra.mxu0 0.0
        %6118 = vmatprep.subr.mxu0 0.0
        %6119 = vmatpush1.xpose.msra.mxu0 0.0
        %6120 = vmatprep.subr.mxu0 0.0
        %6121 = vmatpush1.xpose.msra.mxu0 0.0
        %6122 = vmatprep.subr.mxu0 0.0
        %6123 = vmatpush1.xpose.msra.mxu0 0.0
        %6124 = vmatprep.subr.mxu0 0.0
        %6125 = vmatpush1.xpose.msra.mxu0 0.0
        %6126 = vmatprep.subr.mxu0 0.0
        %6127 = vmatpush1.xpose.msra.mxu0 0.0
        %6128 = vmatprep.subr.mxu0 0.0
        %6129 = vmatpush1.xpose.msra.mxu0 0.0
        %6130 = vmatprep.subr.mxu0 0.0
        %6131 = vmatpush1.xpose.msra.mxu0 0.0
        %6132 = vmatprep.subr.mxu0 0.0
        %6133 = vmatpush1.xpose.msra.mxu0 0.0
        %6134 = vmatprep.subr.mxu0 0.0
        %6135 = vmatpush1.xpose.msra.mxu0 0.0
        %6136 = vmatprep.subr.mxu0 0.0
        %6137 = vmatpush1.xpose.msra.mxu0 0.0
        %6138 = vmatprep.subr.mxu0 0.0
        %6139 = vmatpush1.xpose.msra.mxu0 0.0
        %6140 = vmatprep.subr.mxu0 0.0
        %6141 = vmatpush1.xpose.msra.mxu0 0.0
        %6142 = vmatprep.subr.mxu0 0.0
        %6143 = vmatpush1.xpose.msra.mxu0 0.0
        %6144 = vmatprep.subr.mxu0 0.0
        %6145 = vmatpush1.xpose.msra.mxu0 0.0
        %6146 = vmatprep.subr.mxu0 0.0
        %6147 = vmatpush1.xpose.msra.mxu0 0.0
        %6148 = vmatprep.subr.mxu0 0.0
        %6149 = vmatpush1.xpose.msra.mxu0 0.0
        %6150 = vmatprep.subr.mxu0 0.0
        %6151 = vmatpush1.xpose.msra.mxu0 0.0
        %6152 = vmatprep.subr.mxu0 0.0
        %6153 = vmatpush1.xpose.msra.mxu0 0.0
        %6154 = vmatprep.subr.mxu0 0.0
        %6155 = vmatpush1.xpose.msra.mxu0 0.0
        %6156 = vmatprep.subr.mxu0 0.0
        %6157 = vmatpush1.xpose.msra.mxu0 0.0
        %6158 = vmatprep.subr.mxu0 0.0
        %6159 = vmatpush1.xpose.msra.mxu0 0.0
        %6160 = vmatprep.subr.mxu0 0.0
        %6161 = vmatpush1.xpose.msra.mxu0 0.0
        %6162 = vmatprep.subr.mxu0 0.0
        %6163 = vmatpush1.xpose.msra.mxu0 0.0
        %6164 = vmatprep.subr.mxu0 0.0
        %6165 = vmatpush1.xpose.msra.mxu0 0.0
        %6166 = vmatprep.subr.mxu0 0.0
        %6167 = vmatpush1.xpose.msra.mxu0 0.0
        %6168 = vmatprep.subr.mxu0 0.0
        %6169 = vmatpush1.xpose.msra.mxu0 0.0
        %6170 = vmatprep.mubr.f32.mxu0 0.0
        %6171 = vmatmul.mubr.f32.gmra.mrb[0].mxu0 %v6102
        %v6172 = vpop.f32.mrb[0].mxu0
        %v6173 = vadd.f32 %v284, %v6172
        %v6174 = vpop.f32.mrb[0].mxu0
        %6175 = vdwg.mxu0
        %v6176 = vsel %vm506, %v6173, -inf
        %6177 = vmax.xlane.f32.xlu0 %v6176
        %v6178 = vpop.xlane.xlu0 %6177
        %v6179 = vsub.f32 %v6173, %v6178
        %v6180 = vmul.f32 %v6179, 1.442695
        %v6181 = vpow.pop %v6180
        %v6182 = vsel %vm506, %v6181, 0.0
        %6183 = vadd.xlane.f32.xlu0 %v6182
        %v6184 = vpop.xlane.xlu0 %6183
        %v6185 = vrcp.pop %v6184
        %v6186 = vmul.f32 %v6181, %v6185
        %6187 = vrot.lane.b32.xlu0 %v5618, 48
        %v6188 = vpop.permute.xlu0 %6187
        %v6191 = vsel %vm506, %v6186, 0
        %6193 = vmatprep.subr.mxu0 0.0
        %6194 = vmatpush1.msra.mxu0 %v6188
        %6195 = vmatprep.subr.mxu0 0.0
        %6196 = vmatpush1.msra.mxu0 0.0
        %6197 = vmatprep.subr.mxu0 0.0
        %6198 = vmatpush1.msra.mxu0 0.0
        %6199 = vmatprep.subr.mxu0 0.0
        %6200 = vmatpush1.msra.mxu0 0.0
        %6201 = vmatprep.subr.mxu0 0.0
        %6202 = vmatpush1.msra.mxu0 0.0
        %6203 = vmatprep.subr.mxu0 0.0
        %6204 = vmatpush1.msra.mxu0 0.0
        %6205 = vmatprep.subr.mxu0 0.0
        %6206 = vmatpush1.msra.mxu0 0.0
        %6207 = vmatprep.subr.mxu0 0.0
        %6208 = vmatpush1.msra.mxu0 0.0
        %6209 = vmatprep.subr.mxu0 0.0
        %6210 = vmatpush1.msra.mxu0 0.0
        %6211 = vmatprep.subr.mxu0 0.0
        %6212 = vmatpush1.msra.mxu0 0.0
        %6213 = vmatprep.subr.mxu0 0.0
        %6214 = vmatpush1.msra.mxu0 0.0
        %6215 = vmatprep.subr.mxu0 0.0
        %6216 = vmatpush1.msra.mxu0 0.0
        %6217 = vmatprep.subr.mxu0 0.0
        %6218 = vmatpush1.msra.mxu0 0.0
        %6219 = vmatprep.subr.mxu0 0.0
        %6220 = vmatpush1.msra.mxu0 0.0
        %6221 = vmatprep.subr.mxu0 0.0
        %6222 = vmatpush1.msra.mxu0 0.0
        %6223 = vmatprep.subr.mxu0 0.0
        %6224 = vmatpush1.msra.mxu0 0.0
        %6225 = vmatprep.subr.mxu0 0.0
        %6226 = vmatpush1.msra.mxu0 0.0
        %6227 = vmatprep.subr.mxu0 0.0
        %6228 = vmatpush1.msra.mxu0 0.0
        %6229 = vmatprep.subr.mxu0 0.0
        %6230 = vmatpush1.msra.mxu0 0.0
        %6231 = vmatprep.subr.mxu0 0.0
        %6232 = vmatpush1.msra.mxu0 0.0
        %6233 = vmatprep.subr.mxu0 0.0
        %6234 = vmatpush1.msra.mxu0 0.0
        %6235 = vmatprep.subr.mxu0 0.0
        %6236 = vmatpush1.msra.mxu0 0.0
        %6237 = vmatprep.subr.mxu0 0.0
        %6238 = vmatpush1.msra.mxu0 0.0
        %6239 = vmatprep.subr.mxu0 0.0
        %6240 = vmatpush1.msra.mxu0 0.0
        %6241 = vmatprep.subr.mxu0 0.0
        %6242 = vmatpush1.msra.mxu0 0.0
        %6243 = vmatprep.subr.mxu0 0.0
        %6244 = vmatpush1.msra.mxu0 0.0
        %6245 = vmatprep.subr.mxu0 0.0
        %6246 = vmatpush1.msra.mxu0 0.0
        %6247 = vmatprep.subr.mxu0 0.0
        %6248 = vmatpush1.msra.mxu0 0.0
        %6249 = vmatprep.subr.mxu0 0.0
        %6250 = vmatpush1.msra.mxu0 0.0
        %6251 = vmatprep.subr.mxu0 0.0
        %6252 = vmatpush1.msra.mxu0 0.0
        %6253 = vmatprep.subr.mxu0 0.0
        %6254 = vmatpush1.msra.mxu0 0.0
        %6255 = vmatprep.subr.mxu0 0.0
        %6256 = vmatpush1.msra.mxu0 0.0
        %6257 = vmatprep.mubr.f32.mxu0 0.0
        %6258 = vmatmul.mubr.f32.gmra.mrb[0].mxu0 %v6191
        %v6259 = vpop.f32.mrb[0].mxu0
        %v6260 = vadd.f32 0.0, %v6259
        %v6261 = vpop.f32.mrb[0].mxu0
        %6262 = vdwg.mxu0
        %v6264 = vsel %vm506, %v6260, 0
        %6266 = vmatprep.subr.mxu0 0.0
        %6267 = vmatpush1.msra.mxu0 %v5541
        %6268 = vmatprep.subr.mxu0 0.0
        %6269 = vmatpush1.msra.mxu0 0.0
        %6270 = vmatprep.subr.mxu0 0.0
        %6271 = vmatpush1.msra.mxu0 0.0
        %6272 = vmatprep.subr.mxu0 0.0
        %6273 = vmatpush1.msra.mxu0 0.0
        %6274 = vmatprep.subr.mxu0 0.0
        %6275 = vmatpush1.msra.mxu0 0.0
        %6276 = vmatprep.subr.mxu0 0.0
        %6277 = vmatpush1.msra.mxu0 0.0
        %6278 = vmatprep.subr.mxu0 0.0
        %6279 = vmatpush1.msra.mxu0 0.0
        %6280 = vmatprep.subr.mxu0 0.0
        %6281 = vmatpush1.msra.mxu0 0.0
        %6282 = vmatprep.subr.mxu0 0.0
        %6283 = vmatpush1.msra.mxu0 0.0
        %6284 = vmatprep.subr.mxu0 0.0
        %6285 = vmatpush1.msra.mxu0 0.0
        %6286 = vmatprep.subr.mxu0 0.0
        %6287 = vmatpush1.msra.mxu0 0.0
        %6288 = vmatprep.subr.mxu0 0.0
        %6289 = vmatpush1.msra.mxu0 0.0
        %6290 = vmatprep.subr.mxu0 0.0
        %6291 = vmatpush1.msra.mxu0 0.0
        %6292 = vmatprep.subr.mxu0 0.0
        %6293 = vmatpush1.msra.mxu0 0.0
        %6294 = vmatprep.subr.mxu0 0.0
        %6295 = vmatpush1.msra.mxu0 0.0
        %6296 = vmatprep.subr.mxu0 0.0
        %6297 = vmatpush1.msra.mxu0 0.0
        %6298 = vmatprep.subr.mxu0 0.0
        %6299 = vmatpush1.msra.mxu0 0.0
        %6300 = vmatprep.subr.mxu0 0.0
        %6301 = vmatpush1.msra.mxu0 0.0
        %6302 = vmatprep.subr.mxu0 0.0
        %6303 = vmatpush1.msra.mxu0 0.0
        %6304 = vmatprep.subr.mxu0 0.0
        %6305 = vmatpush1.msra.mxu0 0.0
        %6306 = vmatprep.subr.mxu0 0.0
        %6307 = vmatpush1.msra.mxu0 0.0
        %6308 = vmatprep.subr.mxu0 0.0
        %6309 = vmatpush1.msra.mxu0 0.0
        %6310 = vmatprep.subr.mxu0 0.0
        %6311 = vmatpush1.msra.mxu0 0.0
        %6312 = vmatprep.subr.mxu0 0.0
        %6313 = vmatpush1.msra.mxu0 0.0
        %6314 = vmatprep.subr.mxu0 0.0
        %6315 = vmatpush1.msra.mxu0 0.0
        %6316 = vmatprep.subr.mxu0 0.0
        %6317 = vmatpush1.msra.mxu0 0.0
        %6318 = vmatprep.subr.mxu0 0.0
        %6319 = vmatpush1.msra.mxu0 0.0
        %6320 = vmatprep.subr.mxu0 0.0
        %6321 = vmatpush1.msra.mxu0 0.0
        %6322 = vmatprep.subr.mxu0 0.0
        %6323 = vmatpush1.msra.mxu0 0.0
        %6324 = vmatprep.subr.mxu0 0.0
        %6325 = vmatpush1.msra.mxu0 0.0
        %6326 = vmatprep.subr.mxu0 0.0
        %6327 = vmatpush1.msra.mxu0 0.0
        %6328 = vmatprep.subr.mxu0 0.0
        %6329 = vmatpush1.msra.mxu0 0.0
        %6330 = vmatprep.mubr.f32.mxu0 0.0
        %6331 = vmatmul.mubr.f32.gmra.mrb[0].mxu0 %v6264
        %v6332 = vpop.f32.mrb[0].mxu0
        %v6333 = vadd.f32 0.0, %v6332
        %v6334 = vpop.f32.mrb[0].mxu0
        %6335 = vdwg.mxu0
        %v6336 = vadd.f32 %v6095, %v6333
        %6337 = vrot.lane.b32.xlu0 %v5621, 104
        %v6338 = vpop.permute.xlu0 %6337
        %6339 = vrot.lane.b32.xlu0 %v5618, 72
        %v6340 = vpop.permute.xlu0 %6339
        %v6341 = vsel %vm506, %v6338, 0
        %v6343 = vsel %vm506, %v6340, 0
        %6345 = vmatprep.subr.mxu0 0.0
        %6346 = vmatpush1.xpose.msra.mxu0 %v6343
        %6347 = vmatprep.subr.mxu0 0.0
        %6348 = vmatpush1.xpose.msra.mxu0 0.0
        %6349 = vmatprep.subr.mxu0 0.0
        %6350 = vmatpush1.xpose.msra.mxu0 0.0
        %6351 = vmatprep.subr.mxu0 0.0
        %6352 = vmatpush1.xpose.msra.mxu0 0.0
        %6353 = vmatprep.subr.mxu0 0.0
        %6354 = vmatpush1.xpose.msra.mxu0 0.0
        %6355 = vmatprep.subr.mxu0 0.0
        %6356 = vmatpush1.xpose.msra.mxu0 0.0
        %6357 = vmatprep.subr.mxu0 0.0
        %6358 = vmatpush1.xpose.msra.mxu0 0.0
        %6359 = vmatprep.subr.mxu0 0.0
        %6360 = vmatpush1.xpose.msra.mxu0 0.0
        %6361 = vmatprep.subr.mxu0 0.0
        %6362 = vmatpush1.xpose.msra.mxu0 0.0
        %6363 = vmatprep.subr.mxu0 0.0
        %6364 = vmatpush1.xpose.msra.mxu0 0.0
        %6365 = vmatprep.subr.mxu0 0.0
        %6366 = vmatpush1.xpose.msra.mxu0 0.0
        %6367 = vmatprep.subr.mxu0 0.0
        %6368 = vmatpush1.xpose.msra.mxu0 0.0
        %6369 = vmatprep.subr.mxu0 0.0
        %6370 = vmatpush1.xpose.msra.mxu0 0.0
        %6371 = vmatprep.subr.mxu0 0.0
        %6372 = vmatpush1.xpose.msra.mxu0 0.0
        %6373 = vmatprep.subr.mxu0 0.0
        %6374 = vmatpush1.xpose.msra.mxu0 0.0
        %6375 = vmatprep.subr.mxu0 0.0
        %6376 = vmatpush1.xpose.msra.mxu0 0.0
        %6377 = vmatprep.subr.mxu0 0.0
        %6378 = vmatpush1.xpose.msra.mxu0 0.0
        %6379 = vmatprep.subr.mxu0 0.0
        %6380 = vmatpush1.xpose.msra.mxu0 0.0
        %6381 = vmatprep.subr.mxu0 0.0
        %6382 = vmatpush1.xpose.msra.mxu0 0.0
        %6383 = vmatprep.subr.mxu0 0.0
        %6384 = vmatpush1.xpose.msra.mxu0 0.0
        %6385 = vmatprep.subr.mxu0 0.0
        %6386 = vmatpush1.xpose.msra.mxu0 0.0
        %6387 = vmatprep.subr.mxu0 0.0
        %6388 = vmatpush1.xpose.msra.mxu0 0.0
        %6389 = vmatprep.subr.mxu0 0.0
        %6390 = vmatpush1.xpose.msra.mxu0 0.0
        %6391 = vmatprep.subr.mxu0 0.0
        %6392 = vmatpush1.xpose.msra.mxu0 0.0
        %6393 = vmatprep.subr.mxu0 0.0
        %6394 = vmatpush1.xpose.msra.mxu0 0.0
        %6395 = vmatprep.subr.mxu0 0.0
        %6396 = vmatpush1.xpose.msra.mxu0 0.0
        %6397 = vmatprep.subr.mxu0 0.0
        %6398 = vmatpush1.xpose.msra.mxu0 0.0
        %6399 = vmatprep.subr.mxu0 0.0
        %6400 = vmatpush1.xpose.msra.mxu0 0.0
        %6401 = vmatprep.subr.mxu0 0.0
        %6402 = vmatpush1.xpose.msra.mxu0 0.0
        %6403 = vmatprep.subr.mxu0 0.0
        %6404 = vmatpush1.xpose.msra.mxu0 0.0
        %6405 = vmatprep.subr.mxu0 0.0
        %6406 = vmatpush1.xpose.msra.mxu0 0.0
        %6407 = vmatprep.subr.mxu0 0.0
        %6408 = vmatpush1.xpose.msra.mxu0 0.0
        %6409 = vmatprep.mubr.f32.mxu0 0.0
        %6410 = vmatmul.mubr.f32.gmra.mrb[0].mxu0 %v6341
        %v6411 = vpop.f32.mrb[0].mxu0
        %v6412 = vadd.f32 %v284, %v6411
        %v6413 = vpop.f32.mrb[0].mxu0
        %6414 = vdwg.mxu0
        %v6415 = vsel %vm506, %v6412, -inf
        %6416 = vmax.xlane.f32.xlu0 %v6415
        %v6417 = vpop.xlane.xlu0 %6416
        %v6418 = vsub.f32 %v6412, %v6417
        %v6419 = vmul.f32 %v6418, 1.442695
        %v6420 = vpow.pop %v6419
        %v6421 = vsel %vm506, %v6420, 0.0
        %6422 = vadd.xlane.f32.xlu0 %v6421
        %v6423 = vpop.xlane.xlu0 %6422
        %v6424 = vrcp.pop %v6423
        %v6425 = vmul.f32 %v6420, %v6424
        %6426 = vrot.lane.b32.xlu0 %v5618, 40
        %v6427 = vpop.permute.xlu0 %6426
        %v6430 = vsel %vm506, %v6425, 0
        %6432 = vmatprep.subr.mxu0 0.0
        %6433 = vmatpush1.msra.mxu0 %v6427
        %6434 = vmatprep.subr.mxu0 0.0
        %6435 = vmatpush1.msra.mxu0 0.0
        %6436 = vmatprep.subr.mxu0 0.0
        %6437 = vmatpush1.msra.mxu0 0.0
        %6438 = vmatprep.subr.mxu0 0.0
        %6439 = vmatpush1.msra.mxu0 0.0
        %6440 = vmatprep.subr.mxu0 0.0
        %6441 = vmatpush1.msra.mxu0 0.0
        %6442 = vmatprep.subr.mxu0 0.0
        %6443 = vmatpush1.msra.mxu0 0.0
        %6444 = vmatprep.subr.mxu0 0.0
        %6445 = vmatpush1.msra.mxu0 0.0
        %6446 = vmatprep.subr.mxu0 0.0
        %6447 = vmatpush1.msra.mxu0 0.0
        %6448 = vmatprep.subr.mxu0 0.0
        %6449 = vmatpush1.msra.mxu0 0.0
        %6450 = vmatprep.subr.mxu0 0.0
        %6451 = vmatpush1.msra.mxu0 0.0
        %6452 = vmatprep.subr.mxu0 0.0
        %6453 = vmatpush1.msra.mxu0 0.0
        %6454 = vmatprep.subr.mxu0 0.0
        %6455 = vmatpush1.msra.mxu0 0.0
        %6456 = vmatprep.subr.mxu0 0.0
        %6457 = vmatpush1.msra.mxu0 0.0
        %6458 = vmatprep.subr.mxu0 0.0
        %6459 = vmatpush1.msra.mxu0 0.0
        %6460 = vmatprep.subr.mxu0 0.0
        %6461 = vmatpush1.msra.mxu0 0.0
        %6462 = vmatprep.subr.mxu0 0.0
        %6463 = vmatpush1.msra.mxu0 0.0
        %6464 = vmatprep.subr.mxu0 0.0
        %6465 = vmatpush1.msra.mxu0 0.0
        %6466 = vmatprep.subr.mxu0 0.0
        %6467 = vmatpush1.msra.mxu0 0.0
        %6468 = vmatprep.subr.mxu0 0.0
        %6469 = vmatpush1.msra.mxu0 0.0
        %6470 = vmatprep.subr.mxu0 0.0
        %6471 = vmatpush1.msra.mxu0 0.0
        %6472 = vmatprep.subr.mxu0 0.0
        %6473 = vmatpush1.msra.mxu0 0.0
        %6474 = vmatprep.subr.mxu0 0.0
        %6475 = vmatpush1.msra.mxu0 0.0
        %6476 = vmatprep.subr.mxu0 0.0
        %6477 = vmatpush1.msra.mxu0 0.0
        %6478 = vmatprep.subr.mxu0 0.0
        %6479 = vmatpush1.msra.mxu0 0.0
        %6480 = vmatprep.subr.mxu0 0.0
        %6481 = vmatpush1.msra.mxu0 0.0
        %6482 = vmatprep.subr.mxu0 0.0
        %6483 = vmatpush1.msra.mxu0 0.0
        %6484 = vmatprep.subr.mxu0 0.0
        %6485 = vmatpush1.msra.mxu0 0.0
        %6486 = vmatprep.subr.mxu0 0.0
        %6487 = vmatpush1.msra.mxu0 0.0
        %6488 = vmatprep.subr.mxu0 0.0
        %6489 = vmatpush1.msra.mxu0 0.0
        %6490 = vmatprep.subr.mxu0 0.0
        %6491 = vmatpush1.msra.mxu0 0.0
        %6492 = vmatprep.subr.mxu0 0.0
        %6493 = vmatpush1.msra.mxu0 0.0
        %6494 = vmatprep.subr.mxu0 0.0
        %6495 = vmatpush1.msra.mxu0 0.0
        %6496 = vmatprep.mubr.f32.mxu0 0.0
        %6497 = vmatmul.mubr.f32.gmra.mrb[0].mxu0 %v6430
        %v6498 = vpop.f32.mrb[0].mxu0
        %v6499 = vadd.f32 0.0, %v6498
        %v6500 = vpop.f32.mrb[0].mxu0
        %6501 = vdwg.mxu0
        %v6503 = vsel %vm506, %v6499, 0
        %6505 = vmatprep.subr.mxu0 0.0
        %6506 = vmatpush1.msra.mxu0 %v5542
        %6507 = vmatprep.subr.mxu0 0.0
        %6508 = vmatpush1.msra.mxu0 0.0
        %6509 = vmatprep.subr.mxu0 0.0
        %6510 = vmatpush1.msra.mxu0 0.0
        %6511 = vmatprep.subr.mxu0 0.0
        %6512 = vmatpush1.msra.mxu0 0.0
        %6513 = vmatprep.subr.mxu0 0.0
        %6514 = vmatpush1.msra.mxu0 0.0
        %6515 = vmatprep.subr.mxu0 0.0
        %6516 = vmatpush1.msra.mxu0 0.0
        %6517 = vmatprep.subr.mxu0 0.0
        %6518 = vmatpush1.msra.mxu0 0.0
        %6519 = vmatprep.subr.mxu0 0.0
        %6520 = vmatpush1.msra.mxu0 0.0
        %6521 = vmatprep.subr.mxu0 0.0
        %6522 = vmatpush1.msra.mxu0 0.0
        %6523 = vmatprep.subr.mxu0 0.0
        %6524 = vmatpush1.msra.mxu0 0.0
        %6525 = vmatprep.subr.mxu0 0.0
        %6526 = vmatpush1.msra.mxu0 0.0
        %6527 = vmatprep.subr.mxu0 0.0
        %6528 = vmatpush1.msra.mxu0 0.0
        %6529 = vmatprep.subr.mxu0 0.0
        %6530 = vmatpush1.msra.mxu0 0.0
        %6531 = vmatprep.subr.mxu0 0.0
        %6532 = vmatpush1.msra.mxu0 0.0
        %6533 = vmatprep.subr.mxu0 0.0
        %6534 = vmatpush1.msra.mxu0 0.0
        %6535 = vmatprep.subr.mxu0 0.0
        %6536 = vmatpush1.msra.mxu0 0.0
        %6537 = vmatprep.subr.mxu0 0.0
        %6538 = vmatpush1.msra.mxu0 0.0
        %6539 = vmatprep.subr.mxu0 0.0
        %6540 = vmatpush1.msra.mxu0 0.0
        %6541 = vmatprep.subr.mxu0 0.0
        %6542 = vmatpush1.msra.mxu0 0.0
        %6543 = vmatprep.subr.mxu0 0.0
        %6544 = vmatpush1.msra.mxu0 0.0
        %6545 = vmatprep.subr.mxu0 0.0
        %6546 = vmatpush1.msra.mxu0 0.0
        %6547 = vmatprep.subr.mxu0 0.0
        %6548 = vmatpush1.msra.mxu0 0.0
        %6549 = vmatprep.subr.mxu0 0.0
        %6550 = vmatpush1.msra.mxu0 0.0
        %6551 = vmatprep.subr.mxu0 0.0
        %6552 = vmatpush1.msra.mxu0 0.0
        %6553 = vmatprep.subr.mxu0 0.0
        %6554 = vmatpush1.msra.mxu0 0.0
        %6555 = vmatprep.subr.mxu0 0.0
        %6556 = vmatpush1.msra.mxu0 0.0
        %6557 = vmatprep.subr.mxu0 0.0
        %6558 = vmatpush1.msra.mxu0 0.0
        %6559 = vmatprep.subr.mxu0 0.0
        %6560 = vmatpush1.msra.mxu0 0.0
        %6561 = vmatprep.subr.mxu0 0.0
        %6562 = vmatpush1.msra.mxu0 0.0
        %6563 = vmatprep.subr.mxu0 0.0
        %6564 = vmatpush1.msra.mxu0 0.0
        %6565 = vmatprep.subr.mxu0 0.0
        %6566 = vmatpush1.msra.mxu0 0.0
        %6567 = vmatprep.subr.mxu0 0.0
        %6568 = vmatpush1.msra.mxu0 0.0
        %6569 = vmatprep.mubr.f32.mxu0 0.0
        %6570 = vmatmul.mubr.f32.gmra.mrb[0].mxu0 %v6503
        %v6571 = vpop.f32.mrb[0].mxu0
        %v6572 = vadd.f32 0.0, %v6571
        %v6573 = vpop.f32.mrb[0].mxu0
        %6574 = vdwg.mxu0
        %v6575 = vadd.f32 %v6336, %v6572
        %v6576 = vlaneseq
        %v6577 = vshrl.u32 %v6576, 7
        %v6578 = vsub.s32 0, %v6577
        %v6579 = vrot.slane %v5543, %v6578
        %v6580 = vadd.f32 %v6575, %v6579
        %v6581 = vadd.f32 %v5501, %v6580
        %v6582 = vsel %vm377, %v6581, 0.0
        %6583 = vadd.xlane.f32.xlu0 %v6582
        %v6584 = vpop.xlane.xlu0 %6583
        %v6585 = vmul.f32 %v6584, %v381
        %v6586 = vsub.f32 %v6581, %v6585
        %v6587 = vmul.f32 %v6586, %v6586
        %v6588 = vsel %vm377, %v6587, 0.0
        %6589 = vadd.xlane.f32.xlu0 %v6588
        %v6590 = vpop.xlane.xlu0 %6589
        %v6591 = vmul.f32 %v6590, 0.032258064
        %v6592 = vrsqrt.pop %v6591
        %v6593 = vmul.f32 %v6591, %v6592
        %vm6594 = vcmp.eq.f32.partialorder %v6591, inf
        %v6595 = vsel %vm6594, %v6591, %v6593
        %vm6596 = vcmp.eq.f32.partialorder %v6591, 0.0
        %v6597 = vand.u32 %v6591, 2147483648
        %v6598 = vsel %vm6596, %v6597, %v6595
        %v6599 = vlaneseq
        %v6600 = vshrl.u32 %v6599, 7
        %v6601 = vsub.s32 1, %v6600
        %v6602 = vrot.slane %v5502, %v6601
        %v6603 = vmul.f32 %v6602, %v6586
        %v6604 = vadd.f32 %v6598, 1e-06
        %v6605 = vrcp.pop %v6604
        %v6606 = vmul.f32 %v6603, %v6605
        %v6607 = vlaneseq
        %v6608 = vshrl.u32 %v6607, 7
        %v6609 = vsub.s32 1, %v6608
        %v6610 = vrot.slane %v5503, %v6609
        %v6611 = vadd.f32 %v6606, %v6610
        %v6612 = vld [vmem:[#allocation2 + $0x3a0] sm:$0xff]
        %v6613 = vld [vmem:[#allocation2 + $0x3a8] sm:$0xff]
        %v6614 = vld [vmem:[#allocation2 + $0x3b0] sm:$0xff]
        %v6615 = vld [vmem:[#allocation2 + $0x3b8] sm:$0xff]
        %v6616 = vld [vmem:[#allocation2 + $0x3c0] sm:$0x1]
        %v6617 = vlaneseq
        %v6618 = vshrl.u32 %v6617, 7
        %v6619 = vsub.s32 0, %v6618
        %v6620 = vrot.slane %v6616, %v6619
        %v6622 = vsel %vm377, %v6611, 0
        %6624 = vmatprep.subr.mxu0 0.0
        %6625 = vmatpush1.msra.mxu0 %v6612
        %6626 = vmatprep.subr.mxu0 0.0
        %6627 = vmatpush1.msra.mxu0 %v6613
        %6628 = vmatprep.subr.mxu0 0.0
        %6629 = vmatpush1.msra.mxu0 %v6614
        %6630 = vmatprep.subr.mxu0 0.0
        %6631 = vmatpush1.msra.mxu0 %v6615
        %6632 = vmatprep.subr.mxu0 0.0
        %6633 = vmatpush1.msra.mxu0 0.0
        %6634 = vmatprep.subr.mxu0 0.0
        %6635 = vmatpush1.msra.mxu0 0.0
        %6636 = vmatprep.subr.mxu0 0.0
        %6637 = vmatpush1.msra.mxu0 0.0
        %6638 = vmatprep.subr.mxu0 0.0
        %6639 = vmatpush1.msra.mxu0 0.0
        %6640 = vmatprep.subr.mxu0 0.0
        %6641 = vmatpush1.msra.mxu0 0.0
        %6642 = vmatprep.subr.mxu0 0.0
        %6643 = vmatpush1.msra.mxu0 0.0
        %6644 = vmatprep.subr.mxu0 0.0
        %6645 = vmatpush1.msra.mxu0 0.0
        %6646 = vmatprep.subr.mxu0 0.0
        %6647 = vmatpush1.msra.mxu0 0.0
        %6648 = vmatprep.subr.mxu0 0.0
        %6649 = vmatpush1.msra.mxu0 0.0
        %6650 = vmatprep.subr.mxu0 0.0
        %6651 = vmatpush1.msra.mxu0 0.0
        %6652 = vmatprep.subr.mxu0 0.0
        %6653 = vmatpush1.msra.mxu0 0.0
        %6654 = vmatprep.subr.mxu0 0.0
        %6655 = vmatpush1.msra.mxu0 0.0
        %6656 = vmatprep.subr.mxu0 0.0
        %6657 = vmatpush1.msra.mxu0 0.0
        %6658 = vmatprep.subr.mxu0 0.0
        %6659 = vmatpush1.msra.mxu0 0.0
        %6660 = vmatprep.subr.mxu0 0.0
        %6661 = vmatpush1.msra.mxu0 0.0
        %6662 = vmatprep.subr.mxu0 0.0
        %6663 = vmatpush1.msra.mxu0 0.0
        %6664 = vmatprep.subr.mxu0 0.0
        %6665 = vmatpush1.msra.mxu0 0.0
        %6666 = vmatprep.subr.mxu0 0.0
        %6667 = vmatpush1.msra.mxu0 0.0
        %6668 = vmatprep.subr.mxu0 0.0
        %6669 = vmatpush1.msra.mxu0 0.0
        %6670 = vmatprep.subr.mxu0 0.0
        %6671 = vmatpush1.msra.mxu0 0.0
        %6672 = vmatprep.subr.mxu0 0.0
        %6673 = vmatpush1.msra.mxu0 0.0
        %6674 = vmatprep.subr.mxu0 0.0
        %6675 = vmatpush1.msra.mxu0 0.0
        %6676 = vmatprep.subr.mxu0 0.0
        %6677 = vmatpush1.msra.mxu0 0.0
        %6678 = vmatprep.subr.mxu0 0.0
        %6679 = vmatpush1.msra.mxu0 0.0
        %6680 = vmatprep.subr.mxu0 0.0
        %6681 = vmatpush1.msra.mxu0 0.0
        %6682 = vmatprep.subr.mxu0 0.0
        %6683 = vmatpush1.msra.mxu0 0.0
        %6684 = vmatprep.subr.mxu0 0.0
        %6685 = vmatpush1.msra.mxu0 0.0
        %6686 = vmatprep.subr.mxu0 0.0
        %6687 = vmatpush1.msra.mxu0 0.0
        %6688 = vmatprep.mubr.f32.mxu0 0.0
        %6689 = vmatmul.mubr.f32.gmra.mrb[0].mxu0 %v6622
        %v6690 = vpop.f32.mrb[0].mxu0
        %v6691 = vadd.f32 %v6620, %v6690
        %v6692 = vpop.f32.mrb[0].mxu0
        %6693 = vdwg.mxu0
        %v6694 = vmul.f32 %v6691, 0.35355338
        %v6695 = vld [vmem:[#allocation2 + $0x3c8] sm:$0xff]
        %v6696 = vld [vmem:[#allocation2 + $0x3d0] sm:$0xff]
        %v6697 = vld [vmem:[#allocation2 + $0x3d8] sm:$0xff]
        %v6698 = vld [vmem:[#allocation2 + $0x3e0] sm:$0xff]
        %v6699 = vld [vmem:[#allocation2 + $0x3e8] sm:$0x1]
        %6700 = vrot.lane.b32.xlu0 %v3056, 64
        %v6701 = vpop.permute.xlu0 %6700
        %v6703 = vsel %vm506, %v6694, 0
        %v6705 = vsel %vm506, %v6701, 0
        %6707 = vmatprep.subr.mxu0 0.0
        %6708 = vmatpush1.xpose.msra.mxu0 %v6705
        %6709 = vmatprep.subr.mxu0 0.0
        %6710 = vmatpush1.xpose.msra.mxu0 0.0
        %6711 = vmatprep.subr.mxu0 0.0
        %6712 = vmatpush1.xpose.msra.mxu0 0.0
        %6713 = vmatprep.subr.mxu0 0.0
        %6714 = vmatpush1.xpose.msra.mxu0 0.0
        %6715 = vmatprep.subr.mxu0 0.0
        %6716 = vmatpush1.xpose.msra.mxu0 0.0
        %6717 = vmatprep.subr.mxu0 0.0
        %6718 = vmatpush1.xpose.msra.mxu0 0.0
        %6719 = vmatprep.subr.mxu0 0.0
        %6720 = vmatpush1.xpose.msra.mxu0 0.0
        %6721 = vmatprep.subr.mxu0 0.0
        %6722 = vmatpush1.xpose.msra.mxu0 0.0
        %6723 = vmatprep.subr.mxu0 0.0
        %6724 = vmatpush1.xpose.msra.mxu0 0.0
        %6725 = vmatprep.subr.mxu0 0.0
        %6726 = vmatpush1.xpose.msra.mxu0 0.0
        %6727 = vmatprep.subr.mxu0 0.0
        %6728 = vmatpush1.xpose.msra.mxu0 0.0
        %6729 = vmatprep.subr.mxu0 0.0
        %6730 = vmatpush1.xpose.msra.mxu0 0.0
        %6731 = vmatprep.subr.mxu0 0.0
        %6732 = vmatpush1.xpose.msra.mxu0 0.0
        %6733 = vmatprep.subr.mxu0 0.0
        %6734 = vmatpush1.xpose.msra.mxu0 0.0
        %6735 = vmatprep.subr.mxu0 0.0
        %6736 = vmatpush1.xpose.msra.mxu0 0.0
        %6737 = vmatprep.subr.mxu0 0.0
        %6738 = vmatpush1.xpose.msra.mxu0 0.0
        %6739 = vmatprep.subr.mxu0 0.0
        %6740 = vmatpush1.xpose.msra.mxu0 0.0
        %6741 = vmatprep.subr.mxu0 0.0
        %6742 = vmatpush1.xpose.msra.mxu0 0.0
        %6743 = vmatprep.subr.mxu0 0.0
        %6744 = vmatpush1.xpose.msra.mxu0 0.0
        %6745 = vmatprep.subr.mxu0 0.0
        %6746 = vmatpush1.xpose.msra.mxu0 0.0
        %6747 = vmatprep.subr.mxu0 0.0
        %6748 = vmatpush1.xpose.msra.mxu0 0.0
        %6749 = vmatprep.subr.mxu0 0.0
        %6750 = vmatpush1.xpose.msra.mxu0 0.0
        %6751 = vmatprep.subr.mxu0 0.0
        %6752 = vmatpush1.xpose.msra.mxu0 0.0
        %6753 = vmatprep.subr.mxu0 0.0
        %6754 = vmatpush1.xpose.msra.mxu0 0.0
        %6755 = vmatprep.subr.mxu0 0.0
        %6756 = vmatpush1.xpose.msra.mxu0 0.0
        %6757 = vmatprep.subr.mxu0 0.0
        %6758 = vmatpush1.xpose.msra.mxu0 0.0
        %6759 = vmatprep.subr.mxu0 0.0
        %6760 = vmatpush1.xpose.msra.mxu0 0.0
        %6761 = vmatprep.subr.mxu0 0.0
        %6762 = vmatpush1.xpose.msra.mxu0 0.0
        %6763 = vmatprep.subr.mxu0 0.0
        %6764 = vmatpush1.xpose.msra.mxu0 0.0
        %6765 = vmatprep.subr.mxu0 0.0
        %6766 = vmatpush1.xpose.msra.mxu0 0.0
        %6767 = vmatprep.subr.mxu0 0.0
        %6768 = vmatpush1.xpose.msra.mxu0 0.0
        %6769 = vmatprep.subr.mxu0 0.0
        %6770 = vmatpush1.xpose.msra.mxu0 0.0
        %6771 = vmatprep.mubr.f32.mxu0 0.0
        %6772 = vmatmul.mubr.f32.gmra.mrb[0].mxu0 %v6703
        %v6773 = vpop.f32.mrb[0].mxu0
        %v6774 = vadd.f32 %v501, %v6773
        %v6775 = vpop.f32.mrb[0].mxu0
        %6776 = vdwg.mxu0
        %v6777 = vsel %vm506, %v6774, -inf
        %6778 = vmax.xlane.f32.xlu0 %v6777
        %v6779 = vpop.xlane.xlu0 %6778
        %v6780 = vsub.f32 %v6774, %v6779
        %v6781 = vmul.f32 %v6780, 1.442695
        %v6782 = vpow.pop %v6781
        %v6783 = vsel %vm506, %v6782, 0.0
        %6784 = vadd.xlane.f32.xlu0 %v6783
        %v6785 = vpop.xlane.xlu0 %6784
        %v6786 = vrcp.pop %v6785
        %v6787 = vmul.f32 %v6782, %v6786
        %6788 = vrot.lane.b32.xlu0 %v3056, 32
        %v6789 = vpop.permute.xlu0 %6788
        %v6792 = vsel %vm506, %v6787, 0
        %6794 = vmatprep.subr.mxu0 0.0
        %6795 = vmatpush1.msra.mxu0 %v6789
        %6796 = vmatprep.subr.mxu0 0.0
        %6797 = vmatpush1.msra.mxu0 0.0
        %6798 = vmatprep.subr.mxu0 0.0
        %6799 = vmatpush1.msra.mxu0 0.0
        %6800 = vmatprep.subr.mxu0 0.0
        %6801 = vmatpush1.msra.mxu0 0.0
        %6802 = vmatprep.subr.mxu0 0.0
        %6803 = vmatpush1.msra.mxu0 0.0
        %6804 = vmatprep.subr.mxu0 0.0
        %6805 = vmatpush1.msra.mxu0 0.0
        %6806 = vmatprep.subr.mxu0 0.0
        %6807 = vmatpush1.msra.mxu0 0.0
        %6808 = vmatprep.subr.mxu0 0.0
        %6809 = vmatpush1.msra.mxu0 0.0
        %6810 = vmatprep.subr.mxu0 0.0
        %6811 = vmatpush1.msra.mxu0 0.0
        %6812 = vmatprep.subr.mxu0 0.0
        %6813 = vmatpush1.msra.mxu0 0.0
        %6814 = vmatprep.subr.mxu0 0.0
        %6815 = vmatpush1.msra.mxu0 0.0
        %6816 = vmatprep.subr.mxu0 0.0
        %6817 = vmatpush1.msra.mxu0 0.0
        %6818 = vmatprep.subr.mxu0 0.0
        %6819 = vmatpush1.msra.mxu0 0.0
        %6820 = vmatprep.subr.mxu0 0.0
        %6821 = vmatpush1.msra.mxu0 0.0
        %6822 = vmatprep.subr.mxu0 0.0
        %6823 = vmatpush1.msra.mxu0 0.0
        %6824 = vmatprep.subr.mxu0 0.0
        %6825 = vmatpush1.msra.mxu0 0.0
        %6826 = vmatprep.subr.mxu0 0.0
        %6827 = vmatpush1.msra.mxu0 0.0
        %6828 = vmatprep.subr.mxu0 0.0
        %6829 = vmatpush1.msra.mxu0 0.0
        %6830 = vmatprep.subr.mxu0 0.0
        %6831 = vmatpush1.msra.mxu0 0.0
        %6832 = vmatprep.subr.mxu0 0.0
        %6833 = vmatpush1.msra.mxu0 0.0
        %6834 = vmatprep.subr.mxu0 0.0
        %6835 = vmatpush1.msra.mxu0 0.0
        %6836 = vmatprep.subr.mxu0 0.0
        %6837 = vmatpush1.msra.mxu0 0.0
        %6838 = vmatprep.subr.mxu0 0.0
        %6839 = vmatpush1.msra.mxu0 0.0
        %6840 = vmatprep.subr.mxu0 0.0
        %6841 = vmatpush1.msra.mxu0 0.0
        %6842 = vmatprep.subr.mxu0 0.0
        %6843 = vmatpush1.msra.mxu0 0.0
        %6844 = vmatprep.subr.mxu0 0.0
        %6845 = vmatpush1.msra.mxu0 0.0
        %6846 = vmatprep.subr.mxu0 0.0
        %6847 = vmatpush1.msra.mxu0 0.0
        %6848 = vmatprep.subr.mxu0 0.0
        %6849 = vmatpush1.msra.mxu0 0.0
        %6850 = vmatprep.subr.mxu0 0.0
        %6851 = vmatpush1.msra.mxu0 0.0
        %6852 = vmatprep.subr.mxu0 0.0
        %6853 = vmatpush1.msra.mxu0 0.0
        %6854 = vmatprep.subr.mxu0 0.0
        %6855 = vmatpush1.msra.mxu0 0.0
        %6856 = vmatprep.subr.mxu0 0.0
        %6857 = vmatpush1.msra.mxu0 0.0
        %6858 = vmatprep.mubr.f32.mxu0 0.0
        %6859 = vmatmul.mubr.f32.gmra.mrb[0].mxu0 %v6792
        %v6860 = vpop.f32.mrb[0].mxu0
        %v6861 = vadd.f32 0.0, %v6860
        %v6862 = vpop.f32.mrb[0].mxu0
        %6863 = vdwg.mxu0
        %6864 = vrot.lane.b32.xlu0 %v6694, 120
        %v6865 = vpop.permute.xlu0 %6864
        %6866 = vrot.lane.b32.xlu0 %v3056, 56
        %v6867 = vpop.permute.xlu0 %6866
        %v6868 = vsel %vm506, %v6865, 0
        %v6870 = vsel %vm506, %v6867, 0
        %6872 = vmatprep.subr.mxu0 0.0
        %6873 = vmatpush1.xpose.msra.mxu0 %v6870
        %6874 = vmatprep.subr.mxu0 0.0
        %6875 = vmatpush1.xpose.msra.mxu0 0.0
        %6876 = vmatprep.subr.mxu0 0.0
        %6877 = vmatpush1.xpose.msra.mxu0 0.0
        %6878 = vmatprep.subr.mxu0 0.0
        %6879 = vmatpush1.xpose.msra.mxu0 0.0
        %6880 = vmatprep.subr.mxu0 0.0
        %6881 = vmatpush1.xpose.msra.mxu0 0.0
        %6882 = vmatprep.subr.mxu0 0.0
        %6883 = vmatpush1.xpose.msra.mxu0 0.0
        %6884 = vmatprep.subr.mxu0 0.0
        %6885 = vmatpush1.xpose.msra.mxu0 0.0
        %6886 = vmatprep.subr.mxu0 0.0
        %6887 = vmatpush1.xpose.msra.mxu0 0.0
        %6888 = vmatprep.subr.mxu0 0.0
        %6889 = vmatpush1.xpose.msra.mxu0 0.0
        %6890 = vmatprep.subr.mxu0 0.0
        %6891 = vmatpush1.xpose.msra.mxu0 0.0
        %6892 = vmatprep.subr.mxu0 0.0
        %6893 = vmatpush1.xpose.msra.mxu0 0.0
        %6894 = vmatprep.subr.mxu0 0.0
        %6895 = vmatpush1.xpose.msra.mxu0 0.0
        %6896 = vmatprep.subr.mxu0 0.0
        %6897 = vmatpush1.xpose.msra.mxu0 0.0
        %6898 = vmatprep.subr.mxu0 0.0
        %6899 = vmatpush1.xpose.msra.mxu0 0.0
        %6900 = vmatprep.subr.mxu0 0.0
        %6901 = vmatpush1.xpose.msra.mxu0 0.0
        %6902 = vmatprep.subr.mxu0 0.0
        %6903 = vmatpush1.xpose.msra.mxu0 0.0
        %6904 = vmatprep.subr.mxu0 0.0
        %6905 = vmatpush1.xpose.msra.mxu0 0.0
        %6906 = vmatprep.subr.mxu0 0.0
        %6907 = vmatpush1.xpose.msra.mxu0 0.0
        %6908 = vmatprep.subr.mxu0 0.0
        %6909 = vmatpush1.xpose.msra.mxu0 0.0
        %6910 = vmatprep.subr.mxu0 0.0
        %6911 = vmatpush1.xpose.msra.mxu0 0.0
        %6912 = vmatprep.subr.mxu0 0.0
        %6913 = vmatpush1.xpose.msra.mxu0 0.0
        %6914 = vmatprep.subr.mxu0 0.0
        %6915 = vmatpush1.xpose.msra.mxu0 0.0
        %6916 = vmatprep.subr.mxu0 0.0
        %6917 = vmatpush1.xpose.msra.mxu0 0.0
        %6918 = vmatprep.subr.mxu0 0.0
        %6919 = vmatpush1.xpose.msra.mxu0 0.0
        %6920 = vmatprep.subr.mxu0 0.0
        %6921 = vmatpush1.xpose.msra.mxu0 0.0
        %6922 = vmatprep.subr.mxu0 0.0
        %6923 = vmatpush1.xpose.msra.mxu0 0.0
        %6924 = vmatprep.subr.mxu0 0.0
        %6925 = vmatpush1.xpose.msra.mxu0 0.0
        %6926 = vmatprep.subr.mxu0 0.0
        %6927 = vmatpush1.xpose.msra.mxu0 0.0
        %6928 = vmatprep.subr.mxu0 0.0
        %6929 = vmatpush1.xpose.msra.mxu0 0.0
        %6930 = vmatprep.subr.mxu0 0.0
        %6931 = vmatpush1.xpose.msra.mxu0 0.0
        %6932 = vmatprep.subr.mxu0 0.0
        %6933 = vmatpush1.xpose.msra.mxu0 0.0
        %6934 = vmatprep.subr.mxu0 0.0
        %6935 = vmatpush1.xpose.msra.mxu0 0.0
        %6936 = vmatprep.mubr.f32.mxu0 0.0
        %6937 = vmatmul.mubr.f32.gmra.mrb[0].mxu0 %v6868
        %v6938 = vpop.f32.mrb[0].mxu0
        %v6939 = vadd.f32 %v501, %v6938
        %v6940 = vpop.f32.mrb[0].mxu0
        %6941 = vdwg.mxu0
        %v6942 = vsel %vm506, %v6939, -inf
        %6943 = vmax.xlane.f32.xlu0 %v6942
        %v6944 = vpop.xlane.xlu0 %6943
        %v6945 = vsub.f32 %v6939, %v6944
        %v6946 = vmul.f32 %v6945, 1.442695
        %v6947 = vpow.pop %v6946
        %v6948 = vsel %vm506, %v6947, 0.0
        %6949 = vadd.xlane.f32.xlu0 %v6948
        %v6950 = vpop.xlane.xlu0 %6949
        %v6951 = vrcp.pop %v6950
        %v6952 = vmul.f32 %v6947, %v6951
        %6953 = vrot.lane.b32.xlu0 %v3056, 24
        %v6954 = vpop.permute.xlu0 %6953
        %v6957 = vsel %vm506, %v6952, 0
        %6959 = vmatprep.subr.mxu0 0.0
        %6960 = vmatpush1.msra.mxu0 %v6954
        %6961 = vmatprep.subr.mxu0 0.0
        %6962 = vmatpush1.msra.mxu0 0.0
        %6963 = vmatprep.subr.mxu0 0.0
        %6964 = vmatpush1.msra.mxu0 0.0
        %6965 = vmatprep.subr.mxu0 0.0
        %6966 = vmatpush1.msra.mxu0 0.0
        %6967 = vmatprep.subr.mxu0 0.0
        %6968 = vmatpush1.msra.mxu0 0.0
        %6969 = vmatprep.subr.mxu0 0.0
        %6970 = vmatpush1.msra.mxu0 0.0
        %6971 = vmatprep.subr.mxu0 0.0
        %6972 = vmatpush1.msra.mxu0 0.0
        %6973 = vmatprep.subr.mxu0 0.0
        %6974 = vmatpush1.msra.mxu0 0.0
        %6975 = vmatprep.subr.mxu0 0.0
        %6976 = vmatpush1.msra.mxu0 0.0
        %6977 = vmatprep.subr.mxu0 0.0
        %6978 = vmatpush1.msra.mxu0 0.0
        %6979 = vmatprep.subr.mxu0 0.0
        %6980 = vmatpush1.msra.mxu0 0.0
        %6981 = vmatprep.subr.mxu0 0.0
        %6982 = vmatpush1.msra.mxu0 0.0
        %6983 = vmatprep.subr.mxu0 0.0
        %6984 = vmatpush1.msra.mxu0 0.0
        %6985 = vmatprep.subr.mxu0 0.0
        %6986 = vmatpush1.msra.mxu0 0.0
        %6987 = vmatprep.subr.mxu0 0.0
        %6988 = vmatpush1.msra.mxu0 0.0
        %6989 = vmatprep.subr.mxu0 0.0
        %6990 = vmatpush1.msra.mxu0 0.0
        %6991 = vmatprep.subr.mxu0 0.0
        %6992 = vmatpush1.msra.mxu0 0.0
        %6993 = vmatprep.subr.mxu0 0.0
        %6994 = vmatpush1.msra.mxu0 0.0
        %6995 = vmatprep.subr.mxu0 0.0
        %6996 = vmatpush1.msra.mxu0 0.0
        %6997 = vmatprep.subr.mxu0 0.0
        %6998 = vmatpush1.msra.mxu0 0.0
        %6999 = vmatprep.subr.mxu0 0.0
        %7000 = vmatpush1.msra.mxu0 0.0
        %7001 = vmatprep.subr.mxu0 0.0
        %7002 = vmatpush1.msra.mxu0 0.0
        %7003 = vmatprep.subr.mxu0 0.0
        %7004 = vmatpush1.msra.mxu0 0.0
        %7005 = vmatprep.subr.mxu0 0.0
        %7006 = vmatpush1.msra.mxu0 0.0
        %7007 = vmatprep.subr.mxu0 0.0
        %7008 = vmatpush1.msra.mxu0 0.0
        %7009 = vmatprep.subr.mxu0 0.0
        %7010 = vmatpush1.msra.mxu0 0.0
        %7011 = vmatprep.subr.mxu0 0.0
        %7012 = vmatpush1.msra.mxu0 0.0
        %7013 = vmatprep.subr.mxu0 0.0
        %7014 = vmatpush1.msra.mxu0 0.0
        %7015 = vmatprep.subr.mxu0 0.0
        %7016 = vmatpush1.msra.mxu0 0.0
        %7017 = vmatprep.subr.mxu0 0.0
        %7018 = vmatpush1.msra.mxu0 0.0
        %7019 = vmatprep.subr.mxu0 0.0
        %7020 = vmatpush1.msra.mxu0 0.0
        %7021 = vmatprep.subr.mxu0 0.0
        %7022 = vmatpush1.msra.mxu0 0.0
        %7023 = vmatprep.mubr.f32.mxu0 0.0
        %7024 = vmatmul.mubr.f32.gmra.mrb[0].mxu0 %v6957
        %v7025 = vpop.f32.mrb[0].mxu0
        %v7026 = vadd.f32 0.0, %v7025
        %v7027 = vpop.f32.mrb[0].mxu0
        %7028 = vdwg.mxu0
        %v7030 = vsel %vm506, %v7026, 0
        %7032 = vmatprep.subr.mxu0 0.0
        %7033 = vmatpush1.msra.mxu0 %v6696
        %7034 = vmatprep.subr.mxu0 0.0
        %7035 = vmatpush1.msra.mxu0 0.0
        %7036 = vmatprep.subr.mxu0 0.0
        %7037 = vmatpush1.msra.mxu0 0.0
        %7038 = vmatprep.subr.mxu0 0.0
        %7039 = vmatpush1.msra.mxu0 0.0
        %7040 = vmatprep.subr.mxu0 0.0
        %7041 = vmatpush1.msra.mxu0 0.0
        %7042 = vmatprep.subr.mxu0 0.0
        %7043 = vmatpush1.msra.mxu0 0.0
        %7044 = vmatprep.subr.mxu0 0.0
        %7045 = vmatpush1.msra.mxu0 0.0
        %7046 = vmatprep.subr.mxu0 0.0
        %7047 = vmatpush1.msra.mxu0 0.0
        %7048 = vmatprep.subr.mxu0 0.0
        %7049 = vmatpush1.msra.mxu0 0.0
        %7050 = vmatprep.subr.mxu0 0.0
        %7051 = vmatpush1.msra.mxu0 0.0
        %7052 = vmatprep.subr.mxu0 0.0
        %7053 = vmatpush1.msra.mxu0 0.0
        %7054 = vmatprep.subr.mxu0 0.0
        %7055 = vmatpush1.msra.mxu0 0.0
        %7056 = vmatprep.subr.mxu0 0.0
        %7057 = vmatpush1.msra.mxu0 0.0
        %7058 = vmatprep.subr.mxu0 0.0
        %7059 = vmatpush1.msra.mxu0 0.0
        %7060 = vmatprep.subr.mxu0 0.0
        %7061 = vmatpush1.msra.mxu0 0.0
        %7062 = vmatprep.subr.mxu0 0.0
        %7063 = vmatpush1.msra.mxu0 0.0
        %7064 = vmatprep.subr.mxu0 0.0
        %7065 = vmatpush1.msra.mxu0 0.0
        %7066 = vmatprep.subr.mxu0 0.0
        %7067 = vmatpush1.msra.mxu0 0.0
        %7068 = vmatprep.subr.mxu0 0.0
        %7069 = vmatpush1.msra.mxu0 0.0
        %7070 = vmatprep.subr.mxu0 0.0
        %7071 = vmatpush1.msra.mxu0 0.0
        %7072 = vmatprep.subr.mxu0 0.0
        %7073 = vmatpush1.msra.mxu0 0.0
        %7074 = vmatprep.subr.mxu0 0.0
        %7075 = vmatpush1.msra.mxu0 0.0
        %7076 = vmatprep.subr.mxu0 0.0
        %7077 = vmatpush1.msra.mxu0 0.0
        %7078 = vmatprep.subr.mxu0 0.0
        %7079 = vmatpush1.msra.mxu0 0.0
        %7080 = vmatprep.subr.mxu0 0.0
        %7081 = vmatpush1.msra.mxu0 0.0
        %7082 = vmatprep.subr.mxu0 0.0
        %7083 = vmatpush1.msra.mxu0 0.0
        %7084 = vmatprep.subr.mxu0 0.0
        %7085 = vmatpush1.msra.mxu0 0.0
        %7086 = vmatprep.subr.mxu0 0.0
        %7087 = vmatpush1.msra.mxu0 0.0
        %7088 = vmatprep.subr.mxu0 0.0
        %7089 = vmatpush1.msra.mxu0 0.0
        %7090 = vmatprep.subr.mxu0 0.0
        %7091 = vmatpush1.msra.mxu0 0.0
        %7092 = vmatprep.subr.mxu0 0.0
        %7093 = vmatpush1.msra.mxu0 0.0
        %7094 = vmatprep.subr.mxu0 0.0
        %7095 = vmatpush1.msra.mxu0 0.0
        %7096 = vmatprep.mubr.f32.mxu0 0.0
        %7097 = vmatmul.mubr.f32.gmra.mrb[0].mxu0 %v7030
        %v7098 = vpop.f32.mrb[0].mxu0
        %v7099 = vadd.f32 0.0, %v7098
        %v7100 = vpop.f32.mrb[0].mxu0
        %7101 = vdwg.mxu0
        %v7103 = vsel %vm506, %v6861, 0
        %7105 = vmatprep.subr.mxu0 0.0
        %7106 = vmatpush1.msra.mxu0 %v6695
        %7107 = vmatprep.subr.mxu0 0.0
        %7108 = vmatpush1.msra.mxu0 0.0
        %7109 = vmatprep.subr.mxu0 0.0
        %7110 = vmatpush1.msra.mxu0 0.0
        %7111 = vmatprep.subr.mxu0 0.0
        %7112 = vmatpush1.msra.mxu0 0.0
        %7113 = vmatprep.subr.mxu0 0.0
        %7114 = vmatpush1.msra.mxu0 0.0
        %7115 = vmatprep.subr.mxu0 0.0
        %7116 = vmatpush1.msra.mxu0 0.0
        %7117 = vmatprep.subr.mxu0 0.0
        %7118 = vmatpush1.msra.mxu0 0.0
        %7119 = vmatprep.subr.mxu0 0.0
        %7120 = vmatpush1.msra.mxu0 0.0
        %7121 = vmatprep.subr.mxu0 0.0
        %7122 = vmatpush1.msra.mxu0 0.0
        %7123 = vmatprep.subr.mxu0 0.0
        %7124 = vmatpush1.msra.mxu0 0.0
        %7125 = vmatprep.subr.mxu0 0.0
        %7126 = vmatpush1.msra.mxu0 0.0
        %7127 = vmatprep.subr.mxu0 0.0
        %7128 = vmatpush1.msra.mxu0 0.0
        %7129 = vmatprep.subr.mxu0 0.0
        %7130 = vmatpush1.msra.mxu0 0.0
        %7131 = vmatprep.subr.mxu0 0.0
        %7132 = vmatpush1.msra.mxu0 0.0
        %7133 = vmatprep.subr.mxu0 0.0
        %7134 = vmatpush1.msra.mxu0 0.0
        %7135 = vmatprep.subr.mxu0 0.0
        %7136 = vmatpush1.msra.mxu0 0.0
        %7137 = vmatprep.subr.mxu0 0.0
        %7138 = vmatpush1.msra.mxu0 0.0
        %7139 = vmatprep.subr.mxu0 0.0
        %7140 = vmatpush1.msra.mxu0 0.0
        %7141 = vmatprep.subr.mxu0 0.0
        %7142 = vmatpush1.msra.mxu0 0.0
        %7143 = vmatprep.subr.mxu0 0.0
        %7144 = vmatpush1.msra.mxu0 0.0
        %7145 = vmatprep.subr.mxu0 0.0
        %7146 = vmatpush1.msra.mxu0 0.0
        %7147 = vmatprep.subr.mxu0 0.0
        %7148 = vmatpush1.msra.mxu0 0.0
        %7149 = vmatprep.subr.mxu0 0.0
        %7150 = vmatpush1.msra.mxu0 0.0
        %7151 = vmatprep.subr.mxu0 0.0
        %7152 = vmatpush1.msra.mxu0 0.0
        %7153 = vmatprep.subr.mxu0 0.0
        %7154 = vmatpush1.msra.mxu0 0.0
        %7155 = vmatprep.subr.mxu0 0.0
        %7156 = vmatpush1.msra.mxu0 0.0
        %7157 = vmatprep.subr.mxu0 0.0
        %7158 = vmatpush1.msra.mxu0 0.0
        %7159 = vmatprep.subr.mxu0 0.0
        %7160 = vmatpush1.msra.mxu0 0.0
        %7161 = vmatprep.subr.mxu0 0.0
        %7162 = vmatpush1.msra.mxu0 0.0
        %7163 = vmatprep.subr.mxu0 0.0
        %7164 = vmatpush1.msra.mxu0 0.0
        %7165 = vmatprep.subr.mxu0 0.0
        %7166 = vmatpush1.msra.mxu0 0.0
        %7167 = vmatprep.subr.mxu0 0.0
        %7168 = vmatpush1.msra.mxu0 0.0
        %7169 = vmatprep.mubr.f32.mxu0 0.0
        %7170 = vmatmul.mubr.f32.gmra.mrb[0].mxu0 %v7103
        %v7171 = vpop.f32.mrb[0].mxu0
        %v7172 = vadd.f32 %v7099, %v7171
        %v7173 = vpop.f32.mrb[0].mxu0
        %7174 = vdwg.mxu0
        %7175 = vrot.lane.b32.xlu0 %v6694, 112
        %v7176 = vpop.permute.xlu0 %7175
        %7177 = vrot.lane.b32.xlu0 %v3056, 48
        %v7178 = vpop.permute.xlu0 %7177
        %v7179 = vsel %vm506, %v7176, 0
        %v7181 = vsel %vm506, %v7178, 0
        %7183 = vmatprep.subr.mxu0 0.0
        %7184 = vmatpush1.xpose.msra.mxu0 %v7181
        %7185 = vmatprep.subr.mxu0 0.0
        %7186 = vmatpush1.xpose.msra.mxu0 0.0
        %7187 = vmatprep.subr.mxu0 0.0
        %7188 = vmatpush1.xpose.msra.mxu0 0.0
        %7189 = vmatprep.subr.mxu0 0.0
        %7190 = vmatpush1.xpose.msra.mxu0 0.0
        %7191 = vmatprep.subr.mxu0 0.0
        %7192 = vmatpush1.xpose.msra.mxu0 0.0
        %7193 = vmatprep.subr.mxu0 0.0
        %7194 = vmatpush1.xpose.msra.mxu0 0.0
        %7195 = vmatprep.subr.mxu0 0.0
        %7196 = vmatpush1.xpose.msra.mxu0 0.0
        %7197 = vmatprep.subr.mxu0 0.0
        %7198 = vmatpush1.xpose.msra.mxu0 0.0
        %7199 = vmatprep.subr.mxu0 0.0
        %7200 = vmatpush1.xpose.msra.mxu0 0.0
        %7201 = vmatprep.subr.mxu0 0.0
        %7202 = vmatpush1.xpose.msra.mxu0 0.0
        %7203 = vmatprep.subr.mxu0 0.0
        %7204 = vmatpush1.xpose.msra.mxu0 0.0
        %7205 = vmatprep.subr.mxu0 0.0
        %7206 = vmatpush1.xpose.msra.mxu0 0.0
        %7207 = vmatprep.subr.mxu0 0.0
        %7208 = vmatpush1.xpose.msra.mxu0 0.0
        %7209 = vmatprep.subr.mxu0 0.0
        %7210 = vmatpush1.xpose.msra.mxu0 0.0
        %7211 = vmatprep.subr.mxu0 0.0
        %7212 = vmatpush1.xpose.msra.mxu0 0.0
        %7213 = vmatprep.subr.mxu0 0.0
        %7214 = vmatpush1.xpose.msra.mxu0 0.0
        %7215 = vmatprep.subr.mxu0 0.0
        %7216 = vmatpush1.xpose.msra.mxu0 0.0
        %7217 = vmatprep.subr.mxu0 0.0
        %7218 = vmatpush1.xpose.msra.mxu0 0.0
        %7219 = vmatprep.subr.mxu0 0.0
        %7220 = vmatpush1.xpose.msra.mxu0 0.0
        %7221 = vmatprep.subr.mxu0 0.0
        %7222 = vmatpush1.xpose.msra.mxu0 0.0
        %7223 = vmatprep.subr.mxu0 0.0
        %7224 = vmatpush1.xpose.msra.mxu0 0.0
        %7225 = vmatprep.subr.mxu0 0.0
        %7226 = vmatpush1.xpose.msra.mxu0 0.0
        %7227 = vmatprep.subr.mxu0 0.0
        %7228 = vmatpush1.xpose.msra.mxu0 0.0
        %7229 = vmatprep.subr.mxu0 0.0
        %7230 = vmatpush1.xpose.msra.mxu0 0.0
        %7231 = vmatprep.subr.mxu0 0.0
        %7232 = vmatpush1.xpose.msra.mxu0 0.0
        %7233 = vmatprep.subr.mxu0 0.0
        %7234 = vmatpush1.xpose.msra.mxu0 0.0
        %7235 = vmatprep.subr.mxu0 0.0
        %7236 = vmatpush1.xpose.msra.mxu0 0.0
        %7237 = vmatprep.subr.mxu0 0.0
        %7238 = vmatpush1.xpose.msra.mxu0 0.0
        %7239 = vmatprep.subr.mxu0 0.0
        %7240 = vmatpush1.xpose.msra.mxu0 0.0
        %7241 = vmatprep.subr.mxu0 0.0
        %7242 = vmatpush1.xpose.msra.mxu0 0.0
        %7243 = vmatprep.subr.mxu0 0.0
        %7244 = vmatpush1.xpose.msra.mxu0 0.0
        %7245 = vmatprep.subr.mxu0 0.0
        %7246 = vmatpush1.xpose.msra.mxu0 0.0
        %7247 = vmatprep.mubr.f32.mxu0 0.0
        %7248 = vmatmul.mubr.f32.gmra.mrb[0].mxu0 %v7179
        %v7249 = vpop.f32.mrb[0].mxu0
        %v7250 = vadd.f32 %v501, %v7249
        %v7251 = vpop.f32.mrb[0].mxu0
        %7252 = vdwg.mxu0
        %v7253 = vsel %vm506, %v7250, -inf
        %7254 = vmax.xlane.f32.xlu0 %v7253
        %v7255 = vpop.xlane.xlu0 %7254
        %v7256 = vsub.f32 %v7250, %v7255
        %v7257 = vmul.f32 %v7256, 1.442695
        %v7258 = vpow.pop %v7257
        %v7259 = vsel %vm506, %v7258, 0.0
        %7260 = vadd.xlane.f32.xlu0 %v7259
        %v7261 = vpop.xlane.xlu0 %7260
        %v7262 = vrcp.pop %v7261
        %v7263 = vmul.f32 %v7258, %v7262
        %7264 = vrot.lane.b32.xlu0 %v3056, 16
        %v7265 = vpop.permute.xlu0 %7264
        %v7268 = vsel %vm506, %v7263, 0
        %7270 = vmatprep.subr.mxu0 0.0
        %7271 = vmatpush1.msra.mxu0 %v7265
        %7272 = vmatprep.subr.mxu0 0.0
        %7273 = vmatpush1.msra.mxu0 0.0
        %7274 = vmatprep.subr.mxu0 0.0
        %7275 = vmatpush1.msra.mxu0 0.0
        %7276 = vmatprep.subr.mxu0 0.0
        %7277 = vmatpush1.msra.mxu0 0.0
        %7278 = vmatprep.subr.mxu0 0.0
        %7279 = vmatpush1.msra.mxu0 0.0
        %7280 = vmatprep.subr.mxu0 0.0
        %7281 = vmatpush1.msra.mxu0 0.0
        %7282 = vmatprep.subr.mxu0 0.0
        %7283 = vmatpush1.msra.mxu0 0.0
        %7284 = vmatprep.subr.mxu0 0.0
        %7285 = vmatpush1.msra.mxu0 0.0
        %7286 = vmatprep.subr.mxu0 0.0
        %7287 = vmatpush1.msra.mxu0 0.0
        %7288 = vmatprep.subr.mxu0 0.0
        %7289 = vmatpush1.msra.mxu0 0.0
        %7290 = vmatprep.subr.mxu0 0.0
        %7291 = vmatpush1.msra.mxu0 0.0
        %7292 = vmatprep.subr.mxu0 0.0
        %7293 = vmatpush1.msra.mxu0 0.0
        %7294 = vmatprep.subr.mxu0 0.0
        %7295 = vmatpush1.msra.mxu0 0.0
        %7296 = vmatprep.subr.mxu0 0.0
        %7297 = vmatpush1.msra.mxu0 0.0
        %7298 = vmatprep.subr.mxu0 0.0
        %7299 = vmatpush1.msra.mxu0 0.0
        %7300 = vmatprep.subr.mxu0 0.0
        %7301 = vmatpush1.msra.mxu0 0.0
        %7302 = vmatprep.subr.mxu0 0.0
        %7303 = vmatpush1.msra.mxu0 0.0
        %7304 = vmatprep.subr.mxu0 0.0
        %7305 = vmatpush1.msra.mxu0 0.0
        %7306 = vmatprep.subr.mxu0 0.0
        %7307 = vmatpush1.msra.mxu0 0.0
        %7308 = vmatprep.subr.mxu0 0.0
        %7309 = vmatpush1.msra.mxu0 0.0
        %7310 = vmatprep.subr.mxu0 0.0
        %7311 = vmatpush1.msra.mxu0 0.0
        %7312 = vmatprep.subr.mxu0 0.0
        %7313 = vmatpush1.msra.mxu0 0.0
        %7314 = vmatprep.subr.mxu0 0.0
        %7315 = vmatpush1.msra.mxu0 0.0
        %7316 = vmatprep.subr.mxu0 0.0
        %7317 = vmatpush1.msra.mxu0 0.0
        %7318 = vmatprep.subr.mxu0 0.0
        %7319 = vmatpush1.msra.mxu0 0.0
        %7320 = vmatprep.subr.mxu0 0.0
        %7321 = vmatpush1.msra.mxu0 0.0
        %7322 = vmatprep.subr.mxu0 0.0
        %7323 = vmatpush1.msra.mxu0 0.0
        %7324 = vmatprep.subr.mxu0 0.0
        %7325 = vmatpush1.msra.mxu0 0.0
        %7326 = vmatprep.subr.mxu0 0.0
        %7327 = vmatpush1.msra.mxu0 0.0
        %7328 = vmatprep.subr.mxu0 0.0
        %7329 = vmatpush1.msra.mxu0 0.0
        %7330 = vmatprep.subr.mxu0 0.0
        %7331 = vmatpush1.msra.mxu0 0.0
        %7332 = vmatprep.subr.mxu0 0.0
        %7333 = vmatpush1.msra.mxu0 0.0
        %7334 = vmatprep.mubr.f32.mxu0 0.0
        %7335 = vmatmul.mubr.f32.gmra.mrb[0].mxu0 %v7268
        %v7336 = vpop.f32.mrb[0].mxu0
        %v7337 = vadd.f32 0.0, %v7336
        %v7338 = vpop.f32.mrb[0].mxu0
        %7339 = vdwg.mxu0
        %v7341 = vsel %vm506, %v7337, 0
        %7343 = vmatprep.subr.mxu0 0.0
        %7344 = vmatpush1.msra.mxu0 %v6697
        %7345 = vmatprep.subr.mxu0 0.0
        %7346 = vmatpush1.msra.mxu0 0.0
        %7347 = vmatprep.subr.mxu0 0.0
        %7348 = vmatpush1.msra.mxu0 0.0
        %7349 = vmatprep.subr.mxu0 0.0
        %7350 = vmatpush1.msra.mxu0 0.0
        %7351 = vmatprep.subr.mxu0 0.0
        %7352 = vmatpush1.msra.mxu0 0.0
        %7353 = vmatprep.subr.mxu0 0.0
        %7354 = vmatpush1.msra.mxu0 0.0
        %7355 = vmatprep.subr.mxu0 0.0
        %7356 = vmatpush1.msra.mxu0 0.0
        %7357 = vmatprep.subr.mxu0 0.0
        %7358 = vmatpush1.msra.mxu0 0.0
        %7359 = vmatprep.subr.mxu0 0.0
        %7360 = vmatpush1.msra.mxu0 0.0
        %7361 = vmatprep.subr.mxu0 0.0
        %7362 = vmatpush1.msra.mxu0 0.0
        %7363 = vmatprep.subr.mxu0 0.0
        %7364 = vmatpush1.msra.mxu0 0.0
        %7365 = vmatprep.subr.mxu0 0.0
        %7366 = vmatpush1.msra.mxu0 0.0
        %7367 = vmatprep.subr.mxu0 0.0
        %7368 = vmatpush1.msra.mxu0 0.0
        %7369 = vmatprep.subr.mxu0 0.0
        %7370 = vmatpush1.msra.mxu0 0.0
        %7371 = vmatprep.subr.mxu0 0.0
        %7372 = vmatpush1.msra.mxu0 0.0
        %7373 = vmatprep.subr.mxu0 0.0
        %7374 = vmatpush1.msra.mxu0 0.0
        %7375 = vmatprep.subr.mxu0 0.0
        %7376 = vmatpush1.msra.mxu0 0.0
        %7377 = vmatprep.subr.mxu0 0.0
        %7378 = vmatpush1.msra.mxu0 0.0
        %7379 = vmatprep.subr.mxu0 0.0
        %7380 = vmatpush1.msra.mxu0 0.0
        %7381 = vmatprep.subr.mxu0 0.0
        %7382 = vmatpush1.msra.mxu0 0.0
        %7383 = vmatprep.subr.mxu0 0.0
        %7384 = vmatpush1.msra.mxu0 0.0
        %7385 = vmatprep.subr.mxu0 0.0
        %7386 = vmatpush1.msra.mxu0 0.0
        %7387 = vmatprep.subr.mxu0 0.0
        %7388 = vmatpush1.msra.mxu0 0.0
        %7389 = vmatprep.subr.mxu0 0.0
        %7390 = vmatpush1.msra.mxu0 0.0
        %7391 = vmatprep.subr.mxu0 0.0
        %7392 = vmatpush1.msra.mxu0 0.0
        %7393 = vmatprep.subr.mxu0 0.0
        %7394 = vmatpush1.msra.mxu0 0.0
        %7395 = vmatprep.subr.mxu0 0.0
        %7396 = vmatpush1.msra.mxu0 0.0
        %7397 = vmatprep.subr.mxu0 0.0
        %7398 = vmatpush1.msra.mxu0 0.0
        %7399 = vmatprep.subr.mxu0 0.0
        %7400 = vmatpush1.msra.mxu0 0.0
        %7401 = vmatprep.subr.mxu0 0.0
        %7402 = vmatpush1.msra.mxu0 0.0
        %7403 = vmatprep.subr.mxu0 0.0
        %7404 = vmatpush1.msra.mxu0 0.0
        %7405 = vmatprep.subr.mxu0 0.0
        %7406 = vmatpush1.msra.mxu0 0.0
        %7407 = vmatprep.mubr.f32.mxu0 0.0
        %7408 = vmatmul.mubr.f32.gmra.mrb[0].mxu0 %v7341
        %v7409 = vpop.f32.mrb[0].mxu0
        %v7410 = vadd.f32 0.0, %v7409
        %v7411 = vpop.f32.mrb[0].mxu0
        %7412 = vdwg.mxu0
        %v7413 = vadd.f32 %v7172, %v7410
        %7414 = vrot.lane.b32.xlu0 %v6694, 104
        %v7415 = vpop.permute.xlu0 %7414
        %7416 = vrot.lane.b32.xlu0 %v3056, 40
        %v7417 = vpop.permute.xlu0 %7416
        %v7418 = vsel %vm506, %v7415, 0
        %v7420 = vsel %vm506, %v7417, 0
        %7422 = vmatprep.subr.mxu0 0.0
        %7423 = vmatpush1.xpose.msra.mxu0 %v7420
        %7424 = vmatprep.subr.mxu0 0.0
        %7425 = vmatpush1.xpose.msra.mxu0 0.0
        %7426 = vmatprep.subr.mxu0 0.0
        %7427 = vmatpush1.xpose.msra.mxu0 0.0
        %7428 = vmatprep.subr.mxu0 0.0
        %7429 = vmatpush1.xpose.msra.mxu0 0.0
        %7430 = vmatprep.subr.mxu0 0.0
        %7431 = vmatpush1.xpose.msra.mxu0 0.0
        %7432 = vmatprep.subr.mxu0 0.0
        %7433 = vmatpush1.xpose.msra.mxu0 0.0
        %7434 = vmatprep.subr.mxu0 0.0
        %7435 = vmatpush1.xpose.msra.mxu0 0.0
        %7436 = vmatprep.subr.mxu0 0.0
        %7437 = vmatpush1.xpose.msra.mxu0 0.0
        %7438 = vmatprep.subr.mxu0 0.0
        %7439 = vmatpush1.xpose.msra.mxu0 0.0
        %7440 = vmatprep.subr.mxu0 0.0
        %7441 = vmatpush1.xpose.msra.mxu0 0.0
        %7442 = vmatprep.subr.mxu0 0.0
        %7443 = vmatpush1.xpose.msra.mxu0 0.0
        %7444 = vmatprep.subr.mxu0 0.0
        %7445 = vmatpush1.xpose.msra.mxu0 0.0
        %7446 = vmatprep.subr.mxu0 0.0
        %7447 = vmatpush1.xpose.msra.mxu0 0.0
        %7448 = vmatprep.subr.mxu0 0.0
        %7449 = vmatpush1.xpose.msra.mxu0 0.0
        %7450 = vmatprep.subr.mxu0 0.0
        %7451 = vmatpush1.xpose.msra.mxu0 0.0
        %7452 = vmatprep.subr.mxu0 0.0
        %7453 = vmatpush1.xpose.msra.mxu0 0.0
        %7454 = vmatprep.subr.mxu0 0.0
        %7455 = vmatpush1.xpose.msra.mxu0 0.0
        %7456 = vmatprep.subr.mxu0 0.0
        %7457 = vmatpush1.xpose.msra.mxu0 0.0
        %7458 = vmatprep.subr.mxu0 0.0
        %7459 = vmatpush1.xpose.msra.mxu0 0.0
        %7460 = vmatprep.subr.mxu0 0.0
        %7461 = vmatpush1.xpose.msra.mxu0 0.0
        %7462 = vmatprep.subr.mxu0 0.0
        %7463 = vmatpush1.xpose.msra.mxu0 0.0
        %7464 = vmatprep.subr.mxu0 0.0
        %7465 = vmatpush1.xpose.msra.mxu0 0.0
        %7466 = vmatprep.subr.mxu0 0.0
        %7467 = vmatpush1.xpose.msra.mxu0 0.0
        %7468 = vmatprep.subr.mxu0 0.0
        %7469 = vmatpush1.xpose.msra.mxu0 0.0
        %7470 = vmatprep.subr.mxu0 0.0
        %7471 = vmatpush1.xpose.msra.mxu0 0.0
        %7472 = vmatprep.subr.mxu0 0.0
        %7473 = vmatpush1.xpose.msra.mxu0 0.0
        %7474 = vmatprep.subr.mxu0 0.0
        %7475 = vmatpush1.xpose.msra.mxu0 0.0
        %7476 = vmatprep.subr.mxu0 0.0
        %7477 = vmatpush1.xpose.msra.mxu0 0.0
        %7478 = vmatprep.subr.mxu0 0.0
        %7479 = vmatpush1.xpose.msra.mxu0 0.0
        %7480 = vmatprep.subr.mxu0 0.0
        %7481 = vmatpush1.xpose.msra.mxu0 0.0
        %7482 = vmatprep.subr.mxu0 0.0
        %7483 = vmatpush1.xpose.msra.mxu0 0.0
        %7484 = vmatprep.subr.mxu0 0.0
        %7485 = vmatpush1.xpose.msra.mxu0 0.0
        %7486 = vmatprep.mubr.f32.mxu0 0.0
        %7487 = vmatmul.mubr.f32.gmra.mrb[0].mxu0 %v7418
        %v7488 = vpop.f32.mrb[0].mxu0
        %v7489 = vadd.f32 %v501, %v7488
        %v7490 = vpop.f32.mrb[0].mxu0
        %7491 = vdwg.mxu0
        %v7492 = vsel %vm506, %v7489, -inf
        %7493 = vmax.xlane.f32.xlu0 %v7492
        %v7494 = vpop.xlane.xlu0 %7493
        %v7495 = vsub.f32 %v7489, %v7494
        %v7496 = vmul.f32 %v7495, 1.442695
        %v7497 = vpow.pop %v7496
        %v7498 = vsel %vm506, %v7497, 0.0
        %7499 = vadd.xlane.f32.xlu0 %v7498
        %v7500 = vpop.xlane.xlu0 %7499
        %v7501 = vrcp.pop %v7500
        %v7502 = vmul.f32 %v7497, %v7501
        %7503 = vrot.lane.b32.xlu0 %v3056, 8
        %v7504 = vpop.permute.xlu0 %7503
        %v7507 = vsel %vm506, %v7502, 0
        %7509 = vmatprep.subr.mxu0 0.0
        %7510 = vmatpush1.msra.mxu0 %v7504
        %7511 = vmatprep.subr.mxu0 0.0
        %7512 = vmatpush1.msra.mxu0 0.0
        %7513 = vmatprep.subr.mxu0 0.0
        %7514 = vmatpush1.msra.mxu0 0.0
        %7515 = vmatprep.subr.mxu0 0.0
        %7516 = vmatpush1.msra.mxu0 0.0
        %7517 = vmatprep.subr.mxu0 0.0
        %7518 = vmatpush1.msra.mxu0 0.0
        %7519 = vmatprep.subr.mxu0 0.0
        %7520 = vmatpush1.msra.mxu0 0.0
        %7521 = vmatprep.subr.mxu0 0.0
        %7522 = vmatpush1.msra.mxu0 0.0
        %7523 = vmatprep.subr.mxu0 0.0
        %7524 = vmatpush1.msra.mxu0 0.0
        %7525 = vmatprep.subr.mxu0 0.0
        %7526 = vmatpush1.msra.mxu0 0.0
        %7527 = vmatprep.subr.mxu0 0.0
        %7528 = vmatpush1.msra.mxu0 0.0
        %7529 = vmatprep.subr.mxu0 0.0
        %7530 = vmatpush1.msra.mxu0 0.0
        %7531 = vmatprep.subr.mxu0 0.0
        %7532 = vmatpush1.msra.mxu0 0.0
        %7533 = vmatprep.subr.mxu0 0.0
        %7534 = vmatpush1.msra.mxu0 0.0
        %7535 = vmatprep.subr.mxu0 0.0
        %7536 = vmatpush1.msra.mxu0 0.0
        %7537 = vmatprep.subr.mxu0 0.0
        %7538 = vmatpush1.msra.mxu0 0.0
        %7539 = vmatprep.subr.mxu0 0.0
        %7540 = vmatpush1.msra.mxu0 0.0
        %7541 = vmatprep.subr.mxu0 0.0
        %7542 = vmatpush1.msra.mxu0 0.0
        %7543 = vmatprep.subr.mxu0 0.0
        %7544 = vmatpush1.msra.mxu0 0.0
        %7545 = vmatprep.subr.mxu0 0.0
        %7546 = vmatpush1.msra.mxu0 0.0
        %7547 = vmatprep.subr.mxu0 0.0
        %7548 = vmatpush1.msra.mxu0 0.0
        %7549 = vmatprep.subr.mxu0 0.0
        %7550 = vmatpush1.msra.mxu0 0.0
        %7551 = vmatprep.subr.mxu0 0.0
        %7552 = vmatpush1.msra.mxu0 0.0
        %7553 = vmatprep.subr.mxu0 0.0
        %7554 = vmatpush1.msra.mxu0 0.0
        %7555 = vmatprep.subr.mxu0 0.0
        %7556 = vmatpush1.msra.mxu0 0.0
        %7557 = vmatprep.subr.mxu0 0.0
        %7558 = vmatpush1.msra.mxu0 0.0
        %7559 = vmatprep.subr.mxu0 0.0
        %7560 = vmatpush1.msra.mxu0 0.0
        %7561 = vmatprep.subr.mxu0 0.0
        %7562 = vmatpush1.msra.mxu0 0.0
        %7563 = vmatprep.subr.mxu0 0.0
        %7564 = vmatpush1.msra.mxu0 0.0
        %7565 = vmatprep.subr.mxu0 0.0
        %7566 = vmatpush1.msra.mxu0 0.0
        %7567 = vmatprep.subr.mxu0 0.0
        %7568 = vmatpush1.msra.mxu0 0.0
        %7569 = vmatprep.subr.mxu0 0.0
        %7570 = vmatpush1.msra.mxu0 0.0
        %7571 = vmatprep.subr.mxu0 0.0
        %7572 = vmatpush1.msra.mxu0 0.0
        %7573 = vmatprep.mubr.f32.mxu0 0.0
        %7574 = vmatmul.mubr.f32.gmra.mrb[0].mxu0 %v7507
        %v7575 = vpop.f32.mrb[0].mxu0
        %v7576 = vadd.f32 0.0, %v7575
        %v7577 = vpop.f32.mrb[0].mxu0
        %7578 = vdwg.mxu0
        %v7580 = vsel %vm506, %v7576, 0
        %7582 = vmatprep.subr.mxu0 0.0
        %7583 = vmatpush1.msra.mxu0 %v6698
        %7584 = vmatprep.subr.mxu0 0.0
        %7585 = vmatpush1.msra.mxu0 0.0
        %7586 = vmatprep.subr.mxu0 0.0
        %7587 = vmatpush1.msra.mxu0 0.0
        %7588 = vmatprep.subr.mxu0 0.0
        %7589 = vmatpush1.msra.mxu0 0.0
        %7590 = vmatprep.subr.mxu0 0.0
        %7591 = vmatpush1.msra.mxu0 0.0
        %7592 = vmatprep.subr.mxu0 0.0
        %7593 = vmatpush1.msra.mxu0 0.0
        %7594 = vmatprep.subr.mxu0 0.0
        %7595 = vmatpush1.msra.mxu0 0.0
        %7596 = vmatprep.subr.mxu0 0.0
        %7597 = vmatpush1.msra.mxu0 0.0
        %7598 = vmatprep.subr.mxu0 0.0
        %7599 = vmatpush1.msra.mxu0 0.0
        %7600 = vmatprep.subr.mxu0 0.0
        %7601 = vmatpush1.msra.mxu0 0.0
        %7602 = vmatprep.subr.mxu0 0.0
        %7603 = vmatpush1.msra.mxu0 0.0
        %7604 = vmatprep.subr.mxu0 0.0
        %7605 = vmatpush1.msra.mxu0 0.0
        %7606 = vmatprep.subr.mxu0 0.0
        %7607 = vmatpush1.msra.mxu0 0.0
        %7608 = vmatprep.subr.mxu0 0.0
        %7609 = vmatpush1.msra.mxu0 0.0
        %7610 = vmatprep.subr.mxu0 0.0
        %7611 = vmatpush1.msra.mxu0 0.0
        %7612 = vmatprep.subr.mxu0 0.0
        %7613 = vmatpush1.msra.mxu0 0.0
        %7614 = vmatprep.subr.mxu0 0.0
        %7615 = vmatpush1.msra.mxu0 0.0
        %7616 = vmatprep.subr.mxu0 0.0
        %7617 = vmatpush1.msra.mxu0 0.0
        %7618 = vmatprep.subr.mxu0 0.0
        %7619 = vmatpush1.msra.mxu0 0.0
        %7620 = vmatprep.subr.mxu0 0.0
        %7621 = vmatpush1.msra.mxu0 0.0
        %7622 = vmatprep.subr.mxu0 0.0
        %7623 = vmatpush1.msra.mxu0 0.0
        %7624 = vmatprep.subr.mxu0 0.0
        %7625 = vmatpush1.msra.mxu0 0.0
        %7626 = vmatprep.subr.mxu0 0.0
        %7627 = vmatpush1.msra.mxu0 0.0
        %7628 = vmatprep.subr.mxu0 0.0
        %7629 = vmatpush1.msra.mxu0 0.0
        %7630 = vmatprep.subr.mxu0 0.0
        %7631 = vmatpush1.msra.mxu0 0.0
        %7632 = vmatprep.subr.mxu0 0.0
        %7633 = vmatpush1.msra.mxu0 0.0
        %7634 = vmatprep.subr.mxu0 0.0
        %7635 = vmatpush1.msra.mxu0 0.0
        %7636 = vmatprep.subr.mxu0 0.0
        %7637 = vmatpush1.msra.mxu0 0.0
        %7638 = vmatprep.subr.mxu0 0.0
        %7639 = vmatpush1.msra.mxu0 0.0
        %7640 = vmatprep.subr.mxu0 0.0
        %7641 = vmatpush1.msra.mxu0 0.0
        %7642 = vmatprep.subr.mxu0 0.0
        %7643 = vmatpush1.msra.mxu0 0.0
        %7644 = vmatprep.subr.mxu0 0.0
        %7645 = vmatpush1.msra.mxu0 0.0
        %7646 = vmatprep.mubr.f32.mxu0 0.0
        %7647 = vmatmul.mubr.f32.gmra.mrb[0].mxu0 %v7580
        %v7648 = vpop.f32.mrb[0].mxu0
        %v7649 = vadd.f32 0.0, %v7648
        %v7650 = vpop.f32.mrb[0].mxu0
        %7651 = vdwg.mxu0
        %v7652 = vadd.f32 %v7413, %v7649
        %v7653 = vlaneseq
        %v7654 = vshrl.u32 %v7653, 7
        %v7655 = vsub.s32 0, %v7654
        %v7656 = vrot.slane %v6699, %v7655
        %v7657 = vadd.f32 %v7652, %v7656
        %v7658 = vadd.f32 %v6581, %v7657
        %v7659 = vsel %vm377, %v7658, 0.0
        %7660 = vadd.xlane.f32.xlu0 %v7659
        %v7661 = vpop.xlane.xlu0 %7660
        %v7662 = vmul.f32 %v7661, %v381
        %v7663 = vsub.f32 %v7658, %v7662
        %v7664 = vmul.f32 %v7663, %v7663
        %v7665 = vsel %vm377, %v7664, 0.0
        %7666 = vadd.xlane.f32.xlu0 %v7665
        %v7667 = vpop.xlane.xlu0 %7666
        %v7668 = vmul.f32 %v7667, 0.032258064
        %v7669 = vrsqrt.pop %v7668
        %v7670 = vmul.f32 %v7668, %v7669
        %vm7671 = vcmp.eq.f32.partialorder %v7668, inf
        %v7672 = vsel %vm7671, %v7668, %v7670
        %vm7673 = vcmp.eq.f32.partialorder %v7668, 0.0
        %v7674 = vand.u32 %v7668, 2147483648
        %v7675 = vsel %vm7673, %v7674, %v7672
        %v7676 = vlaneseq
        %v7677 = vshrl.u32 %v7676, 7
        %v7678 = vsub.s32 2, %v7677
        %v7679 = vrot.slane %v5502, %v7678
        %v7680 = vmul.f32 %v7679, %v7663
        %v7681 = vadd.f32 %v7675, 1e-06
        %v7682 = vrcp.pop %v7681
        %v7683 = vmul.f32 %v7680, %v7682
        %v7684 = vlaneseq
        %v7685 = vshrl.u32 %v7684, 7
        %v7686 = vsub.s32 2, %v7685
        %v7687 = vrot.slane %v5503, %v7686
        %v7688 = vadd.f32 %v7683, %v7687
        %v7689 = vld [vmem:[#allocation2 + $0x3f0] sm:$0xff]
        %v7690 = vld [vmem:[#allocation2 + $0x3f8] sm:$0xff]
        %v7691 = vld [vmem:[#allocation2 + $0x400] sm:$0xff]
        %v7692 = vld [vmem:[#allocation2 + $0x408] sm:$0xff]
        %v7693 = vld [vmem:[#allocation2 + $0x410] sm:$0x1]
        %v7694 = vld [vmem:[#allocation2 + $0x418] sm:$0xff]
        %v7695 = vld [vmem:[#allocation2 + $0x420] sm:$0xff]
        %v7696 = vld [vmem:[#allocation2 + $0x428] sm:$0xff]
        %v7697 = vld [vmem:[#allocation2 + $0x430] sm:$0xff]
        %v7698 = vld [vmem:[#allocation2 + $0x438] sm:$0xff]
        %v7699 = vld [vmem:[#allocation2 + $0x440] sm:$0xff]
        %v7700 = vld [vmem:[#allocation2 + $0x448] sm:$0xff]
        %v7701 = vld [vmem:[#allocation2 + $0x450] sm:$0xff]
        %v7702 = vld [vmem:[#allocation2 + $0x458] sm:$0x1]
        %v7703 = vlaneseq
        %v7704 = vshrl.u32 %v7703, 7
        %v7705 = vsub.s32 0, %v7704
        %v7706 = vrot.slane %v7693, %v7705
        %v7708 = vsel %vm377, %v7688, 0
        %7710 = vmatprep.subr.mxu0 0.0
        %7711 = vmatpush1.msra.mxu0 %v7689
        %7712 = vmatprep.subr.mxu0 0.0
        %7713 = vmatpush1.msra.mxu0 %v7690
        %7714 = vmatprep.subr.mxu0 0.0
        %7715 = vmatpush1.msra.mxu0 %v7691
        %7716 = vmatprep.subr.mxu0 0.0
        %7717 = vmatpush1.msra.mxu0 %v7692
        %7718 = vmatprep.subr.mxu0 0.0
        %7719 = vmatpush1.msra.mxu0 0.0
        %7720 = vmatprep.subr.mxu0 0.0
        %7721 = vmatpush1.msra.mxu0 0.0
        %7722 = vmatprep.subr.mxu0 0.0
        %7723 = vmatpush1.msra.mxu0 0.0
        %7724 = vmatprep.subr.mxu0 0.0
        %7725 = vmatpush1.msra.mxu0 0.0
        %7726 = vmatprep.subr.mxu0 0.0
        %7727 = vmatpush1.msra.mxu0 0.0
        %7728 = vmatprep.subr.mxu0 0.0
        %7729 = vmatpush1.msra.mxu0 0.0
        %7730 = vmatprep.subr.mxu0 0.0
        %7731 = vmatpush1.msra.mxu0 0.0
        %7732 = vmatprep.subr.mxu0 0.0
        %7733 = vmatpush1.msra.mxu0 0.0
        %7734 = vmatprep.subr.mxu0 0.0
        %7735 = vmatpush1.msra.mxu0 0.0
        %7736 = vmatprep.subr.mxu0 0.0
        %7737 = vmatpush1.msra.mxu0 0.0
        %7738 = vmatprep.subr.mxu0 0.0
        %7739 = vmatpush1.msra.mxu0 0.0
        %7740 = vmatprep.subr.mxu0 0.0
        %7741 = vmatpush1.msra.mxu0 0.0
        %7742 = vmatprep.subr.mxu0 0.0
        %7743 = vmatpush1.msra.mxu0 0.0
        %7744 = vmatprep.subr.mxu0 0.0
        %7745 = vmatpush1.msra.mxu0 0.0
        %7746 = vmatprep.subr.mxu0 0.0
        %7747 = vmatpush1.msra.mxu0 0.0
        %7748 = vmatprep.subr.mxu0 0.0
        %7749 = vmatpush1.msra.mxu0 0.0
        %7750 = vmatprep.subr.mxu0 0.0
        %7751 = vmatpush1.msra.mxu0 0.0
        %7752 = vmatprep.subr.mxu0 0.0
        %7753 = vmatpush1.msra.mxu0 0.0
        %7754 = vmatprep.subr.mxu0 0.0
        %7755 = vmatpush1.msra.mxu0 0.0
        %7756 = vmatprep.subr.mxu0 0.0
        %7757 = vmatpush1.msra.mxu0 0.0
        %7758 = vmatprep.subr.mxu0 0.0
        %7759 = vmatpush1.msra.mxu0 0.0
        %7760 = vmatprep.subr.mxu0 0.0
        %7761 = vmatpush1.msra.mxu0 0.0
        %7762 = vmatprep.subr.mxu0 0.0
        %7763 = vmatpush1.msra.mxu0 0.0
        %7764 = vmatprep.subr.mxu0 0.0
        %7765 = vmatpush1.msra.mxu0 0.0
        %7766 = vmatprep.subr.mxu0 0.0
        %7767 = vmatpush1.msra.mxu0 0.0
        %7768 = vmatprep.subr.mxu0 0.0
        %7769 = vmatpush1.msra.mxu0 0.0
        %7770 = vmatprep.subr.mxu0 0.0
        %7771 = vmatpush1.msra.mxu0 0.0
        %7772 = vmatprep.subr.mxu0 0.0
        %7773 = vmatpush1.msra.mxu0 0.0
        %7774 = vmatprep.mubr.f32.mxu0 0.0
        %7775 = vmatmul.mubr.f32.gmra.mrb[0].mxu0 %v7708
        %v7776 = vpop.f32.mrb[0].mxu0
        %v7777 = vadd.f32 %v7706, %v7776
        %v7778 = vpop.f32.mrb[0].mxu0
        %7779 = vdwg.mxu0
        %v7780 = vmax.f32 %v7777, 0.0
        %v7781 = vlaneseq
        %v7782 = vshrl.u32 %v7781, 7
        %v7783 = vsub.s32 0, %v7782
        %v7784 = vrot.slane %v7702, %v7783
        %v7786 = vsel %vm1590, %v7780, 0
        %7788 = vmatprep.subr.mxu0 0.0
        %7789 = vmatpush1.msra.mxu0 %v7694
        %7790 = vmatprep.subr.mxu0 0.0
        %7791 = vmatpush1.msra.mxu0 %v7695
        %7792 = vmatprep.subr.mxu0 0.0
        %7793 = vmatpush1.msra.mxu0 %v7696
        %7794 = vmatprep.subr.mxu0 0.0
        %7795 = vmatpush1.msra.mxu0 %v7697
        %7796 = vmatprep.subr.mxu0 0.0
        %7797 = vmatpush1.msra.mxu0 %v7698
        %7798 = vmatprep.subr.mxu0 0.0
        %7799 = vmatpush1.msra.mxu0 %v7699
        %7800 = vmatprep.subr.mxu0 0.0
        %7801 = vmatpush1.msra.mxu0 %v7700
        %7802 = vmatprep.subr.mxu0 0.0
        %7803 = vmatpush1.msra.mxu0 %v7701
        %7804 = vmatprep.subr.mxu0 0.0
        %7805 = vmatpush1.msra.mxu0 0.0
        %7806 = vmatprep.subr.mxu0 0.0
        %7807 = vmatpush1.msra.mxu0 0.0
        %7808 = vmatprep.subr.mxu0 0.0
        %7809 = vmatpush1.msra.mxu0 0.0
        %7810 = vmatprep.subr.mxu0 0.0
        %7811 = vmatpush1.msra.mxu0 0.0
        %7812 = vmatprep.subr.mxu0 0.0
        %7813 = vmatpush1.msra.mxu0 0.0
        %7814 = vmatprep.subr.mxu0 0.0
        %7815 = vmatpush1.msra.mxu0 0.0
        %7816 = vmatprep.subr.mxu0 0.0
        %7817 = vmatpush1.msra.mxu0 0.0
        %7818 = vmatprep.subr.mxu0 0.0
        %7819 = vmatpush1.msra.mxu0 0.0
        %7820 = vmatprep.subr.mxu0 0.0
        %7821 = vmatpush1.msra.mxu0 0.0
        %7822 = vmatprep.subr.mxu0 0.0
        %7823 = vmatpush1.msra.mxu0 0.0
        %7824 = vmatprep.subr.mxu0 0.0
        %7825 = vmatpush1.msra.mxu0 0.0
        %7826 = vmatprep.subr.mxu0 0.0
        %7827 = vmatpush1.msra.mxu0 0.0
        %7828 = vmatprep.subr.mxu0 0.0
        %7829 = vmatpush1.msra.mxu0 0.0
        %7830 = vmatprep.subr.mxu0 0.0
        %7831 = vmatpush1.msra.mxu0 0.0
        %7832 = vmatprep.subr.mxu0 0.0
        %7833 = vmatpush1.msra.mxu0 0.0
        %7834 = vmatprep.subr.mxu0 0.0
        %7835 = vmatpush1.msra.mxu0 0.0
        %7836 = vmatprep.subr.mxu0 0.0
        %7837 = vmatpush1.msra.mxu0 0.0
        %7838 = vmatprep.subr.mxu0 0.0
        %7839 = vmatpush1.msra.mxu0 0.0
        %7840 = vmatprep.subr.mxu0 0.0
        %7841 = vmatpush1.msra.mxu0 0.0
        %7842 = vmatprep.subr.mxu0 0.0
        %7843 = vmatpush1.msra.mxu0 0.0
        %7844 = vmatprep.subr.mxu0 0.0
        %7845 = vmatpush1.msra.mxu0 0.0
        %7846 = vmatprep.subr.mxu0 0.0
        %7847 = vmatpush1.msra.mxu0 0.0
        %7848 = vmatprep.subr.mxu0 0.0
        %7849 = vmatpush1.msra.mxu0 0.0
        %7850 = vmatprep.subr.mxu0 0.0
        %7851 = vmatpush1.msra.mxu0 0.0
        %7852 = vmatprep.mubr.f32.mxu0 0.0
        %7853 = vmatmul.mubr.f32.gmra.mrb[0].mxu0 %v7786
        %v7854 = vpop.f32.mrb[0].mxu0
        %v7855 = vadd.f32 %v7784, %v7854
        %v7856 = vpop.f32.mrb[0].mxu0
        %7857 = vdwg.mxu0
        %v7858 = vadd.f32 %v7658, %v7855
        %v7859 = vld [vmem:[#allocation2 + $0x470] sm:$0x1]
        %v7860 = vld [vmem:[#allocation2 + $0x478] sm:$0x1]
        %v7861 = vsel %vm377, %v7858, 0.0
        %7862 = vadd.xlane.f32.xlu0 %v7861
        %v7863 = vpop.xlane.xlu0 %7862
        %v7864 = vmul.f32 %v7863, %v381
        %v7865 = vsub.f32 %v7858, %v7864
        %v7866 = vmul.f32 %v7865, %v7865
        %v7867 = vsel %vm377, %v7866, 0.0
        %7868 = vadd.xlane.f32.xlu0 %v7867
        %v7869 = vpop.xlane.xlu0 %7868
        %v7870 = vmul.f32 %v7869, 0.032258064
        %v7871 = vrsqrt.pop %v7870
        %v7872 = vmul.f32 %v7870, %v7871
        %vm7873 = vcmp.eq.f32.partialorder %v7870, inf
        %v7874 = vsel %vm7873, %v7870, %v7872
        %vm7875 = vcmp.eq.f32.partialorder %v7870, 0.0
        %v7876 = vand.u32 %v7870, 2147483648
        %v7877 = vsel %vm7875, %v7876, %v7874
        %v7878 = vlaneseq
        %v7879 = vshrl.u32 %v7878, 7
        %v7880 = vsub.s32 0, %v7879
        %v7881 = vrot.slane %v7859, %v7880
        %v7882 = vmul.f32 %v7881, %v7865
        %v7883 = vadd.f32 %v7877, 1e-06
        %v7884 = vrcp.pop %v7883
        %v7885 = vmul.f32 %v7882, %v7884
        %v7886 = vlaneseq
        %v7887 = vshrl.u32 %v7886, 7
        %v7888 = vsub.s32 0, %v7887
        %v7889 = vrot.slane %v7860, %v7888
        %v7890 = vadd.f32 %v7885, %v7889
        %7891 = vst.msk [vmem:[%s267] sm:$0xff] %vm377, %v7890
        %s7892 = sand.u32 %s153, 1
        %s7893 = scalar_lea.sflag [#allocation4], %s7892
        %s7894 = sand.u32 %s153, 1
        %s7895 = smul.addr %s7894, 8
        %s7896 = scalar_lea.vmem [#allocation5], %s7895
        // Predicated region
        $region45: #{encoder_decoder_forward.1} parent=39 // pred_check
          %p7897 = pneg %p163
        $region46: #{encoder_decoder_forward.1} parent=39 // pred_check_branch
          %7899 = sbr.rel (%p7897) target = $region48
        $region47: #{encoder_decoder_forward.1} parent=39 // pred_region
          %s7901 = ssub.s32 128, 128
          %7902 = vsyncadd %s7893, %s7901
          %s7903 = smul.addr %s20, 128
          %s7904 = scalar_lea.hbm %s5, %s7903
          %s7906 = sshll.u32 %s7896, 4
          %s7907 = int_to_ptr.vmem [resolvable:$true] %s7906
          %7909 = dma.vmem_to_hbm [thread:$0]  %s7907, 128, %s7904, %s7893
        $region48: #{encoder_decoder_forward.1} parent=39 // pred_fallthru
          _
      $region40: #{encoder_decoder_forward.1} parent=5 // pred_fallthru
        _
      %p7910 = scmp.le.s32.totalorder 2, %s15
      // Predicated region
      $region49: #{encoder_decoder_forward.1} parent=5 // pred_check
        %p7911 = pneg %p7910
      $region50: #{encoder_decoder_forward.1} parent=5 // pred_check_branch
        %7913 = sbr.rel (%p7911) target = $region52
      $region51: #{encoder_decoder_forward.1} parent=5 // pred_region
        %s7914 = ssub.s32 %s15, 2
        // Predicated region
        $region53: #{encoder_decoder_forward.1} parent=51 // pred_check
          %p7915 = pneg %p169
        $region54: #{encoder_decoder_forward.1} parent=51 // pred_check_branch
          %7917 = sbr.rel (%p7915) target = $region56
        $region55: #{encoder_decoder_forward.1} parent=51 // pred_region
          %s7918 = sand.u32 %s154, 1
          %s7919 = scalar_lea.sflag [#allocation4], %s7918
          %s7920 = sand.u32 %s154, 1
          %s7921 = smul.addr %s7920, 8
          %s7922 = scalar_lea.vmem [#allocation5], %s7921
          %7923 = dma.done %s7919, 128
        $region56: #{encoder_decoder_forward.1} parent=51 // pred_fallthru
          _
      $region52: #{encoder_decoder_forward.1} parent=5 // pred_fallthru
        _
    $region6: #{encoder_decoder_forward.1} parent=1 // loop_footer
      %s19 = sadd.s32 1, %s15
    $region7: #{encoder_decoder_forward.1} parent=1 // loop_footer_branch
      %14 = sbr.rel target = $region3
    $region8: #{encoder_decoder_forward.1} parent=1 // loop_exit
      _
    %7924 = vsyncpa [#allocation3], 1
    %s7925 = scalar_lea.sflag [#allocation3], 1
    %7926 = vsyncpa %s7925, 1
    %7927 = vsyncpa [#allocation4], 1
    %s7928 = scalar_lea.sflag [#allocation4], 1
    %7929 = vsyncpa %s7928, 1

</llo_original>
